<compile_context>
chip_gen: v7x
topology: tpu7x:2x2x1
jax: 0.10.0
libtpu: 0.0.40
codegen_flags: <defaults>
</compile_context>

<pallas_src>
import jax
import jax.numpy as jnp
from jax.experimental import pallas as pl
from jax.experimental.pallas import tpu as pltpu


# ----------------------------- Pallas kernels -----------------------------

def _gemm_bias_relu_kernel(x_ref, w_ref, b_ref, o_ref):
    """o = relu(x @ w + b); bf16 operands, f32 accumulation, bf16 store."""
    acc = jnp.dot(x_ref[...], w_ref[...], preferred_element_type=jnp.float32)
    o_ref[...] = jnp.maximum(acc + b_ref[...], 0.0).astype(o_ref.dtype)


def conv_gemm_pallas(x, w, b, *, tm=512):
    """Conv-as-GEMM with an M grid.  x:(M,K) bf16, w:(K,N) bf16, b:(N,) f32.

    N is lane-dense (128).  The M axis is tiled (multiple of 8) and marked
    'parallel'; ragged last blocks are handled by Pallas (OOB stores dropped).
    """
    M, K = x.shape
    N = w.shape[1]
    tm = min(tm, M)                       # full-dim block when M is small
    grid_m = pl.cdiv(M, tm)
    cost = pl.CostEstimate(
        flops=2 * M * K * N,
        transcendentals=0,
        bytes_accessed=M * K * 2 + K * N * 2 + M * N * 2 + N * 4,
    )
    return pl.pallas_call(
        _gemm_bias_relu_kernel,
        out_shape=jax.ShapeDtypeStruct((M, N), jnp.bfloat16),
        grid_spec=pltpu.PrefetchScalarGridSpec(
            num_scalar_prefetch=0,
            grid=(grid_m,),
            in_specs=[
                pl.BlockSpec((tm, K), lambda m: (m, 0)),
                pl.BlockSpec((K, N), lambda m: (0, 0)),
                pl.BlockSpec((1, N), lambda m: (0, 0)),
            ],
            out_specs=pl.BlockSpec((tm, N), lambda m: (m, 0)),
        ),
        compiler_params=pltpu.CompilerParams(
            dimension_semantics=("parallel",)),
        cost_estimate=cost,
    )(x, w, b.reshape(1, N))


def _fc_kernel(x_ref, w_ref, scale_ref, b_ref, o_ref):
    """o = (x @ dequant(w)) * scale + b.  int8 weights -> bf16 in VMEM."""
    w = w_ref[...].astype(jnp.bfloat16)
    acc = jnp.dot(x_ref[...], w, preferred_element_type=jnp.float32)
    o_ref[...] = (acc * scale_ref[...] + b_ref[...]).astype(o_ref.dtype)


def fc_pallas(x, w_q, scale, b, *, tn=768):
    """y = x @ (w_q * scale) + b.

    x:(M,K) bf16, w_q:(K,N) int8, scale/b:(N,) f32 -> (M,N) f32.
    Grid over N only (K fully resident per step, no accumulator scratch);
    every step writes a distinct lane-dense (M, tn) block -> 'parallel', so
    v7x megacore gets >= 2 weight tiles per TensorCore and each core keeps
    its (memory-bound) weight DMA double-buffered.
    """
    M, K = x.shape
    N = w_q.shape[1]
    assert N % tn == 0 and tn % 128 == 0
    cost = pl.CostEstimate(
        flops=2 * M * K * N,
        transcendentals=0,
        bytes_accessed=K * N + M * K * 2 + M * N * 4 + N * 8,
    )
    return pl.pallas_call(
        _fc_kernel,
        out_shape=jax.ShapeDtypeStruct((M, N), jnp.float32),
        grid_spec=pltpu.PrefetchScalarGridSpec(
            num_scalar_prefetch=0,
            grid=(N // tn,),
            in_specs=[
                pl.BlockSpec((M, K), lambda n: (0, 0)),
                pl.BlockSpec((K, tn), lambda n: (0, n)),
                pl.BlockSpec((1, tn), lambda n: (0, n)),
                pl.BlockSpec((1, tn), lambda n: (0, n)),
            ],
            out_specs=pl.BlockSpec((M, tn), lambda n: (0, n)),
        ),
        compiler_params=pltpu.CompilerParams(
            dimension_semantics=("parallel",)),
        cost_estimate=cost,
    )(x, w_q, scale.reshape(1, N), b.reshape(1, N))


# ----------------------------- plain-JAX glue ------------------------------

def _im2col_nhwc(x, kh, kw):
    """x:(B,H,W,C) NHWC -> (B*Ho*Wo, kh*kw*C); feature order (di, dj, c)."""
    B, H, W, C = x.shape
    Ho, Wo = H - kh + 1, W - kw + 1
    cols = []
    for di in range(kh):
        for dj in range(kw):
            cols.append(x[:, di:di + Ho, dj:dj + Wo, :])
    p = jnp.concatenate(cols, axis=-1)                   # (B,Ho,Wo,kh*kw*C)
    return p.reshape(B * Ho * Wo, kh * kw * C)


def _maxpool_3x3_s2_nhwc(x):
    # TODO(synk): the overlapping 3x3/stride-2 max windows (and im2col patch
    # extraction) stay as XLA glue; fusing them into the conv kernel epilogue
    # needs stride-2 sublane slicing with no clean Mosaic lowering at these
    # (<1 MB, bf16) activation sizes.
    return jax.lax.reduce_window(
        x, jnp.asarray(-jnp.inf, x.dtype), jax.lax.max,
        window_dimensions=(1, 3, 3, 1),
        window_strides=(1, 2, 2, 1),
        padding="VALID")


# ----------------------------- params & forward ----------------------------

def init_raw_params(key, shared_encoder_out=3072):
    """PyTorch-layout parameters (deterministic)."""
    ks = jax.random.split(key, 6)

    def uinit(k, shape, fan_in):
        bound = 1.0 / float(fan_in) ** 0.5
        return jax.random.uniform(k, shape, jnp.float32, -bound, bound)

    return {
        "conv1_w": uinit(ks[0], (64, 3, 5, 5), 3 * 5 * 5),
        "conv1_b": uinit(ks[1], (64,), 3 * 5 * 5),
        "conv2_w": uinit(ks[2], (64, 64, 5, 5), 64 * 5 * 5),
        "conv2_b": uinit(ks[3], (64,), 64 * 5 * 5),
        "fc_w":    uinit(ks[4], (shared_encoder_out, 1024), 1024),  # (out, in)
        "fc_b":    uinit(ks[5], (shared_encoder_out,), 1024),
    }


def prepare_params(raw):
    """One-time weight re-layout: im2col matrices padded to 128 lane-dense
    output channels (bf16), NHWC fc row permutation, int8 fc quantization."""
    C_PAD = 128

    # conv1: (out,in,kh,kw) -> (kh,kw,in,out), pad out 64->128 with zeros.
    w1 = jnp.transpose(raw["conv1_w"], (2, 3, 1, 0))            # (5,5,3,64)
    w1 = jnp.pad(w1, ((0, 0), (0, 0), (0, 0), (0, C_PAD - 64)))
    w1m = w1.reshape(5 * 5 * 3, C_PAD).astype(jnp.bfloat16)     # (75,128)
    b1 = jnp.pad(raw["conv1_b"], (0, C_PAD - 64)).astype(jnp.float32)

    # conv2: pad c_in 64->128 (matches padded activations, zero rows) and
    # c_out 64->128 (zero columns).
    w2 = jnp.transpose(raw["conv2_w"], (2, 3, 1, 0))            # (5,5,64,64)
    w2 = jnp.pad(w2, ((0, 0), (0, 0), (0, C_PAD - 64), (0, C_PAD - 64)))
    w2m = w2.reshape(5 * 5 * C_PAD, C_PAD).astype(jnp.bfloat16)  # (3200,128)
    b2 = jnp.pad(raw["conv2_b"], (0, C_PAD - 64)).astype(jnp.float32)

    # fc: PyTorch flattens (B,64,4,4) as (c,h,w); activations here are NHWC,
    # so permute the fc weight rows once instead of transposing at runtime.
    perm = jnp.arange(64 * 4 * 4).reshape(64, 4, 4).transpose(1, 2, 0).reshape(-1)
    fc_w = jnp.transpose(raw["fc_w"], (1, 0))[perm]              # (1024, 3072)

    # int8 per-output-channel symmetric quantization.  Storage/DMA format
    # only: dequantized to bf16 in VMEM, so no MXU integer path is required
    # (portable to v7x) while the dominant weight stream is halved vs bf16.
    amax = jnp.max(jnp.abs(fc_w), axis=0)                        # (3072,)
    scale = jnp.where(amax > 0, amax / 127.0, 1.0).astype(jnp.float32)
    fc_wq = jnp.clip(jnp.round(fc_w / scale[None, :]), -127, 127).astype(jnp.int8)

    return {
        "w1m": w1m, "b1": b1,
        "w2m": w2m, "b2": b2,
        "fc_wq": fc_wq, "fc_scale": scale, "fc_b": raw["fc_b"],
    }


@jax.jit
def shared_encoder_forward(x_nchw, p):
    B = x_nchw.shape[0]
    x = jnp.transpose(x_nchw, (0, 2, 3, 1)).astype(jnp.bfloat16)   # (B,32,32,3)

    p1 = _im2col_nhwc(x, 5, 5)                                     # (B*784, 75) bf16
    h1 = conv_gemm_pallas(p1, p["w1m"], p["b1"])                   # (B*784, 128) bf16
    h1 = _maxpool_3x3_s2_nhwc(h1.reshape(B, 28, 28, 128))          # (B,13,13,128)

    p2 = _im2col_nhwc(h1, 5, 5)                                    # (B*81, 3200) bf16
    h2 = conv_gemm_pallas(p2, p["w2m"], p["b2"])                   # (B*81, 128) bf16
    h2 = _maxpool_3x3_s2_nhwc(h2.reshape(B, 9, 9, 128))            # (B,4,4,128)

    flat = h2[..., :64].reshape(B, 64 * 4 * 4)                     # drop pad, NHWC flatten
    return fc_pallas(flat, p["fc_wq"], p["fc_scale"], p["fc_b"])   # (B,3072) f32


# ----------------------------- pure-JAX reference ---------------------------

def reference_forward(x, raw):
    dn = ("NCHW", "OIHW", "NCHW")
    out = jax.lax.conv_general_dilated(x, raw["conv1_w"], (1, 1), "VALID",
                                       dimension_numbers=dn)
    out = jnp.maximum(out + raw["conv1_b"][None, :, None, None], 0.0)
    out = jax.lax.reduce_window(out, -jnp.inf, jax.lax.max,
                                (1, 1, 3, 3), (1, 1, 2, 2), "VALID")
    out = jax.lax.conv_general_dilated(out, raw["conv2_w"], (1, 1), "VALID",
                                       dimension_numbers=dn)
    out = jnp.maximum(out + raw["conv2_b"][None, :, None, None], 0.0)
    out = jax.lax.reduce_window(out, -jnp.inf, jax.lax.max,
                                (1, 1, 3, 3), (1, 1, 2, 2), "VALID")
    flat = out.reshape(out.shape[0], -1)                          # NCHW flatten
    return flat @ raw["fc_w"].T + raw["fc_b"]


# ----------------------------- driver ---------------------------------------

if __name__ == "__main__":
    key = jax.random.PRNGKey(0)
    k_params, k_x = jax.random.split(key)

    B = 2
    raw = init_raw_params(k_params)
    params = prepare_params(raw)
    x = jax.random.normal(k_x, (B, 3, 32, 32), jnp.float32)

    out = shared_encoder_forward(x, params)
    out = jax.block_until_ready(out)

    assert out.shape == (B, 3072), out.shape
    assert jnp.isfinite(out).all()

    # Correctness vs pure-JAX f32 reference (bf16 convs + int8 per-channel FC
    # weights -> loose tolerance).
    ref = reference_forward(x, raw)
    err = float(jnp.max(jnp.abs(out - ref.astype(jnp.float32))))
    assert err < 1e-1, f"max abs err vs reference: {err}"

    print("KERNEL_OK")
</pallas_src>

<mosaic_0001>
module attributes {stable_mosaic.version = 11 : i64} {
  func.func @_gemm_bias_relu_kernel(%arg0: i32, %arg1: memref<512x75xbf16, #tpu.memory_space<vmem>>, %arg2: memref<75x128xbf16, #tpu.memory_space<vmem>>, %arg3: memref<1x128xf32, #tpu.memory_space<vmem>>, %arg4: memref<512x128xbf16, #tpu.memory_space<vmem>>) attributes {dimension_semantics = [#tpu.dimension_semantics<parallel>], iteration_bounds = array<i64: 4>, scalar_prefetch = 0 : i64, scratch_operands = 0 : i64, tpu.core_type = #tpu.core_type<tc>, window_params = [{transform_indices = @transform_0, window_bounds = array<i64: 512, 75>}, {pipeline_mode = #tpu.pipeline_mode<synchronous>, transform_indices = @transform_1, window_bounds = array<i64: 75, 128>}, {pipeline_mode = #tpu.pipeline_mode<synchronous>, transform_indices = @transform_2, window_bounds = array<i64: 1, 128>}, {transform_indices = @transform_3, window_bounds = array<i64: 512, 128>}]} {
    %c0 = arith.constant 0 : index
    %c0_0 = arith.constant 0 : index
    %0 = vector.load %arg1[%c0, %c0_0] : memref<512x75xbf16, #tpu.memory_space<vmem>>, vector<512x75xbf16>
    %c0_1 = arith.constant 0 : index
    %c0_2 = arith.constant 0 : index
    %1 = vector.load %arg2[%c0_1, %c0_2] : memref<75x128xbf16, #tpu.memory_space<vmem>>, vector<75x128xbf16>
    %cst = arith.constant dense<0.000000e+00> : vector<512x128xf32>
    %2 = tpu.matmul %0, %1, %cst {dimension_numbers = #tpu.dot_dimension_numbers<[1], [0], [0], [1], [0, 0, 1, 1], [], []>} : vector<512x75xbf16>, vector<75x128xbf16>, vector<512x128xf32> -> vector<512x128xf32>
    %c0_3 = arith.constant 0 : index
    %c0_4 = arith.constant 0 : index
    %3 = vector.load %arg3[%c0_3, %c0_4] : memref<1x128xf32, #tpu.memory_space<vmem>>, vector<1x128xf32>
    %4 = vector.broadcast %3 : vector<1x128xf32> to vector<512x128xf32>
    %5 = arith.addf %2, %4 : vector<512x128xf32>
    %cst_5 = arith.constant 0.000000e+00 : f32
    %6 = vector.broadcast %cst_5 : f32 to vector<512x128xf32>
    %7 = arith.maximumf %5, %6 : vector<512x128xf32>
    %8 = arith.truncf %7 : vector<512x128xf32> to vector<512x128xbf16>
    %c0_6 = arith.constant 0 : index
    %c0_7 = arith.constant 0 : index
    %9 = vector.load %arg4[%c0_6, %c0_7] : memref<512x128xbf16, #tpu.memory_space<vmem>>, vector<512x128xbf16>
    tpu.vector_store %arg4[%c0_6, %c0_7], %8 {strides = array<i32>} : memref<512x128xbf16, #tpu.memory_space<vmem>>, vector<512x128xbf16>,
    return
  }
  func.func @transform_0(%arg0: i32) -> (i32, i32) {
    %c0_i32 = arith.constant 0 : i32
    %c0_i32_0 = arith.constant 0 : i32
    return %arg0, %c0_i32 : i32, i32
  }
  func.func @transform_1(%arg0: i32) -> (i32, i32) {
    %c0_i32 = arith.constant 0 : i32
    %c0_i32_0 = arith.constant 0 : i32
    %c0_i32_1 = arith.constant 0 : i32
    return %c0_i32, %c0_i32_0 : i32, i32
  }
  func.func @transform_2(%arg0: i32) -> (i32, i32) {
    %c0_i32 = arith.constant 0 : i32
    %c0_i32_0 = arith.constant 0 : i32
    %c0_i32_1 = arith.constant 0 : i32
    return %c0_i32, %c0_i32_0 : i32, i32
  }
  func.func @transform_3(%arg0: i32) -> (i32, i32) {
    %c0_i32 = arith.constant 0 : i32
    %c0_i32_0 = arith.constant 0 : i32
    return %arg0, %c0_i32 : i32, i32
  }
}

module attributes {stable_mosaic.version = 11 : i64} {
  func.func @_gemm_bias_relu_kernel(%arg0: i32, %arg1: memref<162x3200xbf16, #tpu.memory_space<vmem>>, %arg2: memref<3200x128xbf16, #tpu.memory_space<vmem>>, %arg3: memref<1x128xf32, #tpu.memory_space<vmem>>, %arg4: memref<162x128xbf16, #tpu.memory_space<vmem>>) attributes {dimension_semantics = [#tpu.dimension_semantics<parallel>], iteration_bounds = array<i64: 1>, scalar_prefetch = 0 : i64, scratch_operands = 0 : i64, tpu.core_type = #tpu.core_type<tc>, window_params = [{transform_indices = @transform_0, window_bounds = array<i64: 162, 3200>}, {pipeline_mode = #tpu.pipeline_mode<synchronous>, transform_indices = @transform_1, window_bounds = array<i64: 3200, 128>}, {pipeline_mode = #tpu.pipeline_mode<synchronous>, transform_indices = @transform_2, window_bounds = array<i64: 1, 128>}, {transform_indices = @transform_3, window_bounds = array<i64: 162, 128>}]} {
    %c0 = arith.constant 0 : index
    %c0_0 = arith.constant 0 : index
    %0 = vector.load %arg1[%c0, %c0_0] : memref<162x3200xbf16, #tpu.memory_space<vmem>>, vector<162x3200xbf16>
    %c0_1 = arith.constant 0 : index
    %c0_2 = arith.constant 0 : index
    %1 = vector.load %arg2[%c0_1, %c0_2] : memref<3200x128xbf16, #tpu.memory_space<vmem>>, vector<3200x128xbf16>
    %cst = arith.constant dense<0.000000e+00> : vector<162x128xf32>
    %2 = tpu.matmul %0, %1, %cst {dimension_numbers = #tpu.dot_dimension_numbers<[1], [0], [0], [1], [0, 0, 1, 1], [], []>} : vector<162x3200xbf16>, vector<3200x128xbf16>, vector<162x128xf32> -> vector<162x128xf32>
    %c0_3 = arith.constant 0 : index
    %c0_4 = arith.constant 0 : index
    %3 = vector.load %arg3[%c0_3, %c0_4] : memref<1x128xf32, #tpu.memory_space<vmem>>, vector<1x128xf32>
    %4 = vector.broadcast %3 : vector<1x128xf32> to vector<162x128xf32>
    %5 = arith.addf %2, %4 : vector<162x128xf32>
    %cst_5 = arith.constant 0.000000e+00 : f32
    %6 = vector.broadcast %cst_5 : f32 to vector<162x128xf32>
    %7 = arith.maximumf %5, %6 : vector<162x128xf32>
    %8 = arith.truncf %7 : vector<162x128xf32> to vector<162x128xbf16>
    %c0_6 = arith.constant 0 : index
    %c0_7 = arith.constant 0 : index
    %9 = vector.load %arg4[%c0_6, %c0_7] : memref<162x128xbf16, #tpu.memory_space<vmem>>, vector<162x128xbf16>
    tpu.vector_store %arg4[%c0_6, %c0_7], %8 {strides = array<i32>} : memref<162x128xbf16, #tpu.memory_space<vmem>>, vector<162x128xbf16>,
    return
  }
  func.func @transform_0(%arg0: i32) -> (i32, i32) {
    %c0_i32 = arith.constant 0 : i32
    %c0_i32_0 = arith.constant 0 : i32
    return %arg0, %c0_i32 : i32, i32
  }
  func.func @transform_1(%arg0: i32) -> (i32, i32) {
    %c0_i32 = arith.constant 0 : i32
    %c0_i32_0 = arith.constant 0 : i32
    %c0_i32_1 = arith.constant 0 : i32
    return %c0_i32, %c0_i32_0 : i32, i32
  }
  func.func @transform_2(%arg0: i32) -> (i32, i32) {
    %c0_i32 = arith.constant 0 : i32
    %c0_i32_0 = arith.constant 0 : i32
    %c0_i32_1 = arith.constant 0 : i32
    return %c0_i32, %c0_i32_0 : i32, i32
  }
  func.func @transform_3(%arg0: i32) -> (i32, i32) {
    %c0_i32 = arith.constant 0 : i32
    %c0_i32_0 = arith.constant 0 : i32
    return %arg0, %c0_i32 : i32, i32
  }
}

module attributes {stable_mosaic.version = 11 : i64} {
  func.func @_fc_kernel(%arg0: i32, %arg1: memref<2x1024xbf16, #tpu.memory_space<vmem>>, %arg2: memref<1024x768xi8, #tpu.memory_space<vmem>>, %arg3: memref<1x768xf32, #tpu.memory_space<vmem>>, %arg4: memref<1x768xf32, #tpu.memory_space<vmem>>, %arg5: memref<2x768xf32, #tpu.memory_space<vmem>>) attributes {dimension_semantics = [#tpu.dimension_semantics<parallel>], iteration_bounds = array<i64: 4>, scalar_prefetch = 0 : i64, scratch_operands = 0 : i64, tpu.core_type = #tpu.core_type<tc>, window_params = [{pipeline_mode = #tpu.pipeline_mode<synchronous>, transform_indices = @transform_0, window_bounds = array<i64: 2, 1024>}, {transform_indices = @transform_1, window_bounds = array<i64: 1024, 768>}, {transform_indices = @transform_2, window_bounds = array<i64: 1, 768>}, {transform_indices = @transform_3, window_bounds = array<i64: 1, 768>}, {transform_indices = @transform_4, window_bounds = array<i64: 2, 768>}]} {
    %c0 = arith.constant 0 : index
    %c0_0 = arith.constant 0 : index
    %0 = vector.load %arg2[%c0, %c0_0] : memref<1024x768xi8, #tpu.memory_space<vmem>>, vector<1024x768xi8>
    %1 = arith.sitofp %0 : vector<1024x768xi8> to vector<1024x768xbf16>
    %c0_1 = arith.constant 0 : index
    %c0_2 = arith.constant 0 : index
    %2 = vector.load %arg1[%c0_1, %c0_2] : memref<2x1024xbf16, #tpu.memory_space<vmem>>, vector<2x1024xbf16>
    %cst = arith.constant dense<0.000000e+00> : vector<2x768xf32>
    %3 = tpu.matmul %2, %1, %cst {dimension_numbers = #tpu.dot_dimension_numbers<[1], [0], [0], [1], [0, 0, 1, 1], [], []>} : vector<2x1024xbf16>, vector<1024x768xbf16>, vector<2x768xf32> -> vector<2x768xf32>
    %c0_3 = arith.constant 0 : index
    %c0_4 = arith.constant 0 : index
    %4 = vector.load %arg3[%c0_3, %c0_4] : memref<1x768xf32, #tpu.memory_space<vmem>>, vector<1x768xf32>
    %5 = vector.broadcast %4 : vector<1x768xf32> to vector<2x768xf32>
    %6 = arith.mulf %3, %5 : vector<2x768xf32>
    %c0_5 = arith.constant 0 : index
    %c0_6 = arith.constant 0 : index
    %7 = vector.load %arg4[%c0_5, %c0_6] : memref<1x768xf32, #tpu.memory_space<vmem>>, vector<1x768xf32>
    %8 = vector.broadcast %7 : vector<1x768xf32> to vector<2x768xf32>
    %9 = arith.addf %6, %8 : vector<2x768xf32>
    %c0_7 = arith.constant 0 : index
    %c0_8 = arith.constant 0 : index
    %10 = vector.load %arg5[%c0_7, %c0_8] : memref<2x768xf32, #tpu.memory_space<vmem>>, vector<2x768xf32>
    tpu.vector_store %arg5[%c0_7, %c0_8], %9 {strides = array<i32>} : memref<2x768xf32, #tpu.memory_space<vmem>>, vector<2x768xf32>,
    return
  }
  func.func @transform_0(%arg0: i32) -> (i32, i32) {
    %c0_i32 = arith.constant 0 : i32
    %c0_i32_0 = arith.constant 0 : i32
    %c0_i32_1 = arith.constant 0 : i32
    return %c0_i32, %c0_i32_0 : i32, i32
  }
  func.func @transform_1(%arg0: i32) -> (i32, i32) {
    %c0_i32 = arith.constant 0 : i32
    %c0_i32_0 = arith.constant 0 : i32
    return %c0_i32, %arg0 : i32, i32
  }
  func.func @transform_2(%arg0: i32) -> (i32, i32) {
    %c0_i32 = arith.constant 0 : i32
    %c0_i32_0 = arith.constant 0 : i32
    return %c0_i32, %arg0 : i32, i32
  }
  func.func @transform_3(%arg0: i32) -> (i32, i32) {
    %c0_i32 = arith.constant 0 : i32
    %c0_i32_0 = arith.constant 0 : i32
    return %c0_i32, %arg0 : i32, i32
  }
  func.func @transform_4(%arg0: i32) -> (i32, i32) {
    %c0_i32 = arith.constant 0 : i32
    %c0_i32_0 = arith.constant 0 : i32
    return %c0_i32, %arg0 : i32, i32
  }
}

</mosaic_0001>

<llo_original>
// kernel: shared_encoder_forward.3
$region0: #{shared_encoder_forward.3}
  #allocation0 [shape = 'u32[]', space=smem, size = 0x4, offset = 0x4, fixed_abs, tag = 'smem constant byte address 0x4 - core index']
  #allocation1 [shape = 'u32[144,128]{1,0:T(1,128)}', space=vmem, size = 0x12000, scoped, tag = 'internal scratch']
  %s0 = inlined_call_operand.vmem [shape: bf16[1568,75], index: 0, kind: input, shape index: {}]
  %s1 = inlined_call_operand.vmem [shape: bf16[75,128], index: 1, kind: input, shape index: {}]
  %s2 = inlined_call_operand.vmem [shape: f32[1,128], index: 2, kind: input, shape index: {}]
  %s3 = inlined_call_operand.vmem [shape: bf16[1568,128], index: 3, kind: output, shape index: {}]
  %s4 = sld [smem:[#allocation0]]
  $region89: #{shared_encoder_forward.3} parent=0
    _
  %s6 = ssub.s32 1, %s4
  %s7 = scalar_select 0, %s6, %s4
  $region1: #{shared_encoder_forward.3} parent=0
    #allocation2 [shape = 'u8[262144]{0}', space=vmem, size = 0x40000, scoped, tag = 'output window, operand 0']
    loop: start=0, step=1, limit=6
    $region2: #{shared_encoder_forward.3} parent=1 // loop_pre_header
      _
    $region3: #{shared_encoder_forward.3} parent=1 // loop_header
      %s9 = sphi 0, %s13
      %p10 = scmp.ge.s32.totalorder %s9, 6
      %s19 = sphi 0, %s21
      %s22 = sphi 0, %s19
      %s23 = sphi 0, %s22
      %s39 = sphi 0, %s23
      %s43 = sphi 0, %s43
      %s45 = sphi 0, %s43
      %s46 = sphi 0, %s45
      %s60 = sphi 0, %s46
      %s64 = sphi 0, %s64
      %s66 = sphi 0, %s64
      %s67 = sphi 0, %s66
      %s81 = sphi 0, %s67
      %s87 = sphi 0, %s89
      %s90 = sphi 0, %s87
      %s91 = sphi 0, %s90
      %s107 = sphi 0, %s91
    $region4: #{shared_encoder_forward.3} parent=1 // loop_header_branch
      %12 = sbr.rel (%p10) target = $region8
    $region5: #{shared_encoder_forward.3} parent=1 // loop_body
      %s14 = ssub.s32 %s9, 1
      %s15 = ssub.s32 %s9, 2
      %s16 = sadd.s32 %s9, 1
      %s17 = ssub.s32 %s9, %s16
      %p18 = scmp.eq.s32.totalorder %s17, 0
      %s20 = sadd.s32 %s19, 1
      %s21 = scalar_select %p18, %s19, %s20
      %p24 = pneg %p18
      %p25 = scmp.eq.s32.totalorder %s9, 3
      %p26 = por %p24, %p25
      %p27 = scmp.ne.s32.totalorder %s19, %s22
      %p28 = scmp.eq.s32.totalorder %s9, 0
      %p29 = por %p27, %p28
      %p30 = scmp.ne.s32.totalorder %s19, %s22
      %p31 = scmp.eq.s32.totalorder %s14, 3
      %p32 = por %p30, %p31
      %p33 = scmp.ne.s32.totalorder %s22, %s23
      %p34 = scmp.eq.s32.totalorder %s14, 0
      %p35 = por %p33, %p34
      %p36 = scmp.ne.s32.totalorder %s22, %s23
      %p37 = scmp.eq.s32.totalorder %s15, 3
      %p38 = por %p36, %p37
      %p40 = scmp.ne.s32.totalorder %s23, %s39
      %p41 = scmp.eq.s32.totalorder %s15, 0
      %p42 = por %p40, %p41
      %s44 = sadd.s32 %s43, 1
      %p47 = scmp.eq.s32.totalorder %s9, 3
      %p48 = scmp.ne.s32.totalorder %s43, %s45
      %p49 = scmp.eq.s32.totalorder %s9, 0
      %p50 = por %p48, %p49
      %p51 = scmp.ne.s32.totalorder %s43, %s45
      %p52 = scmp.eq.s32.totalorder %s14, 3
      %p53 = por %p51, %p52
      %p54 = scmp.ne.s32.totalorder %s45, %s46
      %p55 = scmp.eq.s32.totalorder %s14, 0
      %p56 = por %p54, %p55
      %p57 = scmp.ne.s32.totalorder %s45, %s46
      %p58 = scmp.eq.s32.totalorder %s15, 3
      %p59 = por %p57, %p58
      %p61 = scmp.ne.s32.totalorder %s46, %s60
      %p62 = scmp.eq.s32.totalorder %s15, 0
      %p63 = por %p61, %p62
      %s65 = sadd.s32 %s64, 1
      %p68 = scmp.eq.s32.totalorder %s9, 3
      %p69 = scmp.ne.s32.totalorder %s64, %s66
      %p70 = scmp.eq.s32.totalorder %s9, 0
      %p71 = por %p69, %p70
      %p72 = scmp.ne.s32.totalorder %s64, %s66
      %p73 = scmp.eq.s32.totalorder %s14, 3
      %p74 = por %p72, %p73
      %p75 = scmp.ne.s32.totalorder %s66, %s67
      %p76 = scmp.eq.s32.totalorder %s14, 0
      %p77 = por %p75, %p76
      %p78 = scmp.ne.s32.totalorder %s66, %s67
      %p79 = scmp.eq.s32.totalorder %s15, 3
      %p80 = por %p78, %p79
      %p82 = scmp.ne.s32.totalorder %s67, %s81
      %p83 = scmp.eq.s32.totalorder %s15, 0
      %p84 = por %p82, %p83
      %s85 = ssub.s32 %s9, %s16
      %p86 = scmp.eq.s32.totalorder %s85, 0
      %s88 = sadd.s32 %s87, 1
      %s89 = scalar_select %p86, %s87, %s88
      %p92 = pneg %p86
      %p93 = scmp.eq.s32.totalorder %s9, 3
      %p94 = por %p92, %p93
      %p95 = scmp.ne.s32.totalorder %s87, %s90
      %p96 = scmp.eq.s32.totalorder %s9, 0
      %p97 = por %p95, %p96
      %p98 = scmp.ne.s32.totalorder %s87, %s90
      %p99 = scmp.eq.s32.totalorder %s14, 3
      %p100 = por %p98, %p99
      %p101 = scmp.ne.s32.totalorder %s90, %s91
      %p102 = scmp.eq.s32.totalorder %s14, 0
      %p103 = por %p101, %p102
      %p104 = scmp.ne.s32.totalorder %s90, %s91
      %p105 = scmp.eq.s32.totalorder %s15, 3
      %p106 = por %p104, %p105
      %p108 = scmp.ne.s32.totalorder %s91, %s107
      %p109 = scmp.eq.s32.totalorder %s15, 0
      %p110 = por %p108, %p109
      %p111 = scmp.le.s32.totalorder 1, %s9
      %p112 = scmp.lt.s32.totalorder %s9, 5
      %p113 = pnand %p111, %p112
      %p114 = pneg %p113
      // Predicated region
      $region9: #{shared_encoder_forward.3} parent=5 // pred_check
        _
      $region10: #{shared_encoder_forward.3} parent=5 // pred_check_branch
        %116 = sbr.rel (%p113) target = $region12
      $region11: #{shared_encoder_forward.3} parent=5 // pred_region
        %s117 = ssub.s32 %s9, 1
        // Predicated region
        $region13: #{shared_encoder_forward.3} parent=11 // pred_check
          %p118 = pneg %p56
        $region14: #{shared_encoder_forward.3} parent=11 // pred_check_branch
          %120 = sbr.rel (%p118) target = $region16
        $region15: #{shared_encoder_forward.3} parent=11 // pred_region
          _
        $region16: #{shared_encoder_forward.3} parent=11 // pred_fallthru
          _
        // Predicated region
        $region17: #{shared_encoder_forward.3} parent=11 // pred_check
          %p121 = pneg %p77
        $region18: #{shared_encoder_forward.3} parent=11 // pred_check_branch
          %123 = sbr.rel (%p121) target = $region20
        $region19: #{shared_encoder_forward.3} parent=11 // pred_region
          _
        $region20: #{shared_encoder_forward.3} parent=11 // pred_fallthru
          _
      $region12: #{shared_encoder_forward.3} parent=5 // pred_fallthru
        _
      %p124 = scmp.lt.s32.totalorder %s9, 4
      // Predicated region
      $region21: #{shared_encoder_forward.3} parent=5 // pred_check
        %p125 = pneg %p124
      $region22: #{shared_encoder_forward.3} parent=5 // pred_check_branch
        %127 = sbr.rel (%p125) target = $region24
      $region23: #{shared_encoder_forward.3} parent=5 // pred_region
        // Predicated region
        $region25: #{shared_encoder_forward.3} parent=23 // pred_check
          %p128 = pneg %p29
        $region26: #{shared_encoder_forward.3} parent=23 // pred_check_branch
          %130 = sbr.rel (%p128) target = $region28
        $region27: #{shared_encoder_forward.3} parent=23 // pred_region
          %s131 = smul.u32 64, %s9
          %s132 = ssub.s32 196, %s131
          %p133 = scmp.lt.s32.totalorder %s132, 64
          %s134 = scalar_select %p133, %s132, 64
          %s135 = smul.u32 64, %s134
          %p136 = scmp.lt.s32.totalorder %s131, 195
          %s137 = scalar_select %p136, %s131, 195
          %s138 = smul.addr %s137, 4
          %s139 = scalar_lea.vmem %s0, %s138
          %s140 = smul.u32 64, %s9
          %s141 = ssub.s32 196, %s140
          %p142 = scmp.lt.s32.totalorder %s141, 64
          %s143 = scalar_select %p142, %s141, 64
          %s144 = smul.u32 64, %s143
        $region28: #{shared_encoder_forward.3} parent=23 // pred_fallthru
          _
      $region24: #{shared_encoder_forward.3} parent=5 // pred_fallthru
        _
      %p145 = scmp.le.s32.totalorder 1, %s9
      %p146 = scmp.lt.s32.totalorder %s9, 5
      %p147 = pnand %p145, %p146
      %p148 = pneg %p147
      // Predicated region
      $region29: #{shared_encoder_forward.3} parent=5 // pred_check
        _
      $region30: #{shared_encoder_forward.3} parent=5 // pred_check_branch
        %150 = sbr.rel (%p147) target = $region32
      $region31: #{shared_encoder_forward.3} parent=5 // pred_region
        %s151 = ssub.s32 %s9, 1
        %s152 = smul.u32 64, %s14
        %s153 = ssub.s32 196, %s152
        %p154 = scmp.lt.s32.totalorder %s153, 64
        %s155 = scalar_select %p154, %s153, 64
        %s156 = smul.u32 64, %s155
        %p157 = scmp.lt.s32.totalorder %s152, 195
        %s158 = scalar_select %p157, %s152, 195
        %s159 = smul.addr %s158, 4
        %s160 = scalar_lea.vmem %s0, %s159
        %p161 = pneg %p35
        %p162 = pneg %p32
        %p163 = pneg %p56
        %p164 = pneg %p53
        %p165 = pneg %p77
        %p166 = pneg %p74
        %p167 = pneg %p103
        %p168 = pneg %p100
        %s169 = sand.u32 %s90, 1
        %s170 = sand.u32 %s90, 1
        %s171 = smul.addr %s170, 256
        %s172 = scalar_lea.vmem [#allocation2], %s171
        %s173 = smul.u32 64, %s14
        %s174 = ssub.s32 196, %s173
        %p175 = scmp.lt.s32.totalorder %s174, 64
        %s176 = scalar_select %p175, %s174, 64
        %s177 = smul.u32 64, %s176
        %p178 = scmp.lt.s32.totalorder %s173, 195
        %s179 = scalar_select %p178, %s173, 195
        %s180 = smul.addr %s179, 4
        %s181 = scalar_lea.vmem %s0, %s180
        %s182 = smul.u32 64, %s14
        %s183 = ssub.s32 196, %s182
        %p184 = scmp.lt.s32.totalorder %s183, 64
        %s185 = scalar_select %p184, %s183, 64
        %s186 = smul.u32 64, %s185
        %s187 = smul.u32 64, %s14
        %s188 = ssub.s32 196, %s187
        %p189 = scmp.lt.s32.totalorder %s188, 64
        %s190 = scalar_select %p189, %s188, 64
        %s191 = smul.u32 64, %s190
        %v193 = vld [vmem:[%s181] sm:$0xf]
        %v194 = vld [vmem:[%s181 + $0x4] sm:$0xf]
        %v195 = vld [vmem:[%s181 + $0x8] sm:$0xf]
        %v196 = vld [vmem:[%s181 + $0xc] sm:$0xf]
        %v197 = vld [vmem:[%s181 + $0x10] sm:$0xf]
        %v198 = vld [vmem:[%s181 + $0x14] sm:$0xf]
        %v199 = vld [vmem:[%s181 + $0x18] sm:$0xf]
        %v200 = vld [vmem:[%s181 + $0x1c] sm:$0xf]
        %v201 = vld [vmem:[%s181 + $0x20] sm:$0xf]
        %v202 = vld [vmem:[%s181 + $0x24] sm:$0xf]
        %v203 = vld [vmem:[%s181 + $0x28] sm:$0xf]
        %v204 = vld [vmem:[%s181 + $0x2c] sm:$0xf]
        %v205 = vld [vmem:[%s181 + $0x30] sm:$0xf]
        %v206 = vld [vmem:[%s181 + $0x34] sm:$0xf]
        %v207 = vld [vmem:[%s181 + $0x38] sm:$0xf]
        %v208 = vld [vmem:[%s181 + $0x3c] sm:$0xf]
        %v209 = vld [vmem:[%s181 + $0x40] sm:$0xf]
        %v210 = vld [vmem:[%s181 + $0x44] sm:$0xf]
        %v211 = vld [vmem:[%s181 + $0x48] sm:$0xf]
        %v212 = vld [vmem:[%s181 + $0x4c] sm:$0xf]
        %v213 = vld [vmem:[%s181 + $0x50] sm:$0xf]
        %v214 = vld [vmem:[%s181 + $0x54] sm:$0xf]
        %v215 = vld [vmem:[%s181 + $0x58] sm:$0xf]
        %v216 = vld [vmem:[%s181 + $0x5c] sm:$0xf]
        %v217 = vld [vmem:[%s181 + $0x60] sm:$0xf]
        %v218 = vld [vmem:[%s181 + $0x64] sm:$0xf]
        %v219 = vld [vmem:[%s181 + $0x68] sm:$0xf]
        %v220 = vld [vmem:[%s181 + $0x6c] sm:$0xf]
        %v221 = vld [vmem:[%s181 + $0x70] sm:$0xf]
        %v222 = vld [vmem:[%s181 + $0x74] sm:$0xf]
        %v223 = vld [vmem:[%s181 + $0x78] sm:$0xf]
        %v224 = vld [vmem:[%s181 + $0x7c] sm:$0xf]
        %v225 = vld [vmem:[%s181 + $0x80] sm:$0xf]
        %v226 = vld [vmem:[%s181 + $0x84] sm:$0xf]
        %v227 = vld [vmem:[%s181 + $0x88] sm:$0xf]
        %v228 = vld [vmem:[%s181 + $0x8c] sm:$0xf]
        %v229 = vld [vmem:[%s181 + $0x90] sm:$0xf]
        %v230 = vld [vmem:[%s181 + $0x94] sm:$0xf]
        %v231 = vld [vmem:[%s181 + $0x98] sm:$0xf]
        %v232 = vld [vmem:[%s181 + $0x9c] sm:$0xf]
        %v233 = vld [vmem:[%s181 + $0xa0] sm:$0xf]
        %v234 = vld [vmem:[%s181 + $0xa4] sm:$0xf]
        %v235 = vld [vmem:[%s181 + $0xa8] sm:$0xf]
        %v236 = vld [vmem:[%s181 + $0xac] sm:$0xf]
        %v237 = vld [vmem:[%s181 + $0xb0] sm:$0xf]
        %v238 = vld [vmem:[%s181 + $0xb4] sm:$0xf]
        %v239 = vld [vmem:[%s181 + $0xb8] sm:$0xf]
        %v240 = vld [vmem:[%s181 + $0xbc] sm:$0xf]
        %v241 = vld [vmem:[%s181 + $0xc0] sm:$0xf]
        %v242 = vld [vmem:[%s181 + $0xc4] sm:$0xf]
        %v243 = vld [vmem:[%s181 + $0xc8] sm:$0xf]
        %v244 = vld [vmem:[%s181 + $0xcc] sm:$0xf]
        %v245 = vld [vmem:[%s181 + $0xd0] sm:$0xf]
        %v246 = vld [vmem:[%s181 + $0xd4] sm:$0xf]
        %v247 = vld [vmem:[%s181 + $0xd8] sm:$0xf]
        %v248 = vld [vmem:[%s181 + $0xdc] sm:$0xf]
        %v249 = vld [vmem:[%s181 + $0xe0] sm:$0xf]
        %v250 = vld [vmem:[%s181 + $0xe4] sm:$0xf]
        %v251 = vld [vmem:[%s181 + $0xe8] sm:$0xf]
        %v252 = vld [vmem:[%s181 + $0xec] sm:$0xf]
        %v253 = vld [vmem:[%s181 + $0xf0] sm:$0xf]
        %v254 = vld [vmem:[%s181 + $0xf4] sm:$0xf]
        %v255 = vld [vmem:[%s181 + $0xf8] sm:$0xf]
        %v256 = vld [vmem:[%s181 + $0xfc] sm:$0xf]
        %v257 = vld [vmem:[%s1] sm:$0xf]
        %v258 = vld [vmem:[%s1 + $0x4] sm:$0xf]
        %v259 = vld [vmem:[%s1 + $0x8] sm:$0xf]
        %v260 = vld [vmem:[%s1 + $0xc] sm:$0xf]
        %v261 = vld [vmem:[%s1 + $0x10] sm:$0xf]
        %v262 = vld [vmem:[%s1 + $0x14] sm:$0xf]
        %v263 = vld [vmem:[%s1 + $0x18] sm:$0xf]
        %v264 = vld [vmem:[%s1 + $0x1c] sm:$0xf]
        %v265 = vld [vmem:[%s1 + $0x20] sm:$0xf]
        %v266 = vld [vmem:[%s1 + $0x24] sm:$0x3]
        %v267 = vld [vmem:[%s2] sm:$0x1]
        %v269 = vlaneseq
        %v270 = vshrl.u32 %v269, 7
        %v271 = vsub.s32 0, %v270
        %v272 = vrot.slane %v267, %v271
        %v338 = vunpack.c.l.b16 %v193
        %v339 = vunpack.c.l.b16 %v194
        %v340 = vunpack.c.l.b16 %v195
        %v341 = vunpack.c.l.b16 %v196
        %v342 = vunpack.c.l.b16 %v197
        %v343 = vunpack.c.l.b16 %v198
        %v344 = vunpack.c.l.b16 %v199
        %v345 = vunpack.c.l.b16 %v200
        %v346 = vunpack.c.l.b16 %v201
        %v347 = vunpack.c.l.b16 %v202
        %v348 = vunpack.c.l.b16 %v203
        %v349 = vunpack.c.l.b16 %v204
        %v350 = vunpack.c.l.b16 %v205
        %v351 = vunpack.c.l.b16 %v206
        %v352 = vunpack.c.l.b16 %v207
        %v353 = vunpack.c.l.b16 %v208
        %v354 = vunpack.c.l.b16 %v209
        %v355 = vunpack.c.l.b16 %v210
        %v356 = vunpack.c.l.b16 %v211
        %v357 = vunpack.c.l.b16 %v212
        %v358 = vunpack.c.l.b16 %v213
        %v359 = vunpack.c.l.b16 %v214
        %v360 = vunpack.c.l.b16 %v215
        %v361 = vunpack.c.l.b16 %v216
        %v362 = vunpack.c.l.b16 %v217
        %v363 = vunpack.c.l.b16 %v218
        %v364 = vunpack.c.l.b16 %v219
        %v365 = vunpack.c.l.b16 %v220
        %v366 = vunpack.c.l.b16 %v221
        %v367 = vunpack.c.l.b16 %v222
        %v368 = vunpack.c.l.b16 %v223
        %v369 = vunpack.c.l.b16 %v224
        %v370 = vunpack.c.l.b16 %v225
        %v371 = vunpack.c.l.b16 %v226
        %v372 = vunpack.c.l.b16 %v227
        %v373 = vunpack.c.l.b16 %v228
        %v374 = vunpack.c.l.b16 %v229
        %v375 = vunpack.c.l.b16 %v230
        %v376 = vunpack.c.l.b16 %v231
        %v377 = vunpack.c.l.b16 %v232
        %v378 = vunpack.c.l.b16 %v233
        %v379 = vunpack.c.l.b16 %v234
        %v380 = vunpack.c.l.b16 %v235
        %v381 = vunpack.c.l.b16 %v236
        %v382 = vunpack.c.l.b16 %v237
        %v383 = vunpack.c.l.b16 %v238
        %v384 = vunpack.c.l.b16 %v239
        %v385 = vunpack.c.l.b16 %v240
        %v386 = vunpack.c.l.b16 %v241
        %v387 = vunpack.c.l.b16 %v242
        %v388 = vunpack.c.l.b16 %v243
        %v389 = vunpack.c.l.b16 %v244
        %v390 = vunpack.c.l.b16 %v245
        %v391 = vunpack.c.l.b16 %v246
        %v392 = vunpack.c.l.b16 %v247
        %v393 = vunpack.c.l.b16 %v248
        %v394 = vunpack.c.l.b16 %v249
        %v395 = vunpack.c.l.b16 %v250
        %v396 = vunpack.c.l.b16 %v251
        %v397 = vunpack.c.l.b16 %v252
        %v398 = vunpack.c.l.b16 %v253
        %v399 = vunpack.c.l.b16 %v254
        %v400 = vunpack.c.l.b16 %v255
        %v401 = vunpack.c.l.b16 %v256
        %v402 = vpack.c.b16 %v339, %v338
        %v403 = vpack.c.b16 %v341, %v340
        %v404 = vpack.c.b16 %v343, %v342
        %v405 = vpack.c.b16 %v345, %v344
        %v406 = vpack.c.b16 %v347, %v346
        %v407 = vpack.c.b16 %v349, %v348
        %v408 = vpack.c.b16 %v351, %v350
        %v409 = vpack.c.b16 %v353, %v352
        %v410 = vpack.c.b16 %v355, %v354
        %v411 = vpack.c.b16 %v357, %v356
        %v412 = vpack.c.b16 %v359, %v358
        %v413 = vpack.c.b16 %v361, %v360
        %v414 = vpack.c.b16 %v363, %v362
        %v415 = vpack.c.b16 %v365, %v364
        %v416 = vpack.c.b16 %v367, %v366
        %v417 = vpack.c.b16 %v369, %v368
        %v418 = vpack.c.b16 %v371, %v370
        %v419 = vpack.c.b16 %v373, %v372
        %v420 = vpack.c.b16 %v375, %v374
        %v421 = vpack.c.b16 %v377, %v376
        %v422 = vpack.c.b16 %v379, %v378
        %v423 = vpack.c.b16 %v381, %v380
        %v424 = vpack.c.b16 %v383, %v382
        %v425 = vpack.c.b16 %v385, %v384
        %v426 = vpack.c.b16 %v387, %v386
        %v427 = vpack.c.b16 %v389, %v388
        %v428 = vpack.c.b16 %v391, %v390
        %v429 = vpack.c.b16 %v393, %v392
        %v430 = vpack.c.b16 %v395, %v394
        %v431 = vpack.c.b16 %v397, %v396
        %v432 = vpack.c.b16 %v399, %v398
        %v433 = vpack.c.b16 %v401, %v400
        %v444 = vunpack.c.l.b16 %v257
        %v445 = vunpack.c.l.b16 %v258
        %v446 = vunpack.c.l.b16 %v259
        %v447 = vunpack.c.l.b16 %v260
        %v448 = vunpack.c.l.b16 %v261
        %v449 = vunpack.c.l.b16 %v262
        %v450 = vunpack.c.l.b16 %v263
        %v451 = vunpack.c.l.b16 %v264
        %v452 = vunpack.c.l.b16 %v265
        %v453 = vunpack.c.l.b16 %v266
        %v454 = vpack.c.b16 %v445, %v444
        %v455 = vpack.c.b16 %v447, %v446
        %v456 = vpack.c.b16 %v449, %v448
        %v457 = vpack.c.b16 %v451, %v450
        %v458 = vpack.c.b16 %v453, %v452
        %vm463 = vcmask 613376
        %v465 = vsel %vm463, %v402, 0
        %v468 = vsel %vm463, %v403, 0
        %v471 = vsel %vm463, %v404, 0
        %v474 = vsel %vm463, %v405, 0
        %v477 = vsel %vm463, %v406, 0
        %v480 = vsel %vm463, %v407, 0
        %v483 = vsel %vm463, %v408, 0
        %v486 = vsel %vm463, %v409, 0
        %v489 = vsel %vm463, %v410, 0
        %v492 = vsel %vm463, %v411, 0
        %v495 = vsel %vm463, %v412, 0
        %v498 = vsel %vm463, %v413, 0
        %v501 = vsel %vm463, %v414, 0
        %v504 = vsel %vm463, %v415, 0
        %v507 = vsel %vm463, %v416, 0
        %v510 = vsel %vm463, %v417, 0
        %v513 = vsel %vm463, %v418, 0
        %v516 = vsel %vm463, %v419, 0
        %v519 = vsel %vm463, %v420, 0
        %v522 = vsel %vm463, %v421, 0
        %v525 = vsel %vm463, %v422, 0
        %v528 = vsel %vm463, %v423, 0
        %v531 = vsel %vm463, %v424, 0
        %v534 = vsel %vm463, %v425, 0
        %v537 = vsel %vm463, %v426, 0
        %v540 = vsel %vm463, %v427, 0
        %v543 = vsel %vm463, %v428, 0
        %v546 = vsel %vm463, %v429, 0
        %v549 = vsel %vm463, %v430, 0
        %v552 = vsel %vm463, %v431, 0
        %v555 = vsel %vm463, %v432, 0
        %v558 = vsel %vm463, %v433, 0
        %vm560 = vcmask 1044480
        %vm561 = vcmask 1045504
        %v562 = vsel %vm560, 4294967295, 65535
        %v563 = vsel %vm561, %v562, 0
        %v565 = vand.u32 %v458, %v563
        %567 = vmatprep.subr.bf16.mxu0 0
        %568 = vmatpush1.bf16.msra.mxu0 %v454
        %569 = vmatprep.subr.bf16.mxu0 0
        %570 = vmatpush1.bf16.msra.mxu0 %v455
        %571 = vmatprep.subr.bf16.mxu0 0
        %572 = vmatpush1.bf16.msra.mxu0 %v456
        %573 = vmatprep.subr.bf16.mxu0 0
        %574 = vmatpush1.bf16.msra.mxu0 %v457
        %575 = vmatprep.subr.bf16.mxu0 0
        %576 = vmatpush1.bf16.msra.mxu0 %v565
        %577 = vmatprep.subr.bf16.mxu0 0
        %578 = vmatpush1.bf16.msra.mxu0 0
        %579 = vmatprep.subr.bf16.mxu0 0
        %580 = vmatpush1.bf16.msra.mxu0 0
        %581 = vmatprep.subr.bf16.mxu0 0
        %582 = vmatpush1.bf16.msra.mxu0 0
        %583 = vmatprep.subr.bf16.mxu0 0
        %584 = vmatpush1.bf16.msra.mxu0 0
        %585 = vmatprep.subr.bf16.mxu0 0
        %586 = vmatpush1.bf16.msra.mxu0 0
        %587 = vmatprep.subr.bf16.mxu0 0
        %588 = vmatpush1.bf16.msra.mxu0 0
        %589 = vmatprep.subr.bf16.mxu0 0
        %590 = vmatpush1.bf16.msra.mxu0 0
        %591 = vmatprep.subr.bf16.mxu0 0
        %592 = vmatpush1.bf16.msra.mxu0 0
        %593 = vmatprep.subr.bf16.mxu0 0
        %594 = vmatpush1.bf16.msra.mxu0 0
        %595 = vmatprep.subr.bf16.mxu0 0
        %596 = vmatpush1.bf16.msra.mxu0 0
        %597 = vmatprep.subr.bf16.mxu0 0
        %598 = vmatpush1.bf16.msra.mxu0 0
        %599 = vmatprep.mubr.bf16.mxu0 0
        %600 = vmatmul.mubr.bf16.gmra.mrb[0].mxu0 %v465
        %v601 = vpop.f32.mrb[0].mxu0
        %v602 = vadd.f32 %v272, %v601
        %v603 = vpop.f32.mrb[0].mxu0
        %v604 = vpop.f32.mrb[0].mxu0
        %v605 = vadd.f32 %v272, %v604
        %v606 = vpop.f32.mrb[0].mxu0
        %607 = vmatprep.mubr.bf16.mxu0 0
        %608 = vmatmul.mubr.bf16.gmra.mrb[0].mxu0 %v468
        %v609 = vpop.f32.mrb[0].mxu0
        %v610 = vadd.f32 %v272, %v609
        %v611 = vpop.f32.mrb[0].mxu0
        %v612 = vpop.f32.mrb[0].mxu0
        %v613 = vadd.f32 %v272, %v612
        %v614 = vpop.f32.mrb[0].mxu0
        %615 = vmatprep.mubr.bf16.mxu0 0
        %616 = vmatmul.mubr.bf16.gmra.mrb[0].mxu0 %v471
        %v617 = vpop.f32.mrb[0].mxu0
        %v618 = vadd.f32 %v272, %v617
        %v619 = vpop.f32.mrb[0].mxu0
        %v620 = vpop.f32.mrb[0].mxu0
        %v621 = vadd.f32 %v272, %v620
        %v622 = vpop.f32.mrb[0].mxu0
        %623 = vmatprep.mubr.bf16.mxu0 0
        %624 = vmatmul.mubr.bf16.gmra.mrb[0].mxu0 %v474
        %v625 = vpop.f32.mrb[0].mxu0
        %v626 = vadd.f32 %v272, %v625
        %v627 = vpop.f32.mrb[0].mxu0
        %v628 = vpop.f32.mrb[0].mxu0
        %v629 = vadd.f32 %v272, %v628
        %v630 = vpop.f32.mrb[0].mxu0
        %631 = vmatprep.mubr.bf16.mxu0 0
        %632 = vmatmul.mubr.bf16.gmra.mrb[0].mxu0 %v477
        %v633 = vpop.f32.mrb[0].mxu0
        %v634 = vadd.f32 %v272, %v633
        %v635 = vpop.f32.mrb[0].mxu0
        %v636 = vpop.f32.mrb[0].mxu0
        %v637 = vadd.f32 %v272, %v636
        %v638 = vpop.f32.mrb[0].mxu0
        %639 = vmatprep.mubr.bf16.mxu0 0
        %640 = vmatmul.mubr.bf16.gmra.mrb[0].mxu0 %v480
        %v641 = vpop.f32.mrb[0].mxu0
        %v642 = vadd.f32 %v272, %v641
        %v643 = vpop.f32.mrb[0].mxu0
        %v644 = vpop.f32.mrb[0].mxu0
        %v645 = vadd.f32 %v272, %v644
        %v646 = vpop.f32.mrb[0].mxu0
        %647 = vmatprep.mubr.bf16.mxu0 0
        %648 = vmatmul.mubr.bf16.gmra.mrb[0].mxu0 %v483
        %v649 = vpop.f32.mrb[0].mxu0
        %v650 = vadd.f32 %v272, %v649
        %v651 = vpop.f32.mrb[0].mxu0
        %v652 = vpop.f32.mrb[0].mxu0
        %v653 = vadd.f32 %v272, %v652
        %v654 = vpop.f32.mrb[0].mxu0
        %655 = vmatprep.mubr.bf16.mxu0 0
        %656 = vmatmul.mubr.bf16.gmra.mrb[0].mxu0 %v486
        %v657 = vpop.f32.mrb[0].mxu0
        %v658 = vadd.f32 %v272, %v657
        %v659 = vpop.f32.mrb[0].mxu0
        %v660 = vpop.f32.mrb[0].mxu0
        %v661 = vadd.f32 %v272, %v660
        %v662 = vpop.f32.mrb[0].mxu0
        %663 = vmatprep.mubr.bf16.mxu0 0
        %664 = vmatmul.mubr.bf16.gmra.mrb[0].mxu0 %v489
        %v665 = vpop.f32.mrb[0].mxu0
        %v666 = vadd.f32 %v272, %v665
        %v667 = vpop.f32.mrb[0].mxu0
        %v668 = vpop.f32.mrb[0].mxu0
        %v669 = vadd.f32 %v272, %v668
        %v670 = vpop.f32.mrb[0].mxu0
        %671 = vmatprep.mubr.bf16.mxu0 0
        %672 = vmatmul.mubr.bf16.gmra.mrb[0].mxu0 %v492
        %v673 = vpop.f32.mrb[0].mxu0
        %v674 = vadd.f32 %v272, %v673
        %v675 = vpop.f32.mrb[0].mxu0
        %v676 = vpop.f32.mrb[0].mxu0
        %v677 = vadd.f32 %v272, %v676
        %v678 = vpop.f32.mrb[0].mxu0
        %679 = vmatprep.mubr.bf16.mxu0 0
        %680 = vmatmul.mubr.bf16.gmra.mrb[0].mxu0 %v495
        %v681 = vpop.f32.mrb[0].mxu0
        %v682 = vadd.f32 %v272, %v681
        %v683 = vpop.f32.mrb[0].mxu0
        %v684 = vpop.f32.mrb[0].mxu0
        %v685 = vadd.f32 %v272, %v684
        %v686 = vpop.f32.mrb[0].mxu0
        %687 = vmatprep.mubr.bf16.mxu0 0
        %688 = vmatmul.mubr.bf16.gmra.mrb[0].mxu0 %v498
        %v689 = vpop.f32.mrb[0].mxu0
        %v690 = vadd.f32 %v272, %v689
        %v691 = vpop.f32.mrb[0].mxu0
        %v692 = vpop.f32.mrb[0].mxu0
        %v693 = vadd.f32 %v272, %v692
        %v694 = vpop.f32.mrb[0].mxu0
        %695 = vmatprep.mubr.bf16.mxu0 0
        %696 = vmatmul.mubr.bf16.gmra.mrb[0].mxu0 %v501
        %v697 = vpop.f32.mrb[0].mxu0
        %v698 = vadd.f32 %v272, %v697
        %v699 = vpop.f32.mrb[0].mxu0
        %v700 = vpop.f32.mrb[0].mxu0
        %v701 = vadd.f32 %v272, %v700
        %v702 = vpop.f32.mrb[0].mxu0
        %703 = vmatprep.mubr.bf16.mxu0 0
        %704 = vmatmul.mubr.bf16.gmra.mrb[0].mxu0 %v504
        %v705 = vpop.f32.mrb[0].mxu0
        %v706 = vadd.f32 %v272, %v705
        %v707 = vpop.f32.mrb[0].mxu0
        %v708 = vpop.f32.mrb[0].mxu0
        %v709 = vadd.f32 %v272, %v708
        %v710 = vpop.f32.mrb[0].mxu0
        %711 = vmatprep.mubr.bf16.mxu0 0
        %712 = vmatmul.mubr.bf16.gmra.mrb[0].mxu0 %v507
        %v713 = vpop.f32.mrb[0].mxu0
        %v714 = vadd.f32 %v272, %v713
        %v715 = vpop.f32.mrb[0].mxu0
        %v716 = vpop.f32.mrb[0].mxu0
        %v717 = vadd.f32 %v272, %v716
        %v718 = vpop.f32.mrb[0].mxu0
        %719 = vmatprep.mubr.bf16.mxu0 0
        %720 = vmatmul.mubr.bf16.gmra.mrb[0].mxu0 %v510
        %v721 = vpop.f32.mrb[0].mxu0
        %v722 = vadd.f32 %v272, %v721
        %v723 = vpop.f32.mrb[0].mxu0
        %v724 = vpop.f32.mrb[0].mxu0
        %v725 = vadd.f32 %v272, %v724
        %v726 = vpop.f32.mrb[0].mxu0
        %727 = vmatprep.mubr.bf16.mxu0 0
        %728 = vmatmul.mubr.bf16.gmra.mrb[0].mxu0 %v513
        %v729 = vpop.f32.mrb[0].mxu0
        %v730 = vadd.f32 %v272, %v729
        %v731 = vpop.f32.mrb[0].mxu0
        %v732 = vpop.f32.mrb[0].mxu0
        %v733 = vadd.f32 %v272, %v732
        %v734 = vpop.f32.mrb[0].mxu0
        %735 = vmatprep.mubr.bf16.mxu0 0
        %736 = vmatmul.mubr.bf16.gmra.mrb[0].mxu0 %v516
        %v737 = vpop.f32.mrb[0].mxu0
        %v738 = vadd.f32 %v272, %v737
        %v739 = vpop.f32.mrb[0].mxu0
        %v740 = vpop.f32.mrb[0].mxu0
        %v741 = vadd.f32 %v272, %v740
        %v742 = vpop.f32.mrb[0].mxu0
        %743 = vmatprep.mubr.bf16.mxu0 0
        %744 = vmatmul.mubr.bf16.gmra.mrb[0].mxu0 %v519
        %v745 = vpop.f32.mrb[0].mxu0
        %v746 = vadd.f32 %v272, %v745
        %v747 = vpop.f32.mrb[0].mxu0
        %v748 = vpop.f32.mrb[0].mxu0
        %v749 = vadd.f32 %v272, %v748
        %v750 = vpop.f32.mrb[0].mxu0
        %751 = vmatprep.mubr.bf16.mxu0 0
        %752 = vmatmul.mubr.bf16.gmra.mrb[0].mxu0 %v522
        %v753 = vpop.f32.mrb[0].mxu0
        %v754 = vadd.f32 %v272, %v753
        %v755 = vpop.f32.mrb[0].mxu0
        %v756 = vpop.f32.mrb[0].mxu0
        %v757 = vadd.f32 %v272, %v756
        %v758 = vpop.f32.mrb[0].mxu0
        %759 = vmatprep.mubr.bf16.mxu0 0
        %760 = vmatmul.mubr.bf16.gmra.mrb[0].mxu0 %v525
        %v761 = vpop.f32.mrb[0].mxu0
        %v762 = vadd.f32 %v272, %v761
        %v763 = vpop.f32.mrb[0].mxu0
        %v764 = vpop.f32.mrb[0].mxu0
        %v765 = vadd.f32 %v272, %v764
        %v766 = vpop.f32.mrb[0].mxu0
        %767 = vmatprep.mubr.bf16.mxu0 0
        %768 = vmatmul.mubr.bf16.gmra.mrb[0].mxu0 %v528
        %v769 = vpop.f32.mrb[0].mxu0
        %v770 = vadd.f32 %v272, %v769
        %v771 = vpop.f32.mrb[0].mxu0
        %v772 = vpop.f32.mrb[0].mxu0
        %v773 = vadd.f32 %v272, %v772
        %v774 = vpop.f32.mrb[0].mxu0
        %775 = vmatprep.mubr.bf16.mxu0 0
        %776 = vmatmul.mubr.bf16.gmra.mrb[0].mxu0 %v531
        %v777 = vpop.f32.mrb[0].mxu0
        %v778 = vadd.f32 %v272, %v777
        %v779 = vpop.f32.mrb[0].mxu0
        %v780 = vpop.f32.mrb[0].mxu0
        %v781 = vadd.f32 %v272, %v780
        %v782 = vpop.f32.mrb[0].mxu0
        %783 = vmatprep.mubr.bf16.mxu0 0
        %784 = vmatmul.mubr.bf16.gmra.mrb[0].mxu0 %v534
        %v785 = vpop.f32.mrb[0].mxu0
        %v786 = vadd.f32 %v272, %v785
        %v787 = vpop.f32.mrb[0].mxu0
        %v788 = vpop.f32.mrb[0].mxu0
        %v789 = vadd.f32 %v272, %v788
        %v790 = vpop.f32.mrb[0].mxu0
        %791 = vmatprep.mubr.bf16.mxu0 0
        %792 = vmatmul.mubr.bf16.gmra.mrb[0].mxu0 %v537
        %v793 = vpop.f32.mrb[0].mxu0
        %v794 = vadd.f32 %v272, %v793
        %v795 = vpop.f32.mrb[0].mxu0
        %v796 = vpop.f32.mrb[0].mxu0
        %v797 = vadd.f32 %v272, %v796
        %v798 = vpop.f32.mrb[0].mxu0
        %799 = vmatprep.mubr.bf16.mxu0 0
        %800 = vmatmul.mubr.bf16.gmra.mrb[0].mxu0 %v540
        %v801 = vpop.f32.mrb[0].mxu0
        %v802 = vadd.f32 %v272, %v801
        %v803 = vpop.f32.mrb[0].mxu0
        %v804 = vpop.f32.mrb[0].mxu0
        %v805 = vadd.f32 %v272, %v804
        %v806 = vpop.f32.mrb[0].mxu0
        %807 = vmatprep.mubr.bf16.mxu0 0
        %808 = vmatmul.mubr.bf16.gmra.mrb[0].mxu0 %v543
        %v809 = vpop.f32.mrb[0].mxu0
        %v810 = vadd.f32 %v272, %v809
        %v811 = vpop.f32.mrb[0].mxu0
        %v812 = vpop.f32.mrb[0].mxu0
        %v813 = vadd.f32 %v272, %v812
        %v814 = vpop.f32.mrb[0].mxu0
        %815 = vmatprep.mubr.bf16.mxu0 0
        %816 = vmatmul.mubr.bf16.gmra.mrb[0].mxu0 %v546
        %v817 = vpop.f32.mrb[0].mxu0
        %v818 = vadd.f32 %v272, %v817
        %v819 = vpop.f32.mrb[0].mxu0
        %v820 = vpop.f32.mrb[0].mxu0
        %v821 = vadd.f32 %v272, %v820
        %v822 = vpop.f32.mrb[0].mxu0
        %823 = vmatprep.mubr.bf16.mxu0 0
        %824 = vmatmul.mubr.bf16.gmra.mrb[0].mxu0 %v549
        %v825 = vpop.f32.mrb[0].mxu0
        %v826 = vadd.f32 %v272, %v825
        %v827 = vpop.f32.mrb[0].mxu0
        %v828 = vpop.f32.mrb[0].mxu0
        %v829 = vadd.f32 %v272, %v828
        %v830 = vpop.f32.mrb[0].mxu0
        %831 = vmatprep.mubr.bf16.mxu0 0
        %832 = vmatmul.mubr.bf16.gmra.mrb[0].mxu0 %v552
        %v833 = vpop.f32.mrb[0].mxu0
        %v834 = vadd.f32 %v272, %v833
        %v835 = vpop.f32.mrb[0].mxu0
        %v836 = vpop.f32.mrb[0].mxu0
        %v837 = vadd.f32 %v272, %v836
        %v838 = vpop.f32.mrb[0].mxu0
        %839 = vmatprep.mubr.bf16.mxu0 0
        %840 = vmatmul.mubr.bf16.gmra.mrb[0].mxu0 %v555
        %v841 = vpop.f32.mrb[0].mxu0
        %v842 = vadd.f32 %v272, %v841
        %v843 = vpop.f32.mrb[0].mxu0
        %v844 = vpop.f32.mrb[0].mxu0
        %v845 = vadd.f32 %v272, %v844
        %v846 = vpop.f32.mrb[0].mxu0
        %847 = vmatprep.mubr.bf16.mxu0 0
        %848 = vmatmul.mubr.bf16.gmra.mrb[0].mxu0 %v558
        %v849 = vpop.f32.mrb[0].mxu0
        %v850 = vadd.f32 %v272, %v849
        %v851 = vpop.f32.mrb[0].mxu0
        %v852 = vpop.f32.mrb[0].mxu0
        %v853 = vadd.f32 %v272, %v852
        %v854 = vpop.f32.mrb[0].mxu0
        %855 = vdwg.mxu0
        %v856 = vmax.f32 %v602, 0.0
        %v857 = vmax.f32 %v605, 0.0
        %v858 = vmax.f32 %v610, 0.0
        %v859 = vmax.f32 %v613, 0.0
        %v860 = vmax.f32 %v618, 0.0
        %v861 = vmax.f32 %v621, 0.0
        %v862 = vmax.f32 %v626, 0.0
        %v863 = vmax.f32 %v629, 0.0
        %v864 = vmax.f32 %v634, 0.0
        %v865 = vmax.f32 %v637, 0.0
        %v866 = vmax.f32 %v642, 0.0
        %v867 = vmax.f32 %v645, 0.0
        %v868 = vmax.f32 %v650, 0.0
        %v869 = vmax.f32 %v653, 0.0
        %v870 = vmax.f32 %v658, 0.0
        %v871 = vmax.f32 %v661, 0.0
        %v872 = vmax.f32 %v666, 0.0
        %v873 = vmax.f32 %v669, 0.0
        %v874 = vmax.f32 %v674, 0.0
        %v875 = vmax.f32 %v677, 0.0
        %v876 = vmax.f32 %v682, 0.0
        %v877 = vmax.f32 %v685, 0.0
        %v878 = vmax.f32 %v690, 0.0
        %v879 = vmax.f32 %v693, 0.0
        %v880 = vmax.f32 %v698, 0.0
        %v881 = vmax.f32 %v701, 0.0
        %v882 = vmax.f32 %v706, 0.0
        %v883 = vmax.f32 %v709, 0.0
        %v884 = vmax.f32 %v714, 0.0
        %v885 = vmax.f32 %v717, 0.0
        %v886 = vmax.f32 %v722, 0.0
        %v887 = vmax.f32 %v725, 0.0
        %v888 = vmax.f32 %v730, 0.0
        %v889 = vmax.f32 %v733, 0.0
        %v890 = vmax.f32 %v738, 0.0
        %v891 = vmax.f32 %v741, 0.0
        %v892 = vmax.f32 %v746, 0.0
        %v893 = vmax.f32 %v749, 0.0
        %v894 = vmax.f32 %v754, 0.0
        %v895 = vmax.f32 %v757, 0.0
        %v896 = vmax.f32 %v762, 0.0
        %v897 = vmax.f32 %v765, 0.0
        %v898 = vmax.f32 %v770, 0.0
        %v899 = vmax.f32 %v773, 0.0
        %v900 = vmax.f32 %v778, 0.0
        %v901 = vmax.f32 %v781, 0.0
        %v902 = vmax.f32 %v786, 0.0
        %v903 = vmax.f32 %v789, 0.0
        %v904 = vmax.f32 %v794, 0.0
        %v905 = vmax.f32 %v797, 0.0
        %v906 = vmax.f32 %v802, 0.0
        %v907 = vmax.f32 %v805, 0.0
        %v908 = vmax.f32 %v810, 0.0
        %v909 = vmax.f32 %v813, 0.0
        %v910 = vmax.f32 %v818, 0.0
        %v911 = vmax.f32 %v821, 0.0
        %v912 = vmax.f32 %v826, 0.0
        %v913 = vmax.f32 %v829, 0.0
        %v914 = vmax.f32 %v834, 0.0
        %v915 = vmax.f32 %v837, 0.0
        %v916 = vmax.f32 %v842, 0.0
        %v917 = vmax.f32 %v845, 0.0
        %v918 = vmax.f32 %v850, 0.0
        %v919 = vmax.f32 %v853, 0.0
        %v920 = vpack.c.bf16 %v857, %v856
        %v921 = vpack.c.bf16 %v859, %v858
        %v922 = vpack.c.bf16 %v861, %v860
        %v923 = vpack.c.bf16 %v863, %v862
        %v924 = vpack.c.bf16 %v865, %v864
        %v925 = vpack.c.bf16 %v867, %v866
        %v926 = vpack.c.bf16 %v869, %v868
        %v927 = vpack.c.bf16 %v871, %v870
        %v928 = vpack.c.bf16 %v873, %v872
        %v929 = vpack.c.bf16 %v875, %v874
        %v930 = vpack.c.bf16 %v877, %v876
        %v931 = vpack.c.bf16 %v879, %v878
        %v932 = vpack.c.bf16 %v881, %v880
        %v933 = vpack.c.bf16 %v883, %v882
        %v934 = vpack.c.bf16 %v885, %v884
        %v935 = vpack.c.bf16 %v887, %v886
        %v936 = vpack.c.bf16 %v889, %v888
        %v937 = vpack.c.bf16 %v891, %v890
        %v938 = vpack.c.bf16 %v893, %v892
        %v939 = vpack.c.bf16 %v895, %v894
        %v940 = vpack.c.bf16 %v897, %v896
        %v941 = vpack.c.bf16 %v899, %v898
        %v942 = vpack.c.bf16 %v901, %v900
        %v943 = vpack.c.bf16 %v903, %v902
        %v944 = vpack.c.bf16 %v905, %v904
        %v945 = vpack.c.bf16 %v907, %v906
        %v946 = vpack.c.bf16 %v909, %v908
        %v947 = vpack.c.bf16 %v911, %v910
        %v948 = vpack.c.bf16 %v913, %v912
        %v949 = vpack.c.bf16 %v915, %v914
        %v950 = vpack.c.bf16 %v917, %v916
        %v951 = vpack.c.bf16 %v919, %v918
        %v984 = vunpack.c.l.b16 %v920
        %v985 = vunpack.c.h.b16 %v920
        %v986 = vunpack.c.l.b16 %v921
        %v987 = vunpack.c.h.b16 %v921
        %v988 = vunpack.c.l.b16 %v922
        %v989 = vunpack.c.h.b16 %v922
        %v990 = vunpack.c.l.b16 %v923
        %v991 = vunpack.c.h.b16 %v923
        %v992 = vunpack.c.l.b16 %v924
        %v993 = vunpack.c.h.b16 %v924
        %v994 = vunpack.c.l.b16 %v925
        %v995 = vunpack.c.h.b16 %v925
        %v996 = vunpack.c.l.b16 %v926
        %v997 = vunpack.c.h.b16 %v926
        %v998 = vunpack.c.l.b16 %v927
        %v999 = vunpack.c.h.b16 %v927
        %v1000 = vunpack.c.l.b16 %v928
        %v1001 = vunpack.c.h.b16 %v928
        %v1002 = vunpack.c.l.b16 %v929
        %v1003 = vunpack.c.h.b16 %v929
        %v1004 = vunpack.c.l.b16 %v930
        %v1005 = vunpack.c.h.b16 %v930
        %v1006 = vunpack.c.l.b16 %v931
        %v1007 = vunpack.c.h.b16 %v931
        %v1008 = vunpack.c.l.b16 %v932
        %v1009 = vunpack.c.h.b16 %v932
        %v1010 = vunpack.c.l.b16 %v933
        %v1011 = vunpack.c.h.b16 %v933
        %v1012 = vunpack.c.l.b16 %v934
        %v1013 = vunpack.c.h.b16 %v934
        %v1014 = vunpack.c.l.b16 %v935
        %v1015 = vunpack.c.h.b16 %v935
        %v1016 = vunpack.c.l.b16 %v936
        %v1017 = vunpack.c.h.b16 %v936
        %v1018 = vunpack.c.l.b16 %v937
        %v1019 = vunpack.c.h.b16 %v937
        %v1020 = vunpack.c.l.b16 %v938
        %v1021 = vunpack.c.h.b16 %v938
        %v1022 = vunpack.c.l.b16 %v939
        %v1023 = vunpack.c.h.b16 %v939
        %v1024 = vunpack.c.l.b16 %v940
        %v1025 = vunpack.c.h.b16 %v940
        %v1026 = vunpack.c.l.b16 %v941
        %v1027 = vunpack.c.h.b16 %v941
        %v1028 = vunpack.c.l.b16 %v942
        %v1029 = vunpack.c.h.b16 %v942
        %v1030 = vunpack.c.l.b16 %v943
        %v1031 = vunpack.c.h.b16 %v943
        %v1032 = vunpack.c.l.b16 %v944
        %v1033 = vunpack.c.h.b16 %v944
        %v1034 = vunpack.c.l.b16 %v945
        %v1035 = vunpack.c.h.b16 %v945
        %v1036 = vunpack.c.l.b16 %v946
        %v1037 = vunpack.c.h.b16 %v946
        %v1038 = vunpack.c.l.b16 %v947
        %v1039 = vunpack.c.h.b16 %v947
        %v1040 = vunpack.c.l.b16 %v948
        %v1041 = vunpack.c.h.b16 %v948
        %v1042 = vunpack.c.l.b16 %v949
        %v1043 = vunpack.c.h.b16 %v949
        %v1044 = vunpack.c.l.b16 %v950
        %v1045 = vunpack.c.h.b16 %v950
        %v1046 = vunpack.c.l.b16 %v951
        %v1047 = vunpack.c.h.b16 %v951
        %v1048 = vpack.c.b16 %v984, %v984
        %v1049 = vpack.c.b16 %v985, %v985
        %v1050 = vpack.c.b16 %v986, %v986
        %v1051 = vpack.c.b16 %v987, %v987
        %v1052 = vpack.c.b16 %v988, %v988
        %v1053 = vpack.c.b16 %v989, %v989
        %v1054 = vpack.c.b16 %v990, %v990
        %v1055 = vpack.c.b16 %v991, %v991
        %v1056 = vpack.c.b16 %v992, %v992
        %v1057 = vpack.c.b16 %v993, %v993
        %v1058 = vpack.c.b16 %v994, %v994
        %v1059 = vpack.c.b16 %v995, %v995
        %v1060 = vpack.c.b16 %v996, %v996
        %v1061 = vpack.c.b16 %v997, %v997
        %v1062 = vpack.c.b16 %v998, %v998
        %v1063 = vpack.c.b16 %v999, %v999
        %v1064 = vpack.c.b16 %v1000, %v1000
        %v1065 = vpack.c.b16 %v1001, %v1001
        %v1066 = vpack.c.b16 %v1002, %v1002
        %v1067 = vpack.c.b16 %v1003, %v1003
        %v1068 = vpack.c.b16 %v1004, %v1004
        %v1069 = vpack.c.b16 %v1005, %v1005
        %v1070 = vpack.c.b16 %v1006, %v1006
        %v1071 = vpack.c.b16 %v1007, %v1007
        %v1072 = vpack.c.b16 %v1008, %v1008
        %v1073 = vpack.c.b16 %v1009, %v1009
        %v1074 = vpack.c.b16 %v1010, %v1010
        %v1075 = vpack.c.b16 %v1011, %v1011
        %v1076 = vpack.c.b16 %v1012, %v1012
        %v1077 = vpack.c.b16 %v1013, %v1013
        %v1078 = vpack.c.b16 %v1014, %v1014
        %v1079 = vpack.c.b16 %v1015, %v1015
        %v1080 = vpack.c.b16 %v1016, %v1016
        %v1081 = vpack.c.b16 %v1017, %v1017
        %v1082 = vpack.c.b16 %v1018, %v1018
        %v1083 = vpack.c.b16 %v1019, %v1019
        %v1084 = vpack.c.b16 %v1020, %v1020
        %v1085 = vpack.c.b16 %v1021, %v1021
        %v1086 = vpack.c.b16 %v1022, %v1022
        %v1087 = vpack.c.b16 %v1023, %v1023
        %v1088 = vpack.c.b16 %v1024, %v1024
        %v1089 = vpack.c.b16 %v1025, %v1025
        %v1090 = vpack.c.b16 %v1026, %v1026
        %v1091 = vpack.c.b16 %v1027, %v1027
        %v1092 = vpack.c.b16 %v1028, %v1028
        %v1093 = vpack.c.b16 %v1029, %v1029
        %v1094 = vpack.c.b16 %v1030, %v1030
        %v1095 = vpack.c.b16 %v1031, %v1031
        %v1096 = vpack.c.b16 %v1032, %v1032
        %v1097 = vpack.c.b16 %v1033, %v1033
        %v1098 = vpack.c.b16 %v1034, %v1034
        %v1099 = vpack.c.b16 %v1035, %v1035
        %v1100 = vpack.c.b16 %v1036, %v1036
        %v1101 = vpack.c.b16 %v1037, %v1037
        %v1102 = vpack.c.b16 %v1038, %v1038
        %v1103 = vpack.c.b16 %v1039, %v1039
        %v1104 = vpack.c.b16 %v1040, %v1040
        %v1105 = vpack.c.b16 %v1041, %v1041
        %v1106 = vpack.c.b16 %v1042, %v1042
        %v1107 = vpack.c.b16 %v1043, %v1043
        %v1108 = vpack.c.b16 %v1044, %v1044
        %v1109 = vpack.c.b16 %v1045, %v1045
        %v1110 = vpack.c.b16 %v1046, %v1046
        %v1111 = vpack.c.b16 %v1047, %v1047
        %1176 = vst [vmem:[%s172] sm:$0xf] %v1048
        %1177 = vst [vmem:[%s172 + $0x4] sm:$0xf] %v1049
        %1178 = vst [vmem:[%s172 + $0x8] sm:$0xf] %v1050
        %1179 = vst [vmem:[%s172 + $0xc] sm:$0xf] %v1051
        %1180 = vst [vmem:[%s172 + $0x10] sm:$0xf] %v1052
        %1181 = vst [vmem:[%s172 + $0x14] sm:$0xf] %v1053
        %1182 = vst [vmem:[%s172 + $0x18] sm:$0xf] %v1054
        %1183 = vst [vmem:[%s172 + $0x1c] sm:$0xf] %v1055
        %1184 = vst [vmem:[%s172 + $0x20] sm:$0xf] %v1056
        %1185 = vst [vmem:[%s172 + $0x24] sm:$0xf] %v1057
        %1186 = vst [vmem:[%s172 + $0x28] sm:$0xf] %v1058
        %1187 = vst [vmem:[%s172 + $0x2c] sm:$0xf] %v1059
        %1188 = vst [vmem:[%s172 + $0x30] sm:$0xf] %v1060
        %1189 = vst [vmem:[%s172 + $0x34] sm:$0xf] %v1061
        %1190 = vst [vmem:[%s172 + $0x38] sm:$0xf] %v1062
        %1191 = vst [vmem:[%s172 + $0x3c] sm:$0xf] %v1063
        %1192 = vst [vmem:[%s172 + $0x40] sm:$0xf] %v1064
        %1193 = vst [vmem:[%s172 + $0x44] sm:$0xf] %v1065
        %1194 = vst [vmem:[%s172 + $0x48] sm:$0xf] %v1066
        %1195 = vst [vmem:[%s172 + $0x4c] sm:$0xf] %v1067
        %1196 = vst [vmem:[%s172 + $0x50] sm:$0xf] %v1068
        %1197 = vst [vmem:[%s172 + $0x54] sm:$0xf] %v1069
        %1198 = vst [vmem:[%s172 + $0x58] sm:$0xf] %v1070
        %1199 = vst [vmem:[%s172 + $0x5c] sm:$0xf] %v1071
        %1200 = vst [vmem:[%s172 + $0x60] sm:$0xf] %v1072
        %1201 = vst [vmem:[%s172 + $0x64] sm:$0xf] %v1073
        %1202 = vst [vmem:[%s172 + $0x68] sm:$0xf] %v1074
        %1203 = vst [vmem:[%s172 + $0x6c] sm:$0xf] %v1075
        %1204 = vst [vmem:[%s172 + $0x70] sm:$0xf] %v1076
        %1205 = vst [vmem:[%s172 + $0x74] sm:$0xf] %v1077
        %1206 = vst [vmem:[%s172 + $0x78] sm:$0xf] %v1078
        %1207 = vst [vmem:[%s172 + $0x7c] sm:$0xf] %v1079
        %1208 = vst [vmem:[%s172 + $0x80] sm:$0xf] %v1080
        %1209 = vst [vmem:[%s172 + $0x84] sm:$0xf] %v1081
        %1210 = vst [vmem:[%s172 + $0x88] sm:$0xf] %v1082
        %1211 = vst [vmem:[%s172 + $0x8c] sm:$0xf] %v1083
        %1212 = vst [vmem:[%s172 + $0x90] sm:$0xf] %v1084
        %1213 = vst [vmem:[%s172 + $0x94] sm:$0xf] %v1085
        %1214 = vst [vmem:[%s172 + $0x98] sm:$0xf] %v1086
        %1215 = vst [vmem:[%s172 + $0x9c] sm:$0xf] %v1087
        %1216 = vst [vmem:[%s172 + $0xa0] sm:$0xf] %v1088
        %1217 = vst [vmem:[%s172 + $0xa4] sm:$0xf] %v1089
        %1218 = vst [vmem:[%s172 + $0xa8] sm:$0xf] %v1090
        %1219 = vst [vmem:[%s172 + $0xac] sm:$0xf] %v1091
        %1220 = vst [vmem:[%s172 + $0xb0] sm:$0xf] %v1092
        %1221 = vst [vmem:[%s172 + $0xb4] sm:$0xf] %v1093
        %1222 = vst [vmem:[%s172 + $0xb8] sm:$0xf] %v1094
        %1223 = vst [vmem:[%s172 + $0xbc] sm:$0xf] %v1095
        %1224 = vst [vmem:[%s172 + $0xc0] sm:$0xf] %v1096
        %1225 = vst [vmem:[%s172 + $0xc4] sm:$0xf] %v1097
        %1226 = vst [vmem:[%s172 + $0xc8] sm:$0xf] %v1098
        %1227 = vst [vmem:[%s172 + $0xcc] sm:$0xf] %v1099
        %1228 = vst [vmem:[%s172 + $0xd0] sm:$0xf] %v1100
        %1229 = vst [vmem:[%s172 + $0xd4] sm:$0xf] %v1101
        %1230 = vst [vmem:[%s172 + $0xd8] sm:$0xf] %v1102
        %1231 = vst [vmem:[%s172 + $0xdc] sm:$0xf] %v1103
        %1232 = vst [vmem:[%s172 + $0xe0] sm:$0xf] %v1104
        %1233 = vst [vmem:[%s172 + $0xe4] sm:$0xf] %v1105
        %1234 = vst [vmem:[%s172 + $0xe8] sm:$0xf] %v1106
        %1235 = vst [vmem:[%s172 + $0xec] sm:$0xf] %v1107
        %1236 = vst [vmem:[%s172 + $0xf0] sm:$0xf] %v1108
        %1237 = vst [vmem:[%s172 + $0xf4] sm:$0xf] %v1109
        %1238 = vst [vmem:[%s172 + $0xf8] sm:$0xf] %v1110
        %1239 = vst [vmem:[%s172 + $0xfc] sm:$0xf] %v1111
        %s1240 = sand.u32 %s90, 1
        %s1241 = sand.u32 %s90, 1
        %s1242 = smul.addr %s1241, 256
        %s1243 = scalar_lea.vmem [#allocation2], %s1242
        // Predicated region
        $region33: #{shared_encoder_forward.3} parent=31 // pred_check
          %p1244 = pneg %p100
        $region34: #{shared_encoder_forward.3} parent=31 // pred_check_branch
          %1246 = sbr.rel (%p1244) target = $region36
        $region35: #{shared_encoder_forward.3} parent=31 // pred_region
          %s1247 = smul.u32 64, %s14
          %s1248 = ssub.s32 196, %s1247
          %p1249 = scmp.lt.s32.totalorder %s1248, 64
          %s1250 = scalar_select %p1249, %s1248, 64
          %s1251 = smul.u32 64, %s1250
          %p1252 = scmp.ne.s32.totalorder 0, %s1251
          %s1253 = smul.addr %s1247, 4
          %s1254 = scalar_lea.vmem %s3, %s1253
          // Predicated region
          $region37: #{shared_encoder_forward.3} parent=35 // pred_check
            %p1255 = pneg %p1252
          $region38: #{shared_encoder_forward.3} parent=35 // pred_check_branch
            %1257 = sbr.rel (%p1255) target = $region40
          $region39: #{shared_encoder_forward.3} parent=35 // pred_region
            // Predicated region
            $region41: #{shared_encoder_forward.3} parent=39 // pred_check
              _
            $region42: #{shared_encoder_forward.3} parent=39 // pred_check_branch
              %1259 = sbr.rel target = $region44
            $region43: #{shared_encoder_forward.3} parent=39 // pred_region
              // Predicated region
              $region63: #{shared_encoder_forward.3} parent=43 // pred_check
                _
              $region64: #{shared_encoder_forward.3} parent=43 // pred_check_branch
                %1434 = sbr.rel (0) target = $region66
              $region65: #{shared_encoder_forward.3} parent=43 // pred_region
                %s1436 = sshrl.u32 %s1250, 6
                // While loop
                $region67: #{shared_encoder_forward.3} parent=65 // loop_pre_header
                  _
                $region68: #{shared_encoder_forward.3} parent=65 // loop_header
                  %s1438 = sphi 0, %s1440
                  %p1439 = scmp.ge.s32.totalorder %s1438, %s1436
                  %s1443 = sphi 0, %s1576
                  %s1444 = sphi %s1243, %s1579
                  %s1445 = sphi %s1254, %s1580
                $region69: #{shared_encoder_forward.3} parent=65 // loop_header_branch
                  %1442 = sbr.rel (%p1439) target = $region73
                $region70: #{shared_encoder_forward.3} parent=65 // loop_body
                  %v1446 = vld [vmem:[%s1444] sm:$0xf]
                  %1447 = vst [vmem:[%s1445] sm:$0xf] %v1446
                  %v1448 = vld [vmem:[%s1444 + $0x4] sm:$0xf]
                  %1449 = vst [vmem:[%s1445 + $0x4] sm:$0xf] %v1448
                  %v1450 = vld [vmem:[%s1444 + $0x8] sm:$0xf]
                  %1451 = vst [vmem:[%s1445 + $0x8] sm:$0xf] %v1450
                  %v1452 = vld [vmem:[%s1444 + $0xc] sm:$0xf]
                  %1453 = vst [vmem:[%s1445 + $0xc] sm:$0xf] %v1452
                  %v1454 = vld [vmem:[%s1444 + $0x10] sm:$0xf]
                  %1455 = vst [vmem:[%s1445 + $0x10] sm:$0xf] %v1454
                  %v1456 = vld [vmem:[%s1444 + $0x14] sm:$0xf]
                  %1457 = vst [vmem:[%s1445 + $0x14] sm:$0xf] %v1456
                  %v1458 = vld [vmem:[%s1444 + $0x18] sm:$0xf]
                  %1459 = vst [vmem:[%s1445 + $0x18] sm:$0xf] %v1458
                  %v1460 = vld [vmem:[%s1444 + $0x1c] sm:$0xf]
                  %1461 = vst [vmem:[%s1445 + $0x1c] sm:$0xf] %v1460
                  %v1462 = vld [vmem:[%s1444 + $0x20] sm:$0xf]
                  %1463 = vst [vmem:[%s1445 + $0x20] sm:$0xf] %v1462
                  %v1464 = vld [vmem:[%s1444 + $0x24] sm:$0xf]
                  %1465 = vst [vmem:[%s1445 + $0x24] sm:$0xf] %v1464
                  %v1466 = vld [vmem:[%s1444 + $0x28] sm:$0xf]
                  %1467 = vst [vmem:[%s1445 + $0x28] sm:$0xf] %v1466
                  %v1468 = vld [vmem:[%s1444 + $0x2c] sm:$0xf]
                  %1469 = vst [vmem:[%s1445 + $0x2c] sm:$0xf] %v1468
                  %v1470 = vld [vmem:[%s1444 + $0x30] sm:$0xf]
                  %1471 = vst [vmem:[%s1445 + $0x30] sm:$0xf] %v1470
                  %v1472 = vld [vmem:[%s1444 + $0x34] sm:$0xf]
                  %1473 = vst [vmem:[%s1445 + $0x34] sm:$0xf] %v1472
                  %v1474 = vld [vmem:[%s1444 + $0x38] sm:$0xf]
                  %1475 = vst [vmem:[%s1445 + $0x38] sm:$0xf] %v1474
                  %v1476 = vld [vmem:[%s1444 + $0x3c] sm:$0xf]
                  %1477 = vst [vmem:[%s1445 + $0x3c] sm:$0xf] %v1476
                  %v1478 = vld [vmem:[%s1444 + $0x40] sm:$0xf]
                  %1479 = vst [vmem:[%s1445 + $0x40] sm:$0xf] %v1478
                  %v1480 = vld [vmem:[%s1444 + $0x44] sm:$0xf]
                  %1481 = vst [vmem:[%s1445 + $0x44] sm:$0xf] %v1480
                  %v1482 = vld [vmem:[%s1444 + $0x48] sm:$0xf]
                  %1483 = vst [vmem:[%s1445 + $0x48] sm:$0xf] %v1482
                  %v1484 = vld [vmem:[%s1444 + $0x4c] sm:$0xf]
                  %1485 = vst [vmem:[%s1445 + $0x4c] sm:$0xf] %v1484
                  %v1486 = vld [vmem:[%s1444 + $0x50] sm:$0xf]
                  %1487 = vst [vmem:[%s1445 + $0x50] sm:$0xf] %v1486
                  %v1488 = vld [vmem:[%s1444 + $0x54] sm:$0xf]
                  %1489 = vst [vmem:[%s1445 + $0x54] sm:$0xf] %v1488
                  %v1490 = vld [vmem:[%s1444 + $0x58] sm:$0xf]
                  %1491 = vst [vmem:[%s1445 + $0x58] sm:$0xf] %v1490
                  %v1492 = vld [vmem:[%s1444 + $0x5c] sm:$0xf]
                  %1493 = vst [vmem:[%s1445 + $0x5c] sm:$0xf] %v1492
                  %v1494 = vld [vmem:[%s1444 + $0x60] sm:$0xf]
                  %1495 = vst [vmem:[%s1445 + $0x60] sm:$0xf] %v1494
                  %v1496 = vld [vmem:[%s1444 + $0x64] sm:$0xf]
                  %1497 = vst [vmem:[%s1445 + $0x64] sm:$0xf] %v1496
                  %v1498 = vld [vmem:[%s1444 + $0x68] sm:$0xf]
                  %1499 = vst [vmem:[%s1445 + $0x68] sm:$0xf] %v1498
                  %v1500 = vld [vmem:[%s1444 + $0x6c] sm:$0xf]
                  %1501 = vst [vmem:[%s1445 + $0x6c] sm:$0xf] %v1500
                  %v1502 = vld [vmem:[%s1444 + $0x70] sm:$0xf]
                  %1503 = vst [vmem:[%s1445 + $0x70] sm:$0xf] %v1502
                  %v1504 = vld [vmem:[%s1444 + $0x74] sm:$0xf]
                  %1505 = vst [vmem:[%s1445 + $0x74] sm:$0xf] %v1504
                  %v1506 = vld [vmem:[%s1444 + $0x78] sm:$0xf]
                  %1507 = vst [vmem:[%s1445 + $0x78] sm:$0xf] %v1506
                  %v1508 = vld [vmem:[%s1444 + $0x7c] sm:$0xf]
                  %1509 = vst [vmem:[%s1445 + $0x7c] sm:$0xf] %v1508
                  %v1510 = vld [vmem:[%s1444 + $0x80] sm:$0xf]
                  %1511 = vst [vmem:[%s1445 + $0x80] sm:$0xf] %v1510
                  %v1512 = vld [vmem:[%s1444 + $0x84] sm:$0xf]
                  %1513 = vst [vmem:[%s1445 + $0x84] sm:$0xf] %v1512
                  %v1514 = vld [vmem:[%s1444 + $0x88] sm:$0xf]
                  %1515 = vst [vmem:[%s1445 + $0x88] sm:$0xf] %v1514
                  %v1516 = vld [vmem:[%s1444 + $0x8c] sm:$0xf]
                  %1517 = vst [vmem:[%s1445 + $0x8c] sm:$0xf] %v1516
                  %v1518 = vld [vmem:[%s1444 + $0x90] sm:$0xf]
                  %1519 = vst [vmem:[%s1445 + $0x90] sm:$0xf] %v1518
                  %v1520 = vld [vmem:[%s1444 + $0x94] sm:$0xf]
                  %1521 = vst [vmem:[%s1445 + $0x94] sm:$0xf] %v1520
                  %v1522 = vld [vmem:[%s1444 + $0x98] sm:$0xf]
                  %1523 = vst [vmem:[%s1445 + $0x98] sm:$0xf] %v1522
                  %v1524 = vld [vmem:[%s1444 + $0x9c] sm:$0xf]
                  %1525 = vst [vmem:[%s1445 + $0x9c] sm:$0xf] %v1524
                  %v1526 = vld [vmem:[%s1444 + $0xa0] sm:$0xf]
                  %1527 = vst [vmem:[%s1445 + $0xa0] sm:$0xf] %v1526
                  %v1528 = vld [vmem:[%s1444 + $0xa4] sm:$0xf]
                  %1529 = vst [vmem:[%s1445 + $0xa4] sm:$0xf] %v1528
                  %v1530 = vld [vmem:[%s1444 + $0xa8] sm:$0xf]
                  %1531 = vst [vmem:[%s1445 + $0xa8] sm:$0xf] %v1530
                  %v1532 = vld [vmem:[%s1444 + $0xac] sm:$0xf]
                  %1533 = vst [vmem:[%s1445 + $0xac] sm:$0xf] %v1532
                  %v1534 = vld [vmem:[%s1444 + $0xb0] sm:$0xf]
                  %1535 = vst [vmem:[%s1445 + $0xb0] sm:$0xf] %v1534
                  %v1536 = vld [vmem:[%s1444 + $0xb4] sm:$0xf]
                  %1537 = vst [vmem:[%s1445 + $0xb4] sm:$0xf] %v1536
                  %v1538 = vld [vmem:[%s1444 + $0xb8] sm:$0xf]
                  %1539 = vst [vmem:[%s1445 + $0xb8] sm:$0xf] %v1538
                  %v1540 = vld [vmem:[%s1444 + $0xbc] sm:$0xf]
                  %1541 = vst [vmem:[%s1445 + $0xbc] sm:$0xf] %v1540
                  %v1542 = vld [vmem:[%s1444 + $0xc0] sm:$0xf]
                  %1543 = vst [vmem:[%s1445 + $0xc0] sm:$0xf] %v1542
                  %v1544 = vld [vmem:[%s1444 + $0xc4] sm:$0xf]
                  %1545 = vst [vmem:[%s1445 + $0xc4] sm:$0xf] %v1544
                  %v1546 = vld [vmem:[%s1444 + $0xc8] sm:$0xf]
                  %1547 = vst [vmem:[%s1445 + $0xc8] sm:$0xf] %v1546
                  %v1548 = vld [vmem:[%s1444 + $0xcc] sm:$0xf]
                  %1549 = vst [vmem:[%s1445 + $0xcc] sm:$0xf] %v1548
                  %v1550 = vld [vmem:[%s1444 + $0xd0] sm:$0xf]
                  %1551 = vst [vmem:[%s1445 + $0xd0] sm:$0xf] %v1550
                  %v1552 = vld [vmem:[%s1444 + $0xd4] sm:$0xf]
                  %1553 = vst [vmem:[%s1445 + $0xd4] sm:$0xf] %v1552
                  %v1554 = vld [vmem:[%s1444 + $0xd8] sm:$0xf]
                  %1555 = vst [vmem:[%s1445 + $0xd8] sm:$0xf] %v1554
                  %v1556 = vld [vmem:[%s1444 + $0xdc] sm:$0xf]
                  %1557 = vst [vmem:[%s1445 + $0xdc] sm:$0xf] %v1556
                  %v1558 = vld [vmem:[%s1444 + $0xe0] sm:$0xf]
                  %1559 = vst [vmem:[%s1445 + $0xe0] sm:$0xf] %v1558
                  %v1560 = vld [vmem:[%s1444 + $0xe4] sm:$0xf]
                  %1561 = vst [vmem:[%s1445 + $0xe4] sm:$0xf] %v1560
                  %v1562 = vld [vmem:[%s1444 + $0xe8] sm:$0xf]
                  %1563 = vst [vmem:[%s1445 + $0xe8] sm:$0xf] %v1562
                  %v1564 = vld [vmem:[%s1444 + $0xec] sm:$0xf]
                  %1565 = vst [vmem:[%s1445 + $0xec] sm:$0xf] %v1564
                  %v1566 = vld [vmem:[%s1444 + $0xf0] sm:$0xf]
                  %1567 = vst [vmem:[%s1445 + $0xf0] sm:$0xf] %v1566
                  %v1568 = vld [vmem:[%s1444 + $0xf4] sm:$0xf]
                  %1569 = vst [vmem:[%s1445 + $0xf4] sm:$0xf] %v1568
                  %v1570 = vld [vmem:[%s1444 + $0xf8] sm:$0xf]
                  %1571 = vst [vmem:[%s1445 + $0xf8] sm:$0xf] %v1570
                  %v1572 = vld [vmem:[%s1444 + $0xfc] sm:$0xf]
                  %1573 = vst [vmem:[%s1445 + $0xfc] sm:$0xf] %v1572
                  %s1574 = sadd.s32 1, %s1443
                  %p1575 = scmp.ge.s32.totalorder %s1574, %s1436
                  %s1576 = scalar_select %p1575, 0, %s1574
                  %s1577 = smul.u32 %s1576, 256
                  %s1578 = smul.u32 %s1576, 256
                  %s1579 = scalar_lea.vmem %s1243, %s1577 [#allocation2]
                  %s1580 = scalar_lea.vmem %s1254, %s1578
                $region71: #{shared_encoder_forward.3} parent=65 // loop_footer
                  %s1440 = sadd.s32 %s1438, 1
                $region72: #{shared_encoder_forward.3} parent=65 // loop_footer_branch
                  %1437 = sbr.rel target = $region68
                $region73: #{shared_encoder_forward.3} parent=65 // loop_exit
                  _
                %s1581 = sshrl.u32 %s1250, 6
                %s1582 = sand.u32 %s1250, 63
                %s1583 = smul.u32 %s1581, 64
                %s1584 = smul.u32 4, %s1583
                %s1585 = scalar_lea.vmem %s1243, %s1584 [#allocation2]
                %s1586 = smul.u32 4, %s1583
                %s1587 = scalar_lea.vmem %s1254, %s1586
                // While loop
                $region74: #{shared_encoder_forward.3} parent=65 // loop_pre_header
                  _
                $region75: #{shared_encoder_forward.3} parent=65 // loop_header
                  %s1589 = sphi 0, %s1591
                  %p1590 = scmp.ge.s32.totalorder %s1589, %s1582
                  %s1594 = sphi 0, %s1601
                  %s1595 = sphi %s1585, %s1604
                  %s1596 = sphi %s1587, %s1605
                $region76: #{shared_encoder_forward.3} parent=65 // loop_header_branch
                  %1593 = sbr.rel (%p1590) target = $region80
                $region77: #{shared_encoder_forward.3} parent=65 // loop_body
                  %v1597 = vld [vmem:[%s1595] sm:$0xf]
                  %1598 = vst [vmem:[%s1596] sm:$0xf] %v1597
                  %s1599 = sadd.s32 1, %s1594
                  %p1600 = scmp.ge.s32.totalorder %s1599, %s1582
                  %s1601 = scalar_select %p1600, 0, %s1599
                  %s1602 = smul.u32 %s1601, 4
                  %s1603 = smul.u32 %s1601, 4
                  %s1604 = scalar_lea.vmem %s1585, %s1602 [#allocation2]
                  %s1605 = scalar_lea.vmem %s1587, %s1603
                $region78: #{shared_encoder_forward.3} parent=65 // loop_footer
                  %s1591 = sadd.s32 %s1589, 1
                $region79: #{shared_encoder_forward.3} parent=65 // loop_footer_branch
                  %1588 = sbr.rel target = $region75
                $region80: #{shared_encoder_forward.3} parent=65 // loop_exit
                  _
              $region66: #{shared_encoder_forward.3} parent=43 // pred_fallthru
                _
            $region44: #{shared_encoder_forward.3} parent=39 // pred_fallthru
              _
            // Predicated region
            $region45: #{shared_encoder_forward.3} parent=39 // pred_check
              _
            $region46: #{shared_encoder_forward.3} parent=39 // pred_check_branch
              %1261 = sbr.rel (0) target = $region48
            $region47: #{shared_encoder_forward.3} parent=39 // pred_region
              %s1263 = sshrl.u32 %s1250, 6
              // While loop
              $region49: #{shared_encoder_forward.3} parent=47 // loop_pre_header
                _
              $region50: #{shared_encoder_forward.3} parent=47 // loop_header
                %s1265 = sphi 0, %s1267
                %p1266 = scmp.ge.s32.totalorder %s1265, %s1263
                %s1270 = sphi 0, %s1403
                %s1271 = sphi %s1243, %s1406
                %s1272 = sphi %s1254, %s1407
              $region51: #{shared_encoder_forward.3} parent=47 // loop_header_branch
                %1269 = sbr.rel (%p1266) target = $region55
              $region52: #{shared_encoder_forward.3} parent=47 // loop_body
                %v1273 = vld [vmem:[%s1271] sm:$0xf]
                %1274 = vst [vmem:[%s1272] sm:$0xf] %v1273
                %v1275 = vld [vmem:[%s1271 + $0x4] sm:$0xf]
                %1276 = vst [vmem:[%s1272 + $0x4] sm:$0xf] %v1275
                %v1277 = vld [vmem:[%s1271 + $0x8] sm:$0xf]
                %1278 = vst [vmem:[%s1272 + $0x8] sm:$0xf] %v1277
                %v1279 = vld [vmem:[%s1271 + $0xc] sm:$0xf]
                %1280 = vst [vmem:[%s1272 + $0xc] sm:$0xf] %v1279
                %v1281 = vld [vmem:[%s1271 + $0x10] sm:$0xf]
                %1282 = vst [vmem:[%s1272 + $0x10] sm:$0xf] %v1281
                %v1283 = vld [vmem:[%s1271 + $0x14] sm:$0xf]
                %1284 = vst [vmem:[%s1272 + $0x14] sm:$0xf] %v1283
                %v1285 = vld [vmem:[%s1271 + $0x18] sm:$0xf]
                %1286 = vst [vmem:[%s1272 + $0x18] sm:$0xf] %v1285
                %v1287 = vld [vmem:[%s1271 + $0x1c] sm:$0xf]
                %1288 = vst [vmem:[%s1272 + $0x1c] sm:$0xf] %v1287
                %v1289 = vld [vmem:[%s1271 + $0x20] sm:$0xf]
                %1290 = vst [vmem:[%s1272 + $0x20] sm:$0xf] %v1289
                %v1291 = vld [vmem:[%s1271 + $0x24] sm:$0xf]
                %1292 = vst [vmem:[%s1272 + $0x24] sm:$0xf] %v1291
                %v1293 = vld [vmem:[%s1271 + $0x28] sm:$0xf]
                %1294 = vst [vmem:[%s1272 + $0x28] sm:$0xf] %v1293
                %v1295 = vld [vmem:[%s1271 + $0x2c] sm:$0xf]
                %1296 = vst [vmem:[%s1272 + $0x2c] sm:$0xf] %v1295
                %v1297 = vld [vmem:[%s1271 + $0x30] sm:$0xf]
                %1298 = vst [vmem:[%s1272 + $0x30] sm:$0xf] %v1297
                %v1299 = vld [vmem:[%s1271 + $0x34] sm:$0xf]
                %1300 = vst [vmem:[%s1272 + $0x34] sm:$0xf] %v1299
                %v1301 = vld [vmem:[%s1271 + $0x38] sm:$0xf]
                %1302 = vst [vmem:[%s1272 + $0x38] sm:$0xf] %v1301
                %v1303 = vld [vmem:[%s1271 + $0x3c] sm:$0xf]
                %1304 = vst [vmem:[%s1272 + $0x3c] sm:$0xf] %v1303
                %v1305 = vld [vmem:[%s1271 + $0x40] sm:$0xf]
                %1306 = vst [vmem:[%s1272 + $0x40] sm:$0xf] %v1305
                %v1307 = vld [vmem:[%s1271 + $0x44] sm:$0xf]
                %1308 = vst [vmem:[%s1272 + $0x44] sm:$0xf] %v1307
                %v1309 = vld [vmem:[%s1271 + $0x48] sm:$0xf]
                %1310 = vst [vmem:[%s1272 + $0x48] sm:$0xf] %v1309
                %v1311 = vld [vmem:[%s1271 + $0x4c] sm:$0xf]
                %1312 = vst [vmem:[%s1272 + $0x4c] sm:$0xf] %v1311
                %v1313 = vld [vmem:[%s1271 + $0x50] sm:$0xf]
                %1314 = vst [vmem:[%s1272 + $0x50] sm:$0xf] %v1313
                %v1315 = vld [vmem:[%s1271 + $0x54] sm:$0xf]
                %1316 = vst [vmem:[%s1272 + $0x54] sm:$0xf] %v1315
                %v1317 = vld [vmem:[%s1271 + $0x58] sm:$0xf]
                %1318 = vst [vmem:[%s1272 + $0x58] sm:$0xf] %v1317
                %v1319 = vld [vmem:[%s1271 + $0x5c] sm:$0xf]
                %1320 = vst [vmem:[%s1272 + $0x5c] sm:$0xf] %v1319
                %v1321 = vld [vmem:[%s1271 + $0x60] sm:$0xf]
                %1322 = vst [vmem:[%s1272 + $0x60] sm:$0xf] %v1321
                %v1323 = vld [vmem:[%s1271 + $0x64] sm:$0xf]
                %1324 = vst [vmem:[%s1272 + $0x64] sm:$0xf] %v1323
                %v1325 = vld [vmem:[%s1271 + $0x68] sm:$0xf]
                %1326 = vst [vmem:[%s1272 + $0x68] sm:$0xf] %v1325
                %v1327 = vld [vmem:[%s1271 + $0x6c] sm:$0xf]
                %1328 = vst [vmem:[%s1272 + $0x6c] sm:$0xf] %v1327
                %v1329 = vld [vmem:[%s1271 + $0x70] sm:$0xf]
                %1330 = vst [vmem:[%s1272 + $0x70] sm:$0xf] %v1329
                %v1331 = vld [vmem:[%s1271 + $0x74] sm:$0xf]
                %1332 = vst [vmem:[%s1272 + $0x74] sm:$0xf] %v1331
                %v1333 = vld [vmem:[%s1271 + $0x78] sm:$0xf]
                %1334 = vst [vmem:[%s1272 + $0x78] sm:$0xf] %v1333
                %v1335 = vld [vmem:[%s1271 + $0x7c] sm:$0xf]
                %1336 = vst [vmem:[%s1272 + $0x7c] sm:$0xf] %v1335
                %v1337 = vld [vmem:[%s1271 + $0x80] sm:$0xf]
                %1338 = vst [vmem:[%s1272 + $0x80] sm:$0xf] %v1337
                %v1339 = vld [vmem:[%s1271 + $0x84] sm:$0xf]
                %1340 = vst [vmem:[%s1272 + $0x84] sm:$0xf] %v1339
                %v1341 = vld [vmem:[%s1271 + $0x88] sm:$0xf]
                %1342 = vst [vmem:[%s1272 + $0x88] sm:$0xf] %v1341
                %v1343 = vld [vmem:[%s1271 + $0x8c] sm:$0xf]
                %1344 = vst [vmem:[%s1272 + $0x8c] sm:$0xf] %v1343
                %v1345 = vld [vmem:[%s1271 + $0x90] sm:$0xf]
                %1346 = vst [vmem:[%s1272 + $0x90] sm:$0xf] %v1345
                %v1347 = vld [vmem:[%s1271 + $0x94] sm:$0xf]
                %1348 = vst [vmem:[%s1272 + $0x94] sm:$0xf] %v1347
                %v1349 = vld [vmem:[%s1271 + $0x98] sm:$0xf]
                %1350 = vst [vmem:[%s1272 + $0x98] sm:$0xf] %v1349
                %v1351 = vld [vmem:[%s1271 + $0x9c] sm:$0xf]
                %1352 = vst [vmem:[%s1272 + $0x9c] sm:$0xf] %v1351
                %v1353 = vld [vmem:[%s1271 + $0xa0] sm:$0xf]
                %1354 = vst [vmem:[%s1272 + $0xa0] sm:$0xf] %v1353
                %v1355 = vld [vmem:[%s1271 + $0xa4] sm:$0xf]
                %1356 = vst [vmem:[%s1272 + $0xa4] sm:$0xf] %v1355
                %v1357 = vld [vmem:[%s1271 + $0xa8] sm:$0xf]
                %1358 = vst [vmem:[%s1272 + $0xa8] sm:$0xf] %v1357
                %v1359 = vld [vmem:[%s1271 + $0xac] sm:$0xf]
                %1360 = vst [vmem:[%s1272 + $0xac] sm:$0xf] %v1359
                %v1361 = vld [vmem:[%s1271 + $0xb0] sm:$0xf]
                %1362 = vst [vmem:[%s1272 + $0xb0] sm:$0xf] %v1361
                %v1363 = vld [vmem:[%s1271 + $0xb4] sm:$0xf]
                %1364 = vst [vmem:[%s1272 + $0xb4] sm:$0xf] %v1363
                %v1365 = vld [vmem:[%s1271 + $0xb8] sm:$0xf]
                %1366 = vst [vmem:[%s1272 + $0xb8] sm:$0xf] %v1365
                %v1367 = vld [vmem:[%s1271 + $0xbc] sm:$0xf]
                %1368 = vst [vmem:[%s1272 + $0xbc] sm:$0xf] %v1367
                %v1369 = vld [vmem:[%s1271 + $0xc0] sm:$0xf]
                %1370 = vst [vmem:[%s1272 + $0xc0] sm:$0xf] %v1369
                %v1371 = vld [vmem:[%s1271 + $0xc4] sm:$0xf]
                %1372 = vst [vmem:[%s1272 + $0xc4] sm:$0xf] %v1371
                %v1373 = vld [vmem:[%s1271 + $0xc8] sm:$0xf]
                %1374 = vst [vmem:[%s1272 + $0xc8] sm:$0xf] %v1373
                %v1375 = vld [vmem:[%s1271 + $0xcc] sm:$0xf]
                %1376 = vst [vmem:[%s1272 + $0xcc] sm:$0xf] %v1375
                %v1377 = vld [vmem:[%s1271 + $0xd0] sm:$0xf]
                %1378 = vst [vmem:[%s1272 + $0xd0] sm:$0xf] %v1377
                %v1379 = vld [vmem:[%s1271 + $0xd4] sm:$0xf]
                %1380 = vst [vmem:[%s1272 + $0xd4] sm:$0xf] %v1379
                %v1381 = vld [vmem:[%s1271 + $0xd8] sm:$0xf]
                %1382 = vst [vmem:[%s1272 + $0xd8] sm:$0xf] %v1381
                %v1383 = vld [vmem:[%s1271 + $0xdc] sm:$0xf]
                %1384 = vst [vmem:[%s1272 + $0xdc] sm:$0xf] %v1383
                %v1385 = vld [vmem:[%s1271 + $0xe0] sm:$0xf]
                %1386 = vst [vmem:[%s1272 + $0xe0] sm:$0xf] %v1385
                %v1387 = vld [vmem:[%s1271 + $0xe4] sm:$0xf]
                %1388 = vst [vmem:[%s1272 + $0xe4] sm:$0xf] %v1387
                %v1389 = vld [vmem:[%s1271 + $0xe8] sm:$0xf]
                %1390 = vst [vmem:[%s1272 + $0xe8] sm:$0xf] %v1389
                %v1391 = vld [vmem:[%s1271 + $0xec] sm:$0xf]
                %1392 = vst [vmem:[%s1272 + $0xec] sm:$0xf] %v1391
                %v1393 = vld [vmem:[%s1271 + $0xf0] sm:$0xf]
                %1394 = vst [vmem:[%s1272 + $0xf0] sm:$0xf] %v1393
                %v1395 = vld [vmem:[%s1271 + $0xf4] sm:$0xf]
                %1396 = vst [vmem:[%s1272 + $0xf4] sm:$0xf] %v1395
                %v1397 = vld [vmem:[%s1271 + $0xf8] sm:$0xf]
                %1398 = vst [vmem:[%s1272 + $0xf8] sm:$0xf] %v1397
                %v1399 = vld [vmem:[%s1271 + $0xfc] sm:$0xf]
                %1400 = vst [vmem:[%s1272 + $0xfc] sm:$0xf] %v1399
                %s1401 = sadd.s32 1, %s1270
                %p1402 = scmp.ge.s32.totalorder %s1401, %s1263
                %s1403 = scalar_select %p1402, 0, %s1401
                %s1404 = smul.u32 %s1403, 256
                %s1405 = smul.u32 %s1403, 256
                %s1406 = scalar_lea.vmem %s1243, %s1404 [#allocation2]
                %s1407 = scalar_lea.vmem %s1254, %s1405
              $region53: #{shared_encoder_forward.3} parent=47 // loop_footer
                %s1267 = sadd.s32 %s1265, 1
              $region54: #{shared_encoder_forward.3} parent=47 // loop_footer_branch
                %1264 = sbr.rel target = $region50
              $region55: #{shared_encoder_forward.3} parent=47 // loop_exit
                _
              %s1408 = sshrl.u32 %s1250, 6
              %s1409 = sand.u32 %s1250, 63
              %s1410 = smul.u32 %s1408, 64
              %s1411 = smul.u32 4, %s1410
              %s1412 = scalar_lea.vmem %s1243, %s1411 [#allocation2]
              %s1413 = smul.u32 4, %s1410
              %s1414 = scalar_lea.vmem %s1254, %s1413
              // While loop
              $region56: #{shared_encoder_forward.3} parent=47 // loop_pre_header
                _
              $region57: #{shared_encoder_forward.3} parent=47 // loop_header
                %s1416 = sphi 0, %s1418
                %p1417 = scmp.ge.s32.totalorder %s1416, %s1409
                %s1421 = sphi 0, %s1428
                %s1422 = sphi %s1412, %s1431
                %s1423 = sphi %s1414, %s1432
              $region58: #{shared_encoder_forward.3} parent=47 // loop_header_branch
                %1420 = sbr.rel (%p1417) target = $region62
              $region59: #{shared_encoder_forward.3} parent=47 // loop_body
                %v1424 = vld [vmem:[%s1422] sm:$0xf]
                %1425 = vst [vmem:[%s1423] sm:$0xf] %v1424
                %s1426 = sadd.s32 1, %s1421
                %p1427 = scmp.ge.s32.totalorder %s1426, %s1409
                %s1428 = scalar_select %p1427, 0, %s1426
                %s1429 = smul.u32 %s1428, 4
                %s1430 = smul.u32 %s1428, 4
                %s1431 = scalar_lea.vmem %s1412, %s1429 [#allocation2]
                %s1432 = scalar_lea.vmem %s1414, %s1430
              $region60: #{shared_encoder_forward.3} parent=47 // loop_footer
                %s1418 = sadd.s32 %s1416, 1
              $region61: #{shared_encoder_forward.3} parent=47 // loop_footer_branch
                %1415 = sbr.rel target = $region57
              $region62: #{shared_encoder_forward.3} parent=47 // loop_exit
                _
            $region48: #{shared_encoder_forward.3} parent=39 // pred_fallthru
              _
          $region40: #{shared_encoder_forward.3} parent=35 // pred_fallthru
            _
          %1606 = vnop
        $region36: #{shared_encoder_forward.3} parent=31 // pred_fallthru
          _
      $region32: #{shared_encoder_forward.3} parent=5 // pred_fallthru
        _
      %p1607 = scmp.le.s32.totalorder 2, %s9
      // Predicated region
      $region81: #{shared_encoder_forward.3} parent=5 // pred_check
        %p1608 = pneg %p1607
      $region82: #{shared_encoder_forward.3} parent=5 // pred_check_branch
        %1610 = sbr.rel (%p1608) target = $region84
      $region83: #{shared_encoder_forward.3} parent=5 // pred_region
        %s1611 = ssub.s32 %s9, 2
        // Predicated region
        $region85: #{shared_encoder_forward.3} parent=83 // pred_check
          %p1612 = pneg %p106
        $region86: #{shared_encoder_forward.3} parent=83 // pred_check_branch
          %1614 = sbr.rel (%p1612) target = $region88
        $region87: #{shared_encoder_forward.3} parent=83 // pred_region
          %s1615 = sand.u32 %s91, 1
          %s1616 = sand.u32 %s91, 1
          %s1617 = smul.addr %s1616, 256
          %s1618 = scalar_lea.vmem [#allocation2], %s1617
        $region88: #{shared_encoder_forward.3} parent=83 // pred_fallthru
          _
      $region84: #{shared_encoder_forward.3} parent=5 // pred_fallthru
        _
    $region6: #{shared_encoder_forward.3} parent=1 // loop_footer
      %s13 = sadd.s32 1, %s9
    $region7: #{shared_encoder_forward.3} parent=1 // loop_footer_branch
      %8 = sbr.rel target = $region3
    $region8: #{shared_encoder_forward.3} parent=1 // loop_exit
      _

// kernel: shared_encoder_forward.5
$region0: #{shared_encoder_forward.5}
  #allocation0 [shape = 'u32[]', space=smem, size = 0x4, offset = 0x4, fixed_abs, tag = 'smem constant byte address 0x4 - core index']
  #allocation1 [shape = 'u32[144,128]{1,0:T(1,128)}', space=vmem, size = 0x12000, scoped, tag = 'internal scratch']
  %s0 = inlined_call_operand.vmem [shape: bf16[2,1024], index: 0, kind: input, shape index: {}]
  %s1 = inlined_call_operand.vmem [shape: s8[1024,3072], index: 1, kind: input, shape index: {}]
  %s2 = inlined_call_operand.vmem [shape: f32[1,3072], index: 2, kind: input, shape index: {}]
  %s3 = inlined_call_operand.vmem [shape: f32[1,3072], index: 3, kind: input, shape index: {}]
  %s4 = inlined_call_operand.hbm [shape: f32[2,3072], index: 4, kind: output, shape index: {}]
  %s5 = sld [smem:[#allocation0]]
  $region72: #{shared_encoder_forward.5} parent=0
    _
  %s7 = ssub.s32 1, %s5
  %s8 = scalar_select 0, %s7, %s5
  $region1: #{shared_encoder_forward.5} parent=0
    #allocation2 [shape = 'u8[1572864]{0}', space=vmem, size = 0x180000, scoped, tag = 'input window, operand 1']
    #allocation3 [shape = 'u8[12288]{0}', space=vmem, size = 0x3000, scoped, tag = 'output window, operand 0']
    #allocation4 [shape = 's32[2]{0}', space=sflag, size = 0x8, scoped, tag = 'scoped memory for shared_encoder_forward.5']
    %9 = vsyncpa [#allocation4], 0
    %s10 = scalar_lea.sflag [#allocation4], 1
    %11 = vsyncpa %s10, 0
    loop: start=0, step=1, limit=6
    $region2: #{shared_encoder_forward.5} parent=1 // loop_pre_header
      _
    $region3: #{shared_encoder_forward.5} parent=1 // loop_header
      %s13 = sphi 0, %s17
      %p14 = scmp.ge.s32.totalorder %s13, 6
      %s21 = sphi 0, %s21
      %s23 = sphi 0, %s21
      %s24 = sphi 0, %s23
      %s38 = sphi 0, %s24
      %s44 = sphi 0, %s46
      %s47 = sphi 0, %s44
      %s48 = sphi 0, %s47
      %s64 = sphi 0, %s48
      %s70 = sphi 0, %s72
      %s73 = sphi 0, %s70
      %s74 = sphi 0, %s73
      %s90 = sphi 0, %s74
      %s96 = sphi 0, %s98
      %s99 = sphi 0, %s96
      %s100 = sphi 0, %s99
      %s116 = sphi 0, %s100
      %s122 = sphi 0, %s124
      %s125 = sphi 0, %s122
      %s126 = sphi 0, %s125
      %s142 = sphi 0, %s126
    $region4: #{shared_encoder_forward.5} parent=1 // loop_header_branch
      %16 = sbr.rel (%p14) target = $region8
    $region5: #{shared_encoder_forward.5} parent=1 // loop_body
      %s18 = ssub.s32 %s13, 1
      %s19 = ssub.s32 %s13, 2
      %s20 = sadd.s32 %s13, 1
      %s22 = sadd.s32 %s21, 1
      %p25 = scmp.eq.s32.totalorder %s13, 3
      %p26 = scmp.ne.s32.totalorder %s21, %s23
      %p27 = scmp.eq.s32.totalorder %s13, 0
      %p28 = por %p26, %p27
      %p29 = scmp.ne.s32.totalorder %s21, %s23
      %p30 = scmp.eq.s32.totalorder %s18, 3
      %p31 = por %p29, %p30
      %p32 = scmp.ne.s32.totalorder %s23, %s24
      %p33 = scmp.eq.s32.totalorder %s18, 0
      %p34 = por %p32, %p33
      %p35 = scmp.ne.s32.totalorder %s23, %s24
      %p36 = scmp.eq.s32.totalorder %s19, 3
      %p37 = por %p35, %p36
      %p39 = scmp.ne.s32.totalorder %s24, %s38
      %p40 = scmp.eq.s32.totalorder %s19, 0
      %p41 = por %p39, %p40
      %s42 = ssub.s32 %s13, %s20
      %p43 = scmp.eq.s32.totalorder %s42, 0
      %s45 = sadd.s32 %s44, 1
      %s46 = scalar_select %p43, %s44, %s45
      %p49 = pneg %p43
      %p50 = scmp.eq.s32.totalorder %s13, 3
      %p51 = por %p49, %p50
      %p52 = scmp.ne.s32.totalorder %s44, %s47
      %p53 = scmp.eq.s32.totalorder %s13, 0
      %p54 = por %p52, %p53
      %p55 = scmp.ne.s32.totalorder %s44, %s47
      %p56 = scmp.eq.s32.totalorder %s18, 3
      %p57 = por %p55, %p56
      %p58 = scmp.ne.s32.totalorder %s47, %s48
      %p59 = scmp.eq.s32.totalorder %s18, 0
      %p60 = por %p58, %p59
      %p61 = scmp.ne.s32.totalorder %s47, %s48
      %p62 = scmp.eq.s32.totalorder %s19, 3
      %p63 = por %p61, %p62
      %p65 = scmp.ne.s32.totalorder %s48, %s64
      %p66 = scmp.eq.s32.totalorder %s19, 0
      %p67 = por %p65, %p66
      %s68 = ssub.s32 %s13, %s20
      %p69 = scmp.eq.s32.totalorder %s68, 0
      %s71 = sadd.s32 %s70, 1
      %s72 = scalar_select %p69, %s70, %s71
      %p75 = pneg %p69
      %p76 = scmp.eq.s32.totalorder %s13, 3
      %p77 = por %p75, %p76
      %p78 = scmp.ne.s32.totalorder %s70, %s73
      %p79 = scmp.eq.s32.totalorder %s13, 0
      %p80 = por %p78, %p79
      %p81 = scmp.ne.s32.totalorder %s70, %s73
      %p82 = scmp.eq.s32.totalorder %s18, 3
      %p83 = por %p81, %p82
      %p84 = scmp.ne.s32.totalorder %s73, %s74
      %p85 = scmp.eq.s32.totalorder %s18, 0
      %p86 = por %p84, %p85
      %p87 = scmp.ne.s32.totalorder %s73, %s74
      %p88 = scmp.eq.s32.totalorder %s19, 3
      %p89 = por %p87, %p88
      %p91 = scmp.ne.s32.totalorder %s74, %s90
      %p92 = scmp.eq.s32.totalorder %s19, 0
      %p93 = por %p91, %p92
      %s94 = ssub.s32 %s13, %s20
      %p95 = scmp.eq.s32.totalorder %s94, 0
      %s97 = sadd.s32 %s96, 1
      %s98 = scalar_select %p95, %s96, %s97
      %p101 = pneg %p95
      %p102 = scmp.eq.s32.totalorder %s13, 3
      %p103 = por %p101, %p102
      %p104 = scmp.ne.s32.totalorder %s96, %s99
      %p105 = scmp.eq.s32.totalorder %s13, 0
      %p106 = por %p104, %p105
      %p107 = scmp.ne.s32.totalorder %s96, %s99
      %p108 = scmp.eq.s32.totalorder %s18, 3
      %p109 = por %p107, %p108
      %p110 = scmp.ne.s32.totalorder %s99, %s100
      %p111 = scmp.eq.s32.totalorder %s18, 0
      %p112 = por %p110, %p111
      %p113 = scmp.ne.s32.totalorder %s99, %s100
      %p114 = scmp.eq.s32.totalorder %s19, 3
      %p115 = por %p113, %p114
      %p117 = scmp.ne.s32.totalorder %s100, %s116
      %p118 = scmp.eq.s32.totalorder %s19, 0
      %p119 = por %p117, %p118
      %s120 = ssub.s32 %s13, %s20
      %p121 = scmp.eq.s32.totalorder %s120, 0
      %s123 = sadd.s32 %s122, 1
      %s124 = scalar_select %p121, %s122, %s123
      %p127 = pneg %p121
      %p128 = scmp.eq.s32.totalorder %s13, 3
      %p129 = por %p127, %p128
      %p130 = scmp.ne.s32.totalorder %s122, %s125
      %p131 = scmp.eq.s32.totalorder %s13, 0
      %p132 = por %p130, %p131
      %p133 = scmp.ne.s32.totalorder %s122, %s125
      %p134 = scmp.eq.s32.totalorder %s18, 3
      %p135 = por %p133, %p134
      %p136 = scmp.ne.s32.totalorder %s125, %s126
      %p137 = scmp.eq.s32.totalorder %s18, 0
      %p138 = por %p136, %p137
      %p139 = scmp.ne.s32.totalorder %s125, %s126
      %p140 = scmp.eq.s32.totalorder %s19, 3
      %p141 = por %p139, %p140
      %p143 = scmp.ne.s32.totalorder %s126, %s142
      %p144 = scmp.eq.s32.totalorder %s19, 0
      %p145 = por %p143, %p144
      %p146 = scmp.le.s32.totalorder 1, %s13
      %p147 = scmp.lt.s32.totalorder %s13, 5
      %p148 = pnand %p146, %p147
      %p149 = pneg %p148
      // Predicated region
      $region9: #{shared_encoder_forward.5} parent=5 // pred_check
        _
      $region10: #{shared_encoder_forward.5} parent=5 // pred_check_branch
        %151 = sbr.rel (%p148) target = $region12
      $region11: #{shared_encoder_forward.5} parent=5 // pred_region
        %s152 = ssub.s32 %s13, 1
        // Predicated region
        $region13: #{shared_encoder_forward.5} parent=11 // pred_check
          %p153 = pneg %p34
        $region14: #{shared_encoder_forward.5} parent=11 // pred_check_branch
          %155 = sbr.rel (%p153) target = $region16
        $region15: #{shared_encoder_forward.5} parent=11 // pred_region
          _
        $region16: #{shared_encoder_forward.5} parent=11 // pred_fallthru
          _
      $region12: #{shared_encoder_forward.5} parent=5 // pred_fallthru
        _
      %p156 = scmp.lt.s32.totalorder %s13, 4
      // Predicated region
      $region17: #{shared_encoder_forward.5} parent=5 // pred_check
        %p157 = pneg %p156
      $region18: #{shared_encoder_forward.5} parent=5 // pred_check_branch
        %159 = sbr.rel (%p157) target = $region20
      $region19: #{shared_encoder_forward.5} parent=5 // pred_region
        // Predicated region
        $region21: #{shared_encoder_forward.5} parent=19 // pred_check
          %p160 = pneg %p54
        $region22: #{shared_encoder_forward.5} parent=19 // pred_check_branch
          %162 = sbr.rel (%p160) target = $region24
        $region23: #{shared_encoder_forward.5} parent=19 // pred_region
          %s163 = sand.u32 %s44, 1
          %s164 = sand.u32 %s44, 1
          %s165 = smul.addr %s164, 1536
          %s166 = scalar_lea.vmem [#allocation2], %s165
          %s167 = smul.u32 6, %s13
          %s168 = smul.addr %s167, 8
          %s169 = scalar_lea.vmem %s1, %s168
          // Predicated region
          $region25: #{shared_encoder_forward.5} parent=23 // pred_check
            _
          $region26: #{shared_encoder_forward.5} parent=23 // pred_check_branch
            %171 = sbr.rel (0) target = $region28
          $region27: #{shared_encoder_forward.5} parent=23 // pred_region
            // Predicated region
            $region29: #{shared_encoder_forward.5} parent=27 // pred_check
              _
            $region30: #{shared_encoder_forward.5} parent=27 // pred_check_branch
              %173 = sbr.rel (0) target = $region32
            $region31: #{shared_encoder_forward.5} parent=27 // pred_region
              loop: start=0, step=1, limit=1
              $region33: #{shared_encoder_forward.5} parent=31 // loop_pre_header
                _
              $region34: #{shared_encoder_forward.5} parent=31 // loop_header
                %s175 = sphi 0, %s179
                %p176 = scmp.ge.s32.totalorder %s175, 1
                %s180 = sphi %s169, %s169
                %s181 = sphi %s166, %s166
              $region35: #{shared_encoder_forward.5} parent=31 // loop_header_branch
                %178 = sbr.rel (%p176) target = $region39
              $region36: #{shared_encoder_forward.5} parent=31 // loop_body
                %v182 = vld [vmem:[%s180] sm:$0xff]
                %183 = vst [vmem:[%s181] sm:$0xff] %v182
                %v184 = vld [vmem:[%s180 + $0x8] sm:$0xff]
                %185 = vst [vmem:[%s181 + $0x8] sm:$0xff] %v184
                %v186 = vld [vmem:[%s180 + $0x10] sm:$0xff]
                %187 = vst [vmem:[%s181 + $0x10] sm:$0xff] %v186
                %v188 = vld [vmem:[%s180 + $0x18] sm:$0xff]
                %189 = vst [vmem:[%s181 + $0x18] sm:$0xff] %v188
                %v190 = vld [vmem:[%s180 + $0x20] sm:$0xff]
                %191 = vst [vmem:[%s181 + $0x20] sm:$0xff] %v190
                %v192 = vld [vmem:[%s180 + $0x28] sm:$0xff]
                %193 = vst [vmem:[%s181 + $0x28] sm:$0xff] %v192
                %v194 = vld [vmem:[%s180 + $0xc0] sm:$0xff]
                %195 = vst [vmem:[%s181 + $0x30] sm:$0xff] %v194
                %v196 = vld [vmem:[%s180 + $0xc8] sm:$0xff]
                %197 = vst [vmem:[%s181 + $0x38] sm:$0xff] %v196
                %v198 = vld [vmem:[%s180 + $0xd0] sm:$0xff]
                %199 = vst [vmem:[%s181 + $0x40] sm:$0xff] %v198
                %v200 = vld [vmem:[%s180 + $0xd8] sm:$0xff]
                %201 = vst [vmem:[%s181 + $0x48] sm:$0xff] %v200
                %v202 = vld [vmem:[%s180 + $0xe0] sm:$0xff]
                %203 = vst [vmem:[%s181 + $0x50] sm:$0xff] %v202
                %v204 = vld [vmem:[%s180 + $0xe8] sm:$0xff]
                %205 = vst [vmem:[%s181 + $0x58] sm:$0xff] %v204
                %v206 = vld [vmem:[%s180 + $0x180] sm:$0xff]
                %207 = vst [vmem:[%s181 + $0x60] sm:$0xff] %v206
                %v208 = vld [vmem:[%s180 + $0x188] sm:$0xff]
                %209 = vst [vmem:[%s181 + $0x68] sm:$0xff] %v208
                %v210 = vld [vmem:[%s180 + $0x190] sm:$0xff]
                %211 = vst [vmem:[%s181 + $0x70] sm:$0xff] %v210
                %v212 = vld [vmem:[%s180 + $0x198] sm:$0xff]
                %213 = vst [vmem:[%s181 + $0x78] sm:$0xff] %v212
                %v214 = vld [vmem:[%s180 + $0x1a0] sm:$0xff]
                %215 = vst [vmem:[%s181 + $0x80] sm:$0xff] %v214
                %v216 = vld [vmem:[%s180 + $0x1a8] sm:$0xff]
                %217 = vst [vmem:[%s181 + $0x88] sm:$0xff] %v216
                %v218 = vld [vmem:[%s180 + $0x240] sm:$0xff]
                %219 = vst [vmem:[%s181 + $0x90] sm:$0xff] %v218
                %v220 = vld [vmem:[%s180 + $0x248] sm:$0xff]
                %221 = vst [vmem:[%s181 + $0x98] sm:$0xff] %v220
                %v222 = vld [vmem:[%s180 + $0x250] sm:$0xff]
                %223 = vst [vmem:[%s181 + $0xa0] sm:$0xff] %v222
                %v224 = vld [vmem:[%s180 + $0x258] sm:$0xff]
                %225 = vst [vmem:[%s181 + $0xa8] sm:$0xff] %v224
                %v226 = vld [vmem:[%s180 + $0x260] sm:$0xff]
                %227 = vst [vmem:[%s181 + $0xb0] sm:$0xff] %v226
                %v228 = vld [vmem:[%s180 + $0x268] sm:$0xff]
                %229 = vst [vmem:[%s181 + $0xb8] sm:$0xff] %v228
                %v230 = vld [vmem:[%s180 + $0x300] sm:$0xff]
                %231 = vst [vmem:[%s181 + $0xc0] sm:$0xff] %v230
                %v232 = vld [vmem:[%s180 + $0x308] sm:$0xff]
                %233 = vst [vmem:[%s181 + $0xc8] sm:$0xff] %v232
                %v234 = vld [vmem:[%s180 + $0x310] sm:$0xff]
                %235 = vst [vmem:[%s181 + $0xd0] sm:$0xff] %v234
                %v236 = vld [vmem:[%s180 + $0x318] sm:$0xff]
                %237 = vst [vmem:[%s181 + $0xd8] sm:$0xff] %v236
                %v238 = vld [vmem:[%s180 + $0x320] sm:$0xff]
                %239 = vst [vmem:[%s181 + $0xe0] sm:$0xff] %v238
                %v240 = vld [vmem:[%s180 + $0x328] sm:$0xff]
                %241 = vst [vmem:[%s181 + $0xe8] sm:$0xff] %v240
                %v242 = vld [vmem:[%s180 + $0x3c0] sm:$0xff]
                %243 = vst [vmem:[%s181 + $0xf0] sm:$0xff] %v242
                %v244 = vld [vmem:[%s180 + $0x3c8] sm:$0xff]
                %245 = vst [vmem:[%s181 + $0xf8] sm:$0xff] %v244
                %v246 = vld [vmem:[%s180 + $0x3d0] sm:$0xff]
                %247 = vst [vmem:[%s181 + $0x100] sm:$0xff] %v246
                %v248 = vld [vmem:[%s180 + $0x3d8] sm:$0xff]
                %249 = vst [vmem:[%s181 + $0x108] sm:$0xff] %v248
                %v250 = vld [vmem:[%s180 + $0x3e0] sm:$0xff]
                %251 = vst [vmem:[%s181 + $0x110] sm:$0xff] %v250
                %v252 = vld [vmem:[%s180 + $0x3e8] sm:$0xff]
                %253 = vst [vmem:[%s181 + $0x118] sm:$0xff] %v252
                %v254 = vld [vmem:[%s180 + $0x480] sm:$0xff]
                %255 = vst [vmem:[%s181 + $0x120] sm:$0xff] %v254
                %v256 = vld [vmem:[%s180 + $0x488] sm:$0xff]
                %257 = vst [vmem:[%s181 + $0x128] sm:$0xff] %v256
                %v258 = vld [vmem:[%s180 + $0x490] sm:$0xff]
                %259 = vst [vmem:[%s181 + $0x130] sm:$0xff] %v258
                %v260 = vld [vmem:[%s180 + $0x498] sm:$0xff]
                %261 = vst [vmem:[%s181 + $0x138] sm:$0xff] %v260
                %v262 = vld [vmem:[%s180 + $0x4a0] sm:$0xff]
                %263 = vst [vmem:[%s181 + $0x140] sm:$0xff] %v262
                %v264 = vld [vmem:[%s180 + $0x4a8] sm:$0xff]
                %265 = vst [vmem:[%s181 + $0x148] sm:$0xff] %v264
                %v266 = vld [vmem:[%s180 + $0x540] sm:$0xff]
                %267 = vst [vmem:[%s181 + $0x150] sm:$0xff] %v266
                %v268 = vld [vmem:[%s180 + $0x548] sm:$0xff]
                %269 = vst [vmem:[%s181 + $0x158] sm:$0xff] %v268
                %v270 = vld [vmem:[%s180 + $0x550] sm:$0xff]
                %271 = vst [vmem:[%s181 + $0x160] sm:$0xff] %v270
                %v272 = vld [vmem:[%s180 + $0x558] sm:$0xff]
                %273 = vst [vmem:[%s181 + $0x168] sm:$0xff] %v272
                %v274 = vld [vmem:[%s180 + $0x560] sm:$0xff]
                %275 = vst [vmem:[%s181 + $0x170] sm:$0xff] %v274
                %v276 = vld [vmem:[%s180 + $0x568] sm:$0xff]
                %277 = vst [vmem:[%s181 + $0x178] sm:$0xff] %v276
                %v278 = vld [vmem:[%s180 + $0x600] sm:$0xff]
                %279 = vst [vmem:[%s181 + $0x180] sm:$0xff] %v278
                %v280 = vld [vmem:[%s180 + $0x608] sm:$0xff]
                %281 = vst [vmem:[%s181 + $0x188] sm:$0xff] %v280
                %v282 = vld [vmem:[%s180 + $0x610] sm:$0xff]
                %283 = vst [vmem:[%s181 + $0x190] sm:$0xff] %v282
                %v284 = vld [vmem:[%s180 + $0x618] sm:$0xff]
                %285 = vst [vmem:[%s181 + $0x198] sm:$0xff] %v284
                %v286 = vld [vmem:[%s180 + $0x620] sm:$0xff]
                %287 = vst [vmem:[%s181 + $0x1a0] sm:$0xff] %v286
                %v288 = vld [vmem:[%s180 + $0x628] sm:$0xff]
                %289 = vst [vmem:[%s181 + $0x1a8] sm:$0xff] %v288
                %v290 = vld [vmem:[%s180 + $0x6c0] sm:$0xff]
                %291 = vst [vmem:[%s181 + $0x1b0] sm:$0xff] %v290
                %v292 = vld [vmem:[%s180 + $0x6c8] sm:$0xff]
                %293 = vst [vmem:[%s181 + $0x1b8] sm:$0xff] %v292
                %v294 = vld [vmem:[%s180 + $0x6d0] sm:$0xff]
                %295 = vst [vmem:[%s181 + $0x1c0] sm:$0xff] %v294
                %v296 = vld [vmem:[%s180 + $0x6d8] sm:$0xff]
                %297 = vst [vmem:[%s181 + $0x1c8] sm:$0xff] %v296
                %v298 = vld [vmem:[%s180 + $0x6e0] sm:$0xff]
                %299 = vst [vmem:[%s181 + $0x1d0] sm:$0xff] %v298
                %v300 = vld [vmem:[%s180 + $0x6e8] sm:$0xff]
                %301 = vst [vmem:[%s181 + $0x1d8] sm:$0xff] %v300
                %v302 = vld [vmem:[%s180 + $0x780] sm:$0xff]
                %303 = vst [vmem:[%s181 + $0x1e0] sm:$0xff] %v302
                %v304 = vld [vmem:[%s180 + $0x788] sm:$0xff]
                %305 = vst [vmem:[%s181 + $0x1e8] sm:$0xff] %v304
                %v306 = vld [vmem:[%s180 + $0x790] sm:$0xff]
                %307 = vst [vmem:[%s181 + $0x1f0] sm:$0xff] %v306
                %v308 = vld [vmem:[%s180 + $0x798] sm:$0xff]
                %309 = vst [vmem:[%s181 + $0x1f8] sm:$0xff] %v308
                %v310 = vld [vmem:[%s180 + $0x7a0] sm:$0xff]
                %311 = vst [vmem:[%s181 + $0x200] sm:$0xff] %v310
                %v312 = vld [vmem:[%s180 + $0x7a8] sm:$0xff]
                %313 = vst [vmem:[%s181 + $0x208] sm:$0xff] %v312
                %v314 = vld [vmem:[%s180 + $0x840] sm:$0xff]
                %315 = vst [vmem:[%s181 + $0x210] sm:$0xff] %v314
                %v316 = vld [vmem:[%s180 + $0x848] sm:$0xff]
                %317 = vst [vmem:[%s181 + $0x218] sm:$0xff] %v316
                %v318 = vld [vmem:[%s180 + $0x850] sm:$0xff]
                %319 = vst [vmem:[%s181 + $0x220] sm:$0xff] %v318
                %v320 = vld [vmem:[%s180 + $0x858] sm:$0xff]
                %321 = vst [vmem:[%s181 + $0x228] sm:$0xff] %v320
                %v322 = vld [vmem:[%s180 + $0x860] sm:$0xff]
                %323 = vst [vmem:[%s181 + $0x230] sm:$0xff] %v322
                %v324 = vld [vmem:[%s180 + $0x868] sm:$0xff]
                %325 = vst [vmem:[%s181 + $0x238] sm:$0xff] %v324
                %v326 = vld [vmem:[%s180 + $0x900] sm:$0xff]
                %327 = vst [vmem:[%s181 + $0x240] sm:$0xff] %v326
                %v328 = vld [vmem:[%s180 + $0x908] sm:$0xff]
                %329 = vst [vmem:[%s181 + $0x248] sm:$0xff] %v328
                %v330 = vld [vmem:[%s180 + $0x910] sm:$0xff]
                %331 = vst [vmem:[%s181 + $0x250] sm:$0xff] %v330
                %v332 = vld [vmem:[%s180 + $0x918] sm:$0xff]
                %333 = vst [vmem:[%s181 + $0x258] sm:$0xff] %v332
                %v334 = vld [vmem:[%s180 + $0x920] sm:$0xff]
                %335 = vst [vmem:[%s181 + $0x260] sm:$0xff] %v334
                %v336 = vld [vmem:[%s180 + $0x928] sm:$0xff]
                %337 = vst [vmem:[%s181 + $0x268] sm:$0xff] %v336
                %v338 = vld [vmem:[%s180 + $0x9c0] sm:$0xff]
                %339 = vst [vmem:[%s181 + $0x270] sm:$0xff] %v338
                %v340 = vld [vmem:[%s180 + $0x9c8] sm:$0xff]
                %341 = vst [vmem:[%s181 + $0x278] sm:$0xff] %v340
                %v342 = vld [vmem:[%s180 + $0x9d0] sm:$0xff]
                %343 = vst [vmem:[%s181 + $0x280] sm:$0xff] %v342
                %v344 = vld [vmem:[%s180 + $0x9d8] sm:$0xff]
                %345 = vst [vmem:[%s181 + $0x288] sm:$0xff] %v344
                %v346 = vld [vmem:[%s180 + $0x9e0] sm:$0xff]
                %347 = vst [vmem:[%s181 + $0x290] sm:$0xff] %v346
                %v348 = vld [vmem:[%s180 + $0x9e8] sm:$0xff]
                %349 = vst [vmem:[%s181 + $0x298] sm:$0xff] %v348
                %v350 = vld [vmem:[%s180 + $0xa80] sm:$0xff]
                %351 = vst [vmem:[%s181 + $0x2a0] sm:$0xff] %v350
                %v352 = vld [vmem:[%s180 + $0xa88] sm:$0xff]
                %353 = vst [vmem:[%s181 + $0x2a8] sm:$0xff] %v352
                %v354 = vld [vmem:[%s180 + $0xa90] sm:$0xff]
                %355 = vst [vmem:[%s181 + $0x2b0] sm:$0xff] %v354
                %v356 = vld [vmem:[%s180 + $0xa98] sm:$0xff]
                %357 = vst [vmem:[%s181 + $0x2b8] sm:$0xff] %v356
                %v358 = vld [vmem:[%s180 + $0xaa0] sm:$0xff]
                %359 = vst [vmem:[%s181 + $0x2c0] sm:$0xff] %v358
                %v360 = vld [vmem:[%s180 + $0xaa8] sm:$0xff]
                %361 = vst [vmem:[%s181 + $0x2c8] sm:$0xff] %v360
                %v362 = vld [vmem:[%s180 + $0xb40] sm:$0xff]
                %363 = vst [vmem:[%s181 + $0x2d0] sm:$0xff] %v362
                %v364 = vld [vmem:[%s180 + $0xb48] sm:$0xff]
                %365 = vst [vmem:[%s181 + $0x2d8] sm:$0xff] %v364
                %v366 = vld [vmem:[%s180 + $0xb50] sm:$0xff]
                %367 = vst [vmem:[%s181 + $0x2e0] sm:$0xff] %v366
                %v368 = vld [vmem:[%s180 + $0xb58] sm:$0xff]
                %369 = vst [vmem:[%s181 + $0x2e8] sm:$0xff] %v368
                %v370 = vld [vmem:[%s180 + $0xb60] sm:$0xff]
                %371 = vst [vmem:[%s181 + $0x2f0] sm:$0xff] %v370
                %v372 = vld [vmem:[%s180 + $0xb68] sm:$0xff]
                %373 = vst [vmem:[%s181 + $0x2f8] sm:$0xff] %v372
                %v374 = vld [vmem:[%s180 + $0xc00] sm:$0xff]
                %375 = vst [vmem:[%s181 + $0x300] sm:$0xff] %v374
                %v376 = vld [vmem:[%s180 + $0xc08] sm:$0xff]
                %377 = vst [vmem:[%s181 + $0x308] sm:$0xff] %v376
                %v378 = vld [vmem:[%s180 + $0xc10] sm:$0xff]
                %379 = vst [vmem:[%s181 + $0x310] sm:$0xff] %v378
                %v380 = vld [vmem:[%s180 + $0xc18] sm:$0xff]
                %381 = vst [vmem:[%s181 + $0x318] sm:$0xff] %v380
                %v382 = vld [vmem:[%s180 + $0xc20] sm:$0xff]
                %383 = vst [vmem:[%s181 + $0x320] sm:$0xff] %v382
                %v384 = vld [vmem:[%s180 + $0xc28] sm:$0xff]
                %385 = vst [vmem:[%s181 + $0x328] sm:$0xff] %v384
                %v386 = vld [vmem:[%s180 + $0xcc0] sm:$0xff]
                %387 = vst [vmem:[%s181 + $0x330] sm:$0xff] %v386
                %v388 = vld [vmem:[%s180 + $0xcc8] sm:$0xff]
                %389 = vst [vmem:[%s181 + $0x338] sm:$0xff] %v388
                %v390 = vld [vmem:[%s180 + $0xcd0] sm:$0xff]
                %391 = vst [vmem:[%s181 + $0x340] sm:$0xff] %v390
                %v392 = vld [vmem:[%s180 + $0xcd8] sm:$0xff]
                %393 = vst [vmem:[%s181 + $0x348] sm:$0xff] %v392
                %v394 = vld [vmem:[%s180 + $0xce0] sm:$0xff]
                %395 = vst [vmem:[%s181 + $0x350] sm:$0xff] %v394
                %v396 = vld [vmem:[%s180 + $0xce8] sm:$0xff]
                %397 = vst [vmem:[%s181 + $0x358] sm:$0xff] %v396
                %v398 = vld [vmem:[%s180 + $0xd80] sm:$0xff]
                %399 = vst [vmem:[%s181 + $0x360] sm:$0xff] %v398
                %v400 = vld [vmem:[%s180 + $0xd88] sm:$0xff]
                %401 = vst [vmem:[%s181 + $0x368] sm:$0xff] %v400
                %v402 = vld [vmem:[%s180 + $0xd90] sm:$0xff]
                %403 = vst [vmem:[%s181 + $0x370] sm:$0xff] %v402
                %v404 = vld [vmem:[%s180 + $0xd98] sm:$0xff]
                %405 = vst [vmem:[%s181 + $0x378] sm:$0xff] %v404
                %v406 = vld [vmem:[%s180 + $0xda0] sm:$0xff]
                %407 = vst [vmem:[%s181 + $0x380] sm:$0xff] %v406
                %v408 = vld [vmem:[%s180 + $0xda8] sm:$0xff]
                %409 = vst [vmem:[%s181 + $0x388] sm:$0xff] %v408
                %v410 = vld [vmem:[%s180 + $0xe40] sm:$0xff]
                %411 = vst [vmem:[%s181 + $0x390] sm:$0xff] %v410
                %v412 = vld [vmem:[%s180 + $0xe48] sm:$0xff]
                %413 = vst [vmem:[%s181 + $0x398] sm:$0xff] %v412
                %v414 = vld [vmem:[%s180 + $0xe50] sm:$0xff]
                %415 = vst [vmem:[%s181 + $0x3a0] sm:$0xff] %v414
                %v416 = vld [vmem:[%s180 + $0xe58] sm:$0xff]
                %417 = vst [vmem:[%s181 + $0x3a8] sm:$0xff] %v416
                %v418 = vld [vmem:[%s180 + $0xe60] sm:$0xff]
                %419 = vst [vmem:[%s181 + $0x3b0] sm:$0xff] %v418
                %v420 = vld [vmem:[%s180 + $0xe68] sm:$0xff]
                %421 = vst [vmem:[%s181 + $0x3b8] sm:$0xff] %v420
                %v422 = vld [vmem:[%s180 + $0xf00] sm:$0xff]
                %423 = vst [vmem:[%s181 + $0x3c0] sm:$0xff] %v422
                %v424 = vld [vmem:[%s180 + $0xf08] sm:$0xff]
                %425 = vst [vmem:[%s181 + $0x3c8] sm:$0xff] %v424
                %v426 = vld [vmem:[%s180 + $0xf10] sm:$0xff]
                %427 = vst [vmem:[%s181 + $0x3d0] sm:$0xff] %v426
                %v428 = vld [vmem:[%s180 + $0xf18] sm:$0xff]
                %429 = vst [vmem:[%s181 + $0x3d8] sm:$0xff] %v428
                %v430 = vld [vmem:[%s180 + $0xf20] sm:$0xff]
                %431 = vst [vmem:[%s181 + $0x3e0] sm:$0xff] %v430
                %v432 = vld [vmem:[%s180 + $0xf28] sm:$0xff]
                %433 = vst [vmem:[%s181 + $0x3e8] sm:$0xff] %v432
                %v434 = vld [vmem:[%s180 + $0xfc0] sm:$0xff]
                %435 = vst [vmem:[%s181 + $0x3f0] sm:$0xff] %v434
                %v436 = vld [vmem:[%s180 + $0xfc8] sm:$0xff]
                %437 = vst [vmem:[%s181 + $0x3f8] sm:$0xff] %v436
                %v438 = vld [vmem:[%s180 + $0xfd0] sm:$0xff]
                %439 = vst [vmem:[%s181 + $0x400] sm:$0xff] %v438
                %v440 = vld [vmem:[%s180 + $0xfd8] sm:$0xff]
                %441 = vst [vmem:[%s181 + $0x408] sm:$0xff] %v440
                %v442 = vld [vmem:[%s180 + $0xfe0] sm:$0xff]
                %443 = vst [vmem:[%s181 + $0x410] sm:$0xff] %v442
                %v444 = vld [vmem:[%s180 + $0xfe8] sm:$0xff]
                %445 = vst [vmem:[%s181 + $0x418] sm:$0xff] %v444
                %v446 = vld [vmem:[%s180 + $0x1080] sm:$0xff]
                %447 = vst [vmem:[%s181 + $0x420] sm:$0xff] %v446
                %v448 = vld [vmem:[%s180 + $0x1088] sm:$0xff]
                %449 = vst [vmem:[%s181 + $0x428] sm:$0xff] %v448
                %v450 = vld [vmem:[%s180 + $0x1090] sm:$0xff]
                %451 = vst [vmem:[%s181 + $0x430] sm:$0xff] %v450
                %v452 = vld [vmem:[%s180 + $0x1098] sm:$0xff]
                %453 = vst [vmem:[%s181 + $0x438] sm:$0xff] %v452
                %v454 = vld [vmem:[%s180 + $0x10a0] sm:$0xff]
                %455 = vst [vmem:[%s181 + $0x440] sm:$0xff] %v454
                %v456 = vld [vmem:[%s180 + $0x10a8] sm:$0xff]
                %457 = vst [vmem:[%s181 + $0x448] sm:$0xff] %v456
                %v458 = vld [vmem:[%s180 + $0x1140] sm:$0xff]
                %459 = vst [vmem:[%s181 + $0x450] sm:$0xff] %v458
                %v460 = vld [vmem:[%s180 + $0x1148] sm:$0xff]
                %461 = vst [vmem:[%s181 + $0x458] sm:$0xff] %v460
                %v462 = vld [vmem:[%s180 + $0x1150] sm:$0xff]
                %463 = vst [vmem:[%s181 + $0x460] sm:$0xff] %v462
                %v464 = vld [vmem:[%s180 + $0x1158] sm:$0xff]
                %465 = vst [vmem:[%s181 + $0x468] sm:$0xff] %v464
                %v466 = vld [vmem:[%s180 + $0x1160] sm:$0xff]
                %467 = vst [vmem:[%s181 + $0x470] sm:$0xff] %v466
                %v468 = vld [vmem:[%s180 + $0x1168] sm:$0xff]
                %469 = vst [vmem:[%s181 + $0x478] sm:$0xff] %v468
                %v470 = vld [vmem:[%s180 + $0x1200] sm:$0xff]
                %471 = vst [vmem:[%s181 + $0x480] sm:$0xff] %v470
                %v472 = vld [vmem:[%s180 + $0x1208] sm:$0xff]
                %473 = vst [vmem:[%s181 + $0x488] sm:$0xff] %v472
                %v474 = vld [vmem:[%s180 + $0x1210] sm:$0xff]
                %475 = vst [vmem:[%s181 + $0x490] sm:$0xff] %v474
                %v476 = vld [vmem:[%s180 + $0x1218] sm:$0xff]
                %477 = vst [vmem:[%s181 + $0x498] sm:$0xff] %v476
                %v478 = vld [vmem:[%s180 + $0x1220] sm:$0xff]
                %479 = vst [vmem:[%s181 + $0x4a0] sm:$0xff] %v478
                %v480 = vld [vmem:[%s180 + $0x1228] sm:$0xff]
                %481 = vst [vmem:[%s181 + $0x4a8] sm:$0xff] %v480
                %v482 = vld [vmem:[%s180 + $0x12c0] sm:$0xff]
                %483 = vst [vmem:[%s181 + $0x4b0] sm:$0xff] %v482
                %v484 = vld [vmem:[%s180 + $0x12c8] sm:$0xff]
                %485 = vst [vmem:[%s181 + $0x4b8] sm:$0xff] %v484
                %v486 = vld [vmem:[%s180 + $0x12d0] sm:$0xff]
                %487 = vst [vmem:[%s181 + $0x4c0] sm:$0xff] %v486
                %v488 = vld [vmem:[%s180 + $0x12d8] sm:$0xff]
                %489 = vst [vmem:[%s181 + $0x4c8] sm:$0xff] %v488
                %v490 = vld [vmem:[%s180 + $0x12e0] sm:$0xff]
                %491 = vst [vmem:[%s181 + $0x4d0] sm:$0xff] %v490
                %v492 = vld [vmem:[%s180 + $0x12e8] sm:$0xff]
                %493 = vst [vmem:[%s181 + $0x4d8] sm:$0xff] %v492
                %v494 = vld [vmem:[%s180 + $0x1380] sm:$0xff]
                %495 = vst [vmem:[%s181 + $0x4e0] sm:$0xff] %v494
                %v496 = vld [vmem:[%s180 + $0x1388] sm:$0xff]
                %497 = vst [vmem:[%s181 + $0x4e8] sm:$0xff] %v496
                %v498 = vld [vmem:[%s180 + $0x1390] sm:$0xff]
                %499 = vst [vmem:[%s181 + $0x4f0] sm:$0xff] %v498
                %v500 = vld [vmem:[%s180 + $0x1398] sm:$0xff]
                %501 = vst [vmem:[%s181 + $0x4f8] sm:$0xff] %v500
                %v502 = vld [vmem:[%s180 + $0x13a0] sm:$0xff]
                %503 = vst [vmem:[%s181 + $0x500] sm:$0xff] %v502
                %v504 = vld [vmem:[%s180 + $0x13a8] sm:$0xff]
                %505 = vst [vmem:[%s181 + $0x508] sm:$0xff] %v504
                %v506 = vld [vmem:[%s180 + $0x1440] sm:$0xff]
                %507 = vst [vmem:[%s181 + $0x510] sm:$0xff] %v506
                %v508 = vld [vmem:[%s180 + $0x1448] sm:$0xff]
                %509 = vst [vmem:[%s181 + $0x518] sm:$0xff] %v508
                %v510 = vld [vmem:[%s180 + $0x1450] sm:$0xff]
                %511 = vst [vmem:[%s181 + $0x520] sm:$0xff] %v510
                %v512 = vld [vmem:[%s180 + $0x1458] sm:$0xff]
                %513 = vst [vmem:[%s181 + $0x528] sm:$0xff] %v512
                %v514 = vld [vmem:[%s180 + $0x1460] sm:$0xff]
                %515 = vst [vmem:[%s181 + $0x530] sm:$0xff] %v514
                %v516 = vld [vmem:[%s180 + $0x1468] sm:$0xff]
                %517 = vst [vmem:[%s181 + $0x538] sm:$0xff] %v516
                %v518 = vld [vmem:[%s180 + $0x1500] sm:$0xff]
                %519 = vst [vmem:[%s181 + $0x540] sm:$0xff] %v518
                %v520 = vld [vmem:[%s180 + $0x1508] sm:$0xff]
                %521 = vst [vmem:[%s181 + $0x548] sm:$0xff] %v520
                %v522 = vld [vmem:[%s180 + $0x1510] sm:$0xff]
                %523 = vst [vmem:[%s181 + $0x550] sm:$0xff] %v522
                %v524 = vld [vmem:[%s180 + $0x1518] sm:$0xff]
                %525 = vst [vmem:[%s181 + $0x558] sm:$0xff] %v524
                %v526 = vld [vmem:[%s180 + $0x1520] sm:$0xff]
                %527 = vst [vmem:[%s181 + $0x560] sm:$0xff] %v526
                %v528 = vld [vmem:[%s180 + $0x1528] sm:$0xff]
                %529 = vst [vmem:[%s181 + $0x568] sm:$0xff] %v528
                %v530 = vld [vmem:[%s180 + $0x15c0] sm:$0xff]
                %531 = vst [vmem:[%s181 + $0x570] sm:$0xff] %v530
                %v532 = vld [vmem:[%s180 + $0x15c8] sm:$0xff]
                %533 = vst [vmem:[%s181 + $0x578] sm:$0xff] %v532
                %v534 = vld [vmem:[%s180 + $0x15d0] sm:$0xff]
                %535 = vst [vmem:[%s181 + $0x580] sm:$0xff] %v534
                %v536 = vld [vmem:[%s180 + $0x15d8] sm:$0xff]
                %537 = vst [vmem:[%s181 + $0x588] sm:$0xff] %v536
                %v538 = vld [vmem:[%s180 + $0x15e0] sm:$0xff]
                %539 = vst [vmem:[%s181 + $0x590] sm:$0xff] %v538
                %v540 = vld [vmem:[%s180 + $0x15e8] sm:$0xff]
                %541 = vst [vmem:[%s181 + $0x598] sm:$0xff] %v540
                %v542 = vld [vmem:[%s180 + $0x1680] sm:$0xff]
                %543 = vst [vmem:[%s181 + $0x5a0] sm:$0xff] %v542
                %v544 = vld [vmem:[%s180 + $0x1688] sm:$0xff]
                %545 = vst [vmem:[%s181 + $0x5a8] sm:$0xff] %v544
                %v546 = vld [vmem:[%s180 + $0x1690] sm:$0xff]
                %547 = vst [vmem:[%s181 + $0x5b0] sm:$0xff] %v546
                %v548 = vld [vmem:[%s180 + $0x1698] sm:$0xff]
                %549 = vst [vmem:[%s181 + $0x5b8] sm:$0xff] %v548
                %v550 = vld [vmem:[%s180 + $0x16a0] sm:$0xff]
                %551 = vst [vmem:[%s181 + $0x5c0] sm:$0xff] %v550
                %v552 = vld [vmem:[%s180 + $0x16a8] sm:$0xff]
                %553 = vst [vmem:[%s181 + $0x5c8] sm:$0xff] %v552
                %v554 = vld [vmem:[%s180 + $0x1740] sm:$0xff]
                %555 = vst [vmem:[%s181 + $0x5d0] sm:$0xff] %v554
                %v556 = vld [vmem:[%s180 + $0x1748] sm:$0xff]
                %557 = vst [vmem:[%s181 + $0x5d8] sm:$0xff] %v556
                %v558 = vld [vmem:[%s180 + $0x1750] sm:$0xff]
                %559 = vst [vmem:[%s181 + $0x5e0] sm:$0xff] %v558
                %v560 = vld [vmem:[%s180 + $0x1758] sm:$0xff]
                %561 = vst [vmem:[%s181 + $0x5e8] sm:$0xff] %v560
                %v562 = vld [vmem:[%s180 + $0x1760] sm:$0xff]
                %563 = vst [vmem:[%s181 + $0x5f0] sm:$0xff] %v562
                %v564 = vld [vmem:[%s180 + $0x1768] sm:$0xff]
                %565 = vst [vmem:[%s181 + $0x5f8] sm:$0xff] %v564
              $region37: #{shared_encoder_forward.5} parent=31 // loop_footer
                %s179 = sadd.s32 1, %s175
              $region38: #{shared_encoder_forward.5} parent=31 // loop_footer_branch
                %174 = sbr.rel target = $region34
              $region39: #{shared_encoder_forward.5} parent=31 // loop_exit
                _
            $region32: #{shared_encoder_forward.5} parent=27 // pred_fallthru
              _
            // Predicated region
            $region40: #{shared_encoder_forward.5} parent=27 // pred_check
              _
            $region41: #{shared_encoder_forward.5} parent=27 // pred_check_branch
              %567 = sbr.rel target = $region43
            $region42: #{shared_encoder_forward.5} parent=27 // pred_region
              _
            $region43: #{shared_encoder_forward.5} parent=27 // pred_fallthru
              _
          $region28: #{shared_encoder_forward.5} parent=23 // pred_fallthru
            _
          %568 = vnop
        $region24: #{shared_encoder_forward.5} parent=19 // pred_fallthru
          _
        // Predicated region
        $region44: #{shared_encoder_forward.5} parent=19 // pred_check
          %p569 = pneg %p80
        $region45: #{shared_encoder_forward.5} parent=19 // pred_check_branch
          %571 = sbr.rel (%p569) target = $region47
        $region46: #{shared_encoder_forward.5} parent=19 // pred_region
          %s572 = smul.u32 6, %s13
          %p573 = scmp.lt.s32.totalorder %s572, 23
          %s574 = scalar_select %p573, %s572, 23
          %s575 = scalar_lea.vmem %s2, %s574
          %s576 = smul.u32 6, %s13
        $region47: #{shared_encoder_forward.5} parent=19 // pred_fallthru
          _
        // Predicated region
        $region48: #{shared_encoder_forward.5} parent=19 // pred_check
          %p577 = pneg %p106
        $region49: #{shared_encoder_forward.5} parent=19 // pred_check_branch
          %579 = sbr.rel (%p577) target = $region51
        $region50: #{shared_encoder_forward.5} parent=19 // pred_region
          %s580 = smul.u32 6, %s13
          %p581 = scmp.lt.s32.totalorder %s580, 23
          %s582 = scalar_select %p581, %s580, 23
          %s583 = scalar_lea.vmem %s3, %s582
          %s584 = smul.u32 6, %s13
        $region51: #{shared_encoder_forward.5} parent=19 // pred_fallthru
          _
      $region20: #{shared_encoder_forward.5} parent=5 // pred_fallthru
        _
      %p585 = scmp.le.s32.totalorder 1, %s13
      %p586 = scmp.lt.s32.totalorder %s13, 5
      %p587 = pnand %p585, %p586
      %p588 = pneg %p587
      // Predicated region
      $region52: #{shared_encoder_forward.5} parent=5 // pred_check
        _
      $region53: #{shared_encoder_forward.5} parent=5 // pred_check_branch
        %590 = sbr.rel (%p587) target = $region55
      $region54: #{shared_encoder_forward.5} parent=5 // pred_region
        %s591 = ssub.s32 %s13, 1
        %s592 = sand.u32 %s47, 1
        %s593 = sand.u32 %s47, 1
        %s594 = smul.addr %s593, 1536
        %s595 = scalar_lea.vmem [#allocation2], %s594
        // Predicated region
        $region56: #{shared_encoder_forward.5} parent=54 // pred_check
          %p596 = pneg %p60
        $region57: #{shared_encoder_forward.5} parent=54 // pred_check_branch
          %598 = sbr.rel (%p596) target = $region59
        $region58: #{shared_encoder_forward.5} parent=54 // pred_region
          _
        $region59: #{shared_encoder_forward.5} parent=54 // pred_fallthru
          _
        %p599 = pneg %p34
        %p600 = pneg %p31
        %s601 = sand.u32 %s47, 1
        %s602 = sand.u32 %s47, 1
        %s603 = smul.addr %s602, 1536
        %s604 = scalar_lea.vmem [#allocation2], %s603
        %p605 = pneg %p60
        %p606 = pneg %p57
        %s607 = smul.u32 6, %s18
        %p608 = scmp.lt.s32.totalorder %s607, 23
        %s609 = scalar_select %p608, %s607, 23
        %s610 = scalar_lea.vmem %s2, %s609
        %p611 = pneg %p86
        %p612 = pneg %p83
        %s613 = smul.u32 6, %s18
        %p614 = scmp.lt.s32.totalorder %s613, 23
        %s615 = scalar_select %p614, %s613, 23
        %s616 = scalar_lea.vmem %s3, %s615
        %p617 = pneg %p112
        %p618 = pneg %p109
        %p619 = pneg %p138
        %p620 = pneg %p135
        %s621 = sand.u32 %s125, 1
        %s622 = scalar_lea.sflag [#allocation4], %s621
        %s623 = sand.u32 %s125, 1
        %s624 = smul.addr %s623, 12
        %s625 = scalar_lea.vmem [#allocation3], %s624
        %s626 = smul.u32 6, %s18
        %s627 = smul.u32 6, %s18
        %p628 = scmp.lt.s32.totalorder %s627, 23
        %s629 = scalar_select %p628, %s627, 23
        %s630 = scalar_lea.vmem %s2, %s629
        %s631 = smul.u32 6, %s18
        %s632 = smul.u32 6, %s18
        %p633 = scmp.lt.s32.totalorder %s632, 23
        %s634 = scalar_select %p633, %s632, 23
        %s635 = scalar_lea.vmem %s3, %s634
        %s636 = smul.u32 6, %s18
        %s637 = smul.u32 6, %s18
        %v638 = vld [vmem:[%s595] sm:$0xff]
        %v639 = vld [vmem:[%s595 + $0x8] sm:$0xff]
        %v640 = vld [vmem:[%s595 + $0x10] sm:$0xff]
        %v641 = vld [vmem:[%s595 + $0x18] sm:$0xff]
        %v642 = vld [vmem:[%s595 + $0x20] sm:$0xff]
        %v643 = vld [vmem:[%s595 + $0x28] sm:$0xff]
        %v644 = vld [vmem:[%s595 + $0x30] sm:$0xff]
        %v645 = vld [vmem:[%s595 + $0x38] sm:$0xff]
        %v646 = vld [vmem:[%s595 + $0x40] sm:$0xff]
        %v647 = vld [vmem:[%s595 + $0x48] sm:$0xff]
        %v648 = vld [vmem:[%s595 + $0x50] sm:$0xff]
        %v649 = vld [vmem:[%s595 + $0x58] sm:$0xff]
        %v650 = vld [vmem:[%s595 + $0x60] sm:$0xff]
        %v651 = vld [vmem:[%s595 + $0x68] sm:$0xff]
        %v652 = vld [vmem:[%s595 + $0x70] sm:$0xff]
        %v653 = vld [vmem:[%s595 + $0x78] sm:$0xff]
        %v654 = vld [vmem:[%s595 + $0x80] sm:$0xff]
        %v655 = vld [vmem:[%s595 + $0x88] sm:$0xff]
        %v656 = vld [vmem:[%s595 + $0x90] sm:$0xff]
        %v657 = vld [vmem:[%s595 + $0x98] sm:$0xff]
        %v658 = vld [vmem:[%s595 + $0xa0] sm:$0xff]
        %v659 = vld [vmem:[%s595 + $0xa8] sm:$0xff]
        %v660 = vld [vmem:[%s595 + $0xb0] sm:$0xff]
        %v661 = vld [vmem:[%s595 + $0xb8] sm:$0xff]
        %v662 = vld [vmem:[%s595 + $0xc0] sm:$0xff]
        %v663 = vld [vmem:[%s595 + $0xc8] sm:$0xff]
        %v664 = vld [vmem:[%s595 + $0xd0] sm:$0xff]
        %v665 = vld [vmem:[%s595 + $0xd8] sm:$0xff]
        %v666 = vld [vmem:[%s595 + $0xe0] sm:$0xff]
        %v667 = vld [vmem:[%s595 + $0xe8] sm:$0xff]
        %v668 = vld [vmem:[%s595 + $0xf0] sm:$0xff]
        %v669 = vld [vmem:[%s595 + $0xf8] sm:$0xff]
        %v670 = vld [vmem:[%s595 + $0x100] sm:$0xff]
        %v671 = vld [vmem:[%s595 + $0x108] sm:$0xff]
        %v672 = vld [vmem:[%s595 + $0x110] sm:$0xff]
        %v673 = vld [vmem:[%s595 + $0x118] sm:$0xff]
        %v674 = vld [vmem:[%s595 + $0x120] sm:$0xff]
        %v675 = vld [vmem:[%s595 + $0x128] sm:$0xff]
        %v676 = vld [vmem:[%s595 + $0x130] sm:$0xff]
        %v677 = vld [vmem:[%s595 + $0x138] sm:$0xff]
        %v678 = vld [vmem:[%s595 + $0x140] sm:$0xff]
        %v679 = vld [vmem:[%s595 + $0x148] sm:$0xff]
        %v680 = vld [vmem:[%s595 + $0x150] sm:$0xff]
        %v681 = vld [vmem:[%s595 + $0x158] sm:$0xff]
        %v682 = vld [vmem:[%s595 + $0x160] sm:$0xff]
        %v683 = vld [vmem:[%s595 + $0x168] sm:$0xff]
        %v684 = vld [vmem:[%s595 + $0x170] sm:$0xff]
        %v685 = vld [vmem:[%s595 + $0x178] sm:$0xff]
        %v686 = vld [vmem:[%s595 + $0x180] sm:$0xff]
        %v687 = vld [vmem:[%s595 + $0x188] sm:$0xff]
        %v688 = vld [vmem:[%s595 + $0x190] sm:$0xff]
        %v689 = vld [vmem:[%s595 + $0x198] sm:$0xff]
        %v690 = vld [vmem:[%s595 + $0x1a0] sm:$0xff]
        %v691 = vld [vmem:[%s595 + $0x1a8] sm:$0xff]
        %v692 = vld [vmem:[%s595 + $0x1b0] sm:$0xff]
        %v693 = vld [vmem:[%s595 + $0x1b8] sm:$0xff]
        %v694 = vld [vmem:[%s595 + $0x1c0] sm:$0xff]
        %v695 = vld [vmem:[%s595 + $0x1c8] sm:$0xff]
        %v696 = vld [vmem:[%s595 + $0x1d0] sm:$0xff]
        %v697 = vld [vmem:[%s595 + $0x1d8] sm:$0xff]
        %v698 = vld [vmem:[%s595 + $0x1e0] sm:$0xff]
        %v699 = vld [vmem:[%s595 + $0x1e8] sm:$0xff]
        %v700 = vld [vmem:[%s595 + $0x1f0] sm:$0xff]
        %v701 = vld [vmem:[%s595 + $0x1f8] sm:$0xff]
        %v702 = vld [vmem:[%s595 + $0x200] sm:$0xff]
        %v703 = vld [vmem:[%s595 + $0x208] sm:$0xff]
        %v704 = vld [vmem:[%s595 + $0x210] sm:$0xff]
        %v705 = vld [vmem:[%s595 + $0x218] sm:$0xff]
        %v706 = vld [vmem:[%s595 + $0x220] sm:$0xff]
        %v707 = vld [vmem:[%s595 + $0x228] sm:$0xff]
        %v708 = vld [vmem:[%s595 + $0x230] sm:$0xff]
        %v709 = vld [vmem:[%s595 + $0x238] sm:$0xff]
        %v710 = vld [vmem:[%s595 + $0x240] sm:$0xff]
        %v711 = vld [vmem:[%s595 + $0x248] sm:$0xff]
        %v712 = vld [vmem:[%s595 + $0x250] sm:$0xff]
        %v713 = vld [vmem:[%s595 + $0x258] sm:$0xff]
        %v714 = vld [vmem:[%s595 + $0x260] sm:$0xff]
        %v715 = vld [vmem:[%s595 + $0x268] sm:$0xff]
        %v716 = vld [vmem:[%s595 + $0x270] sm:$0xff]
        %v717 = vld [vmem:[%s595 + $0x278] sm:$0xff]
        %v718 = vld [vmem:[%s595 + $0x280] sm:$0xff]
        %v719 = vld [vmem:[%s595 + $0x288] sm:$0xff]
        %v720 = vld [vmem:[%s595 + $0x290] sm:$0xff]
        %v721 = vld [vmem:[%s595 + $0x298] sm:$0xff]
        %v722 = vld [vmem:[%s595 + $0x2a0] sm:$0xff]
        %v723 = vld [vmem:[%s595 + $0x2a8] sm:$0xff]
        %v724 = vld [vmem:[%s595 + $0x2b0] sm:$0xff]
        %v725 = vld [vmem:[%s595 + $0x2b8] sm:$0xff]
        %v726 = vld [vmem:[%s595 + $0x2c0] sm:$0xff]
        %v727 = vld [vmem:[%s595 + $0x2c8] sm:$0xff]
        %v728 = vld [vmem:[%s595 + $0x2d0] sm:$0xff]
        %v729 = vld [vmem:[%s595 + $0x2d8] sm:$0xff]
        %v730 = vld [vmem:[%s595 + $0x2e0] sm:$0xff]
        %v731 = vld [vmem:[%s595 + $0x2e8] sm:$0xff]
        %v732 = vld [vmem:[%s595 + $0x2f0] sm:$0xff]
        %v733 = vld [vmem:[%s595 + $0x2f8] sm:$0xff]
        %v734 = vld [vmem:[%s595 + $0x300] sm:$0xff]
        %v735 = vld [vmem:[%s595 + $0x308] sm:$0xff]
        %v736 = vld [vmem:[%s595 + $0x310] sm:$0xff]
        %v737 = vld [vmem:[%s595 + $0x318] sm:$0xff]
        %v738 = vld [vmem:[%s595 + $0x320] sm:$0xff]
        %v739 = vld [vmem:[%s595 + $0x328] sm:$0xff]
        %v740 = vld [vmem:[%s595 + $0x330] sm:$0xff]
        %v741 = vld [vmem:[%s595 + $0x338] sm:$0xff]
        %v742 = vld [vmem:[%s595 + $0x340] sm:$0xff]
        %v743 = vld [vmem:[%s595 + $0x348] sm:$0xff]
        %v744 = vld [vmem:[%s595 + $0x350] sm:$0xff]
        %v745 = vld [vmem:[%s595 + $0x358] sm:$0xff]
        %v746 = vld [vmem:[%s595 + $0x360] sm:$0xff]
        %v747 = vld [vmem:[%s595 + $0x368] sm:$0xff]
        %v748 = vld [vmem:[%s595 + $0x370] sm:$0xff]
        %v749 = vld [vmem:[%s595 + $0x378] sm:$0xff]
        %v750 = vld [vmem:[%s595 + $0x380] sm:$0xff]
        %v751 = vld [vmem:[%s595 + $0x388] sm:$0xff]
        %v752 = vld [vmem:[%s595 + $0x390] sm:$0xff]
        %v753 = vld [vmem:[%s595 + $0x398] sm:$0xff]
        %v754 = vld [vmem:[%s595 + $0x3a0] sm:$0xff]
        %v755 = vld [vmem:[%s595 + $0x3a8] sm:$0xff]
        %v756 = vld [vmem:[%s595 + $0x3b0] sm:$0xff]
        %v757 = vld [vmem:[%s595 + $0x3b8] sm:$0xff]
        %v758 = vld [vmem:[%s595 + $0x3c0] sm:$0xff]
        %v759 = vld [vmem:[%s595 + $0x3c8] sm:$0xff]
        %v760 = vld [vmem:[%s595 + $0x3d0] sm:$0xff]
        %v761 = vld [vmem:[%s595 + $0x3d8] sm:$0xff]
        %v762 = vld [vmem:[%s595 + $0x3e0] sm:$0xff]
        %v763 = vld [vmem:[%s595 + $0x3e8] sm:$0xff]
        %v764 = vld [vmem:[%s595 + $0x3f0] sm:$0xff]
        %v765 = vld [vmem:[%s595 + $0x3f8] sm:$0xff]
        %v766 = vld [vmem:[%s595 + $0x400] sm:$0xff]
        %v767 = vld [vmem:[%s595 + $0x408] sm:$0xff]
        %v768 = vld [vmem:[%s595 + $0x410] sm:$0xff]
        %v769 = vld [vmem:[%s595 + $0x418] sm:$0xff]
        %v770 = vld [vmem:[%s595 + $0x420] sm:$0xff]
        %v771 = vld [vmem:[%s595 + $0x428] sm:$0xff]
        %v772 = vld [vmem:[%s595 + $0x430] sm:$0xff]
        %v773 = vld [vmem:[%s595 + $0x438] sm:$0xff]
        %v774 = vld [vmem:[%s595 + $0x440] sm:$0xff]
        %v775 = vld [vmem:[%s595 + $0x448] sm:$0xff]
        %v776 = vld [vmem:[%s595 + $0x450] sm:$0xff]
        %v777 = vld [vmem:[%s595 + $0x458] sm:$0xff]
        %v778 = vld [vmem:[%s595 + $0x460] sm:$0xff]
        %v779 = vld [vmem:[%s595 + $0x468] sm:$0xff]
        %v780 = vld [vmem:[%s595 + $0x470] sm:$0xff]
        %v781 = vld [vmem:[%s595 + $0x478] sm:$0xff]
        %v782 = vld [vmem:[%s595 + $0x480] sm:$0xff]
        %v783 = vld [vmem:[%s595 + $0x488] sm:$0xff]
        %v784 = vld [vmem:[%s595 + $0x490] sm:$0xff]
        %v785 = vld [vmem:[%s595 + $0x498] sm:$0xff]
        %v786 = vld [vmem:[%s595 + $0x4a0] sm:$0xff]
        %v787 = vld [vmem:[%s595 + $0x4a8] sm:$0xff]
        %v788 = vld [vmem:[%s595 + $0x4b0] sm:$0xff]
        %v789 = vld [vmem:[%s595 + $0x4b8] sm:$0xff]
        %v790 = vld [vmem:[%s595 + $0x4c0] sm:$0xff]
        %v791 = vld [vmem:[%s595 + $0x4c8] sm:$0xff]
        %v792 = vld [vmem:[%s595 + $0x4d0] sm:$0xff]
        %v793 = vld [vmem:[%s595 + $0x4d8] sm:$0xff]
        %v794 = vld [vmem:[%s595 + $0x4e0] sm:$0xff]
        %v795 = vld [vmem:[%s595 + $0x4e8] sm:$0xff]
        %v796 = vld [vmem:[%s595 + $0x4f0] sm:$0xff]
        %v797 = vld [vmem:[%s595 + $0x4f8] sm:$0xff]
        %v798 = vld [vmem:[%s595 + $0x500] sm:$0xff]
        %v799 = vld [vmem:[%s595 + $0x508] sm:$0xff]
        %v800 = vld [vmem:[%s595 + $0x510] sm:$0xff]
        %v801 = vld [vmem:[%s595 + $0x518] sm:$0xff]
        %v802 = vld [vmem:[%s595 + $0x520] sm:$0xff]
        %v803 = vld [vmem:[%s595 + $0x528] sm:$0xff]
        %v804 = vld [vmem:[%s595 + $0x530] sm:$0xff]
        %v805 = vld [vmem:[%s595 + $0x538] sm:$0xff]
        %v806 = vld [vmem:[%s595 + $0x540] sm:$0xff]
        %v807 = vld [vmem:[%s595 + $0x548] sm:$0xff]
        %v808 = vld [vmem:[%s595 + $0x550] sm:$0xff]
        %v809 = vld [vmem:[%s595 + $0x558] sm:$0xff]
        %v810 = vld [vmem:[%s595 + $0x560] sm:$0xff]
        %v811 = vld [vmem:[%s595 + $0x568] sm:$0xff]
        %v812 = vld [vmem:[%s595 + $0x570] sm:$0xff]
        %v813 = vld [vmem:[%s595 + $0x578] sm:$0xff]
        %v814 = vld [vmem:[%s595 + $0x580] sm:$0xff]
        %v815 = vld [vmem:[%s595 + $0x588] sm:$0xff]
        %v816 = vld [vmem:[%s595 + $0x590] sm:$0xff]
        %v817 = vld [vmem:[%s595 + $0x598] sm:$0xff]
        %v818 = vld [vmem:[%s595 + $0x5a0] sm:$0xff]
        %v819 = vld [vmem:[%s595 + $0x5a8] sm:$0xff]
        %v820 = vld [vmem:[%s595 + $0x5b0] sm:$0xff]
        %v821 = vld [vmem:[%s595 + $0x5b8] sm:$0xff]
        %v822 = vld [vmem:[%s595 + $0x5c0] sm:$0xff]
        %v823 = vld [vmem:[%s595 + $0x5c8] sm:$0xff]
        %v824 = vld [vmem:[%s595 + $0x5d0] sm:$0xff]
        %v825 = vld [vmem:[%s595 + $0x5d8] sm:$0xff]
        %v826 = vld [vmem:[%s595 + $0x5e0] sm:$0xff]
        %v827 = vld [vmem:[%s595 + $0x5e8] sm:$0xff]
        %v828 = vld [vmem:[%s595 + $0x5f0] sm:$0xff]
        %v829 = vld [vmem:[%s595 + $0x5f8] sm:$0xff]
        %v830 = vunpack.c.l.s8.bf16 %v638
        %v831 = vunpack.c.l.s8.bf16 %v639
        %v832 = vunpack.c.l.s8.bf16 %v640
        %v833 = vunpack.c.l.s8.bf16 %v641
        %v834 = vunpack.c.l.s8.bf16 %v642
        %v835 = vunpack.c.l.s8.bf16 %v643
        %v836 = vunpack.c.h.s8.bf16 %v638
        %v837 = vunpack.c.h.s8.bf16 %v639
        %v838 = vunpack.c.h.s8.bf16 %v640
        %v839 = vunpack.c.h.s8.bf16 %v641
        %v840 = vunpack.c.h.s8.bf16 %v642
        %v841 = vunpack.c.h.s8.bf16 %v643
        %v842 = vunpack.c.l.s8.bf16 %v644
        %v843 = vunpack.c.l.s8.bf16 %v645
        %v844 = vunpack.c.l.s8.bf16 %v646
        %v845 = vunpack.c.l.s8.bf16 %v647
        %v846 = vunpack.c.l.s8.bf16 %v648
        %v847 = vunpack.c.l.s8.bf16 %v649
        %v848 = vunpack.c.h.s8.bf16 %v644
        %v849 = vunpack.c.h.s8.bf16 %v645
        %v850 = vunpack.c.h.s8.bf16 %v646
        %v851 = vunpack.c.h.s8.bf16 %v647
        %v852 = vunpack.c.h.s8.bf16 %v648
        %v853 = vunpack.c.h.s8.bf16 %v649
        %v854 = vunpack.c.l.s8.bf16 %v650
        %v855 = vunpack.c.l.s8.bf16 %v651
        %v856 = vunpack.c.l.s8.bf16 %v652
        %v857 = vunpack.c.l.s8.bf16 %v653
        %v858 = vunpack.c.l.s8.bf16 %v654
        %v859 = vunpack.c.l.s8.bf16 %v655
        %v860 = vunpack.c.h.s8.bf16 %v650
        %v861 = vunpack.c.h.s8.bf16 %v651
        %v862 = vunpack.c.h.s8.bf16 %v652
        %v863 = vunpack.c.h.s8.bf16 %v653
        %v864 = vunpack.c.h.s8.bf16 %v654
        %v865 = vunpack.c.h.s8.bf16 %v655
        %v866 = vunpack.c.l.s8.bf16 %v656
        %v867 = vunpack.c.l.s8.bf16 %v657
        %v868 = vunpack.c.l.s8.bf16 %v658
        %v869 = vunpack.c.l.s8.bf16 %v659
        %v870 = vunpack.c.l.s8.bf16 %v660
        %v871 = vunpack.c.l.s8.bf16 %v661
        %v872 = vunpack.c.h.s8.bf16 %v656
        %v873 = vunpack.c.h.s8.bf16 %v657
        %v874 = vunpack.c.h.s8.bf16 %v658
        %v875 = vunpack.c.h.s8.bf16 %v659
        %v876 = vunpack.c.h.s8.bf16 %v660
        %v877 = vunpack.c.h.s8.bf16 %v661
        %v878 = vunpack.c.l.s8.bf16 %v662
        %v879 = vunpack.c.l.s8.bf16 %v663
        %v880 = vunpack.c.l.s8.bf16 %v664
        %v881 = vunpack.c.l.s8.bf16 %v665
        %v882 = vunpack.c.l.s8.bf16 %v666
        %v883 = vunpack.c.l.s8.bf16 %v667
        %v884 = vunpack.c.h.s8.bf16 %v662
        %v885 = vunpack.c.h.s8.bf16 %v663
        %v886 = vunpack.c.h.s8.bf16 %v664
        %v887 = vunpack.c.h.s8.bf16 %v665
        %v888 = vunpack.c.h.s8.bf16 %v666
        %v889 = vunpack.c.h.s8.bf16 %v667
        %v890 = vunpack.c.l.s8.bf16 %v668
        %v891 = vunpack.c.l.s8.bf16 %v669
        %v892 = vunpack.c.l.s8.bf16 %v670
        %v893 = vunpack.c.l.s8.bf16 %v671
        %v894 = vunpack.c.l.s8.bf16 %v672
        %v895 = vunpack.c.l.s8.bf16 %v673
        %v896 = vunpack.c.h.s8.bf16 %v668
        %v897 = vunpack.c.h.s8.bf16 %v669
        %v898 = vunpack.c.h.s8.bf16 %v670
        %v899 = vunpack.c.h.s8.bf16 %v671
        %v900 = vunpack.c.h.s8.bf16 %v672
        %v901 = vunpack.c.h.s8.bf16 %v673
        %v902 = vunpack.c.l.s8.bf16 %v674
        %v903 = vunpack.c.l.s8.bf16 %v675
        %v904 = vunpack.c.l.s8.bf16 %v676
        %v905 = vunpack.c.l.s8.bf16 %v677
        %v906 = vunpack.c.l.s8.bf16 %v678
        %v907 = vunpack.c.l.s8.bf16 %v679
        %v908 = vunpack.c.h.s8.bf16 %v674
        %v909 = vunpack.c.h.s8.bf16 %v675
        %v910 = vunpack.c.h.s8.bf16 %v676
        %v911 = vunpack.c.h.s8.bf16 %v677
        %v912 = vunpack.c.h.s8.bf16 %v678
        %v913 = vunpack.c.h.s8.bf16 %v679
        %v914 = vunpack.c.l.s8.bf16 %v680
        %v915 = vunpack.c.l.s8.bf16 %v681
        %v916 = vunpack.c.l.s8.bf16 %v682
        %v917 = vunpack.c.l.s8.bf16 %v683
        %v918 = vunpack.c.l.s8.bf16 %v684
        %v919 = vunpack.c.l.s8.bf16 %v685
        %v920 = vunpack.c.h.s8.bf16 %v680
        %v921 = vunpack.c.h.s8.bf16 %v681
        %v922 = vunpack.c.h.s8.bf16 %v682
        %v923 = vunpack.c.h.s8.bf16 %v683
        %v924 = vunpack.c.h.s8.bf16 %v684
        %v925 = vunpack.c.h.s8.bf16 %v685
        %v926 = vunpack.c.l.s8.bf16 %v686
        %v927 = vunpack.c.l.s8.bf16 %v687
        %v928 = vunpack.c.l.s8.bf16 %v688
        %v929 = vunpack.c.l.s8.bf16 %v689
        %v930 = vunpack.c.l.s8.bf16 %v690
        %v931 = vunpack.c.l.s8.bf16 %v691
        %v932 = vunpack.c.h.s8.bf16 %v686
        %v933 = vunpack.c.h.s8.bf16 %v687
        %v934 = vunpack.c.h.s8.bf16 %v688
        %v935 = vunpack.c.h.s8.bf16 %v689
        %v936 = vunpack.c.h.s8.bf16 %v690
        %v937 = vunpack.c.h.s8.bf16 %v691
        %v938 = vunpack.c.l.s8.bf16 %v692
        %v939 = vunpack.c.l.s8.bf16 %v693
        %v940 = vunpack.c.l.s8.bf16 %v694
        %v941 = vunpack.c.l.s8.bf16 %v695
        %v942 = vunpack.c.l.s8.bf16 %v696
        %v943 = vunpack.c.l.s8.bf16 %v697
        %v944 = vunpack.c.h.s8.bf16 %v692
        %v945 = vunpack.c.h.s8.bf16 %v693
        %v946 = vunpack.c.h.s8.bf16 %v694
        %v947 = vunpack.c.h.s8.bf16 %v695
        %v948 = vunpack.c.h.s8.bf16 %v696
        %v949 = vunpack.c.h.s8.bf16 %v697
        %v950 = vunpack.c.l.s8.bf16 %v698
        %v951 = vunpack.c.l.s8.bf16 %v699
        %v952 = vunpack.c.l.s8.bf16 %v700
        %v953 = vunpack.c.l.s8.bf16 %v701
        %v954 = vunpack.c.l.s8.bf16 %v702
        %v955 = vunpack.c.l.s8.bf16 %v703
        %v956 = vunpack.c.h.s8.bf16 %v698
        %v957 = vunpack.c.h.s8.bf16 %v699
        %v958 = vunpack.c.h.s8.bf16 %v700
        %v959 = vunpack.c.h.s8.bf16 %v701
        %v960 = vunpack.c.h.s8.bf16 %v702
        %v961 = vunpack.c.h.s8.bf16 %v703
        %v962 = vunpack.c.l.s8.bf16 %v704
        %v963 = vunpack.c.l.s8.bf16 %v705
        %v964 = vunpack.c.l.s8.bf16 %v706
        %v965 = vunpack.c.l.s8.bf16 %v707
        %v966 = vunpack.c.l.s8.bf16 %v708
        %v967 = vunpack.c.l.s8.bf16 %v709
        %v968 = vunpack.c.h.s8.bf16 %v704
        %v969 = vunpack.c.h.s8.bf16 %v705
        %v970 = vunpack.c.h.s8.bf16 %v706
        %v971 = vunpack.c.h.s8.bf16 %v707
        %v972 = vunpack.c.h.s8.bf16 %v708
        %v973 = vunpack.c.h.s8.bf16 %v709
        %v974 = vunpack.c.l.s8.bf16 %v710
        %v975 = vunpack.c.l.s8.bf16 %v711
        %v976 = vunpack.c.l.s8.bf16 %v712
        %v977 = vunpack.c.l.s8.bf16 %v713
        %v978 = vunpack.c.l.s8.bf16 %v714
        %v979 = vunpack.c.l.s8.bf16 %v715
        %v980 = vunpack.c.h.s8.bf16 %v710
        %v981 = vunpack.c.h.s8.bf16 %v711
        %v982 = vunpack.c.h.s8.bf16 %v712
        %v983 = vunpack.c.h.s8.bf16 %v713
        %v984 = vunpack.c.h.s8.bf16 %v714
        %v985 = vunpack.c.h.s8.bf16 %v715
        %v986 = vunpack.c.l.s8.bf16 %v716
        %v987 = vunpack.c.l.s8.bf16 %v717
        %v988 = vunpack.c.l.s8.bf16 %v718
        %v989 = vunpack.c.l.s8.bf16 %v719
        %v990 = vunpack.c.l.s8.bf16 %v720
        %v991 = vunpack.c.l.s8.bf16 %v721
        %v992 = vunpack.c.h.s8.bf16 %v716
        %v993 = vunpack.c.h.s8.bf16 %v717
        %v994 = vunpack.c.h.s8.bf16 %v718
        %v995 = vunpack.c.h.s8.bf16 %v719
        %v996 = vunpack.c.h.s8.bf16 %v720
        %v997 = vunpack.c.h.s8.bf16 %v721
        %v998 = vunpack.c.l.s8.bf16 %v722
        %v999 = vunpack.c.l.s8.bf16 %v723
        %v1000 = vunpack.c.l.s8.bf16 %v724
        %v1001 = vunpack.c.l.s8.bf16 %v725
        %v1002 = vunpack.c.l.s8.bf16 %v726
        %v1003 = vunpack.c.l.s8.bf16 %v727
        %v1004 = vunpack.c.h.s8.bf16 %v722
        %v1005 = vunpack.c.h.s8.bf16 %v723
        %v1006 = vunpack.c.h.s8.bf16 %v724
        %v1007 = vunpack.c.h.s8.bf16 %v725
        %v1008 = vunpack.c.h.s8.bf16 %v726
        %v1009 = vunpack.c.h.s8.bf16 %v727
        %v1010 = vunpack.c.l.s8.bf16 %v728
        %v1011 = vunpack.c.l.s8.bf16 %v729
        %v1012 = vunpack.c.l.s8.bf16 %v730
        %v1013 = vunpack.c.l.s8.bf16 %v731
        %v1014 = vunpack.c.l.s8.bf16 %v732
        %v1015 = vunpack.c.l.s8.bf16 %v733
        %v1016 = vunpack.c.h.s8.bf16 %v728
        %v1017 = vunpack.c.h.s8.bf16 %v729
        %v1018 = vunpack.c.h.s8.bf16 %v730
        %v1019 = vunpack.c.h.s8.bf16 %v731
        %v1020 = vunpack.c.h.s8.bf16 %v732
        %v1021 = vunpack.c.h.s8.bf16 %v733
        %v1022 = vunpack.c.l.s8.bf16 %v734
        %v1023 = vunpack.c.l.s8.bf16 %v735
        %v1024 = vunpack.c.l.s8.bf16 %v736
        %v1025 = vunpack.c.l.s8.bf16 %v737
        %v1026 = vunpack.c.l.s8.bf16 %v738
        %v1027 = vunpack.c.l.s8.bf16 %v739
        %v1028 = vunpack.c.h.s8.bf16 %v734
        %v1029 = vunpack.c.h.s8.bf16 %v735
        %v1030 = vunpack.c.h.s8.bf16 %v736
        %v1031 = vunpack.c.h.s8.bf16 %v737
        %v1032 = vunpack.c.h.s8.bf16 %v738
        %v1033 = vunpack.c.h.s8.bf16 %v739
        %v1034 = vunpack.c.l.s8.bf16 %v740
        %v1035 = vunpack.c.l.s8.bf16 %v741
        %v1036 = vunpack.c.l.s8.bf16 %v742
        %v1037 = vunpack.c.l.s8.bf16 %v743
        %v1038 = vunpack.c.l.s8.bf16 %v744
        %v1039 = vunpack.c.l.s8.bf16 %v745
        %v1040 = vunpack.c.h.s8.bf16 %v740
        %v1041 = vunpack.c.h.s8.bf16 %v741
        %v1042 = vunpack.c.h.s8.bf16 %v742
        %v1043 = vunpack.c.h.s8.bf16 %v743
        %v1044 = vunpack.c.h.s8.bf16 %v744
        %v1045 = vunpack.c.h.s8.bf16 %v745
        %v1046 = vunpack.c.l.s8.bf16 %v746
        %v1047 = vunpack.c.l.s8.bf16 %v747
        %v1048 = vunpack.c.l.s8.bf16 %v748
        %v1049 = vunpack.c.l.s8.bf16 %v749
        %v1050 = vunpack.c.l.s8.bf16 %v750
        %v1051 = vunpack.c.l.s8.bf16 %v751
        %v1052 = vunpack.c.h.s8.bf16 %v746
        %v1053 = vunpack.c.h.s8.bf16 %v747
        %v1054 = vunpack.c.h.s8.bf16 %v748
        %v1055 = vunpack.c.h.s8.bf16 %v749
        %v1056 = vunpack.c.h.s8.bf16 %v750
        %v1057 = vunpack.c.h.s8.bf16 %v751
        %v1058 = vunpack.c.l.s8.bf16 %v752
        %v1059 = vunpack.c.l.s8.bf16 %v753
        %v1060 = vunpack.c.l.s8.bf16 %v754
        %v1061 = vunpack.c.l.s8.bf16 %v755
        %v1062 = vunpack.c.l.s8.bf16 %v756
        %v1063 = vunpack.c.l.s8.bf16 %v757
        %v1064 = vunpack.c.h.s8.bf16 %v752
        %v1065 = vunpack.c.h.s8.bf16 %v753
        %v1066 = vunpack.c.h.s8.bf16 %v754
        %v1067 = vunpack.c.h.s8.bf16 %v755
        %v1068 = vunpack.c.h.s8.bf16 %v756
        %v1069 = vunpack.c.h.s8.bf16 %v757
        %v1070 = vunpack.c.l.s8.bf16 %v758
        %v1071 = vunpack.c.l.s8.bf16 %v759
        %v1072 = vunpack.c.l.s8.bf16 %v760
        %v1073 = vunpack.c.l.s8.bf16 %v761
        %v1074 = vunpack.c.l.s8.bf16 %v762
        %v1075 = vunpack.c.l.s8.bf16 %v763
        %v1076 = vunpack.c.h.s8.bf16 %v758
        %v1077 = vunpack.c.h.s8.bf16 %v759
        %v1078 = vunpack.c.h.s8.bf16 %v760
        %v1079 = vunpack.c.h.s8.bf16 %v761
        %v1080 = vunpack.c.h.s8.bf16 %v762
        %v1081 = vunpack.c.h.s8.bf16 %v763
        %v1082 = vunpack.c.l.s8.bf16 %v764
        %v1083 = vunpack.c.l.s8.bf16 %v765
        %v1084 = vunpack.c.l.s8.bf16 %v766
        %v1085 = vunpack.c.l.s8.bf16 %v767
        %v1086 = vunpack.c.l.s8.bf16 %v768
        %v1087 = vunpack.c.l.s8.bf16 %v769
        %v1088 = vunpack.c.h.s8.bf16 %v764
        %v1089 = vunpack.c.h.s8.bf16 %v765
        %v1090 = vunpack.c.h.s8.bf16 %v766
        %v1091 = vunpack.c.h.s8.bf16 %v767
        %v1092 = vunpack.c.h.s8.bf16 %v768
        %v1093 = vunpack.c.h.s8.bf16 %v769
        %v1094 = vunpack.c.l.s8.bf16 %v770
        %v1095 = vunpack.c.l.s8.bf16 %v771
        %v1096 = vunpack.c.l.s8.bf16 %v772
        %v1097 = vunpack.c.l.s8.bf16 %v773
        %v1098 = vunpack.c.l.s8.bf16 %v774
        %v1099 = vunpack.c.l.s8.bf16 %v775
        %v1100 = vunpack.c.h.s8.bf16 %v770
        %v1101 = vunpack.c.h.s8.bf16 %v771
        %v1102 = vunpack.c.h.s8.bf16 %v772
        %v1103 = vunpack.c.h.s8.bf16 %v773
        %v1104 = vunpack.c.h.s8.bf16 %v774
        %v1105 = vunpack.c.h.s8.bf16 %v775
        %v1106 = vunpack.c.l.s8.bf16 %v776
        %v1107 = vunpack.c.l.s8.bf16 %v777
        %v1108 = vunpack.c.l.s8.bf16 %v778
        %v1109 = vunpack.c.l.s8.bf16 %v779
        %v1110 = vunpack.c.l.s8.bf16 %v780
        %v1111 = vunpack.c.l.s8.bf16 %v781
        %v1112 = vunpack.c.h.s8.bf16 %v776
        %v1113 = vunpack.c.h.s8.bf16 %v777
        %v1114 = vunpack.c.h.s8.bf16 %v778
        %v1115 = vunpack.c.h.s8.bf16 %v779
        %v1116 = vunpack.c.h.s8.bf16 %v780
        %v1117 = vunpack.c.h.s8.bf16 %v781
        %v1118 = vunpack.c.l.s8.bf16 %v782
        %v1119 = vunpack.c.l.s8.bf16 %v783
        %v1120 = vunpack.c.l.s8.bf16 %v784
        %v1121 = vunpack.c.l.s8.bf16 %v785
        %v1122 = vunpack.c.l.s8.bf16 %v786
        %v1123 = vunpack.c.l.s8.bf16 %v787
        %v1124 = vunpack.c.h.s8.bf16 %v782
        %v1125 = vunpack.c.h.s8.bf16 %v783
        %v1126 = vunpack.c.h.s8.bf16 %v784
        %v1127 = vunpack.c.h.s8.bf16 %v785
        %v1128 = vunpack.c.h.s8.bf16 %v786
        %v1129 = vunpack.c.h.s8.bf16 %v787
        %v1130 = vunpack.c.l.s8.bf16 %v788
        %v1131 = vunpack.c.l.s8.bf16 %v789
        %v1132 = vunpack.c.l.s8.bf16 %v790
        %v1133 = vunpack.c.l.s8.bf16 %v791
        %v1134 = vunpack.c.l.s8.bf16 %v792
        %v1135 = vunpack.c.l.s8.bf16 %v793
        %v1136 = vunpack.c.h.s8.bf16 %v788
        %v1137 = vunpack.c.h.s8.bf16 %v789
        %v1138 = vunpack.c.h.s8.bf16 %v790
        %v1139 = vunpack.c.h.s8.bf16 %v791
        %v1140 = vunpack.c.h.s8.bf16 %v792
        %v1141 = vunpack.c.h.s8.bf16 %v793
        %v1142 = vunpack.c.l.s8.bf16 %v794
        %v1143 = vunpack.c.l.s8.bf16 %v795
        %v1144 = vunpack.c.l.s8.bf16 %v796
        %v1145 = vunpack.c.l.s8.bf16 %v797
        %v1146 = vunpack.c.l.s8.bf16 %v798
        %v1147 = vunpack.c.l.s8.bf16 %v799
        %v1148 = vunpack.c.h.s8.bf16 %v794
        %v1149 = vunpack.c.h.s8.bf16 %v795
        %v1150 = vunpack.c.h.s8.bf16 %v796
        %v1151 = vunpack.c.h.s8.bf16 %v797
        %v1152 = vunpack.c.h.s8.bf16 %v798
        %v1153 = vunpack.c.h.s8.bf16 %v799
        %v1154 = vunpack.c.l.s8.bf16 %v800
        %v1155 = vunpack.c.l.s8.bf16 %v801
        %v1156 = vunpack.c.l.s8.bf16 %v802
        %v1157 = vunpack.c.l.s8.bf16 %v803
        %v1158 = vunpack.c.l.s8.bf16 %v804
        %v1159 = vunpack.c.l.s8.bf16 %v805
        %v1160 = vunpack.c.h.s8.bf16 %v800
        %v1161 = vunpack.c.h.s8.bf16 %v801
        %v1162 = vunpack.c.h.s8.bf16 %v802
        %v1163 = vunpack.c.h.s8.bf16 %v803
        %v1164 = vunpack.c.h.s8.bf16 %v804
        %v1165 = vunpack.c.h.s8.bf16 %v805
        %v1166 = vunpack.c.l.s8.bf16 %v806
        %v1167 = vunpack.c.l.s8.bf16 %v807
        %v1168 = vunpack.c.l.s8.bf16 %v808
        %v1169 = vunpack.c.l.s8.bf16 %v809
        %v1170 = vunpack.c.l.s8.bf16 %v810
        %v1171 = vunpack.c.l.s8.bf16 %v811
        %v1172 = vunpack.c.h.s8.bf16 %v806
        %v1173 = vunpack.c.h.s8.bf16 %v807
        %v1174 = vunpack.c.h.s8.bf16 %v808
        %v1175 = vunpack.c.h.s8.bf16 %v809
        %v1176 = vunpack.c.h.s8.bf16 %v810
        %v1177 = vunpack.c.h.s8.bf16 %v811
        %v1178 = vunpack.c.l.s8.bf16 %v812
        %v1179 = vunpack.c.l.s8.bf16 %v813
        %v1180 = vunpack.c.l.s8.bf16 %v814
        %v1181 = vunpack.c.l.s8.bf16 %v815
        %v1182 = vunpack.c.l.s8.bf16 %v816
        %v1183 = vunpack.c.l.s8.bf16 %v817
        %v1184 = vunpack.c.h.s8.bf16 %v812
        %v1185 = vunpack.c.h.s8.bf16 %v813
        %v1186 = vunpack.c.h.s8.bf16 %v814
        %v1187 = vunpack.c.h.s8.bf16 %v815
        %v1188 = vunpack.c.h.s8.bf16 %v816
        %v1189 = vunpack.c.h.s8.bf16 %v817
        %v1190 = vunpack.c.l.s8.bf16 %v818
        %v1191 = vunpack.c.l.s8.bf16 %v819
        %v1192 = vunpack.c.l.s8.bf16 %v820
        %v1193 = vunpack.c.l.s8.bf16 %v821
        %v1194 = vunpack.c.l.s8.bf16 %v822
        %v1195 = vunpack.c.l.s8.bf16 %v823
        %v1196 = vunpack.c.h.s8.bf16 %v818
        %v1197 = vunpack.c.h.s8.bf16 %v819
        %v1198 = vunpack.c.h.s8.bf16 %v820
        %v1199 = vunpack.c.h.s8.bf16 %v821
        %v1200 = vunpack.c.h.s8.bf16 %v822
        %v1201 = vunpack.c.h.s8.bf16 %v823
        %v1202 = vunpack.c.l.s8.bf16 %v824
        %v1203 = vunpack.c.l.s8.bf16 %v825
        %v1204 = vunpack.c.l.s8.bf16 %v826
        %v1205 = vunpack.c.l.s8.bf16 %v827
        %v1206 = vunpack.c.l.s8.bf16 %v828
        %v1207 = vunpack.c.l.s8.bf16 %v829
        %v1208 = vunpack.c.h.s8.bf16 %v824
        %v1209 = vunpack.c.h.s8.bf16 %v825
        %v1210 = vunpack.c.h.s8.bf16 %v826
        %v1211 = vunpack.c.h.s8.bf16 %v827
        %v1212 = vunpack.c.h.s8.bf16 %v828
        %v1213 = vunpack.c.h.s8.bf16 %v829
        %v1214 = vld [vmem:[%s0] sm:$0xff]
        %v1216 = vcombine.high %v1214, %v1214
        %v1218 = vunpack.c.l.s4 1966171168
        %v1219 = vunpack.c.0.s8 %v1218
        %v1220 = vlaneseq
        %v1221 = vshrl.u32 %v1220, 7
        %v1222 = vsub.s32 %v1219, %v1221
        %v1223 = vrot.slane %v1214, %v1222
        %v1225 = vunpack.c.l.s4 1966171168
        %v1226 = vunpack.c.0.s8 %v1225
        %v1227 = vlaneseq
        %v1228 = vshrl.u32 %v1227, 7
        %v1229 = vsub.s32 %v1226, %v1228
        %v1230 = vrot.slane %v1216, %v1229
        %v1231 = vcombine.high %v1223, %v1223
        %v1232 = vcombine.high %v1230, %v1230
        %v1234 = vunpack.c.l.s4 1966171168
        %v1235 = vunpack.c.0.s8 %v1234
        %v1236 = vlaneseq
        %v1237 = vshrl.u32 %v1236, 7
        %v1238 = vsub.s32 %v1235, %v1237
        %v1239 = vrot.slane %v1223, %v1238
        %v1241 = vunpack.c.l.s4 1966171168
        %v1242 = vunpack.c.0.s8 %v1241
        %v1243 = vlaneseq
        %v1244 = vshrl.u32 %v1243, 7
        %v1245 = vsub.s32 %v1242, %v1244
        %v1246 = vrot.slane %v1230, %v1245
        %v1248 = vunpack.c.l.s4 1966171168
        %v1249 = vunpack.c.0.s8 %v1248
        %v1250 = vlaneseq
        %v1251 = vshrl.u32 %v1250, 7
        %v1252 = vsub.s32 %v1249, %v1251
        %v1253 = vrot.slane %v1231, %v1252
        %v1255 = vunpack.c.l.s4 1966171168
        %v1256 = vunpack.c.0.s8 %v1255
        %v1257 = vlaneseq
        %v1258 = vshrl.u32 %v1257, 7
        %v1259 = vsub.s32 %v1256, %v1258
        %v1260 = vrot.slane %v1232, %v1259
        %v1261 = vcombine.high %v1239, %v1239
        %v1262 = vcombine.high %v1246, %v1246
        %v1263 = vcombine.high %v1253, %v1253
        %v1264 = vcombine.high %v1260, %v1260
        %1273 = vmatprep.subr.bf16.mxu0 %v831
        %1274 = vmatpush1.bf16.msra.mxu0 %v830
        %1275 = vmatprep.subr.bf16.mxu0 %v837
        %1276 = vmatpush1.bf16.msra.mxu0 %v836
        %1277 = vmatprep.subr.bf16.mxu0 %v843
        %1278 = vmatpush1.bf16.msra.mxu0 %v842
        %1279 = vmatprep.subr.bf16.mxu0 %v849
        %1280 = vmatpush1.bf16.msra.mxu0 %v848
        %1281 = vmatprep.subr.bf16.mxu0 %v855
        %1282 = vmatpush1.bf16.msra.mxu0 %v854
        %1283 = vmatprep.subr.bf16.mxu0 %v861
        %1284 = vmatpush1.bf16.msra.mxu0 %v860
        %1285 = vmatprep.subr.bf16.mxu0 %v867
        %1286 = vmatpush1.bf16.msra.mxu0 %v866
        %1287 = vmatprep.subr.bf16.mxu0 %v873
        %1288 = vmatpush1.bf16.msra.mxu0 %v872
        %1289 = vmatprep.subr.bf16.mxu0 %v879
        %1290 = vmatpush1.bf16.msra.mxu0 %v878
        %1291 = vmatprep.subr.bf16.mxu0 %v885
        %1292 = vmatpush1.bf16.msra.mxu0 %v884
        %1293 = vmatprep.subr.bf16.mxu0 %v891
        %1294 = vmatpush1.bf16.msra.mxu0 %v890
        %1295 = vmatprep.subr.bf16.mxu0 %v897
        %1296 = vmatpush1.bf16.msra.mxu0 %v896
        %1297 = vmatprep.subr.bf16.mxu0 %v903
        %1298 = vmatpush1.bf16.msra.mxu0 %v902
        %1299 = vmatprep.subr.bf16.mxu0 %v909
        %1300 = vmatpush1.bf16.msra.mxu0 %v908
        %1301 = vmatprep.subr.bf16.mxu0 %v915
        %1302 = vmatpush1.bf16.msra.mxu0 %v914
        %1303 = vmatprep.subr.bf16.mxu0 %v921
        %1304 = vmatpush1.bf16.msra.mxu0 %v920
        %1305 = vmatprep.mubr.bf16.mxu0 %v1253
        %1306 = vmatmul.mubr.bf16.gmra.mrb[0].mxu0 %v1239
        %v1307 = vpop.f32.mrb[0].mxu0
        %v1308 = vadd.f32 0.0, %v1307
        %v1309 = vpop.f32.mrb[0].mxu0
        %v1310 = vadd.f32 0.0, %v1309
        %v1311 = vpop.f32.mrb[0].mxu0
        %v1312 = vpop.f32.mrb[0].mxu0
        %1313 = vdwg.mxu0
        %1314 = vmatprep.subr.bf16.mxu0 %v927
        %1315 = vmatpush1.bf16.msra.mxu0 %v926
        %1316 = vmatprep.subr.bf16.mxu0 %v933
        %1317 = vmatpush1.bf16.msra.mxu0 %v932
        %1318 = vmatprep.subr.bf16.mxu0 %v939
        %1319 = vmatpush1.bf16.msra.mxu0 %v938
        %1320 = vmatprep.subr.bf16.mxu0 %v945
        %1321 = vmatpush1.bf16.msra.mxu0 %v944
        %1322 = vmatprep.subr.bf16.mxu0 %v951
        %1323 = vmatpush1.bf16.msra.mxu0 %v950
        %1324 = vmatprep.subr.bf16.mxu0 %v957
        %1325 = vmatpush1.bf16.msra.mxu0 %v956
        %1326 = vmatprep.subr.bf16.mxu0 %v963
        %1327 = vmatpush1.bf16.msra.mxu0 %v962
        %1328 = vmatprep.subr.bf16.mxu0 %v969
        %1329 = vmatpush1.bf16.msra.mxu0 %v968
        %1330 = vmatprep.subr.bf16.mxu0 %v975
        %1331 = vmatpush1.bf16.msra.mxu0 %v974
        %1332 = vmatprep.subr.bf16.mxu0 %v981
        %1333 = vmatpush1.bf16.msra.mxu0 %v980
        %1334 = vmatprep.subr.bf16.mxu0 %v987
        %1335 = vmatpush1.bf16.msra.mxu0 %v986
        %1336 = vmatprep.subr.bf16.mxu0 %v993
        %1337 = vmatpush1.bf16.msra.mxu0 %v992
        %1338 = vmatprep.subr.bf16.mxu0 %v999
        %1339 = vmatpush1.bf16.msra.mxu0 %v998
        %1340 = vmatprep.subr.bf16.mxu0 %v1005
        %1341 = vmatpush1.bf16.msra.mxu0 %v1004
        %1342 = vmatprep.subr.bf16.mxu0 %v1011
        %1343 = vmatpush1.bf16.msra.mxu0 %v1010
        %1344 = vmatprep.subr.bf16.mxu0 %v1017
        %1345 = vmatpush1.bf16.msra.mxu0 %v1016
        %1346 = vmatprep.mubr.bf16.mxu0 %v1263
        %1347 = vmatmul.mubr.bf16.gmra.mrb[0].mxu0 %v1261
        %v1348 = vpop.f32.mrb[0].mxu0
        %v1349 = vadd.f32 %v1308, %v1348
        %v1350 = vpop.f32.mrb[0].mxu0
        %v1351 = vadd.f32 %v1310, %v1350
        %v1352 = vpop.f32.mrb[0].mxu0
        %v1353 = vpop.f32.mrb[0].mxu0
        %1354 = vdwg.mxu0
        %1355 = vmatprep.subr.bf16.mxu0 %v1023
        %1356 = vmatpush1.bf16.msra.mxu0 %v1022
        %1357 = vmatprep.subr.bf16.mxu0 %v1029
        %1358 = vmatpush1.bf16.msra.mxu0 %v1028
        %1359 = vmatprep.subr.bf16.mxu0 %v1035
        %1360 = vmatpush1.bf16.msra.mxu0 %v1034
        %1361 = vmatprep.subr.bf16.mxu0 %v1041
        %1362 = vmatpush1.bf16.msra.mxu0 %v1040
        %1363 = vmatprep.subr.bf16.mxu0 %v1047
        %1364 = vmatpush1.bf16.msra.mxu0 %v1046
        %1365 = vmatprep.subr.bf16.mxu0 %v1053
        %1366 = vmatpush1.bf16.msra.mxu0 %v1052
        %1367 = vmatprep.subr.bf16.mxu0 %v1059
        %1368 = vmatpush1.bf16.msra.mxu0 %v1058
        %1369 = vmatprep.subr.bf16.mxu0 %v1065
        %1370 = vmatpush1.bf16.msra.mxu0 %v1064
        %1371 = vmatprep.subr.bf16.mxu0 %v1071
        %1372 = vmatpush1.bf16.msra.mxu0 %v1070
        %1373 = vmatprep.subr.bf16.mxu0 %v1077
        %1374 = vmatpush1.bf16.msra.mxu0 %v1076
        %1375 = vmatprep.subr.bf16.mxu0 %v1083
        %1376 = vmatpush1.bf16.msra.mxu0 %v1082
        %1377 = vmatprep.subr.bf16.mxu0 %v1089
        %1378 = vmatpush1.bf16.msra.mxu0 %v1088
        %1379 = vmatprep.subr.bf16.mxu0 %v1095
        %1380 = vmatpush1.bf16.msra.mxu0 %v1094
        %1381 = vmatprep.subr.bf16.mxu0 %v1101
        %1382 = vmatpush1.bf16.msra.mxu0 %v1100
        %1383 = vmatprep.subr.bf16.mxu0 %v1107
        %1384 = vmatpush1.bf16.msra.mxu0 %v1106
        %1385 = vmatprep.subr.bf16.mxu0 %v1113
        %1386 = vmatpush1.bf16.msra.mxu0 %v1112
        %1387 = vmatprep.mubr.bf16.mxu0 %v1260
        %1388 = vmatmul.mubr.bf16.gmra.mrb[0].mxu0 %v1246
        %v1389 = vpop.f32.mrb[0].mxu0
        %v1390 = vadd.f32 %v1349, %v1389
        %v1391 = vpop.f32.mrb[0].mxu0
        %v1392 = vadd.f32 %v1351, %v1391
        %v1393 = vpop.f32.mrb[0].mxu0
        %v1394 = vpop.f32.mrb[0].mxu0
        %1395 = vdwg.mxu0
        %1396 = vmatprep.subr.bf16.mxu0 %v1119
        %1397 = vmatpush1.bf16.msra.mxu0 %v1118
        %1398 = vmatprep.subr.bf16.mxu0 %v1125
        %1399 = vmatpush1.bf16.msra.mxu0 %v1124
        %1400 = vmatprep.subr.bf16.mxu0 %v1131
        %1401 = vmatpush1.bf16.msra.mxu0 %v1130
        %1402 = vmatprep.subr.bf16.mxu0 %v1137
        %1403 = vmatpush1.bf16.msra.mxu0 %v1136
        %1404 = vmatprep.subr.bf16.mxu0 %v1143
        %1405 = vmatpush1.bf16.msra.mxu0 %v1142
        %1406 = vmatprep.subr.bf16.mxu0 %v1149
        %1407 = vmatpush1.bf16.msra.mxu0 %v1148
        %1408 = vmatprep.subr.bf16.mxu0 %v1155
        %1409 = vmatpush1.bf16.msra.mxu0 %v1154
        %1410 = vmatprep.subr.bf16.mxu0 %v1161
        %1411 = vmatpush1.bf16.msra.mxu0 %v1160
        %1412 = vmatprep.subr.bf16.mxu0 %v1167
        %1413 = vmatpush1.bf16.msra.mxu0 %v1166
        %1414 = vmatprep.subr.bf16.mxu0 %v1173
        %1415 = vmatpush1.bf16.msra.mxu0 %v1172
        %1416 = vmatprep.subr.bf16.mxu0 %v1179
        %1417 = vmatpush1.bf16.msra.mxu0 %v1178
        %1418 = vmatprep.subr.bf16.mxu0 %v1185
        %1419 = vmatpush1.bf16.msra.mxu0 %v1184
        %1420 = vmatprep.subr.bf16.mxu0 %v1191
        %1421 = vmatpush1.bf16.msra.mxu0 %v1190
        %1422 = vmatprep.subr.bf16.mxu0 %v1197
        %1423 = vmatpush1.bf16.msra.mxu0 %v1196
        %1424 = vmatprep.subr.bf16.mxu0 %v1203
        %1425 = vmatpush1.bf16.msra.mxu0 %v1202
        %1426 = vmatprep.subr.bf16.mxu0 %v1209
        %1427 = vmatpush1.bf16.msra.mxu0 %v1208
        %1428 = vmatprep.mubr.bf16.mxu0 %v1264
        %1429 = vmatmul.mubr.bf16.gmra.mrb[0].mxu0 %v1262
        %v1430 = vpop.f32.mrb[0].mxu0
        %v1431 = vadd.f32 %v1390, %v1430
        %v1432 = vpop.f32.mrb[0].mxu0
        %v1433 = vadd.f32 %v1392, %v1432
        %v1434 = vpop.f32.mrb[0].mxu0
        %v1435 = vpop.f32.mrb[0].mxu0
        %1436 = vdwg.mxu0
        %1437 = vmatprep.subr.bf16.mxu0 %v833
        %1438 = vmatpush1.bf16.msra.mxu0 %v832
        %1439 = vmatprep.subr.bf16.mxu0 %v839
        %1440 = vmatpush1.bf16.msra.mxu0 %v838
        %1441 = vmatprep.subr.bf16.mxu0 %v845
        %1442 = vmatpush1.bf16.msra.mxu0 %v844
        %1443 = vmatprep.subr.bf16.mxu0 %v851
        %1444 = vmatpush1.bf16.msra.mxu0 %v850
        %1445 = vmatprep.subr.bf16.mxu0 %v857
        %1446 = vmatpush1.bf16.msra.mxu0 %v856
        %1447 = vmatprep.subr.bf16.mxu0 %v863
        %1448 = vmatpush1.bf16.msra.mxu0 %v862
        %1449 = vmatprep.subr.bf16.mxu0 %v869
        %1450 = vmatpush1.bf16.msra.mxu0 %v868
        %1451 = vmatprep.subr.bf16.mxu0 %v875
        %1452 = vmatpush1.bf16.msra.mxu0 %v874
        %1453 = vmatprep.subr.bf16.mxu0 %v881
        %1454 = vmatpush1.bf16.msra.mxu0 %v880
        %1455 = vmatprep.subr.bf16.mxu0 %v887
        %1456 = vmatpush1.bf16.msra.mxu0 %v886
        %1457 = vmatprep.subr.bf16.mxu0 %v893
        %1458 = vmatpush1.bf16.msra.mxu0 %v892
        %1459 = vmatprep.subr.bf16.mxu0 %v899
        %1460 = vmatpush1.bf16.msra.mxu0 %v898
        %1461 = vmatprep.subr.bf16.mxu0 %v905
        %1462 = vmatpush1.bf16.msra.mxu0 %v904
        %1463 = vmatprep.subr.bf16.mxu0 %v911
        %1464 = vmatpush1.bf16.msra.mxu0 %v910
        %1465 = vmatprep.subr.bf16.mxu0 %v917
        %1466 = vmatpush1.bf16.msra.mxu0 %v916
        %1467 = vmatprep.subr.bf16.mxu0 %v923
        %1468 = vmatpush1.bf16.msra.mxu0 %v922
        %1469 = vmatprep.mubr.bf16.mxu0 %v1253
        %1470 = vmatmul.mubr.bf16.gmra.mrb[0].mxu0 %v1239
        %v1471 = vpop.f32.mrb[0].mxu0
        %v1472 = vadd.f32 0.0, %v1471
        %v1473 = vpop.f32.mrb[0].mxu0
        %v1474 = vadd.f32 0.0, %v1473
        %v1475 = vpop.f32.mrb[0].mxu0
        %v1476 = vpop.f32.mrb[0].mxu0
        %1477 = vdwg.mxu0
        %1478 = vmatprep.subr.bf16.mxu0 %v929
        %1479 = vmatpush1.bf16.msra.mxu0 %v928
        %1480 = vmatprep.subr.bf16.mxu0 %v935
        %1481 = vmatpush1.bf16.msra.mxu0 %v934
        %1482 = vmatprep.subr.bf16.mxu0 %v941
        %1483 = vmatpush1.bf16.msra.mxu0 %v940
        %1484 = vmatprep.subr.bf16.mxu0 %v947
        %1485 = vmatpush1.bf16.msra.mxu0 %v946
        %1486 = vmatprep.subr.bf16.mxu0 %v953
        %1487 = vmatpush1.bf16.msra.mxu0 %v952
        %1488 = vmatprep.subr.bf16.mxu0 %v959
        %1489 = vmatpush1.bf16.msra.mxu0 %v958
        %1490 = vmatprep.subr.bf16.mxu0 %v965
        %1491 = vmatpush1.bf16.msra.mxu0 %v964
        %1492 = vmatprep.subr.bf16.mxu0 %v971
        %1493 = vmatpush1.bf16.msra.mxu0 %v970
        %1494 = vmatprep.subr.bf16.mxu0 %v977
        %1495 = vmatpush1.bf16.msra.mxu0 %v976
        %1496 = vmatprep.subr.bf16.mxu0 %v983
        %1497 = vmatpush1.bf16.msra.mxu0 %v982
        %1498 = vmatprep.subr.bf16.mxu0 %v989
        %1499 = vmatpush1.bf16.msra.mxu0 %v988
        %1500 = vmatprep.subr.bf16.mxu0 %v995
        %1501 = vmatpush1.bf16.msra.mxu0 %v994
        %1502 = vmatprep.subr.bf16.mxu0 %v1001
        %1503 = vmatpush1.bf16.msra.mxu0 %v1000
        %1504 = vmatprep.subr.bf16.mxu0 %v1007
        %1505 = vmatpush1.bf16.msra.mxu0 %v1006
        %1506 = vmatprep.subr.bf16.mxu0 %v1013
        %1507 = vmatpush1.bf16.msra.mxu0 %v1012
        %1508 = vmatprep.subr.bf16.mxu0 %v1019
        %1509 = vmatpush1.bf16.msra.mxu0 %v1018
        %1510 = vmatprep.mubr.bf16.mxu0 %v1263
        %1511 = vmatmul.mubr.bf16.gmra.mrb[0].mxu0 %v1261
        %v1512 = vpop.f32.mrb[0].mxu0
        %v1513 = vadd.f32 %v1472, %v1512
        %v1514 = vpop.f32.mrb[0].mxu0
        %v1515 = vadd.f32 %v1474, %v1514
        %v1516 = vpop.f32.mrb[0].mxu0
        %v1517 = vpop.f32.mrb[0].mxu0
        %1518 = vdwg.mxu0
        %1519 = vmatprep.subr.bf16.mxu0 %v1025
        %1520 = vmatpush1.bf16.msra.mxu0 %v1024
        %1521 = vmatprep.subr.bf16.mxu0 %v1031
        %1522 = vmatpush1.bf16.msra.mxu0 %v1030
        %1523 = vmatprep.subr.bf16.mxu0 %v1037
        %1524 = vmatpush1.bf16.msra.mxu0 %v1036
        %1525 = vmatprep.subr.bf16.mxu0 %v1043
        %1526 = vmatpush1.bf16.msra.mxu0 %v1042
        %1527 = vmatprep.subr.bf16.mxu0 %v1049
        %1528 = vmatpush1.bf16.msra.mxu0 %v1048
        %1529 = vmatprep.subr.bf16.mxu0 %v1055
        %1530 = vmatpush1.bf16.msra.mxu0 %v1054
        %1531 = vmatprep.subr.bf16.mxu0 %v1061
        %1532 = vmatpush1.bf16.msra.mxu0 %v1060
        %1533 = vmatprep.subr.bf16.mxu0 %v1067
        %1534 = vmatpush1.bf16.msra.mxu0 %v1066
        %1535 = vmatprep.subr.bf16.mxu0 %v1073
        %1536 = vmatpush1.bf16.msra.mxu0 %v1072
        %1537 = vmatprep.subr.bf16.mxu0 %v1079
        %1538 = vmatpush1.bf16.msra.mxu0 %v1078
        %1539 = vmatprep.subr.bf16.mxu0 %v1085
        %1540 = vmatpush1.bf16.msra.mxu0 %v1084
        %1541 = vmatprep.subr.bf16.mxu0 %v1091
        %1542 = vmatpush1.bf16.msra.mxu0 %v1090
        %1543 = vmatprep.subr.bf16.mxu0 %v1097
        %1544 = vmatpush1.bf16.msra.mxu0 %v1096
        %1545 = vmatprep.subr.bf16.mxu0 %v1103
        %1546 = vmatpush1.bf16.msra.mxu0 %v1102
        %1547 = vmatprep.subr.bf16.mxu0 %v1109
        %1548 = vmatpush1.bf16.msra.mxu0 %v1108
        %1549 = vmatprep.subr.bf16.mxu0 %v1115
        %1550 = vmatpush1.bf16.msra.mxu0 %v1114
        %1551 = vmatprep.mubr.bf16.mxu0 %v1260
        %1552 = vmatmul.mubr.bf16.gmra.mrb[0].mxu0 %v1246
        %v1553 = vpop.f32.mrb[0].mxu0
        %v1554 = vadd.f32 %v1513, %v1553
        %v1555 = vpop.f32.mrb[0].mxu0
        %v1556 = vadd.f32 %v1515, %v1555
        %v1557 = vpop.f32.mrb[0].mxu0
        %v1558 = vpop.f32.mrb[0].mxu0
        %1559 = vdwg.mxu0
        %1560 = vmatprep.subr.bf16.mxu0 %v1121
        %1561 = vmatpush1.bf16.msra.mxu0 %v1120
        %1562 = vmatprep.subr.bf16.mxu0 %v1127
        %1563 = vmatpush1.bf16.msra.mxu0 %v1126
        %1564 = vmatprep.subr.bf16.mxu0 %v1133
        %1565 = vmatpush1.bf16.msra.mxu0 %v1132
        %1566 = vmatprep.subr.bf16.mxu0 %v1139
        %1567 = vmatpush1.bf16.msra.mxu0 %v1138
        %1568 = vmatprep.subr.bf16.mxu0 %v1145
        %1569 = vmatpush1.bf16.msra.mxu0 %v1144
        %1570 = vmatprep.subr.bf16.mxu0 %v1151
        %1571 = vmatpush1.bf16.msra.mxu0 %v1150
        %1572 = vmatprep.subr.bf16.mxu0 %v1157
        %1573 = vmatpush1.bf16.msra.mxu0 %v1156
        %1574 = vmatprep.subr.bf16.mxu0 %v1163
        %1575 = vmatpush1.bf16.msra.mxu0 %v1162
        %1576 = vmatprep.subr.bf16.mxu0 %v1169
        %1577 = vmatpush1.bf16.msra.mxu0 %v1168
        %1578 = vmatprep.subr.bf16.mxu0 %v1175
        %1579 = vmatpush1.bf16.msra.mxu0 %v1174
        %1580 = vmatprep.subr.bf16.mxu0 %v1181
        %1581 = vmatpush1.bf16.msra.mxu0 %v1180
        %1582 = vmatprep.subr.bf16.mxu0 %v1187
        %1583 = vmatpush1.bf16.msra.mxu0 %v1186
        %1584 = vmatprep.subr.bf16.mxu0 %v1193
        %1585 = vmatpush1.bf16.msra.mxu0 %v1192
        %1586 = vmatprep.subr.bf16.mxu0 %v1199
        %1587 = vmatpush1.bf16.msra.mxu0 %v1198
        %1588 = vmatprep.subr.bf16.mxu0 %v1205
        %1589 = vmatpush1.bf16.msra.mxu0 %v1204
        %1590 = vmatprep.subr.bf16.mxu0 %v1211
        %1591 = vmatpush1.bf16.msra.mxu0 %v1210
        %1592 = vmatprep.mubr.bf16.mxu0 %v1264
        %1593 = vmatmul.mubr.bf16.gmra.mrb[0].mxu0 %v1262
        %v1594 = vpop.f32.mrb[0].mxu0
        %v1595 = vadd.f32 %v1554, %v1594
        %v1596 = vpop.f32.mrb[0].mxu0
        %v1597 = vadd.f32 %v1556, %v1596
        %v1598 = vpop.f32.mrb[0].mxu0
        %v1599 = vpop.f32.mrb[0].mxu0
        %1600 = vdwg.mxu0
        %1601 = vmatprep.subr.bf16.mxu0 %v835
        %1602 = vmatpush1.bf16.msra.mxu0 %v834
        %1603 = vmatprep.subr.bf16.mxu0 %v841
        %1604 = vmatpush1.bf16.msra.mxu0 %v840
        %1605 = vmatprep.subr.bf16.mxu0 %v847
        %1606 = vmatpush1.bf16.msra.mxu0 %v846
        %1607 = vmatprep.subr.bf16.mxu0 %v853
        %1608 = vmatpush1.bf16.msra.mxu0 %v852
        %1609 = vmatprep.subr.bf16.mxu0 %v859
        %1610 = vmatpush1.bf16.msra.mxu0 %v858
        %1611 = vmatprep.subr.bf16.mxu0 %v865
        %1612 = vmatpush1.bf16.msra.mxu0 %v864
        %1613 = vmatprep.subr.bf16.mxu0 %v871
        %1614 = vmatpush1.bf16.msra.mxu0 %v870
        %1615 = vmatprep.subr.bf16.mxu0 %v877
        %1616 = vmatpush1.bf16.msra.mxu0 %v876
        %1617 = vmatprep.subr.bf16.mxu0 %v883
        %1618 = vmatpush1.bf16.msra.mxu0 %v882
        %1619 = vmatprep.subr.bf16.mxu0 %v889
        %1620 = vmatpush1.bf16.msra.mxu0 %v888
        %1621 = vmatprep.subr.bf16.mxu0 %v895
        %1622 = vmatpush1.bf16.msra.mxu0 %v894
        %1623 = vmatprep.subr.bf16.mxu0 %v901
        %1624 = vmatpush1.bf16.msra.mxu0 %v900
        %1625 = vmatprep.subr.bf16.mxu0 %v907
        %1626 = vmatpush1.bf16.msra.mxu0 %v906
        %1627 = vmatprep.subr.bf16.mxu0 %v913
        %1628 = vmatpush1.bf16.msra.mxu0 %v912
        %1629 = vmatprep.subr.bf16.mxu0 %v919
        %1630 = vmatpush1.bf16.msra.mxu0 %v918
        %1631 = vmatprep.subr.bf16.mxu0 %v925
        %1632 = vmatpush1.bf16.msra.mxu0 %v924
        %1633 = vmatprep.mubr.bf16.mxu0 %v1253
        %1634 = vmatmul.mubr.bf16.gmra.mrb[0].mxu0 %v1239
        %v1635 = vpop.f32.mrb[0].mxu0
        %v1636 = vadd.f32 0.0, %v1635
        %v1637 = vpop.f32.mrb[0].mxu0
        %v1638 = vadd.f32 0.0, %v1637
        %v1639 = vpop.f32.mrb[0].mxu0
        %v1640 = vpop.f32.mrb[0].mxu0
        %1641 = vdwg.mxu0
        %1642 = vmatprep.subr.bf16.mxu0 %v931
        %1643 = vmatpush1.bf16.msra.mxu0 %v930
        %1644 = vmatprep.subr.bf16.mxu0 %v937
        %1645 = vmatpush1.bf16.msra.mxu0 %v936
        %1646 = vmatprep.subr.bf16.mxu0 %v943
        %1647 = vmatpush1.bf16.msra.mxu0 %v942
        %1648 = vmatprep.subr.bf16.mxu0 %v949
        %1649 = vmatpush1.bf16.msra.mxu0 %v948
        %1650 = vmatprep.subr.bf16.mxu0 %v955
        %1651 = vmatpush1.bf16.msra.mxu0 %v954
        %1652 = vmatprep.subr.bf16.mxu0 %v961
        %1653 = vmatpush1.bf16.msra.mxu0 %v960
        %1654 = vmatprep.subr.bf16.mxu0 %v967
        %1655 = vmatpush1.bf16.msra.mxu0 %v966
        %1656 = vmatprep.subr.bf16.mxu0 %v973
        %1657 = vmatpush1.bf16.msra.mxu0 %v972
        %1658 = vmatprep.subr.bf16.mxu0 %v979
        %1659 = vmatpush1.bf16.msra.mxu0 %v978
        %1660 = vmatprep.subr.bf16.mxu0 %v985
        %1661 = vmatpush1.bf16.msra.mxu0 %v984
        %1662 = vmatprep.subr.bf16.mxu0 %v991
        %1663 = vmatpush1.bf16.msra.mxu0 %v990
        %1664 = vmatprep.subr.bf16.mxu0 %v997
        %1665 = vmatpush1.bf16.msra.mxu0 %v996
        %1666 = vmatprep.subr.bf16.mxu0 %v1003
        %1667 = vmatpush1.bf16.msra.mxu0 %v1002
        %1668 = vmatprep.subr.bf16.mxu0 %v1009
        %1669 = vmatpush1.bf16.msra.mxu0 %v1008
        %1670 = vmatprep.subr.bf16.mxu0 %v1015
        %1671 = vmatpush1.bf16.msra.mxu0 %v1014
        %1672 = vmatprep.subr.bf16.mxu0 %v1021
        %1673 = vmatpush1.bf16.msra.mxu0 %v1020
        %1674 = vmatprep.mubr.bf16.mxu0 %v1263
        %1675 = vmatmul.mubr.bf16.gmra.mrb[0].mxu0 %v1261
        %v1676 = vpop.f32.mrb[0].mxu0
        %v1677 = vadd.f32 %v1636, %v1676
        %v1678 = vpop.f32.mrb[0].mxu0
        %v1679 = vadd.f32 %v1638, %v1678
        %v1680 = vpop.f32.mrb[0].mxu0
        %v1681 = vpop.f32.mrb[0].mxu0
        %1682 = vdwg.mxu0
        %1683 = vmatprep.subr.bf16.mxu0 %v1027
        %1684 = vmatpush1.bf16.msra.mxu0 %v1026
        %1685 = vmatprep.subr.bf16.mxu0 %v1033
        %1686 = vmatpush1.bf16.msra.mxu0 %v1032
        %1687 = vmatprep.subr.bf16.mxu0 %v1039
        %1688 = vmatpush1.bf16.msra.mxu0 %v1038
        %1689 = vmatprep.subr.bf16.mxu0 %v1045
        %1690 = vmatpush1.bf16.msra.mxu0 %v1044
        %1691 = vmatprep.subr.bf16.mxu0 %v1051
        %1692 = vmatpush1.bf16.msra.mxu0 %v1050
        %1693 = vmatprep.subr.bf16.mxu0 %v1057
        %1694 = vmatpush1.bf16.msra.mxu0 %v1056
        %1695 = vmatprep.subr.bf16.mxu0 %v1063
        %1696 = vmatpush1.bf16.msra.mxu0 %v1062
        %1697 = vmatprep.subr.bf16.mxu0 %v1069
        %1698 = vmatpush1.bf16.msra.mxu0 %v1068
        %1699 = vmatprep.subr.bf16.mxu0 %v1075
        %1700 = vmatpush1.bf16.msra.mxu0 %v1074
        %1701 = vmatprep.subr.bf16.mxu0 %v1081
        %1702 = vmatpush1.bf16.msra.mxu0 %v1080
        %1703 = vmatprep.subr.bf16.mxu0 %v1087
        %1704 = vmatpush1.bf16.msra.mxu0 %v1086
        %1705 = vmatprep.subr.bf16.mxu0 %v1093
        %1706 = vmatpush1.bf16.msra.mxu0 %v1092
        %1707 = vmatprep.subr.bf16.mxu0 %v1099
        %1708 = vmatpush1.bf16.msra.mxu0 %v1098
        %1709 = vmatprep.subr.bf16.mxu0 %v1105
        %1710 = vmatpush1.bf16.msra.mxu0 %v1104
        %1711 = vmatprep.subr.bf16.mxu0 %v1111
        %1712 = vmatpush1.bf16.msra.mxu0 %v1110
        %1713 = vmatprep.subr.bf16.mxu0 %v1117
        %1714 = vmatpush1.bf16.msra.mxu0 %v1116
        %1715 = vmatprep.mubr.bf16.mxu0 %v1260
        %1716 = vmatmul.mubr.bf16.gmra.mrb[0].mxu0 %v1246
        %v1717 = vpop.f32.mrb[0].mxu0
        %v1718 = vadd.f32 %v1677, %v1717
        %v1719 = vpop.f32.mrb[0].mxu0
        %v1720 = vadd.f32 %v1679, %v1719
        %v1721 = vpop.f32.mrb[0].mxu0
        %v1722 = vpop.f32.mrb[0].mxu0
        %1723 = vdwg.mxu0
        %1724 = vmatprep.subr.bf16.mxu0 %v1123
        %1725 = vmatpush1.bf16.msra.mxu0 %v1122
        %1726 = vmatprep.subr.bf16.mxu0 %v1129
        %1727 = vmatpush1.bf16.msra.mxu0 %v1128
        %1728 = vmatprep.subr.bf16.mxu0 %v1135
        %1729 = vmatpush1.bf16.msra.mxu0 %v1134
        %1730 = vmatprep.subr.bf16.mxu0 %v1141
        %1731 = vmatpush1.bf16.msra.mxu0 %v1140
        %1732 = vmatprep.subr.bf16.mxu0 %v1147
        %1733 = vmatpush1.bf16.msra.mxu0 %v1146
        %1734 = vmatprep.subr.bf16.mxu0 %v1153
        %1735 = vmatpush1.bf16.msra.mxu0 %v1152
        %1736 = vmatprep.subr.bf16.mxu0 %v1159
        %1737 = vmatpush1.bf16.msra.mxu0 %v1158
        %1738 = vmatprep.subr.bf16.mxu0 %v1165
        %1739 = vmatpush1.bf16.msra.mxu0 %v1164
        %1740 = vmatprep.subr.bf16.mxu0 %v1171
        %1741 = vmatpush1.bf16.msra.mxu0 %v1170
        %1742 = vmatprep.subr.bf16.mxu0 %v1177
        %1743 = vmatpush1.bf16.msra.mxu0 %v1176
        %1744 = vmatprep.subr.bf16.mxu0 %v1183
        %1745 = vmatpush1.bf16.msra.mxu0 %v1182
        %1746 = vmatprep.subr.bf16.mxu0 %v1189
        %1747 = vmatpush1.bf16.msra.mxu0 %v1188
        %1748 = vmatprep.subr.bf16.mxu0 %v1195
        %1749 = vmatpush1.bf16.msra.mxu0 %v1194
        %1750 = vmatprep.subr.bf16.mxu0 %v1201
        %1751 = vmatpush1.bf16.msra.mxu0 %v1200
        %1752 = vmatprep.subr.bf16.mxu0 %v1207
        %1753 = vmatpush1.bf16.msra.mxu0 %v1206
        %1754 = vmatprep.subr.bf16.mxu0 %v1213
        %1755 = vmatpush1.bf16.msra.mxu0 %v1212
        %1756 = vmatprep.mubr.bf16.mxu0 %v1264
        %1757 = vmatmul.mubr.bf16.gmra.mrb[0].mxu0 %v1262
        %v1758 = vpop.f32.mrb[0].mxu0
        %v1759 = vadd.f32 %v1718, %v1758
        %v1760 = vpop.f32.mrb[0].mxu0
        %v1761 = vadd.f32 %v1720, %v1760
        %v1762 = vpop.f32.mrb[0].mxu0
        %v1763 = vpop.f32.mrb[0].mxu0
        %1764 = vdwg.mxu0
        %v1765 = vld [vmem:[%s630] sm:$0x3f]
        %v1767 = vlaneseq
        %v1768 = vshrl.u32 %v1767, 7
        %v1769 = vsub.s32 0, %v1768
        %v1770 = vrot.slane %v1765, %v1769
        %v1771 = vlaneseq
        %v1772 = vshrl.u32 %v1771, 7
        %v1773 = vsub.s32 1, %v1772
        %v1774 = vrot.slane %v1765, %v1773
        %v1775 = vlaneseq
        %v1776 = vshrl.u32 %v1775, 7
        %v1777 = vsub.s32 2, %v1776
        %v1778 = vrot.slane %v1765, %v1777
        %v1779 = vlaneseq
        %v1780 = vshrl.u32 %v1779, 7
        %v1781 = vsub.s32 3, %v1780
        %v1782 = vrot.slane %v1765, %v1781
        %v1783 = vlaneseq
        %v1784 = vshrl.u32 %v1783, 7
        %v1785 = vsub.s32 4, %v1784
        %v1786 = vrot.slane %v1765, %v1785
        %v1787 = vlaneseq
        %v1788 = vshrl.u32 %v1787, 7
        %v1789 = vsub.s32 5, %v1788
        %v1790 = vrot.slane %v1765, %v1789
        %v1797 = vmul.f32 %v1431, %v1770
        %v1798 = vmul.f32 %v1433, %v1774
        %v1799 = vmul.f32 %v1595, %v1778
        %v1800 = vmul.f32 %v1597, %v1782
        %v1801 = vmul.f32 %v1759, %v1786
        %v1802 = vmul.f32 %v1761, %v1790
        %v1803 = vld [vmem:[%s635] sm:$0x3f]
        %v1805 = vlaneseq
        %v1806 = vshrl.u32 %v1805, 7
        %v1807 = vsub.s32 0, %v1806
        %v1808 = vrot.slane %v1803, %v1807
        %v1809 = vlaneseq
        %v1810 = vshrl.u32 %v1809, 7
        %v1811 = vsub.s32 1, %v1810
        %v1812 = vrot.slane %v1803, %v1811
        %v1813 = vlaneseq
        %v1814 = vshrl.u32 %v1813, 7
        %v1815 = vsub.s32 2, %v1814
        %v1816 = vrot.slane %v1803, %v1815
        %v1817 = vlaneseq
        %v1818 = vshrl.u32 %v1817, 7
        %v1819 = vsub.s32 3, %v1818
        %v1820 = vrot.slane %v1803, %v1819
        %v1821 = vlaneseq
        %v1822 = vshrl.u32 %v1821, 7
        %v1823 = vsub.s32 4, %v1822
        %v1824 = vrot.slane %v1803, %v1823
        %v1825 = vlaneseq
        %v1826 = vshrl.u32 %v1825, 7
        %v1827 = vsub.s32 5, %v1826
        %v1828 = vrot.slane %v1803, %v1827
        %v1835 = vadd.f32 %v1797, %v1808
        %v1836 = vadd.f32 %v1798, %v1812
        %v1837 = vadd.f32 %v1799, %v1816
        %v1838 = vadd.f32 %v1800, %v1820
        %v1839 = vadd.f32 %v1801, %v1824
        %v1840 = vadd.f32 %v1802, %v1828
        %v1847 = vcombine.low %v1835, %v1836
        %v1848 = vcombine.low %v1837, %v1838
        %v1850 = vunpack.c.l.s4 1983009808
        %v1851 = vunpack.c.0.s8 %v1850
        %v1852 = vlaneseq
        %v1853 = vshrl.u32 %v1852, 7
        %v1854 = vsub.s32 %v1851, %v1853
        %v1855 = vrot.slane %v1847, %v1854
        %v1857 = vunpack.c.l.s4 1983009808
        %v1858 = vunpack.c.0.s8 %v1857
        %v1859 = vlaneseq
        %v1860 = vshrl.u32 %v1859, 7
        %v1861 = vsub.s32 %v1858, %v1860
        %v1862 = vrot.slane %v1848, %v1861
        %v1863 = vcombine.low %v1855, %v1862
        %v1864 = vcombine.low %v1839, %v1840
        %v1866 = vunpack.c.l.s4 1983009808
        %v1867 = vunpack.c.0.s8 %v1866
        %v1868 = vlaneseq
        %v1869 = vshrl.u32 %v1868, 7
        %v1870 = vsub.s32 %v1867, %v1869
        %v1871 = vrot.slane %v1864, %v1870
        %1874 = vst [vmem:[%s625] sm:$0xff] %v1863
        %1875 = vst [vmem:[%s625 + $0x8] sm:$0xf] %v1871
        %s1876 = sand.u32 %s125, 1
        %s1877 = scalar_lea.sflag [#allocation4], %s1876
        %s1878 = sand.u32 %s125, 1
        %s1879 = smul.addr %s1878, 12
        %s1880 = scalar_lea.vmem [#allocation3], %s1879
        // Predicated region
        $region60: #{shared_encoder_forward.5} parent=54 // pred_check
          %p1881 = pneg %p135
        $region61: #{shared_encoder_forward.5} parent=54 // pred_check_branch
          %1883 = sbr.rel (%p1881) target = $region63
        $region62: #{shared_encoder_forward.5} parent=54 // pred_region
          %s1884 = smul.u32 6, %s18
          %s1886 = ssub.s32 192, 192
          %1887 = vsyncadd %s1877, %s1886
          %s1888 = smul.addr %s1884, 32
          %s1889 = scalar_lea.hbm %s4, %s1888
          %s1891 = sshll.u32 %s1880, 4
          %s1892 = int_to_ptr.vmem [resolvable:$true] %s1891
          %1894 = dma.vmem_to_hbm [thread:$0]  %s1892, 192, %s1889, %s1877
        $region63: #{shared_encoder_forward.5} parent=54 // pred_fallthru
          _
      $region55: #{shared_encoder_forward.5} parent=5 // pred_fallthru
        _
      %p1895 = scmp.le.s32.totalorder 2, %s13
      // Predicated region
      $region64: #{shared_encoder_forward.5} parent=5 // pred_check
        %p1896 = pneg %p1895
      $region65: #{shared_encoder_forward.5} parent=5 // pred_check_branch
        %1898 = sbr.rel (%p1896) target = $region67
      $region66: #{shared_encoder_forward.5} parent=5 // pred_region
        %s1899 = ssub.s32 %s13, 2
        // Predicated region
        $region68: #{shared_encoder_forward.5} parent=66 // pred_check
          %p1900 = pneg %p141
        $region69: #{shared_encoder_forward.5} parent=66 // pred_check_branch
          %1902 = sbr.rel (%p1900) target = $region71
        $region70: #{shared_encoder_forward.5} parent=66 // pred_region
          %s1903 = sand.u32 %s126, 1
          %s1904 = scalar_lea.sflag [#allocation4], %s1903
          %s1905 = sand.u32 %s126, 1
          %s1906 = smul.addr %s1905, 12
          %s1907 = scalar_lea.vmem [#allocation3], %s1906
          %1908 = dma.done %s1904, 192
        $region71: #{shared_encoder_forward.5} parent=66 // pred_fallthru
          _
      $region67: #{shared_encoder_forward.5} parent=5 // pred_fallthru
        _
    $region6: #{shared_encoder_forward.5} parent=1 // loop_footer
      %s17 = sadd.s32 1, %s13
    $region7: #{shared_encoder_forward.5} parent=1 // loop_footer_branch
      %12 = sbr.rel target = $region3
    $region8: #{shared_encoder_forward.5} parent=1 // loop_exit
      _
    %1909 = vsyncpa [#allocation4], 1
    %s1910 = scalar_lea.sflag [#allocation4], 1
    %1911 = vsyncpa %s1910, 1

// kernel: shared_encoder_forward.4
$region0: #{shared_encoder_forward.4}
  #allocation0 [shape = 'u32[]', space=smem, size = 0x4, offset = 0x4, fixed_abs, tag = 'smem constant byte address 0x4 - core index']
  #allocation1 [shape = 'u32[144,128]{1,0:T(1,128)}', space=vmem, size = 0x12000, scoped, tag = 'internal scratch']
  %s0 = inlined_call_operand.vmem [shape: bf16[162,3200], index: 0, kind: input, shape index: {}]
  %s1 = inlined_call_operand.vmem [shape: bf16[3200,128], index: 1, kind: input, shape index: {}]
  %s2 = inlined_call_operand.vmem [shape: f32[1,128], index: 2, kind: input, shape index: {}]
  %s3 = inlined_call_operand.vmem [shape: bf16[162,128], index: 3, kind: output, shape index: {}]
  %s4 = sld [smem:[#allocation0]]
  $region22: #{shared_encoder_forward.4} parent=0
    _
  %s6 = ssub.s32 1, %s4
  %s7 = scalar_select 0, %s6, %s4
  // Predicated region
  $region2: #{shared_encoder_forward.4} parent=0 // pred_check
    _
  $region3: #{shared_encoder_forward.4} parent=0 // pred_check_branch
    %9 = sbr.rel (0) target = $region5
  $region4: #{shared_encoder_forward.4} parent=0 // pred_region
    _
  $region5: #{shared_encoder_forward.4} parent=0 // pred_fallthru
    _
  // Predicated region
  $region6: #{shared_encoder_forward.4} parent=0 // pred_check
    _
  $region7: #{shared_encoder_forward.4} parent=0 // pred_check_branch
    %11 = sbr.rel (0) target = $region9
  $region8: #{shared_encoder_forward.4} parent=0 // pred_region
    _
  $region9: #{shared_encoder_forward.4} parent=0 // pred_fallthru
    _
  // Predicated region
  $region10: #{shared_encoder_forward.4} parent=0 // pred_check
    _
  $region11: #{shared_encoder_forward.4} parent=0 // pred_check_branch
    %13 = sbr.rel (0) target = $region13
  $region12: #{shared_encoder_forward.4} parent=0 // pred_region
    _
  $region13: #{shared_encoder_forward.4} parent=0 // pred_fallthru
    _
  %v15 = vld [vmem:[%s0] sm:$0xff]
  %v16 = vld [vmem:[%s0 + $0x8] sm:$0xff]
  %v17 = vld [vmem:[%s0 + $0x10] sm:$0xff]
  %v18 = vld [vmem:[%s0 + $0x18] sm:$0xff]
  %v19 = vld [vmem:[%s0 + $0x20] sm:$0xff]
  %v20 = vld [vmem:[%s0 + $0x28] sm:$0xff]
  %v21 = vld [vmem:[%s0 + $0x30] sm:$0xff]
  %v22 = vld [vmem:[%s0 + $0x38] sm:$0xff]
  %v23 = vld [vmem:[%s0 + $0x40] sm:$0xff]
  %v24 = vld [vmem:[%s0 + $0x48] sm:$0xff]
  %v25 = vld [vmem:[%s0 + $0x50] sm:$0xff]
  %v26 = vld [vmem:[%s0 + $0x58] sm:$0xff]
  %v27 = vld [vmem:[%s0 + $0x60] sm:$0xf]
  %v28 = vld [vmem:[%s0 + $0x64] sm:$0xff]
  %v29 = vld [vmem:[%s0 + $0x6c] sm:$0xff]
  %v30 = vld [vmem:[%s0 + $0x74] sm:$0xff]
  %v31 = vld [vmem:[%s0 + $0x7c] sm:$0xff]
  %v32 = vld [vmem:[%s0 + $0x84] sm:$0xff]
  %v33 = vld [vmem:[%s0 + $0x8c] sm:$0xff]
  %v34 = vld [vmem:[%s0 + $0x94] sm:$0xff]
  %v35 = vld [vmem:[%s0 + $0x9c] sm:$0xff]
  %v36 = vld [vmem:[%s0 + $0xa4] sm:$0xff]
  %v37 = vld [vmem:[%s0 + $0xac] sm:$0xff]
  %v38 = vld [vmem:[%s0 + $0xb4] sm:$0xff]
  %v39 = vld [vmem:[%s0 + $0xbc] sm:$0xff]
  %v40 = vld [vmem:[%s0 + $0xc4] sm:$0xf]
  %v41 = vld [vmem:[%s0 + $0xc8] sm:$0xff]
  %v42 = vld [vmem:[%s0 + $0xd0] sm:$0xff]
  %v43 = vld [vmem:[%s0 + $0xd8] sm:$0xff]
  %v44 = vld [vmem:[%s0 + $0xe0] sm:$0xff]
  %v45 = vld [vmem:[%s0 + $0xe8] sm:$0xff]
  %v46 = vld [vmem:[%s0 + $0xf0] sm:$0xff]
  %v47 = vld [vmem:[%s0 + $0xf8] sm:$0xff]
  %v48 = vld [vmem:[%s0 + $0x100] sm:$0xff]
  %v49 = vld [vmem:[%s0 + $0x108] sm:$0xff]
  %v50 = vld [vmem:[%s0 + $0x110] sm:$0xff]
  %v51 = vld [vmem:[%s0 + $0x118] sm:$0xff]
  %v52 = vld [vmem:[%s0 + $0x120] sm:$0xff]
  %v53 = vld [vmem:[%s0 + $0x128] sm:$0xf]
  %v54 = vld [vmem:[%s0 + $0x12c] sm:$0xff]
  %v55 = vld [vmem:[%s0 + $0x134] sm:$0xff]
  %v56 = vld [vmem:[%s0 + $0x13c] sm:$0xff]
  %v57 = vld [vmem:[%s0 + $0x144] sm:$0xff]
  %v58 = vld [vmem:[%s0 + $0x14c] sm:$0xff]
  %v59 = vld [vmem:[%s0 + $0x154] sm:$0xff]
  %v60 = vld [vmem:[%s0 + $0x15c] sm:$0xff]
  %v61 = vld [vmem:[%s0 + $0x164] sm:$0xff]
  %v62 = vld [vmem:[%s0 + $0x16c] sm:$0xff]
  %v63 = vld [vmem:[%s0 + $0x174] sm:$0xff]
  %v64 = vld [vmem:[%s0 + $0x17c] sm:$0xff]
  %v65 = vld [vmem:[%s0 + $0x184] sm:$0xff]
  %v66 = vld [vmem:[%s0 + $0x18c] sm:$0xf]
  %v67 = vld [vmem:[%s0 + $0x190] sm:$0xff]
  %v68 = vld [vmem:[%s0 + $0x198] sm:$0xff]
  %v69 = vld [vmem:[%s0 + $0x1a0] sm:$0xff]
  %v70 = vld [vmem:[%s0 + $0x1a8] sm:$0xff]
  %v71 = vld [vmem:[%s0 + $0x1b0] sm:$0xff]
  %v72 = vld [vmem:[%s0 + $0x1b8] sm:$0xff]
  %v73 = vld [vmem:[%s0 + $0x1c0] sm:$0xff]
  %v74 = vld [vmem:[%s0 + $0x1c8] sm:$0xff]
  %v75 = vld [vmem:[%s0 + $0x1d0] sm:$0xff]
  %v76 = vld [vmem:[%s0 + $0x1d8] sm:$0xff]
  %v77 = vld [vmem:[%s0 + $0x1e0] sm:$0xff]
  %v78 = vld [vmem:[%s0 + $0x1e8] sm:$0xff]
  %v79 = vld [vmem:[%s0 + $0x1f0] sm:$0xf]
  %v80 = vld [vmem:[%s0 + $0x1f4] sm:$0xff]
  %v81 = vld [vmem:[%s0 + $0x1fc] sm:$0xff]
  %v82 = vld [vmem:[%s0 + $0x204] sm:$0xff]
  %v83 = vld [vmem:[%s0 + $0x20c] sm:$0xff]
  %v84 = vld [vmem:[%s0 + $0x214] sm:$0xff]
  %v85 = vld [vmem:[%s0 + $0x21c] sm:$0xff]
  %v86 = vld [vmem:[%s0 + $0x224] sm:$0xff]
  %v87 = vld [vmem:[%s0 + $0x22c] sm:$0xff]
  %v88 = vld [vmem:[%s0 + $0x234] sm:$0xff]
  %v89 = vld [vmem:[%s0 + $0x23c] sm:$0xff]
  %v90 = vld [vmem:[%s0 + $0x244] sm:$0xff]
  %v91 = vld [vmem:[%s0 + $0x24c] sm:$0xff]
  %v92 = vld [vmem:[%s0 + $0x254] sm:$0xf]
  %v93 = vld [vmem:[%s0 + $0x258] sm:$0xff]
  %v94 = vld [vmem:[%s0 + $0x260] sm:$0xff]
  %v95 = vld [vmem:[%s0 + $0x268] sm:$0xff]
  %v96 = vld [vmem:[%s0 + $0x270] sm:$0xff]
  %v97 = vld [vmem:[%s0 + $0x278] sm:$0xff]
  %v98 = vld [vmem:[%s0 + $0x280] sm:$0xff]
  %v99 = vld [vmem:[%s0 + $0x288] sm:$0xff]
  %v100 = vld [vmem:[%s0 + $0x290] sm:$0xff]
  %v101 = vld [vmem:[%s0 + $0x298] sm:$0xff]
  %v102 = vld [vmem:[%s0 + $0x2a0] sm:$0xff]
  %v103 = vld [vmem:[%s0 + $0x2a8] sm:$0xff]
  %v104 = vld [vmem:[%s0 + $0x2b0] sm:$0xff]
  %v105 = vld [vmem:[%s0 + $0x2b8] sm:$0xf]
  %v106 = vld [vmem:[%s0 + $0x2bc] sm:$0xff]
  %v107 = vld [vmem:[%s0 + $0x2c4] sm:$0xff]
  %v108 = vld [vmem:[%s0 + $0x2cc] sm:$0xff]
  %v109 = vld [vmem:[%s0 + $0x2d4] sm:$0xff]
  %v110 = vld [vmem:[%s0 + $0x2dc] sm:$0xff]
  %v111 = vld [vmem:[%s0 + $0x2e4] sm:$0xff]
  %v112 = vld [vmem:[%s0 + $0x2ec] sm:$0xff]
  %v113 = vld [vmem:[%s0 + $0x2f4] sm:$0xff]
  %v114 = vld [vmem:[%s0 + $0x2fc] sm:$0xff]
  %v115 = vld [vmem:[%s0 + $0x304] sm:$0xff]
  %v116 = vld [vmem:[%s0 + $0x30c] sm:$0xff]
  %v117 = vld [vmem:[%s0 + $0x314] sm:$0xff]
  %v118 = vld [vmem:[%s0 + $0x31c] sm:$0xf]
  %v119 = vld [vmem:[%s0 + $0x320] sm:$0xff]
  %v120 = vld [vmem:[%s0 + $0x328] sm:$0xff]
  %v121 = vld [vmem:[%s0 + $0x330] sm:$0xff]
  %v122 = vld [vmem:[%s0 + $0x338] sm:$0xff]
  %v123 = vld [vmem:[%s0 + $0x340] sm:$0xff]
  %v124 = vld [vmem:[%s0 + $0x348] sm:$0xff]
  %v125 = vld [vmem:[%s0 + $0x350] sm:$0xff]
  %v126 = vld [vmem:[%s0 + $0x358] sm:$0xff]
  %v127 = vld [vmem:[%s0 + $0x360] sm:$0xff]
  %v128 = vld [vmem:[%s0 + $0x368] sm:$0xff]
  %v129 = vld [vmem:[%s0 + $0x370] sm:$0xff]
  %v130 = vld [vmem:[%s0 + $0x378] sm:$0xff]
  %v131 = vld [vmem:[%s0 + $0x380] sm:$0xf]
  %v132 = vld [vmem:[%s0 + $0x384] sm:$0xff]
  %v133 = vld [vmem:[%s0 + $0x38c] sm:$0xff]
  %v134 = vld [vmem:[%s0 + $0x394] sm:$0xff]
  %v135 = vld [vmem:[%s0 + $0x39c] sm:$0xff]
  %v136 = vld [vmem:[%s0 + $0x3a4] sm:$0xff]
  %v137 = vld [vmem:[%s0 + $0x3ac] sm:$0xff]
  %v138 = vld [vmem:[%s0 + $0x3b4] sm:$0xff]
  %v139 = vld [vmem:[%s0 + $0x3bc] sm:$0xff]
  %v140 = vld [vmem:[%s0 + $0x3c4] sm:$0xff]
  %v141 = vld [vmem:[%s0 + $0x3cc] sm:$0xff]
  %v142 = vld [vmem:[%s0 + $0x3d4] sm:$0xff]
  %v143 = vld [vmem:[%s0 + $0x3dc] sm:$0xff]
  %v144 = vld [vmem:[%s0 + $0x3e4] sm:$0xf]
  %v145 = vld [vmem:[%s0 + $0x3e8] sm:$0xff]
  %v146 = vld [vmem:[%s0 + $0x3f0] sm:$0xff]
  %v147 = vld [vmem:[%s0 + $0x3f8] sm:$0xff]
  %v148 = vld [vmem:[%s0 + $0x400] sm:$0xff]
  %v149 = vld [vmem:[%s0 + $0x408] sm:$0xff]
  %v150 = vld [vmem:[%s0 + $0x410] sm:$0xff]
  %v151 = vld [vmem:[%s0 + $0x418] sm:$0xff]
  %v152 = vld [vmem:[%s0 + $0x420] sm:$0xff]
  %v153 = vld [vmem:[%s0 + $0x428] sm:$0xff]
  %v154 = vld [vmem:[%s0 + $0x430] sm:$0xff]
  %v155 = vld [vmem:[%s0 + $0x438] sm:$0xff]
  %v156 = vld [vmem:[%s0 + $0x440] sm:$0xff]
  %v157 = vld [vmem:[%s0 + $0x448] sm:$0xf]
  %v158 = vld [vmem:[%s0 + $0x44c] sm:$0xff]
  %v159 = vld [vmem:[%s0 + $0x454] sm:$0xff]
  %v160 = vld [vmem:[%s0 + $0x45c] sm:$0xff]
  %v161 = vld [vmem:[%s0 + $0x464] sm:$0xff]
  %v162 = vld [vmem:[%s0 + $0x46c] sm:$0xff]
  %v163 = vld [vmem:[%s0 + $0x474] sm:$0xff]
  %v164 = vld [vmem:[%s0 + $0x47c] sm:$0xff]
  %v165 = vld [vmem:[%s0 + $0x484] sm:$0xff]
  %v166 = vld [vmem:[%s0 + $0x48c] sm:$0xff]
  %v167 = vld [vmem:[%s0 + $0x494] sm:$0xff]
  %v168 = vld [vmem:[%s0 + $0x49c] sm:$0xff]
  %v169 = vld [vmem:[%s0 + $0x4a4] sm:$0xff]
  %v170 = vld [vmem:[%s0 + $0x4ac] sm:$0xf]
  %v171 = vld [vmem:[%s0 + $0x4b0] sm:$0xff]
  %v172 = vld [vmem:[%s0 + $0x4b8] sm:$0xff]
  %v173 = vld [vmem:[%s0 + $0x4c0] sm:$0xff]
  %v174 = vld [vmem:[%s0 + $0x4c8] sm:$0xff]
  %v175 = vld [vmem:[%s0 + $0x4d0] sm:$0xff]
  %v176 = vld [vmem:[%s0 + $0x4d8] sm:$0xff]
  %v177 = vld [vmem:[%s0 + $0x4e0] sm:$0xff]
  %v178 = vld [vmem:[%s0 + $0x4e8] sm:$0xff]
  %v179 = vld [vmem:[%s0 + $0x4f0] sm:$0xff]
  %v180 = vld [vmem:[%s0 + $0x4f8] sm:$0xff]
  %v181 = vld [vmem:[%s0 + $0x500] sm:$0xff]
  %v182 = vld [vmem:[%s0 + $0x508] sm:$0xff]
  %v183 = vld [vmem:[%s0 + $0x510] sm:$0xf]
  %v184 = vld [vmem:[%s0 + $0x514] sm:$0xff]
  %v185 = vld [vmem:[%s0 + $0x51c] sm:$0xff]
  %v186 = vld [vmem:[%s0 + $0x524] sm:$0xff]
  %v187 = vld [vmem:[%s0 + $0x52c] sm:$0xff]
  %v188 = vld [vmem:[%s0 + $0x534] sm:$0xff]
  %v189 = vld [vmem:[%s0 + $0x53c] sm:$0xff]
  %v190 = vld [vmem:[%s0 + $0x544] sm:$0xff]
  %v191 = vld [vmem:[%s0 + $0x54c] sm:$0xff]
  %v192 = vld [vmem:[%s0 + $0x554] sm:$0xff]
  %v193 = vld [vmem:[%s0 + $0x55c] sm:$0xff]
  %v194 = vld [vmem:[%s0 + $0x564] sm:$0xff]
  %v195 = vld [vmem:[%s0 + $0x56c] sm:$0xff]
  %v196 = vld [vmem:[%s0 + $0x574] sm:$0xf]
  %v197 = vld [vmem:[%s0 + $0x578] sm:$0xff]
  %v198 = vld [vmem:[%s0 + $0x580] sm:$0xff]
  %v199 = vld [vmem:[%s0 + $0x588] sm:$0xff]
  %v200 = vld [vmem:[%s0 + $0x590] sm:$0xff]
  %v201 = vld [vmem:[%s0 + $0x598] sm:$0xff]
  %v202 = vld [vmem:[%s0 + $0x5a0] sm:$0xff]
  %v203 = vld [vmem:[%s0 + $0x5a8] sm:$0xff]
  %v204 = vld [vmem:[%s0 + $0x5b0] sm:$0xff]
  %v205 = vld [vmem:[%s0 + $0x5b8] sm:$0xff]
  %v206 = vld [vmem:[%s0 + $0x5c0] sm:$0xff]
  %v207 = vld [vmem:[%s0 + $0x5c8] sm:$0xff]
  %v208 = vld [vmem:[%s0 + $0x5d0] sm:$0xff]
  %v209 = vld [vmem:[%s0 + $0x5d8] sm:$0xf]
  %v210 = vld [vmem:[%s0 + $0x5dc] sm:$0xff]
  %v211 = vld [vmem:[%s0 + $0x5e4] sm:$0xff]
  %v212 = vld [vmem:[%s0 + $0x5ec] sm:$0xff]
  %v213 = vld [vmem:[%s0 + $0x5f4] sm:$0xff]
  %v214 = vld [vmem:[%s0 + $0x5fc] sm:$0xff]
  %v215 = vld [vmem:[%s0 + $0x604] sm:$0xff]
  %v216 = vld [vmem:[%s0 + $0x60c] sm:$0xff]
  %v217 = vld [vmem:[%s0 + $0x614] sm:$0xff]
  %v218 = vld [vmem:[%s0 + $0x61c] sm:$0xff]
  %v219 = vld [vmem:[%s0 + $0x624] sm:$0xff]
  %v220 = vld [vmem:[%s0 + $0x62c] sm:$0xff]
  %v221 = vld [vmem:[%s0 + $0x634] sm:$0xff]
  %v222 = vld [vmem:[%s0 + $0x63c] sm:$0xf]
  %v223 = vld [vmem:[%s0 + $0x640] sm:$0xff]
  %v224 = vld [vmem:[%s0 + $0x648] sm:$0xff]
  %v225 = vld [vmem:[%s0 + $0x650] sm:$0xff]
  %v226 = vld [vmem:[%s0 + $0x658] sm:$0xff]
  %v227 = vld [vmem:[%s0 + $0x660] sm:$0xff]
  %v228 = vld [vmem:[%s0 + $0x668] sm:$0xff]
  %v229 = vld [vmem:[%s0 + $0x670] sm:$0xff]
  %v230 = vld [vmem:[%s0 + $0x678] sm:$0xff]
  %v231 = vld [vmem:[%s0 + $0x680] sm:$0xff]
  %v232 = vld [vmem:[%s0 + $0x688] sm:$0xff]
  %v233 = vld [vmem:[%s0 + $0x690] sm:$0xff]
  %v234 = vld [vmem:[%s0 + $0x698] sm:$0xff]
  %v235 = vld [vmem:[%s0 + $0x6a0] sm:$0xf]
  %v236 = vld [vmem:[%s0 + $0x6a4] sm:$0xff]
  %v237 = vld [vmem:[%s0 + $0x6ac] sm:$0xff]
  %v238 = vld [vmem:[%s0 + $0x6b4] sm:$0xff]
  %v239 = vld [vmem:[%s0 + $0x6bc] sm:$0xff]
  %v240 = vld [vmem:[%s0 + $0x6c4] sm:$0xff]
  %v241 = vld [vmem:[%s0 + $0x6cc] sm:$0xff]
  %v242 = vld [vmem:[%s0 + $0x6d4] sm:$0xff]
  %v243 = vld [vmem:[%s0 + $0x6dc] sm:$0xff]
  %v244 = vld [vmem:[%s0 + $0x6e4] sm:$0xff]
  %v245 = vld [vmem:[%s0 + $0x6ec] sm:$0xff]
  %v246 = vld [vmem:[%s0 + $0x6f4] sm:$0xff]
  %v247 = vld [vmem:[%s0 + $0x6fc] sm:$0xff]
  %v248 = vld [vmem:[%s0 + $0x704] sm:$0xf]
  %v249 = vld [vmem:[%s0 + $0x708] sm:$0xff]
  %v250 = vld [vmem:[%s0 + $0x710] sm:$0xff]
  %v251 = vld [vmem:[%s0 + $0x718] sm:$0xff]
  %v252 = vld [vmem:[%s0 + $0x720] sm:$0xff]
  %v253 = vld [vmem:[%s0 + $0x728] sm:$0xff]
  %v254 = vld [vmem:[%s0 + $0x730] sm:$0xff]
  %v255 = vld [vmem:[%s0 + $0x738] sm:$0xff]
  %v256 = vld [vmem:[%s0 + $0x740] sm:$0xff]
  %v257 = vld [vmem:[%s0 + $0x748] sm:$0xff]
  %v258 = vld [vmem:[%s0 + $0x750] sm:$0xff]
  %v259 = vld [vmem:[%s0 + $0x758] sm:$0xff]
  %v260 = vld [vmem:[%s0 + $0x760] sm:$0xff]
  %v261 = vld [vmem:[%s0 + $0x768] sm:$0xf]
  %v262 = vld [vmem:[%s0 + $0x76c] sm:$0xff]
  %v263 = vld [vmem:[%s0 + $0x774] sm:$0xff]
  %v264 = vld [vmem:[%s0 + $0x77c] sm:$0xff]
  %v265 = vld [vmem:[%s0 + $0x784] sm:$0xff]
  %v266 = vld [vmem:[%s0 + $0x78c] sm:$0xff]
  %v267 = vld [vmem:[%s0 + $0x794] sm:$0xff]
  %v268 = vld [vmem:[%s0 + $0x79c] sm:$0xff]
  %v269 = vld [vmem:[%s0 + $0x7a4] sm:$0xff]
  %v270 = vld [vmem:[%s0 + $0x7ac] sm:$0xff]
  %v271 = vld [vmem:[%s0 + $0x7b4] sm:$0xff]
  %v272 = vld [vmem:[%s0 + $0x7bc] sm:$0xff]
  %v273 = vld [vmem:[%s0 + $0x7c4] sm:$0xff]
  %v274 = vld [vmem:[%s0 + $0x7cc] sm:$0xf]
  %v275 = vld [vmem:[%s0 + $0x7d0] sm:$0x11]
  %v276 = vld [vmem:[%s0 + $0x7d8] sm:$0x11]
  %v277 = vld [vmem:[%s0 + $0x7e0] sm:$0x11]
  %v278 = vld [vmem:[%s0 + $0x7e8] sm:$0x11]
  %v279 = vld [vmem:[%s0 + $0x7f0] sm:$0x11]
  %v280 = vld [vmem:[%s0 + $0x7f8] sm:$0x11]
  %v281 = vld [vmem:[%s0 + $0x800] sm:$0x11]
  %v282 = vld [vmem:[%s0 + $0x808] sm:$0x11]
  %v283 = vld [vmem:[%s0 + $0x810] sm:$0x11]
  %v284 = vld [vmem:[%s0 + $0x818] sm:$0x11]
  %v285 = vld [vmem:[%s0 + $0x820] sm:$0x11]
  %v286 = vld [vmem:[%s0 + $0x828] sm:$0x11]
  %v287 = vld [vmem:[%s0 + $0x830] sm:$0x1]
  %v288 = vld [vmem:[%s1] sm:$0xf]
  %v289 = vld [vmem:[%s1 + $0x4] sm:$0xf]
  %v290 = vld [vmem:[%s1 + $0x8] sm:$0xf]
  %v291 = vld [vmem:[%s1 + $0xc] sm:$0xf]
  %v292 = vld [vmem:[%s1 + $0x10] sm:$0xf]
  %v293 = vld [vmem:[%s1 + $0x14] sm:$0xf]
  %v294 = vld [vmem:[%s1 + $0x18] sm:$0xf]
  %v295 = vld [vmem:[%s1 + $0x1c] sm:$0xf]
  %v296 = vld [vmem:[%s1 + $0x20] sm:$0xf]
  %v297 = vld [vmem:[%s1 + $0x24] sm:$0xf]
  %v298 = vld [vmem:[%s1 + $0x28] sm:$0xf]
  %v299 = vld [vmem:[%s1 + $0x2c] sm:$0xf]
  %v300 = vld [vmem:[%s1 + $0x30] sm:$0xf]
  %v301 = vld [vmem:[%s1 + $0x34] sm:$0xf]
  %v302 = vld [vmem:[%s1 + $0x38] sm:$0xf]
  %v303 = vld [vmem:[%s1 + $0x3c] sm:$0xf]
  %v304 = vld [vmem:[%s1 + $0x40] sm:$0xf]
  %v305 = vld [vmem:[%s1 + $0x44] sm:$0xf]
  %v306 = vld [vmem:[%s1 + $0x48] sm:$0xf]
  %v307 = vld [vmem:[%s1 + $0x4c] sm:$0xf]
  %v308 = vld [vmem:[%s1 + $0x50] sm:$0xf]
  %v309 = vld [vmem:[%s1 + $0x54] sm:$0xf]
  %v310 = vld [vmem:[%s1 + $0x58] sm:$0xf]
  %v311 = vld [vmem:[%s1 + $0x5c] sm:$0xf]
  %v312 = vld [vmem:[%s1 + $0x60] sm:$0xf]
  %v313 = vld [vmem:[%s1 + $0x64] sm:$0xf]
  %v314 = vld [vmem:[%s1 + $0x68] sm:$0xf]
  %v315 = vld [vmem:[%s1 + $0x6c] sm:$0xf]
  %v316 = vld [vmem:[%s1 + $0x70] sm:$0xf]
  %v317 = vld [vmem:[%s1 + $0x74] sm:$0xf]
  %v318 = vld [vmem:[%s1 + $0x78] sm:$0xf]
  %v319 = vld [vmem:[%s1 + $0x7c] sm:$0xf]
  %v320 = vld [vmem:[%s1 + $0x80] sm:$0xf]
  %v321 = vld [vmem:[%s1 + $0x84] sm:$0xf]
  %v322 = vld [vmem:[%s1 + $0x88] sm:$0xf]
  %v323 = vld [vmem:[%s1 + $0x8c] sm:$0xf]
  %v324 = vld [vmem:[%s1 + $0x90] sm:$0xf]
  %v325 = vld [vmem:[%s1 + $0x94] sm:$0xf]
  %v326 = vld [vmem:[%s1 + $0x98] sm:$0xf]
  %v327 = vld [vmem:[%s1 + $0x9c] sm:$0xf]
  %v328 = vld [vmem:[%s1 + $0xa0] sm:$0xf]
  %v329 = vld [vmem:[%s1 + $0xa4] sm:$0xf]
  %v330 = vld [vmem:[%s1 + $0xa8] sm:$0xf]
  %v331 = vld [vmem:[%s1 + $0xac] sm:$0xf]
  %v332 = vld [vmem:[%s1 + $0xb0] sm:$0xf]
  %v333 = vld [vmem:[%s1 + $0xb4] sm:$0xf]
  %v334 = vld [vmem:[%s1 + $0xb8] sm:$0xf]
  %v335 = vld [vmem:[%s1 + $0xbc] sm:$0xf]
  %v336 = vld [vmem:[%s1 + $0xc0] sm:$0xf]
  %v337 = vld [vmem:[%s1 + $0xc4] sm:$0xf]
  %v338 = vld [vmem:[%s1 + $0xc8] sm:$0xf]
  %v339 = vld [vmem:[%s1 + $0xcc] sm:$0xf]
  %v340 = vld [vmem:[%s1 + $0xd0] sm:$0xf]
  %v341 = vld [vmem:[%s1 + $0xd4] sm:$0xf]
  %v342 = vld [vmem:[%s1 + $0xd8] sm:$0xf]
  %v343 = vld [vmem:[%s1 + $0xdc] sm:$0xf]
  %v344 = vld [vmem:[%s1 + $0xe0] sm:$0xf]
  %v345 = vld [vmem:[%s1 + $0xe4] sm:$0xf]
  %v346 = vld [vmem:[%s1 + $0xe8] sm:$0xf]
  %v347 = vld [vmem:[%s1 + $0xec] sm:$0xf]
  %v348 = vld [vmem:[%s1 + $0xf0] sm:$0xf]
  %v349 = vld [vmem:[%s1 + $0xf4] sm:$0xf]
  %v350 = vld [vmem:[%s1 + $0xf8] sm:$0xf]
  %v351 = vld [vmem:[%s1 + $0xfc] sm:$0xf]
  %v352 = vld [vmem:[%s1 + $0x100] sm:$0xf]
  %v353 = vld [vmem:[%s1 + $0x104] sm:$0xf]
  %v354 = vld [vmem:[%s1 + $0x108] sm:$0xf]
  %v355 = vld [vmem:[%s1 + $0x10c] sm:$0xf]
  %v356 = vld [vmem:[%s1 + $0x110] sm:$0xf]
  %v357 = vld [vmem:[%s1 + $0x114] sm:$0xf]
  %v358 = vld [vmem:[%s1 + $0x118] sm:$0xf]
  %v359 = vld [vmem:[%s1 + $0x11c] sm:$0xf]
  %v360 = vld [vmem:[%s1 + $0x120] sm:$0xf]
  %v361 = vld [vmem:[%s1 + $0x124] sm:$0xf]
  %v362 = vld [vmem:[%s1 + $0x128] sm:$0xf]
  %v363 = vld [vmem:[%s1 + $0x12c] sm:$0xf]
  %v364 = vld [vmem:[%s1 + $0x130] sm:$0xf]
  %v365 = vld [vmem:[%s1 + $0x134] sm:$0xf]
  %v366 = vld [vmem:[%s1 + $0x138] sm:$0xf]
  %v367 = vld [vmem:[%s1 + $0x13c] sm:$0xf]
  %v368 = vld [vmem:[%s1 + $0x140] sm:$0xf]
  %v369 = vld [vmem:[%s1 + $0x144] sm:$0xf]
  %v370 = vld [vmem:[%s1 + $0x148] sm:$0xf]
  %v371 = vld [vmem:[%s1 + $0x14c] sm:$0xf]
  %v372 = vld [vmem:[%s1 + $0x150] sm:$0xf]
  %v373 = vld [vmem:[%s1 + $0x154] sm:$0xf]
  %v374 = vld [vmem:[%s1 + $0x158] sm:$0xf]
  %v375 = vld [vmem:[%s1 + $0x15c] sm:$0xf]
  %v376 = vld [vmem:[%s1 + $0x160] sm:$0xf]
  %v377 = vld [vmem:[%s1 + $0x164] sm:$0xf]
  %v378 = vld [vmem:[%s1 + $0x168] sm:$0xf]
  %v379 = vld [vmem:[%s1 + $0x16c] sm:$0xf]
  %v380 = vld [vmem:[%s1 + $0x170] sm:$0xf]
  %v381 = vld [vmem:[%s1 + $0x174] sm:$0xf]
  %v382 = vld [vmem:[%s1 + $0x178] sm:$0xf]
  %v383 = vld [vmem:[%s1 + $0x17c] sm:$0xf]
  %v384 = vld [vmem:[%s1 + $0x180] sm:$0xf]
  %v385 = vld [vmem:[%s1 + $0x184] sm:$0xf]
  %v386 = vld [vmem:[%s1 + $0x188] sm:$0xf]
  %v387 = vld [vmem:[%s1 + $0x18c] sm:$0xf]
  %v388 = vld [vmem:[%s1 + $0x190] sm:$0xf]
  %v389 = vld [vmem:[%s1 + $0x194] sm:$0xf]
  %v390 = vld [vmem:[%s1 + $0x198] sm:$0xf]
  %v391 = vld [vmem:[%s1 + $0x19c] sm:$0xf]
  %v392 = vld [vmem:[%s1 + $0x1a0] sm:$0xf]
  %v393 = vld [vmem:[%s1 + $0x1a4] sm:$0xf]
  %v394 = vld [vmem:[%s1 + $0x1a8] sm:$0xf]
  %v395 = vld [vmem:[%s1 + $0x1ac] sm:$0xf]
  %v396 = vld [vmem:[%s1 + $0x1b0] sm:$0xf]
  %v397 = vld [vmem:[%s1 + $0x1b4] sm:$0xf]
  %v398 = vld [vmem:[%s1 + $0x1b8] sm:$0xf]
  %v399 = vld [vmem:[%s1 + $0x1bc] sm:$0xf]
  %v400 = vld [vmem:[%s1 + $0x1c0] sm:$0xf]
  %v401 = vld [vmem:[%s1 + $0x1c4] sm:$0xf]
  %v402 = vld [vmem:[%s1 + $0x1c8] sm:$0xf]
  %v403 = vld [vmem:[%s1 + $0x1cc] sm:$0xf]
  %v404 = vld [vmem:[%s1 + $0x1d0] sm:$0xf]
  %v405 = vld [vmem:[%s1 + $0x1d4] sm:$0xf]
  %v406 = vld [vmem:[%s1 + $0x1d8] sm:$0xf]
  %v407 = vld [vmem:[%s1 + $0x1dc] sm:$0xf]
  %v408 = vld [vmem:[%s1 + $0x1e0] sm:$0xf]
  %v409 = vld [vmem:[%s1 + $0x1e4] sm:$0xf]
  %v410 = vld [vmem:[%s1 + $0x1e8] sm:$0xf]
  %v411 = vld [vmem:[%s1 + $0x1ec] sm:$0xf]
  %v412 = vld [vmem:[%s1 + $0x1f0] sm:$0xf]
  %v413 = vld [vmem:[%s1 + $0x1f4] sm:$0xf]
  %v414 = vld [vmem:[%s1 + $0x1f8] sm:$0xf]
  %v415 = vld [vmem:[%s1 + $0x1fc] sm:$0xf]
  %v416 = vld [vmem:[%s1 + $0x200] sm:$0xf]
  %v417 = vld [vmem:[%s1 + $0x204] sm:$0xf]
  %v418 = vld [vmem:[%s1 + $0x208] sm:$0xf]
  %v419 = vld [vmem:[%s1 + $0x20c] sm:$0xf]
  %v420 = vld [vmem:[%s1 + $0x210] sm:$0xf]
  %v421 = vld [vmem:[%s1 + $0x214] sm:$0xf]
  %v422 = vld [vmem:[%s1 + $0x218] sm:$0xf]
  %v423 = vld [vmem:[%s1 + $0x21c] sm:$0xf]
  %v424 = vld [vmem:[%s1 + $0x220] sm:$0xf]
  %v425 = vld [vmem:[%s1 + $0x224] sm:$0xf]
  %v426 = vld [vmem:[%s1 + $0x228] sm:$0xf]
  %v427 = vld [vmem:[%s1 + $0x22c] sm:$0xf]
  %v428 = vld [vmem:[%s1 + $0x230] sm:$0xf]
  %v429 = vld [vmem:[%s1 + $0x234] sm:$0xf]
  %v430 = vld [vmem:[%s1 + $0x238] sm:$0xf]
  %v431 = vld [vmem:[%s1 + $0x23c] sm:$0xf]
  %v432 = vld [vmem:[%s1 + $0x240] sm:$0xf]
  %v433 = vld [vmem:[%s1 + $0x244] sm:$0xf]
  %v434 = vld [vmem:[%s1 + $0x248] sm:$0xf]
  %v435 = vld [vmem:[%s1 + $0x24c] sm:$0xf]
  %v436 = vld [vmem:[%s1 + $0x250] sm:$0xf]
  %v437 = vld [vmem:[%s1 + $0x254] sm:$0xf]
  %v438 = vld [vmem:[%s1 + $0x258] sm:$0xf]
  %v439 = vld [vmem:[%s1 + $0x25c] sm:$0xf]
  %v440 = vld [vmem:[%s1 + $0x260] sm:$0xf]
  %v441 = vld [vmem:[%s1 + $0x264] sm:$0xf]
  %v442 = vld [vmem:[%s1 + $0x268] sm:$0xf]
  %v443 = vld [vmem:[%s1 + $0x26c] sm:$0xf]
  %v444 = vld [vmem:[%s1 + $0x270] sm:$0xf]
  %v445 = vld [vmem:[%s1 + $0x274] sm:$0xf]
  %v446 = vld [vmem:[%s1 + $0x278] sm:$0xf]
  %v447 = vld [vmem:[%s1 + $0x27c] sm:$0xf]
  %v448 = vld [vmem:[%s1 + $0x280] sm:$0xf]
  %v449 = vld [vmem:[%s1 + $0x284] sm:$0xf]
  %v450 = vld [vmem:[%s1 + $0x288] sm:$0xf]
  %v451 = vld [vmem:[%s1 + $0x28c] sm:$0xf]
  %v452 = vld [vmem:[%s1 + $0x290] sm:$0xf]
  %v453 = vld [vmem:[%s1 + $0x294] sm:$0xf]
  %v454 = vld [vmem:[%s1 + $0x298] sm:$0xf]
  %v455 = vld [vmem:[%s1 + $0x29c] sm:$0xf]
  %v456 = vld [vmem:[%s1 + $0x2a0] sm:$0xf]
  %v457 = vld [vmem:[%s1 + $0x2a4] sm:$0xf]
  %v458 = vld [vmem:[%s1 + $0x2a8] sm:$0xf]
  %v459 = vld [vmem:[%s1 + $0x2ac] sm:$0xf]
  %v460 = vld [vmem:[%s1 + $0x2b0] sm:$0xf]
  %v461 = vld [vmem:[%s1 + $0x2b4] sm:$0xf]
  %v462 = vld [vmem:[%s1 + $0x2b8] sm:$0xf]
  %v463 = vld [vmem:[%s1 + $0x2bc] sm:$0xf]
  %v464 = vld [vmem:[%s1 + $0x2c0] sm:$0xf]
  %v465 = vld [vmem:[%s1 + $0x2c4] sm:$0xf]
  %v466 = vld [vmem:[%s1 + $0x2c8] sm:$0xf]
  %v467 = vld [vmem:[%s1 + $0x2cc] sm:$0xf]
  %v468 = vld [vmem:[%s1 + $0x2d0] sm:$0xf]
  %v469 = vld [vmem:[%s1 + $0x2d4] sm:$0xf]
  %v470 = vld [vmem:[%s1 + $0x2d8] sm:$0xf]
  %v471 = vld [vmem:[%s1 + $0x2dc] sm:$0xf]
  %v472 = vld [vmem:[%s1 + $0x2e0] sm:$0xf]
  %v473 = vld [vmem:[%s1 + $0x2e4] sm:$0xf]
  %v474 = vld [vmem:[%s1 + $0x2e8] sm:$0xf]
  %v475 = vld [vmem:[%s1 + $0x2ec] sm:$0xf]
  %v476 = vld [vmem:[%s1 + $0x2f0] sm:$0xf]
  %v477 = vld [vmem:[%s1 + $0x2f4] sm:$0xf]
  %v478 = vld [vmem:[%s1 + $0x2f8] sm:$0xf]
  %v479 = vld [vmem:[%s1 + $0x2fc] sm:$0xf]
  %v480 = vld [vmem:[%s1 + $0x300] sm:$0xf]
  %v481 = vld [vmem:[%s1 + $0x304] sm:$0xf]
  %v482 = vld [vmem:[%s1 + $0x308] sm:$0xf]
  %v483 = vld [vmem:[%s1 + $0x30c] sm:$0xf]
  %v484 = vld [vmem:[%s1 + $0x310] sm:$0xf]
  %v485 = vld [vmem:[%s1 + $0x314] sm:$0xf]
  %v486 = vld [vmem:[%s1 + $0x318] sm:$0xf]
  %v487 = vld [vmem:[%s1 + $0x31c] sm:$0xf]
  %v488 = vld [vmem:[%s1 + $0x320] sm:$0xf]
  %v489 = vld [vmem:[%s1 + $0x324] sm:$0xf]
  %v490 = vld [vmem:[%s1 + $0x328] sm:$0xf]
  %v491 = vld [vmem:[%s1 + $0x32c] sm:$0xf]
  %v492 = vld [vmem:[%s1 + $0x330] sm:$0xf]
  %v493 = vld [vmem:[%s1 + $0x334] sm:$0xf]
  %v494 = vld [vmem:[%s1 + $0x338] sm:$0xf]
  %v495 = vld [vmem:[%s1 + $0x33c] sm:$0xf]
  %v496 = vld [vmem:[%s1 + $0x340] sm:$0xf]
  %v497 = vld [vmem:[%s1 + $0x344] sm:$0xf]
  %v498 = vld [vmem:[%s1 + $0x348] sm:$0xf]
  %v499 = vld [vmem:[%s1 + $0x34c] sm:$0xf]
  %v500 = vld [vmem:[%s1 + $0x350] sm:$0xf]
  %v501 = vld [vmem:[%s1 + $0x354] sm:$0xf]
  %v502 = vld [vmem:[%s1 + $0x358] sm:$0xf]
  %v503 = vld [vmem:[%s1 + $0x35c] sm:$0xf]
  %v504 = vld [vmem:[%s1 + $0x360] sm:$0xf]
  %v505 = vld [vmem:[%s1 + $0x364] sm:$0xf]
  %v506 = vld [vmem:[%s1 + $0x368] sm:$0xf]
  %v507 = vld [vmem:[%s1 + $0x36c] sm:$0xf]
  %v508 = vld [vmem:[%s1 + $0x370] sm:$0xf]
  %v509 = vld [vmem:[%s1 + $0x374] sm:$0xf]
  %v510 = vld [vmem:[%s1 + $0x378] sm:$0xf]
  %v511 = vld [vmem:[%s1 + $0x37c] sm:$0xf]
  %v512 = vld [vmem:[%s1 + $0x380] sm:$0xf]
  %v513 = vld [vmem:[%s1 + $0x384] sm:$0xf]
  %v514 = vld [vmem:[%s1 + $0x388] sm:$0xf]
  %v515 = vld [vmem:[%s1 + $0x38c] sm:$0xf]
  %v516 = vld [vmem:[%s1 + $0x390] sm:$0xf]
  %v517 = vld [vmem:[%s1 + $0x394] sm:$0xf]
  %v518 = vld [vmem:[%s1 + $0x398] sm:$0xf]
  %v519 = vld [vmem:[%s1 + $0x39c] sm:$0xf]
  %v520 = vld [vmem:[%s1 + $0x3a0] sm:$0xf]
  %v521 = vld [vmem:[%s1 + $0x3a4] sm:$0xf]
  %v522 = vld [vmem:[%s1 + $0x3a8] sm:$0xf]
  %v523 = vld [vmem:[%s1 + $0x3ac] sm:$0xf]
  %v524 = vld [vmem:[%s1 + $0x3b0] sm:$0xf]
  %v525 = vld [vmem:[%s1 + $0x3b4] sm:$0xf]
  %v526 = vld [vmem:[%s1 + $0x3b8] sm:$0xf]
  %v527 = vld [vmem:[%s1 + $0x3bc] sm:$0xf]
  %v528 = vld [vmem:[%s1 + $0x3c0] sm:$0xf]
  %v529 = vld [vmem:[%s1 + $0x3c4] sm:$0xf]
  %v530 = vld [vmem:[%s1 + $0x3c8] sm:$0xf]
  %v531 = vld [vmem:[%s1 + $0x3cc] sm:$0xf]
  %v532 = vld [vmem:[%s1 + $0x3d0] sm:$0xf]
  %v533 = vld [vmem:[%s1 + $0x3d4] sm:$0xf]
  %v534 = vld [vmem:[%s1 + $0x3d8] sm:$0xf]
  %v535 = vld [vmem:[%s1 + $0x3dc] sm:$0xf]
  %v536 = vld [vmem:[%s1 + $0x3e0] sm:$0xf]
  %v537 = vld [vmem:[%s1 + $0x3e4] sm:$0xf]
  %v538 = vld [vmem:[%s1 + $0x3e8] sm:$0xf]
  %v539 = vld [vmem:[%s1 + $0x3ec] sm:$0xf]
  %v540 = vld [vmem:[%s1 + $0x3f0] sm:$0xf]
  %v541 = vld [vmem:[%s1 + $0x3f4] sm:$0xf]
  %v542 = vld [vmem:[%s1 + $0x3f8] sm:$0xf]
  %v543 = vld [vmem:[%s1 + $0x3fc] sm:$0xf]
  %v544 = vld [vmem:[%s1 + $0x400] sm:$0xf]
  %v545 = vld [vmem:[%s1 + $0x404] sm:$0xf]
  %v546 = vld [vmem:[%s1 + $0x408] sm:$0xf]
  %v547 = vld [vmem:[%s1 + $0x40c] sm:$0xf]
  %v548 = vld [vmem:[%s1 + $0x410] sm:$0xf]
  %v549 = vld [vmem:[%s1 + $0x414] sm:$0xf]
  %v550 = vld [vmem:[%s1 + $0x418] sm:$0xf]
  %v551 = vld [vmem:[%s1 + $0x41c] sm:$0xf]
  %v552 = vld [vmem:[%s1 + $0x420] sm:$0xf]
  %v553 = vld [vmem:[%s1 + $0x424] sm:$0xf]
  %v554 = vld [vmem:[%s1 + $0x428] sm:$0xf]
  %v555 = vld [vmem:[%s1 + $0x42c] sm:$0xf]
  %v556 = vld [vmem:[%s1 + $0x430] sm:$0xf]
  %v557 = vld [vmem:[%s1 + $0x434] sm:$0xf]
  %v558 = vld [vmem:[%s1 + $0x438] sm:$0xf]
  %v559 = vld [vmem:[%s1 + $0x43c] sm:$0xf]
  %v560 = vld [vmem:[%s1 + $0x440] sm:$0xf]
  %v561 = vld [vmem:[%s1 + $0x444] sm:$0xf]
  %v562 = vld [vmem:[%s1 + $0x448] sm:$0xf]
  %v563 = vld [vmem:[%s1 + $0x44c] sm:$0xf]
  %v564 = vld [vmem:[%s1 + $0x450] sm:$0xf]
  %v565 = vld [vmem:[%s1 + $0x454] sm:$0xf]
  %v566 = vld [vmem:[%s1 + $0x458] sm:$0xf]
  %v567 = vld [vmem:[%s1 + $0x45c] sm:$0xf]
  %v568 = vld [vmem:[%s1 + $0x460] sm:$0xf]
  %v569 = vld [vmem:[%s1 + $0x464] sm:$0xf]
  %v570 = vld [vmem:[%s1 + $0x468] sm:$0xf]
  %v571 = vld [vmem:[%s1 + $0x46c] sm:$0xf]
  %v572 = vld [vmem:[%s1 + $0x470] sm:$0xf]
  %v573 = vld [vmem:[%s1 + $0x474] sm:$0xf]
  %v574 = vld [vmem:[%s1 + $0x478] sm:$0xf]
  %v575 = vld [vmem:[%s1 + $0x47c] sm:$0xf]
  %v576 = vld [vmem:[%s1 + $0x480] sm:$0xf]
  %v577 = vld [vmem:[%s1 + $0x484] sm:$0xf]
  %v578 = vld [vmem:[%s1 + $0x488] sm:$0xf]
  %v579 = vld [vmem:[%s1 + $0x48c] sm:$0xf]
  %v580 = vld [vmem:[%s1 + $0x490] sm:$0xf]
  %v581 = vld [vmem:[%s1 + $0x494] sm:$0xf]
  %v582 = vld [vmem:[%s1 + $0x498] sm:$0xf]
  %v583 = vld [vmem:[%s1 + $0x49c] sm:$0xf]
  %v584 = vld [vmem:[%s1 + $0x4a0] sm:$0xf]
  %v585 = vld [vmem:[%s1 + $0x4a4] sm:$0xf]
  %v586 = vld [vmem:[%s1 + $0x4a8] sm:$0xf]
  %v587 = vld [vmem:[%s1 + $0x4ac] sm:$0xf]
  %v588 = vld [vmem:[%s1 + $0x4b0] sm:$0xf]
  %v589 = vld [vmem:[%s1 + $0x4b4] sm:$0xf]
  %v590 = vld [vmem:[%s1 + $0x4b8] sm:$0xf]
  %v591 = vld [vmem:[%s1 + $0x4bc] sm:$0xf]
  %v592 = vld [vmem:[%s1 + $0x4c0] sm:$0xf]
  %v593 = vld [vmem:[%s1 + $0x4c4] sm:$0xf]
  %v594 = vld [vmem:[%s1 + $0x4c8] sm:$0xf]
  %v595 = vld [vmem:[%s1 + $0x4cc] sm:$0xf]
  %v596 = vld [vmem:[%s1 + $0x4d0] sm:$0xf]
  %v597 = vld [vmem:[%s1 + $0x4d4] sm:$0xf]
  %v598 = vld [vmem:[%s1 + $0x4d8] sm:$0xf]
  %v599 = vld [vmem:[%s1 + $0x4dc] sm:$0xf]
  %v600 = vld [vmem:[%s1 + $0x4e0] sm:$0xf]
  %v601 = vld [vmem:[%s1 + $0x4e4] sm:$0xf]
  %v602 = vld [vmem:[%s1 + $0x4e8] sm:$0xf]
  %v603 = vld [vmem:[%s1 + $0x4ec] sm:$0xf]
  %v604 = vld [vmem:[%s1 + $0x4f0] sm:$0xf]
  %v605 = vld [vmem:[%s1 + $0x4f4] sm:$0xf]
  %v606 = vld [vmem:[%s1 + $0x4f8] sm:$0xf]
  %v607 = vld [vmem:[%s1 + $0x4fc] sm:$0xf]
  %v608 = vld [vmem:[%s1 + $0x500] sm:$0xf]
  %v609 = vld [vmem:[%s1 + $0x504] sm:$0xf]
  %v610 = vld [vmem:[%s1 + $0x508] sm:$0xf]
  %v611 = vld [vmem:[%s1 + $0x50c] sm:$0xf]
  %v612 = vld [vmem:[%s1 + $0x510] sm:$0xf]
  %v613 = vld [vmem:[%s1 + $0x514] sm:$0xf]
  %v614 = vld [vmem:[%s1 + $0x518] sm:$0xf]
  %v615 = vld [vmem:[%s1 + $0x51c] sm:$0xf]
  %v616 = vld [vmem:[%s1 + $0x520] sm:$0xf]
  %v617 = vld [vmem:[%s1 + $0x524] sm:$0xf]
  %v618 = vld [vmem:[%s1 + $0x528] sm:$0xf]
  %v619 = vld [vmem:[%s1 + $0x52c] sm:$0xf]
  %v620 = vld [vmem:[%s1 + $0x530] sm:$0xf]
  %v621 = vld [vmem:[%s1 + $0x534] sm:$0xf]
  %v622 = vld [vmem:[%s1 + $0x538] sm:$0xf]
  %v623 = vld [vmem:[%s1 + $0x53c] sm:$0xf]
  %v624 = vld [vmem:[%s1 + $0x540] sm:$0xf]
  %v625 = vld [vmem:[%s1 + $0x544] sm:$0xf]
  %v626 = vld [vmem:[%s1 + $0x548] sm:$0xf]
  %v627 = vld [vmem:[%s1 + $0x54c] sm:$0xf]
  %v628 = vld [vmem:[%s1 + $0x550] sm:$0xf]
  %v629 = vld [vmem:[%s1 + $0x554] sm:$0xf]
  %v630 = vld [vmem:[%s1 + $0x558] sm:$0xf]
  %v631 = vld [vmem:[%s1 + $0x55c] sm:$0xf]
  %v632 = vld [vmem:[%s1 + $0x560] sm:$0xf]
  %v633 = vld [vmem:[%s1 + $0x564] sm:$0xf]
  %v634 = vld [vmem:[%s1 + $0x568] sm:$0xf]
  %v635 = vld [vmem:[%s1 + $0x56c] sm:$0xf]
  %v636 = vld [vmem:[%s1 + $0x570] sm:$0xf]
  %v637 = vld [vmem:[%s1 + $0x574] sm:$0xf]
  %v638 = vld [vmem:[%s1 + $0x578] sm:$0xf]
  %v639 = vld [vmem:[%s1 + $0x57c] sm:$0xf]
  %v640 = vld [vmem:[%s1 + $0x580] sm:$0xf]
  %v641 = vld [vmem:[%s1 + $0x584] sm:$0xf]
  %v642 = vld [vmem:[%s1 + $0x588] sm:$0xf]
  %v643 = vld [vmem:[%s1 + $0x58c] sm:$0xf]
  %v644 = vld [vmem:[%s1 + $0x590] sm:$0xf]
  %v645 = vld [vmem:[%s1 + $0x594] sm:$0xf]
  %v646 = vld [vmem:[%s1 + $0x598] sm:$0xf]
  %v647 = vld [vmem:[%s1 + $0x59c] sm:$0xf]
  %v648 = vld [vmem:[%s1 + $0x5a0] sm:$0xf]
  %v649 = vld [vmem:[%s1 + $0x5a4] sm:$0xf]
  %v650 = vld [vmem:[%s1 + $0x5a8] sm:$0xf]
  %v651 = vld [vmem:[%s1 + $0x5ac] sm:$0xf]
  %v652 = vld [vmem:[%s1 + $0x5b0] sm:$0xf]
  %v653 = vld [vmem:[%s1 + $0x5b4] sm:$0xf]
  %v654 = vld [vmem:[%s1 + $0x5b8] sm:$0xf]
  %v655 = vld [vmem:[%s1 + $0x5bc] sm:$0xf]
  %v656 = vld [vmem:[%s1 + $0x5c0] sm:$0xf]
  %v657 = vld [vmem:[%s1 + $0x5c4] sm:$0xf]
  %v658 = vld [vmem:[%s1 + $0x5c8] sm:$0xf]
  %v659 = vld [vmem:[%s1 + $0x5cc] sm:$0xf]
  %v660 = vld [vmem:[%s1 + $0x5d0] sm:$0xf]
  %v661 = vld [vmem:[%s1 + $0x5d4] sm:$0xf]
  %v662 = vld [vmem:[%s1 + $0x5d8] sm:$0xf]
  %v663 = vld [vmem:[%s1 + $0x5dc] sm:$0xf]
  %v664 = vld [vmem:[%s1 + $0x5e0] sm:$0xf]
  %v665 = vld [vmem:[%s1 + $0x5e4] sm:$0xf]
  %v666 = vld [vmem:[%s1 + $0x5e8] sm:$0xf]
  %v667 = vld [vmem:[%s1 + $0x5ec] sm:$0xf]
  %v668 = vld [vmem:[%s1 + $0x5f0] sm:$0xf]
  %v669 = vld [vmem:[%s1 + $0x5f4] sm:$0xf]
  %v670 = vld [vmem:[%s1 + $0x5f8] sm:$0xf]
  %v671 = vld [vmem:[%s1 + $0x5fc] sm:$0xf]
  %v672 = vld [vmem:[%s1 + $0x600] sm:$0xf]
  %v673 = vld [vmem:[%s1 + $0x604] sm:$0xf]
  %v674 = vld [vmem:[%s1 + $0x608] sm:$0xf]
  %v675 = vld [vmem:[%s1 + $0x60c] sm:$0xf]
  %v676 = vld [vmem:[%s1 + $0x610] sm:$0xf]
  %v677 = vld [vmem:[%s1 + $0x614] sm:$0xf]
  %v678 = vld [vmem:[%s1 + $0x618] sm:$0xf]
  %v679 = vld [vmem:[%s1 + $0x61c] sm:$0xf]
  %v680 = vld [vmem:[%s1 + $0x620] sm:$0xf]
  %v681 = vld [vmem:[%s1 + $0x624] sm:$0xf]
  %v682 = vld [vmem:[%s1 + $0x628] sm:$0xf]
  %v683 = vld [vmem:[%s1 + $0x62c] sm:$0xf]
  %v684 = vld [vmem:[%s1 + $0x630] sm:$0xf]
  %v685 = vld [vmem:[%s1 + $0x634] sm:$0xf]
  %v686 = vld [vmem:[%s1 + $0x638] sm:$0xf]
  %v687 = vld [vmem:[%s1 + $0x63c] sm:$0xf]
  %v688 = vld [vmem:[%s2] sm:$0x1]
  %v690 = vlaneseq
  %v691 = vshrl.u32 %v690, 7
  %v692 = vsub.s32 0, %v691
  %v693 = vrot.slane %v688, %v692
  %v968 = vunpack.c.l.b16 %v15
  %v969 = vunpack.c.h.b16 %v15
  %v970 = vunpack.c.l.b16 %v16
  %v971 = vunpack.c.h.b16 %v16
  %v972 = vunpack.c.l.b16 %v17
  %v973 = vunpack.c.h.b16 %v17
  %v974 = vunpack.c.l.b16 %v18
  %v975 = vunpack.c.h.b16 %v18
  %v976 = vunpack.c.l.b16 %v19
  %v977 = vunpack.c.h.b16 %v19
  %v978 = vunpack.c.l.b16 %v20
  %v979 = vunpack.c.h.b16 %v20
  %v980 = vunpack.c.l.b16 %v21
  %v981 = vunpack.c.h.b16 %v21
  %v982 = vunpack.c.l.b16 %v22
  %v983 = vunpack.c.h.b16 %v22
  %v984 = vunpack.c.l.b16 %v23
  %v985 = vunpack.c.h.b16 %v23
  %v986 = vunpack.c.l.b16 %v24
  %v987 = vunpack.c.h.b16 %v24
  %v988 = vunpack.c.l.b16 %v25
  %v989 = vunpack.c.h.b16 %v25
  %v990 = vunpack.c.l.b16 %v26
  %v991 = vunpack.c.h.b16 %v26
  %v992 = vunpack.c.l.b16 %v27
  %v993 = vunpack.c.l.b16 %v28
  %v994 = vunpack.c.h.b16 %v28
  %v995 = vunpack.c.l.b16 %v29
  %v996 = vunpack.c.h.b16 %v29
  %v997 = vunpack.c.l.b16 %v30
  %v998 = vunpack.c.h.b16 %v30
  %v999 = vunpack.c.l.b16 %v31
  %v1000 = vunpack.c.h.b16 %v31
  %v1001 = vunpack.c.l.b16 %v32
  %v1002 = vunpack.c.h.b16 %v32
  %v1003 = vunpack.c.l.b16 %v33
  %v1004 = vunpack.c.h.b16 %v33
  %v1005 = vunpack.c.l.b16 %v34
  %v1006 = vunpack.c.h.b16 %v34
  %v1007 = vunpack.c.l.b16 %v35
  %v1008 = vunpack.c.h.b16 %v35
  %v1009 = vunpack.c.l.b16 %v36
  %v1010 = vunpack.c.h.b16 %v36
  %v1011 = vunpack.c.l.b16 %v37
  %v1012 = vunpack.c.h.b16 %v37
  %v1013 = vunpack.c.l.b16 %v38
  %v1014 = vunpack.c.h.b16 %v38
  %v1015 = vunpack.c.l.b16 %v39
  %v1016 = vunpack.c.h.b16 %v39
  %v1017 = vunpack.c.l.b16 %v40
  %v1018 = vunpack.c.l.b16 %v41
  %v1019 = vunpack.c.h.b16 %v41
  %v1020 = vunpack.c.l.b16 %v42
  %v1021 = vunpack.c.h.b16 %v42
  %v1022 = vunpack.c.l.b16 %v43
  %v1023 = vunpack.c.h.b16 %v43
  %v1024 = vunpack.c.l.b16 %v44
  %v1025 = vunpack.c.h.b16 %v44
  %v1026 = vunpack.c.l.b16 %v45
  %v1027 = vunpack.c.h.b16 %v45
  %v1028 = vunpack.c.l.b16 %v46
  %v1029 = vunpack.c.h.b16 %v46
  %v1030 = vunpack.c.l.b16 %v47
  %v1031 = vunpack.c.h.b16 %v47
  %v1032 = vunpack.c.l.b16 %v48
  %v1033 = vunpack.c.h.b16 %v48
  %v1034 = vunpack.c.l.b16 %v49
  %v1035 = vunpack.c.h.b16 %v49
  %v1036 = vunpack.c.l.b16 %v50
  %v1037 = vunpack.c.h.b16 %v50
  %v1038 = vunpack.c.l.b16 %v51
  %v1039 = vunpack.c.h.b16 %v51
  %v1040 = vunpack.c.l.b16 %v52
  %v1041 = vunpack.c.h.b16 %v52
  %v1042 = vunpack.c.l.b16 %v53
  %v1043 = vunpack.c.l.b16 %v54
  %v1044 = vunpack.c.h.b16 %v54
  %v1045 = vunpack.c.l.b16 %v55
  %v1046 = vunpack.c.h.b16 %v55
  %v1047 = vunpack.c.l.b16 %v56
  %v1048 = vunpack.c.h.b16 %v56
  %v1049 = vunpack.c.l.b16 %v57
  %v1050 = vunpack.c.h.b16 %v57
  %v1051 = vunpack.c.l.b16 %v58
  %v1052 = vunpack.c.h.b16 %v58
  %v1053 = vunpack.c.l.b16 %v59
  %v1054 = vunpack.c.h.b16 %v59
  %v1055 = vunpack.c.l.b16 %v60
  %v1056 = vunpack.c.h.b16 %v60
  %v1057 = vunpack.c.l.b16 %v61
  %v1058 = vunpack.c.h.b16 %v61
  %v1059 = vunpack.c.l.b16 %v62
  %v1060 = vunpack.c.h.b16 %v62
  %v1061 = vunpack.c.l.b16 %v63
  %v1062 = vunpack.c.h.b16 %v63
  %v1063 = vunpack.c.l.b16 %v64
  %v1064 = vunpack.c.h.b16 %v64
  %v1065 = vunpack.c.l.b16 %v65
  %v1066 = vunpack.c.h.b16 %v65
  %v1067 = vunpack.c.l.b16 %v66
  %v1068 = vunpack.c.l.b16 %v67
  %v1069 = vunpack.c.h.b16 %v67
  %v1070 = vunpack.c.l.b16 %v68
  %v1071 = vunpack.c.h.b16 %v68
  %v1072 = vunpack.c.l.b16 %v69
  %v1073 = vunpack.c.h.b16 %v69
  %v1074 = vunpack.c.l.b16 %v70
  %v1075 = vunpack.c.h.b16 %v70
  %v1076 = vunpack.c.l.b16 %v71
  %v1077 = vunpack.c.h.b16 %v71
  %v1078 = vunpack.c.l.b16 %v72
  %v1079 = vunpack.c.h.b16 %v72
  %v1080 = vunpack.c.l.b16 %v73
  %v1081 = vunpack.c.h.b16 %v73
  %v1082 = vunpack.c.l.b16 %v74
  %v1083 = vunpack.c.h.b16 %v74
  %v1084 = vunpack.c.l.b16 %v75
  %v1085 = vunpack.c.h.b16 %v75
  %v1086 = vunpack.c.l.b16 %v76
  %v1087 = vunpack.c.h.b16 %v76
  %v1088 = vunpack.c.l.b16 %v77
  %v1089 = vunpack.c.h.b16 %v77
  %v1090 = vunpack.c.l.b16 %v78
  %v1091 = vunpack.c.h.b16 %v78
  %v1092 = vunpack.c.l.b16 %v79
  %v1093 = vunpack.c.l.b16 %v80
  %v1094 = vunpack.c.h.b16 %v80
  %v1095 = vunpack.c.l.b16 %v81
  %v1096 = vunpack.c.h.b16 %v81
  %v1097 = vunpack.c.l.b16 %v82
  %v1098 = vunpack.c.h.b16 %v82
  %v1099 = vunpack.c.l.b16 %v83
  %v1100 = vunpack.c.h.b16 %v83
  %v1101 = vunpack.c.l.b16 %v84
  %v1102 = vunpack.c.h.b16 %v84
  %v1103 = vunpack.c.l.b16 %v85
  %v1104 = vunpack.c.h.b16 %v85
  %v1105 = vunpack.c.l.b16 %v86
  %v1106 = vunpack.c.h.b16 %v86
  %v1107 = vunpack.c.l.b16 %v87
  %v1108 = vunpack.c.h.b16 %v87
  %v1109 = vunpack.c.l.b16 %v88
  %v1110 = vunpack.c.h.b16 %v88
  %v1111 = vunpack.c.l.b16 %v89
  %v1112 = vunpack.c.h.b16 %v89
  %v1113 = vunpack.c.l.b16 %v90
  %v1114 = vunpack.c.h.b16 %v90
  %v1115 = vunpack.c.l.b16 %v91
  %v1116 = vunpack.c.h.b16 %v91
  %v1117 = vunpack.c.l.b16 %v92
  %v1118 = vunpack.c.l.b16 %v93
  %v1119 = vunpack.c.h.b16 %v93
  %v1120 = vunpack.c.l.b16 %v94
  %v1121 = vunpack.c.h.b16 %v94
  %v1122 = vunpack.c.l.b16 %v95
  %v1123 = vunpack.c.h.b16 %v95
  %v1124 = vunpack.c.l.b16 %v96
  %v1125 = vunpack.c.h.b16 %v96
  %v1126 = vunpack.c.l.b16 %v97
  %v1127 = vunpack.c.h.b16 %v97
  %v1128 = vunpack.c.l.b16 %v98
  %v1129 = vunpack.c.h.b16 %v98
  %v1130 = vunpack.c.l.b16 %v99
  %v1131 = vunpack.c.h.b16 %v99
  %v1132 = vunpack.c.l.b16 %v100
  %v1133 = vunpack.c.h.b16 %v100
  %v1134 = vunpack.c.l.b16 %v101
  %v1135 = vunpack.c.h.b16 %v101
  %v1136 = vunpack.c.l.b16 %v102
  %v1137 = vunpack.c.h.b16 %v102
  %v1138 = vunpack.c.l.b16 %v103
  %v1139 = vunpack.c.h.b16 %v103
  %v1140 = vunpack.c.l.b16 %v104
  %v1141 = vunpack.c.h.b16 %v104
  %v1142 = vunpack.c.l.b16 %v105
  %v1143 = vunpack.c.l.b16 %v106
  %v1144 = vunpack.c.h.b16 %v106
  %v1145 = vunpack.c.l.b16 %v107
  %v1146 = vunpack.c.h.b16 %v107
  %v1147 = vunpack.c.l.b16 %v108
  %v1148 = vunpack.c.h.b16 %v108
  %v1149 = vunpack.c.l.b16 %v109
  %v1150 = vunpack.c.h.b16 %v109
  %v1151 = vunpack.c.l.b16 %v110
  %v1152 = vunpack.c.h.b16 %v110
  %v1153 = vunpack.c.l.b16 %v111
  %v1154 = vunpack.c.h.b16 %v111
  %v1155 = vunpack.c.l.b16 %v112
  %v1156 = vunpack.c.h.b16 %v112
  %v1157 = vunpack.c.l.b16 %v113
  %v1158 = vunpack.c.h.b16 %v113
  %v1159 = vunpack.c.l.b16 %v114
  %v1160 = vunpack.c.h.b16 %v114
  %v1161 = vunpack.c.l.b16 %v115
  %v1162 = vunpack.c.h.b16 %v115
  %v1163 = vunpack.c.l.b16 %v116
  %v1164 = vunpack.c.h.b16 %v116
  %v1165 = vunpack.c.l.b16 %v117
  %v1166 = vunpack.c.h.b16 %v117
  %v1167 = vunpack.c.l.b16 %v118
  %v1168 = vunpack.c.l.b16 %v119
  %v1169 = vunpack.c.h.b16 %v119
  %v1170 = vunpack.c.l.b16 %v120
  %v1171 = vunpack.c.h.b16 %v120
  %v1172 = vunpack.c.l.b16 %v121
  %v1173 = vunpack.c.h.b16 %v121
  %v1174 = vunpack.c.l.b16 %v122
  %v1175 = vunpack.c.h.b16 %v122
  %v1176 = vunpack.c.l.b16 %v123
  %v1177 = vunpack.c.h.b16 %v123
  %v1178 = vunpack.c.l.b16 %v124
  %v1179 = vunpack.c.h.b16 %v124
  %v1180 = vunpack.c.l.b16 %v125
  %v1181 = vunpack.c.h.b16 %v125
  %v1182 = vunpack.c.l.b16 %v126
  %v1183 = vunpack.c.h.b16 %v126
  %v1184 = vunpack.c.l.b16 %v127
  %v1185 = vunpack.c.h.b16 %v127
  %v1186 = vunpack.c.l.b16 %v128
  %v1187 = vunpack.c.h.b16 %v128
  %v1188 = vunpack.c.l.b16 %v129
  %v1189 = vunpack.c.h.b16 %v129
  %v1190 = vunpack.c.l.b16 %v130
  %v1191 = vunpack.c.h.b16 %v130
  %v1192 = vunpack.c.l.b16 %v131
  %v1193 = vunpack.c.l.b16 %v132
  %v1194 = vunpack.c.h.b16 %v132
  %v1195 = vunpack.c.l.b16 %v133
  %v1196 = vunpack.c.h.b16 %v133
  %v1197 = vunpack.c.l.b16 %v134
  %v1198 = vunpack.c.h.b16 %v134
  %v1199 = vunpack.c.l.b16 %v135
  %v1200 = vunpack.c.h.b16 %v135
  %v1201 = vunpack.c.l.b16 %v136
  %v1202 = vunpack.c.h.b16 %v136
  %v1203 = vunpack.c.l.b16 %v137
  %v1204 = vunpack.c.h.b16 %v137
  %v1205 = vunpack.c.l.b16 %v138
  %v1206 = vunpack.c.h.b16 %v138
  %v1207 = vunpack.c.l.b16 %v139
  %v1208 = vunpack.c.h.b16 %v139
  %v1209 = vunpack.c.l.b16 %v140
  %v1210 = vunpack.c.h.b16 %v140
  %v1211 = vunpack.c.l.b16 %v141
  %v1212 = vunpack.c.h.b16 %v141
  %v1213 = vunpack.c.l.b16 %v142
  %v1214 = vunpack.c.h.b16 %v142
  %v1215 = vunpack.c.l.b16 %v143
  %v1216 = vunpack.c.h.b16 %v143
  %v1217 = vunpack.c.l.b16 %v144
  %v1218 = vunpack.c.l.b16 %v145
  %v1219 = vunpack.c.h.b16 %v145
  %v1220 = vunpack.c.l.b16 %v146
  %v1221 = vunpack.c.h.b16 %v146
  %v1222 = vunpack.c.l.b16 %v147
  %v1223 = vunpack.c.h.b16 %v147
  %v1224 = vunpack.c.l.b16 %v148
  %v1225 = vunpack.c.h.b16 %v148
  %v1226 = vunpack.c.l.b16 %v149
  %v1227 = vunpack.c.h.b16 %v149
  %v1228 = vunpack.c.l.b16 %v150
  %v1229 = vunpack.c.h.b16 %v150
  %v1230 = vunpack.c.l.b16 %v151
  %v1231 = vunpack.c.h.b16 %v151
  %v1232 = vunpack.c.l.b16 %v152
  %v1233 = vunpack.c.h.b16 %v152
  %v1234 = vunpack.c.l.b16 %v153
  %v1235 = vunpack.c.h.b16 %v153
  %v1236 = vunpack.c.l.b16 %v154
  %v1237 = vunpack.c.h.b16 %v154
  %v1238 = vunpack.c.l.b16 %v155
  %v1239 = vunpack.c.h.b16 %v155
  %v1240 = vunpack.c.l.b16 %v156
  %v1241 = vunpack.c.h.b16 %v156
  %v1242 = vunpack.c.l.b16 %v157
  %v1243 = vunpack.c.l.b16 %v158
  %v1244 = vunpack.c.h.b16 %v158
  %v1245 = vunpack.c.l.b16 %v159
  %v1246 = vunpack.c.h.b16 %v159
  %v1247 = vunpack.c.l.b16 %v160
  %v1248 = vunpack.c.h.b16 %v160
  %v1249 = vunpack.c.l.b16 %v161
  %v1250 = vunpack.c.h.b16 %v161
  %v1251 = vunpack.c.l.b16 %v162
  %v1252 = vunpack.c.h.b16 %v162
  %v1253 = vunpack.c.l.b16 %v163
  %v1254 = vunpack.c.h.b16 %v163
  %v1255 = vunpack.c.l.b16 %v164
  %v1256 = vunpack.c.h.b16 %v164
  %v1257 = vunpack.c.l.b16 %v165
  %v1258 = vunpack.c.h.b16 %v165
  %v1259 = vunpack.c.l.b16 %v166
  %v1260 = vunpack.c.h.b16 %v166
  %v1261 = vunpack.c.l.b16 %v167
  %v1262 = vunpack.c.h.b16 %v167
  %v1263 = vunpack.c.l.b16 %v168
  %v1264 = vunpack.c.h.b16 %v168
  %v1265 = vunpack.c.l.b16 %v169
  %v1266 = vunpack.c.h.b16 %v169
  %v1267 = vunpack.c.l.b16 %v170
  %v1268 = vunpack.c.l.b16 %v171
  %v1269 = vunpack.c.h.b16 %v171
  %v1270 = vunpack.c.l.b16 %v172
  %v1271 = vunpack.c.h.b16 %v172
  %v1272 = vunpack.c.l.b16 %v173
  %v1273 = vunpack.c.h.b16 %v173
  %v1274 = vunpack.c.l.b16 %v174
  %v1275 = vunpack.c.h.b16 %v174
  %v1276 = vunpack.c.l.b16 %v175
  %v1277 = vunpack.c.h.b16 %v175
  %v1278 = vunpack.c.l.b16 %v176
  %v1279 = vunpack.c.h.b16 %v176
  %v1280 = vunpack.c.l.b16 %v177
  %v1281 = vunpack.c.h.b16 %v177
  %v1282 = vunpack.c.l.b16 %v178
  %v1283 = vunpack.c.h.b16 %v178
  %v1284 = vunpack.c.l.b16 %v179
  %v1285 = vunpack.c.h.b16 %v179
  %v1286 = vunpack.c.l.b16 %v180
  %v1287 = vunpack.c.h.b16 %v180
  %v1288 = vunpack.c.l.b16 %v181
  %v1289 = vunpack.c.h.b16 %v181
  %v1290 = vunpack.c.l.b16 %v182
  %v1291 = vunpack.c.h.b16 %v182
  %v1292 = vunpack.c.l.b16 %v183
  %v1293 = vunpack.c.l.b16 %v184
  %v1294 = vunpack.c.h.b16 %v184
  %v1295 = vunpack.c.l.b16 %v185
  %v1296 = vunpack.c.h.b16 %v185
  %v1297 = vunpack.c.l.b16 %v186
  %v1298 = vunpack.c.h.b16 %v186
  %v1299 = vunpack.c.l.b16 %v187
  %v1300 = vunpack.c.h.b16 %v187
  %v1301 = vunpack.c.l.b16 %v188
  %v1302 = vunpack.c.h.b16 %v188
  %v1303 = vunpack.c.l.b16 %v189
  %v1304 = vunpack.c.h.b16 %v189
  %v1305 = vunpack.c.l.b16 %v190
  %v1306 = vunpack.c.h.b16 %v190
  %v1307 = vunpack.c.l.b16 %v191
  %v1308 = vunpack.c.h.b16 %v191
  %v1309 = vunpack.c.l.b16 %v192
  %v1310 = vunpack.c.h.b16 %v192
  %v1311 = vunpack.c.l.b16 %v193
  %v1312 = vunpack.c.h.b16 %v193
  %v1313 = vunpack.c.l.b16 %v194
  %v1314 = vunpack.c.h.b16 %v194
  %v1315 = vunpack.c.l.b16 %v195
  %v1316 = vunpack.c.h.b16 %v195
  %v1317 = vunpack.c.l.b16 %v196
  %v1318 = vunpack.c.l.b16 %v197
  %v1319 = vunpack.c.h.b16 %v197
  %v1320 = vunpack.c.l.b16 %v198
  %v1321 = vunpack.c.h.b16 %v198
  %v1322 = vunpack.c.l.b16 %v199
  %v1323 = vunpack.c.h.b16 %v199
  %v1324 = vunpack.c.l.b16 %v200
  %v1325 = vunpack.c.h.b16 %v200
  %v1326 = vunpack.c.l.b16 %v201
  %v1327 = vunpack.c.h.b16 %v201
  %v1328 = vunpack.c.l.b16 %v202
  %v1329 = vunpack.c.h.b16 %v202
  %v1330 = vunpack.c.l.b16 %v203
  %v1331 = vunpack.c.h.b16 %v203
  %v1332 = vunpack.c.l.b16 %v204
  %v1333 = vunpack.c.h.b16 %v204
  %v1334 = vunpack.c.l.b16 %v205
  %v1335 = vunpack.c.h.b16 %v205
  %v1336 = vunpack.c.l.b16 %v206
  %v1337 = vunpack.c.h.b16 %v206
  %v1338 = vunpack.c.l.b16 %v207
  %v1339 = vunpack.c.h.b16 %v207
  %v1340 = vunpack.c.l.b16 %v208
  %v1341 = vunpack.c.h.b16 %v208
  %v1342 = vunpack.c.l.b16 %v209
  %v1343 = vunpack.c.l.b16 %v210
  %v1344 = vunpack.c.h.b16 %v210
  %v1345 = vunpack.c.l.b16 %v211
  %v1346 = vunpack.c.h.b16 %v211
  %v1347 = vunpack.c.l.b16 %v212
  %v1348 = vunpack.c.h.b16 %v212
  %v1349 = vunpack.c.l.b16 %v213
  %v1350 = vunpack.c.h.b16 %v213
  %v1351 = vunpack.c.l.b16 %v214
  %v1352 = vunpack.c.h.b16 %v214
  %v1353 = vunpack.c.l.b16 %v215
  %v1354 = vunpack.c.h.b16 %v215
  %v1355 = vunpack.c.l.b16 %v216
  %v1356 = vunpack.c.h.b16 %v216
  %v1357 = vunpack.c.l.b16 %v217
  %v1358 = vunpack.c.h.b16 %v217
  %v1359 = vunpack.c.l.b16 %v218
  %v1360 = vunpack.c.h.b16 %v218
  %v1361 = vunpack.c.l.b16 %v219
  %v1362 = vunpack.c.h.b16 %v219
  %v1363 = vunpack.c.l.b16 %v220
  %v1364 = vunpack.c.h.b16 %v220
  %v1365 = vunpack.c.l.b16 %v221
  %v1366 = vunpack.c.h.b16 %v221
  %v1367 = vunpack.c.l.b16 %v222
  %v1368 = vunpack.c.l.b16 %v223
  %v1369 = vunpack.c.h.b16 %v223
  %v1370 = vunpack.c.l.b16 %v224
  %v1371 = vunpack.c.h.b16 %v224
  %v1372 = vunpack.c.l.b16 %v225
  %v1373 = vunpack.c.h.b16 %v225
  %v1374 = vunpack.c.l.b16 %v226
  %v1375 = vunpack.c.h.b16 %v226
  %v1376 = vunpack.c.l.b16 %v227
  %v1377 = vunpack.c.h.b16 %v227
  %v1378 = vunpack.c.l.b16 %v228
  %v1379 = vunpack.c.h.b16 %v228
  %v1380 = vunpack.c.l.b16 %v229
  %v1381 = vunpack.c.h.b16 %v229
  %v1382 = vunpack.c.l.b16 %v230
  %v1383 = vunpack.c.h.b16 %v230
  %v1384 = vunpack.c.l.b16 %v231
  %v1385 = vunpack.c.h.b16 %v231
  %v1386 = vunpack.c.l.b16 %v232
  %v1387 = vunpack.c.h.b16 %v232
  %v1388 = vunpack.c.l.b16 %v233
  %v1389 = vunpack.c.h.b16 %v233
  %v1390 = vunpack.c.l.b16 %v234
  %v1391 = vunpack.c.h.b16 %v234
  %v1392 = vunpack.c.l.b16 %v235
  %v1393 = vunpack.c.l.b16 %v236
  %v1394 = vunpack.c.h.b16 %v236
  %v1395 = vunpack.c.l.b16 %v237
  %v1396 = vunpack.c.h.b16 %v237
  %v1397 = vunpack.c.l.b16 %v238
  %v1398 = vunpack.c.h.b16 %v238
  %v1399 = vunpack.c.l.b16 %v239
  %v1400 = vunpack.c.h.b16 %v239
  %v1401 = vunpack.c.l.b16 %v240
  %v1402 = vunpack.c.h.b16 %v240
  %v1403 = vunpack.c.l.b16 %v241
  %v1404 = vunpack.c.h.b16 %v241
  %v1405 = vunpack.c.l.b16 %v242
  %v1406 = vunpack.c.h.b16 %v242
  %v1407 = vunpack.c.l.b16 %v243
  %v1408 = vunpack.c.h.b16 %v243
  %v1409 = vunpack.c.l.b16 %v244
  %v1410 = vunpack.c.h.b16 %v244
  %v1411 = vunpack.c.l.b16 %v245
  %v1412 = vunpack.c.h.b16 %v245
  %v1413 = vunpack.c.l.b16 %v246
  %v1414 = vunpack.c.h.b16 %v246
  %v1415 = vunpack.c.l.b16 %v247
  %v1416 = vunpack.c.h.b16 %v247
  %v1417 = vunpack.c.l.b16 %v248
  %v1418 = vunpack.c.l.b16 %v249
  %v1419 = vunpack.c.h.b16 %v249
  %v1420 = vunpack.c.l.b16 %v250
  %v1421 = vunpack.c.h.b16 %v250
  %v1422 = vunpack.c.l.b16 %v251
  %v1423 = vunpack.c.h.b16 %v251
  %v1424 = vunpack.c.l.b16 %v252
  %v1425 = vunpack.c.h.b16 %v252
  %v1426 = vunpack.c.l.b16 %v253
  %v1427 = vunpack.c.h.b16 %v253
  %v1428 = vunpack.c.l.b16 %v254
  %v1429 = vunpack.c.h.b16 %v254
  %v1430 = vunpack.c.l.b16 %v255
  %v1431 = vunpack.c.h.b16 %v255
  %v1432 = vunpack.c.l.b16 %v256
  %v1433 = vunpack.c.h.b16 %v256
  %v1434 = vunpack.c.l.b16 %v257
  %v1435 = vunpack.c.h.b16 %v257
  %v1436 = vunpack.c.l.b16 %v258
  %v1437 = vunpack.c.h.b16 %v258
  %v1438 = vunpack.c.l.b16 %v259
  %v1439 = vunpack.c.h.b16 %v259
  %v1440 = vunpack.c.l.b16 %v260
  %v1441 = vunpack.c.h.b16 %v260
  %v1442 = vunpack.c.l.b16 %v261
  %v1443 = vunpack.c.l.b16 %v262
  %v1444 = vunpack.c.h.b16 %v262
  %v1445 = vunpack.c.l.b16 %v263
  %v1446 = vunpack.c.h.b16 %v263
  %v1447 = vunpack.c.l.b16 %v264
  %v1448 = vunpack.c.h.b16 %v264
  %v1449 = vunpack.c.l.b16 %v265
  %v1450 = vunpack.c.h.b16 %v265
  %v1451 = vunpack.c.l.b16 %v266
  %v1452 = vunpack.c.h.b16 %v266
  %v1453 = vunpack.c.l.b16 %v267
  %v1454 = vunpack.c.h.b16 %v267
  %v1455 = vunpack.c.l.b16 %v268
  %v1456 = vunpack.c.h.b16 %v268
  %v1457 = vunpack.c.l.b16 %v269
  %v1458 = vunpack.c.h.b16 %v269
  %v1459 = vunpack.c.l.b16 %v270
  %v1460 = vunpack.c.h.b16 %v270
  %v1461 = vunpack.c.l.b16 %v271
  %v1462 = vunpack.c.h.b16 %v271
  %v1463 = vunpack.c.l.b16 %v272
  %v1464 = vunpack.c.h.b16 %v272
  %v1465 = vunpack.c.l.b16 %v273
  %v1466 = vunpack.c.h.b16 %v273
  %v1467 = vunpack.c.l.b16 %v274
  %v1468 = vunpack.c.l.b16 %v275
  %v1469 = vunpack.c.h.b16 %v275
  %v1470 = vunpack.c.l.b16 %v276
  %v1471 = vunpack.c.h.b16 %v276
  %v1472 = vunpack.c.l.b16 %v277
  %v1473 = vunpack.c.h.b16 %v277
  %v1474 = vunpack.c.l.b16 %v278
  %v1475 = vunpack.c.h.b16 %v278
  %v1476 = vunpack.c.l.b16 %v279
  %v1477 = vunpack.c.h.b16 %v279
  %v1478 = vunpack.c.l.b16 %v280
  %v1479 = vunpack.c.h.b16 %v280
  %v1480 = vunpack.c.l.b16 %v281
  %v1481 = vunpack.c.h.b16 %v281
  %v1482 = vunpack.c.l.b16 %v282
  %v1483 = vunpack.c.h.b16 %v282
  %v1484 = vunpack.c.l.b16 %v283
  %v1485 = vunpack.c.h.b16 %v283
  %v1486 = vunpack.c.l.b16 %v284
  %v1487 = vunpack.c.h.b16 %v284
  %v1488 = vunpack.c.l.b16 %v285
  %v1489 = vunpack.c.h.b16 %v285
  %v1490 = vunpack.c.l.b16 %v286
  %v1491 = vunpack.c.h.b16 %v286
  %v1492 = vunpack.c.l.b16 %v287
  %v1493 = vpack.c.b16 %v993, %v968
  %v1494 = vpack.c.b16 %v994, %v969
  %v1495 = vpack.c.b16 %v995, %v970
  %v1496 = vpack.c.b16 %v996, %v971
  %v1497 = vpack.c.b16 %v997, %v972
  %v1498 = vpack.c.b16 %v998, %v973
  %v1499 = vpack.c.b16 %v999, %v974
  %v1500 = vpack.c.b16 %v1000, %v975
  %v1501 = vpack.c.b16 %v1001, %v976
  %v1502 = vpack.c.b16 %v1002, %v977
  %v1503 = vpack.c.b16 %v1003, %v978
  %v1504 = vpack.c.b16 %v1004, %v979
  %v1505 = vpack.c.b16 %v1005, %v980
  %v1506 = vpack.c.b16 %v1006, %v981
  %v1507 = vpack.c.b16 %v1007, %v982
  %v1508 = vpack.c.b16 %v1008, %v983
  %v1509 = vpack.c.b16 %v1009, %v984
  %v1510 = vpack.c.b16 %v1010, %v985
  %v1511 = vpack.c.b16 %v1011, %v986
  %v1512 = vpack.c.b16 %v1012, %v987
  %v1513 = vpack.c.b16 %v1013, %v988
  %v1514 = vpack.c.b16 %v1014, %v989
  %v1515 = vpack.c.b16 %v1015, %v990
  %v1516 = vpack.c.b16 %v1016, %v991
  %v1517 = vpack.c.b16 %v1017, %v992
  %v1518 = vpack.c.b16 %v1043, %v1018
  %v1519 = vpack.c.b16 %v1044, %v1019
  %v1520 = vpack.c.b16 %v1045, %v1020
  %v1521 = vpack.c.b16 %v1046, %v1021
  %v1522 = vpack.c.b16 %v1047, %v1022
  %v1523 = vpack.c.b16 %v1048, %v1023
  %v1524 = vpack.c.b16 %v1049, %v1024
  %v1525 = vpack.c.b16 %v1050, %v1025
  %v1526 = vpack.c.b16 %v1051, %v1026
  %v1527 = vpack.c.b16 %v1052, %v1027
  %v1528 = vpack.c.b16 %v1053, %v1028
  %v1529 = vpack.c.b16 %v1054, %v1029
  %v1530 = vpack.c.b16 %v1055, %v1030
  %v1531 = vpack.c.b16 %v1056, %v1031
  %v1532 = vpack.c.b16 %v1057, %v1032
  %v1533 = vpack.c.b16 %v1058, %v1033
  %v1534 = vpack.c.b16 %v1059, %v1034
  %v1535 = vpack.c.b16 %v1060, %v1035
  %v1536 = vpack.c.b16 %v1061, %v1036
  %v1537 = vpack.c.b16 %v1062, %v1037
  %v1538 = vpack.c.b16 %v1063, %v1038
  %v1539 = vpack.c.b16 %v1064, %v1039
  %v1540 = vpack.c.b16 %v1065, %v1040
  %v1541 = vpack.c.b16 %v1066, %v1041
  %v1542 = vpack.c.b16 %v1067, %v1042
  %v1543 = vpack.c.b16 %v1093, %v1068
  %v1544 = vpack.c.b16 %v1094, %v1069
  %v1545 = vpack.c.b16 %v1095, %v1070
  %v1546 = vpack.c.b16 %v1096, %v1071
  %v1547 = vpack.c.b16 %v1097, %v1072
  %v1548 = vpack.c.b16 %v1098, %v1073
  %v1549 = vpack.c.b16 %v1099, %v1074
  %v1550 = vpack.c.b16 %v1100, %v1075
  %v1551 = vpack.c.b16 %v1101, %v1076
  %v1552 = vpack.c.b16 %v1102, %v1077
  %v1553 = vpack.c.b16 %v1103, %v1078
  %v1554 = vpack.c.b16 %v1104, %v1079
  %v1555 = vpack.c.b16 %v1105, %v1080
  %v1556 = vpack.c.b16 %v1106, %v1081
  %v1557 = vpack.c.b16 %v1107, %v1082
  %v1558 = vpack.c.b16 %v1108, %v1083
  %v1559 = vpack.c.b16 %v1109, %v1084
  %v1560 = vpack.c.b16 %v1110, %v1085
  %v1561 = vpack.c.b16 %v1111, %v1086
  %v1562 = vpack.c.b16 %v1112, %v1087
  %v1563 = vpack.c.b16 %v1113, %v1088
  %v1564 = vpack.c.b16 %v1114, %v1089
  %v1565 = vpack.c.b16 %v1115, %v1090
  %v1566 = vpack.c.b16 %v1116, %v1091
  %v1567 = vpack.c.b16 %v1117, %v1092
  %v1568 = vpack.c.b16 %v1143, %v1118
  %v1569 = vpack.c.b16 %v1144, %v1119
  %v1570 = vpack.c.b16 %v1145, %v1120
  %v1571 = vpack.c.b16 %v1146, %v1121
  %v1572 = vpack.c.b16 %v1147, %v1122
  %v1573 = vpack.c.b16 %v1148, %v1123
  %v1574 = vpack.c.b16 %v1149, %v1124
  %v1575 = vpack.c.b16 %v1150, %v1125
  %v1576 = vpack.c.b16 %v1151, %v1126
  %v1577 = vpack.c.b16 %v1152, %v1127
  %v1578 = vpack.c.b16 %v1153, %v1128
  %v1579 = vpack.c.b16 %v1154, %v1129
  %v1580 = vpack.c.b16 %v1155, %v1130
  %v1581 = vpack.c.b16 %v1156, %v1131
  %v1582 = vpack.c.b16 %v1157, %v1132
  %v1583 = vpack.c.b16 %v1158, %v1133
  %v1584 = vpack.c.b16 %v1159, %v1134
  %v1585 = vpack.c.b16 %v1160, %v1135
  %v1586 = vpack.c.b16 %v1161, %v1136
  %v1587 = vpack.c.b16 %v1162, %v1137
  %v1588 = vpack.c.b16 %v1163, %v1138
  %v1589 = vpack.c.b16 %v1164, %v1139
  %v1590 = vpack.c.b16 %v1165, %v1140
  %v1591 = vpack.c.b16 %v1166, %v1141
  %v1592 = vpack.c.b16 %v1167, %v1142
  %v1593 = vpack.c.b16 %v1193, %v1168
  %v1594 = vpack.c.b16 %v1194, %v1169
  %v1595 = vpack.c.b16 %v1195, %v1170
  %v1596 = vpack.c.b16 %v1196, %v1171
  %v1597 = vpack.c.b16 %v1197, %v1172
  %v1598 = vpack.c.b16 %v1198, %v1173
  %v1599 = vpack.c.b16 %v1199, %v1174
  %v1600 = vpack.c.b16 %v1200, %v1175
  %v1601 = vpack.c.b16 %v1201, %v1176
  %v1602 = vpack.c.b16 %v1202, %v1177
  %v1603 = vpack.c.b16 %v1203, %v1178
  %v1604 = vpack.c.b16 %v1204, %v1179
  %v1605 = vpack.c.b16 %v1205, %v1180
  %v1606 = vpack.c.b16 %v1206, %v1181
  %v1607 = vpack.c.b16 %v1207, %v1182
  %v1608 = vpack.c.b16 %v1208, %v1183
  %v1609 = vpack.c.b16 %v1209, %v1184
  %v1610 = vpack.c.b16 %v1210, %v1185
  %v1611 = vpack.c.b16 %v1211, %v1186
  %v1612 = vpack.c.b16 %v1212, %v1187
  %v1613 = vpack.c.b16 %v1213, %v1188
  %v1614 = vpack.c.b16 %v1214, %v1189
  %v1615 = vpack.c.b16 %v1215, %v1190
  %v1616 = vpack.c.b16 %v1216, %v1191
  %v1617 = vpack.c.b16 %v1217, %v1192
  %v1618 = vpack.c.b16 %v1243, %v1218
  %v1619 = vpack.c.b16 %v1244, %v1219
  %v1620 = vpack.c.b16 %v1245, %v1220
  %v1621 = vpack.c.b16 %v1246, %v1221
  %v1622 = vpack.c.b16 %v1247, %v1222
  %v1623 = vpack.c.b16 %v1248, %v1223
  %v1624 = vpack.c.b16 %v1249, %v1224
  %v1625 = vpack.c.b16 %v1250, %v1225
  %v1626 = vpack.c.b16 %v1251, %v1226
  %v1627 = vpack.c.b16 %v1252, %v1227
  %v1628 = vpack.c.b16 %v1253, %v1228
  %v1629 = vpack.c.b16 %v1254, %v1229
  %v1630 = vpack.c.b16 %v1255, %v1230
  %v1631 = vpack.c.b16 %v1256, %v1231
  %v1632 = vpack.c.b16 %v1257, %v1232
  %v1633 = vpack.c.b16 %v1258, %v1233
  %v1634 = vpack.c.b16 %v1259, %v1234
  %v1635 = vpack.c.b16 %v1260, %v1235
  %v1636 = vpack.c.b16 %v1261, %v1236
  %v1637 = vpack.c.b16 %v1262, %v1237
  %v1638 = vpack.c.b16 %v1263, %v1238
  %v1639 = vpack.c.b16 %v1264, %v1239
  %v1640 = vpack.c.b16 %v1265, %v1240
  %v1641 = vpack.c.b16 %v1266, %v1241
  %v1642 = vpack.c.b16 %v1267, %v1242
  %v1643 = vpack.c.b16 %v1293, %v1268
  %v1644 = vpack.c.b16 %v1294, %v1269
  %v1645 = vpack.c.b16 %v1295, %v1270
  %v1646 = vpack.c.b16 %v1296, %v1271
  %v1647 = vpack.c.b16 %v1297, %v1272
  %v1648 = vpack.c.b16 %v1298, %v1273
  %v1649 = vpack.c.b16 %v1299, %v1274
  %v1650 = vpack.c.b16 %v1300, %v1275
  %v1651 = vpack.c.b16 %v1301, %v1276
  %v1652 = vpack.c.b16 %v1302, %v1277
  %v1653 = vpack.c.b16 %v1303, %v1278
  %v1654 = vpack.c.b16 %v1304, %v1279
  %v1655 = vpack.c.b16 %v1305, %v1280
  %v1656 = vpack.c.b16 %v1306, %v1281
  %v1657 = vpack.c.b16 %v1307, %v1282
  %v1658 = vpack.c.b16 %v1308, %v1283
  %v1659 = vpack.c.b16 %v1309, %v1284
  %v1660 = vpack.c.b16 %v1310, %v1285
  %v1661 = vpack.c.b16 %v1311, %v1286
  %v1662 = vpack.c.b16 %v1312, %v1287
  %v1663 = vpack.c.b16 %v1313, %v1288
  %v1664 = vpack.c.b16 %v1314, %v1289
  %v1665 = vpack.c.b16 %v1315, %v1290
  %v1666 = vpack.c.b16 %v1316, %v1291
  %v1667 = vpack.c.b16 %v1317, %v1292
  %v1668 = vpack.c.b16 %v1343, %v1318
  %v1669 = vpack.c.b16 %v1344, %v1319
  %v1670 = vpack.c.b16 %v1345, %v1320
  %v1671 = vpack.c.b16 %v1346, %v1321
  %v1672 = vpack.c.b16 %v1347, %v1322
  %v1673 = vpack.c.b16 %v1348, %v1323
  %v1674 = vpack.c.b16 %v1349, %v1324
  %v1675 = vpack.c.b16 %v1350, %v1325
  %v1676 = vpack.c.b16 %v1351, %v1326
  %v1677 = vpack.c.b16 %v1352, %v1327
  %v1678 = vpack.c.b16 %v1353, %v1328
  %v1679 = vpack.c.b16 %v1354, %v1329
  %v1680 = vpack.c.b16 %v1355, %v1330
  %v1681 = vpack.c.b16 %v1356, %v1331
  %v1682 = vpack.c.b16 %v1357, %v1332
  %v1683 = vpack.c.b16 %v1358, %v1333
  %v1684 = vpack.c.b16 %v1359, %v1334
  %v1685 = vpack.c.b16 %v1360, %v1335
  %v1686 = vpack.c.b16 %v1361, %v1336
  %v1687 = vpack.c.b16 %v1362, %v1337
  %v1688 = vpack.c.b16 %v1363, %v1338
  %v1689 = vpack.c.b16 %v1364, %v1339
  %v1690 = vpack.c.b16 %v1365, %v1340
  %v1691 = vpack.c.b16 %v1366, %v1341
  %v1692 = vpack.c.b16 %v1367, %v1342
  %v1693 = vpack.c.b16 %v1393, %v1368
  %v1694 = vpack.c.b16 %v1394, %v1369
  %v1695 = vpack.c.b16 %v1395, %v1370
  %v1696 = vpack.c.b16 %v1396, %v1371
  %v1697 = vpack.c.b16 %v1397, %v1372
  %v1698 = vpack.c.b16 %v1398, %v1373
  %v1699 = vpack.c.b16 %v1399, %v1374
  %v1700 = vpack.c.b16 %v1400, %v1375
  %v1701 = vpack.c.b16 %v1401, %v1376
  %v1702 = vpack.c.b16 %v1402, %v1377
  %v1703 = vpack.c.b16 %v1403, %v1378
  %v1704 = vpack.c.b16 %v1404, %v1379
  %v1705 = vpack.c.b16 %v1405, %v1380
  %v1706 = vpack.c.b16 %v1406, %v1381
  %v1707 = vpack.c.b16 %v1407, %v1382
  %v1708 = vpack.c.b16 %v1408, %v1383
  %v1709 = vpack.c.b16 %v1409, %v1384
  %v1710 = vpack.c.b16 %v1410, %v1385
  %v1711 = vpack.c.b16 %v1411, %v1386
  %v1712 = vpack.c.b16 %v1412, %v1387
  %v1713 = vpack.c.b16 %v1413, %v1388
  %v1714 = vpack.c.b16 %v1414, %v1389
  %v1715 = vpack.c.b16 %v1415, %v1390
  %v1716 = vpack.c.b16 %v1416, %v1391
  %v1717 = vpack.c.b16 %v1417, %v1392
  %v1718 = vpack.c.b16 %v1443, %v1418
  %v1719 = vpack.c.b16 %v1444, %v1419
  %v1720 = vpack.c.b16 %v1445, %v1420
  %v1721 = vpack.c.b16 %v1446, %v1421
  %v1722 = vpack.c.b16 %v1447, %v1422
  %v1723 = vpack.c.b16 %v1448, %v1423
  %v1724 = vpack.c.b16 %v1449, %v1424
  %v1725 = vpack.c.b16 %v1450, %v1425
  %v1726 = vpack.c.b16 %v1451, %v1426
  %v1727 = vpack.c.b16 %v1452, %v1427
  %v1728 = vpack.c.b16 %v1453, %v1428
  %v1729 = vpack.c.b16 %v1454, %v1429
  %v1730 = vpack.c.b16 %v1455, %v1430
  %v1731 = vpack.c.b16 %v1456, %v1431
  %v1732 = vpack.c.b16 %v1457, %v1432
  %v1733 = vpack.c.b16 %v1458, %v1433
  %v1734 = vpack.c.b16 %v1459, %v1434
  %v1735 = vpack.c.b16 %v1460, %v1435
  %v1736 = vpack.c.b16 %v1461, %v1436
  %v1737 = vpack.c.b16 %v1462, %v1437
  %v1738 = vpack.c.b16 %v1463, %v1438
  %v1739 = vpack.c.b16 %v1464, %v1439
  %v1740 = vpack.c.b16 %v1465, %v1440
  %v1741 = vpack.c.b16 %v1466, %v1441
  %v1742 = vpack.c.b16 %v1467, %v1442
  %v1743 = vpack.c.b16 %v1468, %v1468
  %v1744 = vpack.c.b16 %v1469, %v1469
  %v1745 = vpack.c.b16 %v1470, %v1470
  %v1746 = vpack.c.b16 %v1471, %v1471
  %v1747 = vpack.c.b16 %v1472, %v1472
  %v1748 = vpack.c.b16 %v1473, %v1473
  %v1749 = vpack.c.b16 %v1474, %v1474
  %v1750 = vpack.c.b16 %v1475, %v1475
  %v1751 = vpack.c.b16 %v1476, %v1476
  %v1752 = vpack.c.b16 %v1477, %v1477
  %v1753 = vpack.c.b16 %v1478, %v1478
  %v1754 = vpack.c.b16 %v1479, %v1479
  %v1755 = vpack.c.b16 %v1480, %v1480
  %v1756 = vpack.c.b16 %v1481, %v1481
  %v1757 = vpack.c.b16 %v1482, %v1482
  %v1758 = vpack.c.b16 %v1483, %v1483
  %v1759 = vpack.c.b16 %v1484, %v1484
  %v1760 = vpack.c.b16 %v1485, %v1485
  %v1761 = vpack.c.b16 %v1486, %v1486
  %v1762 = vpack.c.b16 %v1487, %v1487
  %v1763 = vpack.c.b16 %v1488, %v1488
  %v1764 = vpack.c.b16 %v1489, %v1489
  %v1765 = vpack.c.b16 %v1490, %v1490
  %v1766 = vpack.c.b16 %v1491, %v1491
  %v1767 = vpack.c.b16 %v1492, %v1492
  %v2443 = vunpack.c.l.b16 %v288
  %v2444 = vunpack.c.l.b16 %v289
  %v2445 = vunpack.c.l.b16 %v290
  %v2446 = vunpack.c.l.b16 %v291
  %v2447 = vunpack.c.l.b16 %v292
  %v2448 = vunpack.c.l.b16 %v293
  %v2449 = vunpack.c.l.b16 %v294
  %v2450 = vunpack.c.l.b16 %v295
  %v2451 = vunpack.c.l.b16 %v296
  %v2452 = vunpack.c.l.b16 %v297
  %v2453 = vunpack.c.l.b16 %v298
  %v2454 = vunpack.c.l.b16 %v299
  %v2455 = vunpack.c.l.b16 %v300
  %v2456 = vunpack.c.l.b16 %v301
  %v2457 = vunpack.c.l.b16 %v302
  %v2458 = vunpack.c.l.b16 %v303
  %v2459 = vunpack.c.l.b16 %v304
  %v2460 = vunpack.c.l.b16 %v305
  %v2461 = vunpack.c.l.b16 %v306
  %v2462 = vunpack.c.l.b16 %v307
  %v2463 = vunpack.c.l.b16 %v308
  %v2464 = vunpack.c.l.b16 %v309
  %v2465 = vunpack.c.l.b16 %v310
  %v2466 = vunpack.c.l.b16 %v311
  %v2467 = vunpack.c.l.b16 %v312
  %v2468 = vunpack.c.l.b16 %v313
  %v2469 = vunpack.c.l.b16 %v314
  %v2470 = vunpack.c.l.b16 %v315
  %v2471 = vunpack.c.l.b16 %v316
  %v2472 = vunpack.c.l.b16 %v317
  %v2473 = vunpack.c.l.b16 %v318
  %v2474 = vunpack.c.l.b16 %v319
  %v2475 = vunpack.c.l.b16 %v320
  %v2476 = vunpack.c.l.b16 %v321
  %v2477 = vunpack.c.l.b16 %v322
  %v2478 = vunpack.c.l.b16 %v323
  %v2479 = vunpack.c.l.b16 %v324
  %v2480 = vunpack.c.l.b16 %v325
  %v2481 = vunpack.c.l.b16 %v326
  %v2482 = vunpack.c.l.b16 %v327
  %v2483 = vunpack.c.l.b16 %v328
  %v2484 = vunpack.c.l.b16 %v329
  %v2485 = vunpack.c.l.b16 %v330
  %v2486 = vunpack.c.l.b16 %v331
  %v2487 = vunpack.c.l.b16 %v332
  %v2488 = vunpack.c.l.b16 %v333
  %v2489 = vunpack.c.l.b16 %v334
  %v2490 = vunpack.c.l.b16 %v335
  %v2491 = vunpack.c.l.b16 %v336
  %v2492 = vunpack.c.l.b16 %v337
  %v2493 = vunpack.c.l.b16 %v338
  %v2494 = vunpack.c.l.b16 %v339
  %v2495 = vunpack.c.l.b16 %v340
  %v2496 = vunpack.c.l.b16 %v341
  %v2497 = vunpack.c.l.b16 %v342
  %v2498 = vunpack.c.l.b16 %v343
  %v2499 = vunpack.c.l.b16 %v344
  %v2500 = vunpack.c.l.b16 %v345
  %v2501 = vunpack.c.l.b16 %v346
  %v2502 = vunpack.c.l.b16 %v347
  %v2503 = vunpack.c.l.b16 %v348
  %v2504 = vunpack.c.l.b16 %v349
  %v2505 = vunpack.c.l.b16 %v350
  %v2506 = vunpack.c.l.b16 %v351
  %v2507 = vunpack.c.l.b16 %v352
  %v2508 = vunpack.c.l.b16 %v353
  %v2509 = vunpack.c.l.b16 %v354
  %v2510 = vunpack.c.l.b16 %v355
  %v2511 = vunpack.c.l.b16 %v356
  %v2512 = vunpack.c.l.b16 %v357
  %v2513 = vunpack.c.l.b16 %v358
  %v2514 = vunpack.c.l.b16 %v359
  %v2515 = vunpack.c.l.b16 %v360
  %v2516 = vunpack.c.l.b16 %v361
  %v2517 = vunpack.c.l.b16 %v362
  %v2518 = vunpack.c.l.b16 %v363
  %v2519 = vunpack.c.l.b16 %v364
  %v2520 = vunpack.c.l.b16 %v365
  %v2521 = vunpack.c.l.b16 %v366
  %v2522 = vunpack.c.l.b16 %v367
  %v2523 = vunpack.c.l.b16 %v368
  %v2524 = vunpack.c.l.b16 %v369
  %v2525 = vunpack.c.l.b16 %v370
  %v2526 = vunpack.c.l.b16 %v371
  %v2527 = vunpack.c.l.b16 %v372
  %v2528 = vunpack.c.l.b16 %v373
  %v2529 = vunpack.c.l.b16 %v374
  %v2530 = vunpack.c.l.b16 %v375
  %v2531 = vunpack.c.l.b16 %v376
  %v2532 = vunpack.c.l.b16 %v377
  %v2533 = vunpack.c.l.b16 %v378
  %v2534 = vunpack.c.l.b16 %v379
  %v2535 = vunpack.c.l.b16 %v380
  %v2536 = vunpack.c.l.b16 %v381
  %v2537 = vunpack.c.l.b16 %v382
  %v2538 = vunpack.c.l.b16 %v383
  %v2539 = vunpack.c.l.b16 %v384
  %v2540 = vunpack.c.l.b16 %v385
  %v2541 = vunpack.c.l.b16 %v386
  %v2542 = vunpack.c.l.b16 %v387
  %v2543 = vunpack.c.l.b16 %v388
  %v2544 = vunpack.c.l.b16 %v389
  %v2545 = vunpack.c.l.b16 %v390
  %v2546 = vunpack.c.l.b16 %v391
  %v2547 = vunpack.c.l.b16 %v392
  %v2548 = vunpack.c.l.b16 %v393
  %v2549 = vunpack.c.l.b16 %v394
  %v2550 = vunpack.c.l.b16 %v395
  %v2551 = vunpack.c.l.b16 %v396
  %v2552 = vunpack.c.l.b16 %v397
  %v2553 = vunpack.c.l.b16 %v398
  %v2554 = vunpack.c.l.b16 %v399
  %v2555 = vunpack.c.l.b16 %v400
  %v2556 = vunpack.c.l.b16 %v401
  %v2557 = vunpack.c.l.b16 %v402
  %v2558 = vunpack.c.l.b16 %v403
  %v2559 = vunpack.c.l.b16 %v404
  %v2560 = vunpack.c.l.b16 %v405
  %v2561 = vunpack.c.l.b16 %v406
  %v2562 = vunpack.c.l.b16 %v407
  %v2563 = vunpack.c.l.b16 %v408
  %v2564 = vunpack.c.l.b16 %v409
  %v2565 = vunpack.c.l.b16 %v410
  %v2566 = vunpack.c.l.b16 %v411
  %v2567 = vunpack.c.l.b16 %v412
  %v2568 = vunpack.c.l.b16 %v413
  %v2569 = vunpack.c.l.b16 %v414
  %v2570 = vunpack.c.l.b16 %v415
  %v2571 = vunpack.c.l.b16 %v416
  %v2572 = vunpack.c.l.b16 %v417
  %v2573 = vunpack.c.l.b16 %v418
  %v2574 = vunpack.c.l.b16 %v419
  %v2575 = vunpack.c.l.b16 %v420
  %v2576 = vunpack.c.l.b16 %v421
  %v2577 = vunpack.c.l.b16 %v422
  %v2578 = vunpack.c.l.b16 %v423
  %v2579 = vunpack.c.l.b16 %v424
  %v2580 = vunpack.c.l.b16 %v425
  %v2581 = vunpack.c.l.b16 %v426
  %v2582 = vunpack.c.l.b16 %v427
  %v2583 = vunpack.c.l.b16 %v428
  %v2584 = vunpack.c.l.b16 %v429
  %v2585 = vunpack.c.l.b16 %v430
  %v2586 = vunpack.c.l.b16 %v431
  %v2587 = vunpack.c.l.b16 %v432
  %v2588 = vunpack.c.l.b16 %v433
  %v2589 = vunpack.c.l.b16 %v434
  %v2590 = vunpack.c.l.b16 %v435
  %v2591 = vunpack.c.l.b16 %v436
  %v2592 = vunpack.c.l.b16 %v437
  %v2593 = vunpack.c.l.b16 %v438
  %v2594 = vunpack.c.l.b16 %v439
  %v2595 = vunpack.c.l.b16 %v440
  %v2596 = vunpack.c.l.b16 %v441
  %v2597 = vunpack.c.l.b16 %v442
  %v2598 = vunpack.c.l.b16 %v443
  %v2599 = vunpack.c.l.b16 %v444
  %v2600 = vunpack.c.l.b16 %v445
  %v2601 = vunpack.c.l.b16 %v446
  %v2602 = vunpack.c.l.b16 %v447
  %v2603 = vunpack.c.l.b16 %v448
  %v2604 = vunpack.c.l.b16 %v449
  %v2605 = vunpack.c.l.b16 %v450
  %v2606 = vunpack.c.l.b16 %v451
  %v2607 = vunpack.c.l.b16 %v452
  %v2608 = vunpack.c.l.b16 %v453
  %v2609 = vunpack.c.l.b16 %v454
  %v2610 = vunpack.c.l.b16 %v455
  %v2611 = vunpack.c.l.b16 %v456
  %v2612 = vunpack.c.l.b16 %v457
  %v2613 = vunpack.c.l.b16 %v458
  %v2614 = vunpack.c.l.b16 %v459
  %v2615 = vunpack.c.l.b16 %v460
  %v2616 = vunpack.c.l.b16 %v461
  %v2617 = vunpack.c.l.b16 %v462
  %v2618 = vunpack.c.l.b16 %v463
  %v2619 = vunpack.c.l.b16 %v464
  %v2620 = vunpack.c.l.b16 %v465
  %v2621 = vunpack.c.l.b16 %v466
  %v2622 = vunpack.c.l.b16 %v467
  %v2623 = vunpack.c.l.b16 %v468
  %v2624 = vunpack.c.l.b16 %v469
  %v2625 = vunpack.c.l.b16 %v470
  %v2626 = vunpack.c.l.b16 %v471
  %v2627 = vunpack.c.l.b16 %v472
  %v2628 = vunpack.c.l.b16 %v473
  %v2629 = vunpack.c.l.b16 %v474
  %v2630 = vunpack.c.l.b16 %v475
  %v2631 = vunpack.c.l.b16 %v476
  %v2632 = vunpack.c.l.b16 %v477
  %v2633 = vunpack.c.l.b16 %v478
  %v2634 = vunpack.c.l.b16 %v479
  %v2635 = vunpack.c.l.b16 %v480
  %v2636 = vunpack.c.l.b16 %v481
  %v2637 = vunpack.c.l.b16 %v482
  %v2638 = vunpack.c.l.b16 %v483
  %v2639 = vunpack.c.l.b16 %v484
  %v2640 = vunpack.c.l.b16 %v485
  %v2641 = vunpack.c.l.b16 %v486
  %v2642 = vunpack.c.l.b16 %v487
  %v2643 = vunpack.c.l.b16 %v488
  %v2644 = vunpack.c.l.b16 %v489
  %v2645 = vunpack.c.l.b16 %v490
  %v2646 = vunpack.c.l.b16 %v491
  %v2647 = vunpack.c.l.b16 %v492
  %v2648 = vunpack.c.l.b16 %v493
  %v2649 = vunpack.c.l.b16 %v494
  %v2650 = vunpack.c.l.b16 %v495
  %v2651 = vunpack.c.l.b16 %v496
  %v2652 = vunpack.c.l.b16 %v497
  %v2653 = vunpack.c.l.b16 %v498
  %v2654 = vunpack.c.l.b16 %v499
  %v2655 = vunpack.c.l.b16 %v500
  %v2656 = vunpack.c.l.b16 %v501
  %v2657 = vunpack.c.l.b16 %v502
  %v2658 = vunpack.c.l.b16 %v503
  %v2659 = vunpack.c.l.b16 %v504
  %v2660 = vunpack.c.l.b16 %v505
  %v2661 = vunpack.c.l.b16 %v506
  %v2662 = vunpack.c.l.b16 %v507
  %v2663 = vunpack.c.l.b16 %v508
  %v2664 = vunpack.c.l.b16 %v509
  %v2665 = vunpack.c.l.b16 %v510
  %v2666 = vunpack.c.l.b16 %v511
  %v2667 = vunpack.c.l.b16 %v512
  %v2668 = vunpack.c.l.b16 %v513
  %v2669 = vunpack.c.l.b16 %v514
  %v2670 = vunpack.c.l.b16 %v515
  %v2671 = vunpack.c.l.b16 %v516
  %v2672 = vunpack.c.l.b16 %v517
  %v2673 = vunpack.c.l.b16 %v518
  %v2674 = vunpack.c.l.b16 %v519
  %v2675 = vunpack.c.l.b16 %v520
  %v2676 = vunpack.c.l.b16 %v521
  %v2677 = vunpack.c.l.b16 %v522
  %v2678 = vunpack.c.l.b16 %v523
  %v2679 = vunpack.c.l.b16 %v524
  %v2680 = vunpack.c.l.b16 %v525
  %v2681 = vunpack.c.l.b16 %v526
  %v2682 = vunpack.c.l.b16 %v527
  %v2683 = vunpack.c.l.b16 %v528
  %v2684 = vunpack.c.l.b16 %v529
  %v2685 = vunpack.c.l.b16 %v530
  %v2686 = vunpack.c.l.b16 %v531
  %v2687 = vunpack.c.l.b16 %v532
  %v2688 = vunpack.c.l.b16 %v533
  %v2689 = vunpack.c.l.b16 %v534
  %v2690 = vunpack.c.l.b16 %v535
  %v2691 = vunpack.c.l.b16 %v536
  %v2692 = vunpack.c.l.b16 %v537
  %v2693 = vunpack.c.l.b16 %v538
  %v2694 = vunpack.c.l.b16 %v539
  %v2695 = vunpack.c.l.b16 %v540
  %v2696 = vunpack.c.l.b16 %v541
  %v2697 = vunpack.c.l.b16 %v542
  %v2698 = vunpack.c.l.b16 %v543
  %v2699 = vunpack.c.l.b16 %v544
  %v2700 = vunpack.c.l.b16 %v545
  %v2701 = vunpack.c.l.b16 %v546
  %v2702 = vunpack.c.l.b16 %v547
  %v2703 = vunpack.c.l.b16 %v548
  %v2704 = vunpack.c.l.b16 %v549
  %v2705 = vunpack.c.l.b16 %v550
  %v2706 = vunpack.c.l.b16 %v551
  %v2707 = vunpack.c.l.b16 %v552
  %v2708 = vunpack.c.l.b16 %v553
  %v2709 = vunpack.c.l.b16 %v554
  %v2710 = vunpack.c.l.b16 %v555
  %v2711 = vunpack.c.l.b16 %v556
  %v2712 = vunpack.c.l.b16 %v557
  %v2713 = vunpack.c.l.b16 %v558
  %v2714 = vunpack.c.l.b16 %v559
  %v2715 = vunpack.c.l.b16 %v560
  %v2716 = vunpack.c.l.b16 %v561
  %v2717 = vunpack.c.l.b16 %v562
  %v2718 = vunpack.c.l.b16 %v563
  %v2719 = vunpack.c.l.b16 %v564
  %v2720 = vunpack.c.l.b16 %v565
  %v2721 = vunpack.c.l.b16 %v566
  %v2722 = vunpack.c.l.b16 %v567
  %v2723 = vunpack.c.l.b16 %v568
  %v2724 = vunpack.c.l.b16 %v569
  %v2725 = vunpack.c.l.b16 %v570
  %v2726 = vunpack.c.l.b16 %v571
  %v2727 = vunpack.c.l.b16 %v572
  %v2728 = vunpack.c.l.b16 %v573
  %v2729 = vunpack.c.l.b16 %v574
  %v2730 = vunpack.c.l.b16 %v575
  %v2731 = vunpack.c.l.b16 %v576
  %v2732 = vunpack.c.l.b16 %v577
  %v2733 = vunpack.c.l.b16 %v578
  %v2734 = vunpack.c.l.b16 %v579
  %v2735 = vunpack.c.l.b16 %v580
  %v2736 = vunpack.c.l.b16 %v581
  %v2737 = vunpack.c.l.b16 %v582
  %v2738 = vunpack.c.l.b16 %v583
  %v2739 = vunpack.c.l.b16 %v584
  %v2740 = vunpack.c.l.b16 %v585
  %v2741 = vunpack.c.l.b16 %v586
  %v2742 = vunpack.c.l.b16 %v587
  %v2743 = vunpack.c.l.b16 %v588
  %v2744 = vunpack.c.l.b16 %v589
  %v2745 = vunpack.c.l.b16 %v590
  %v2746 = vunpack.c.l.b16 %v591
  %v2747 = vunpack.c.l.b16 %v592
  %v2748 = vunpack.c.l.b16 %v593
  %v2749 = vunpack.c.l.b16 %v594
  %v2750 = vunpack.c.l.b16 %v595
  %v2751 = vunpack.c.l.b16 %v596
  %v2752 = vunpack.c.l.b16 %v597
  %v2753 = vunpack.c.l.b16 %v598
  %v2754 = vunpack.c.l.b16 %v599
  %v2755 = vunpack.c.l.b16 %v600
  %v2756 = vunpack.c.l.b16 %v601
  %v2757 = vunpack.c.l.b16 %v602
  %v2758 = vunpack.c.l.b16 %v603
  %v2759 = vunpack.c.l.b16 %v604
  %v2760 = vunpack.c.l.b16 %v605
  %v2761 = vunpack.c.l.b16 %v606
  %v2762 = vunpack.c.l.b16 %v607
  %v2763 = vunpack.c.l.b16 %v608
  %v2764 = vunpack.c.l.b16 %v609
  %v2765 = vunpack.c.l.b16 %v610
  %v2766 = vunpack.c.l.b16 %v611
  %v2767 = vunpack.c.l.b16 %v612
  %v2768 = vunpack.c.l.b16 %v613
  %v2769 = vunpack.c.l.b16 %v614
  %v2770 = vunpack.c.l.b16 %v615
  %v2771 = vunpack.c.l.b16 %v616
  %v2772 = vunpack.c.l.b16 %v617
  %v2773 = vunpack.c.l.b16 %v618
  %v2774 = vunpack.c.l.b16 %v619
  %v2775 = vunpack.c.l.b16 %v620
  %v2776 = vunpack.c.l.b16 %v621
  %v2777 = vunpack.c.l.b16 %v622
  %v2778 = vunpack.c.l.b16 %v623
  %v2779 = vunpack.c.l.b16 %v624
  %v2780 = vunpack.c.l.b16 %v625
  %v2781 = vunpack.c.l.b16 %v626
  %v2782 = vunpack.c.l.b16 %v627
  %v2783 = vunpack.c.l.b16 %v628
  %v2784 = vunpack.c.l.b16 %v629
  %v2785 = vunpack.c.l.b16 %v630
  %v2786 = vunpack.c.l.b16 %v631
  %v2787 = vunpack.c.l.b16 %v632
  %v2788 = vunpack.c.l.b16 %v633
  %v2789 = vunpack.c.l.b16 %v634
  %v2790 = vunpack.c.l.b16 %v635
  %v2791 = vunpack.c.l.b16 %v636
  %v2792 = vunpack.c.l.b16 %v637
  %v2793 = vunpack.c.l.b16 %v638
  %v2794 = vunpack.c.l.b16 %v639
  %v2795 = vunpack.c.l.b16 %v640
  %v2796 = vunpack.c.l.b16 %v641
  %v2797 = vunpack.c.l.b16 %v642
  %v2798 = vunpack.c.l.b16 %v643
  %v2799 = vunpack.c.l.b16 %v644
  %v2800 = vunpack.c.l.b16 %v645
  %v2801 = vunpack.c.l.b16 %v646
  %v2802 = vunpack.c.l.b16 %v647
  %v2803 = vunpack.c.l.b16 %v648
  %v2804 = vunpack.c.l.b16 %v649
  %v2805 = vunpack.c.l.b16 %v650
  %v2806 = vunpack.c.l.b16 %v651
  %v2807 = vunpack.c.l.b16 %v652
  %v2808 = vunpack.c.l.b16 %v653
  %v2809 = vunpack.c.l.b16 %v654
  %v2810 = vunpack.c.l.b16 %v655
  %v2811 = vunpack.c.l.b16 %v656
  %v2812 = vunpack.c.l.b16 %v657
  %v2813 = vunpack.c.l.b16 %v658
  %v2814 = vunpack.c.l.b16 %v659
  %v2815 = vunpack.c.l.b16 %v660
  %v2816 = vunpack.c.l.b16 %v661
  %v2817 = vunpack.c.l.b16 %v662
  %v2818 = vunpack.c.l.b16 %v663
  %v2819 = vunpack.c.l.b16 %v664
  %v2820 = vunpack.c.l.b16 %v665
  %v2821 = vunpack.c.l.b16 %v666
  %v2822 = vunpack.c.l.b16 %v667
  %v2823 = vunpack.c.l.b16 %v668
  %v2824 = vunpack.c.l.b16 %v669
  %v2825 = vunpack.c.l.b16 %v670
  %v2826 = vunpack.c.l.b16 %v671
  %v2827 = vunpack.c.l.b16 %v672
  %v2828 = vunpack.c.l.b16 %v673
  %v2829 = vunpack.c.l.b16 %v674
  %v2830 = vunpack.c.l.b16 %v675
  %v2831 = vunpack.c.l.b16 %v676
  %v2832 = vunpack.c.l.b16 %v677
  %v2833 = vunpack.c.l.b16 %v678
  %v2834 = vunpack.c.l.b16 %v679
  %v2835 = vunpack.c.l.b16 %v680
  %v2836 = vunpack.c.l.b16 %v681
  %v2837 = vunpack.c.l.b16 %v682
  %v2838 = vunpack.c.l.b16 %v683
  %v2839 = vunpack.c.l.b16 %v684
  %v2840 = vunpack.c.l.b16 %v685
  %v2841 = vunpack.c.l.b16 %v686
  %v2842 = vunpack.c.l.b16 %v687
  %v2843 = vpack.c.b16 %v2444, %v2443
  %v2844 = vpack.c.b16 %v2446, %v2445
  %v2845 = vpack.c.b16 %v2448, %v2447
  %v2846 = vpack.c.b16 %v2450, %v2449
  %v2847 = vpack.c.b16 %v2452, %v2451
  %v2848 = vpack.c.b16 %v2454, %v2453
  %v2849 = vpack.c.b16 %v2456, %v2455
  %v2850 = vpack.c.b16 %v2458, %v2457
  %v2851 = vpack.c.b16 %v2460, %v2459
  %v2852 = vpack.c.b16 %v2462, %v2461
  %v2853 = vpack.c.b16 %v2464, %v2463
  %v2854 = vpack.c.b16 %v2466, %v2465
  %v2855 = vpack.c.b16 %v2468, %v2467
  %v2856 = vpack.c.b16 %v2470, %v2469
  %v2857 = vpack.c.b16 %v2472, %v2471
  %v2858 = vpack.c.b16 %v2474, %v2473
  %v2859 = vpack.c.b16 %v2476, %v2475
  %v2860 = vpack.c.b16 %v2478, %v2477
  %v2861 = vpack.c.b16 %v2480, %v2479
  %v2862 = vpack.c.b16 %v2482, %v2481
  %v2863 = vpack.c.b16 %v2484, %v2483
  %v2864 = vpack.c.b16 %v2486, %v2485
  %v2865 = vpack.c.b16 %v2488, %v2487
  %v2866 = vpack.c.b16 %v2490, %v2489
  %v2867 = vpack.c.b16 %v2492, %v2491
  %v2868 = vpack.c.b16 %v2494, %v2493
  %v2869 = vpack.c.b16 %v2496, %v2495
  %v2870 = vpack.c.b16 %v2498, %v2497
  %v2871 = vpack.c.b16 %v2500, %v2499
  %v2872 = vpack.c.b16 %v2502, %v2501
  %v2873 = vpack.c.b16 %v2504, %v2503
  %v2874 = vpack.c.b16 %v2506, %v2505
  %v2875 = vpack.c.b16 %v2508, %v2507
  %v2876 = vpack.c.b16 %v2510, %v2509
  %v2877 = vpack.c.b16 %v2512, %v2511
  %v2878 = vpack.c.b16 %v2514, %v2513
  %v2879 = vpack.c.b16 %v2516, %v2515
  %v2880 = vpack.c.b16 %v2518, %v2517
  %v2881 = vpack.c.b16 %v2520, %v2519
  %v2882 = vpack.c.b16 %v2522, %v2521
  %v2883 = vpack.c.b16 %v2524, %v2523
  %v2884 = vpack.c.b16 %v2526, %v2525
  %v2885 = vpack.c.b16 %v2528, %v2527
  %v2886 = vpack.c.b16 %v2530, %v2529
  %v2887 = vpack.c.b16 %v2532, %v2531
  %v2888 = vpack.c.b16 %v2534, %v2533
  %v2889 = vpack.c.b16 %v2536, %v2535
  %v2890 = vpack.c.b16 %v2538, %v2537
  %v2891 = vpack.c.b16 %v2540, %v2539
  %v2892 = vpack.c.b16 %v2542, %v2541
  %v2893 = vpack.c.b16 %v2544, %v2543
  %v2894 = vpack.c.b16 %v2546, %v2545
  %v2895 = vpack.c.b16 %v2548, %v2547
  %v2896 = vpack.c.b16 %v2550, %v2549
  %v2897 = vpack.c.b16 %v2552, %v2551
  %v2898 = vpack.c.b16 %v2554, %v2553
  %v2899 = vpack.c.b16 %v2556, %v2555
  %v2900 = vpack.c.b16 %v2558, %v2557
  %v2901 = vpack.c.b16 %v2560, %v2559
  %v2902 = vpack.c.b16 %v2562, %v2561
  %v2903 = vpack.c.b16 %v2564, %v2563
  %v2904 = vpack.c.b16 %v2566, %v2565
  %v2905 = vpack.c.b16 %v2568, %v2567
  %v2906 = vpack.c.b16 %v2570, %v2569
  %v2907 = vpack.c.b16 %v2572, %v2571
  %v2908 = vpack.c.b16 %v2574, %v2573
  %v2909 = vpack.c.b16 %v2576, %v2575
  %v2910 = vpack.c.b16 %v2578, %v2577
  %v2911 = vpack.c.b16 %v2580, %v2579
  %v2912 = vpack.c.b16 %v2582, %v2581
  %v2913 = vpack.c.b16 %v2584, %v2583
  %v2914 = vpack.c.b16 %v2586, %v2585
  %v2915 = vpack.c.b16 %v2588, %v2587
  %v2916 = vpack.c.b16 %v2590, %v2589
  %v2917 = vpack.c.b16 %v2592, %v2591
  %v2918 = vpack.c.b16 %v2594, %v2593
  %v2919 = vpack.c.b16 %v2596, %v2595
  %v2920 = vpack.c.b16 %v2598, %v2597
  %v2921 = vpack.c.b16 %v2600, %v2599
  %v2922 = vpack.c.b16 %v2602, %v2601
  %v2923 = vpack.c.b16 %v2604, %v2603
  %v2924 = vpack.c.b16 %v2606, %v2605
  %v2925 = vpack.c.b16 %v2608, %v2607
  %v2926 = vpack.c.b16 %v2610, %v2609
  %v2927 = vpack.c.b16 %v2612, %v2611
  %v2928 = vpack.c.b16 %v2614, %v2613
  %v2929 = vpack.c.b16 %v2616, %v2615
  %v2930 = vpack.c.b16 %v2618, %v2617
  %v2931 = vpack.c.b16 %v2620, %v2619
  %v2932 = vpack.c.b16 %v2622, %v2621
  %v2933 = vpack.c.b16 %v2624, %v2623
  %v2934 = vpack.c.b16 %v2626, %v2625
  %v2935 = vpack.c.b16 %v2628, %v2627
  %v2936 = vpack.c.b16 %v2630, %v2629
  %v2937 = vpack.c.b16 %v2632, %v2631
  %v2938 = vpack.c.b16 %v2634, %v2633
  %v2939 = vpack.c.b16 %v2636, %v2635
  %v2940 = vpack.c.b16 %v2638, %v2637
  %v2941 = vpack.c.b16 %v2640, %v2639
  %v2942 = vpack.c.b16 %v2642, %v2641
  %v2943 = vpack.c.b16 %v2644, %v2643
  %v2944 = vpack.c.b16 %v2646, %v2645
  %v2945 = vpack.c.b16 %v2648, %v2647
  %v2946 = vpack.c.b16 %v2650, %v2649
  %v2947 = vpack.c.b16 %v2652, %v2651
  %v2948 = vpack.c.b16 %v2654, %v2653
  %v2949 = vpack.c.b16 %v2656, %v2655
  %v2950 = vpack.c.b16 %v2658, %v2657
  %v2951 = vpack.c.b16 %v2660, %v2659
  %v2952 = vpack.c.b16 %v2662, %v2661
  %v2953 = vpack.c.b16 %v2664, %v2663
  %v2954 = vpack.c.b16 %v2666, %v2665
  %v2955 = vpack.c.b16 %v2668, %v2667
  %v2956 = vpack.c.b16 %v2670, %v2669
  %v2957 = vpack.c.b16 %v2672, %v2671
  %v2958 = vpack.c.b16 %v2674, %v2673
  %v2959 = vpack.c.b16 %v2676, %v2675
  %v2960 = vpack.c.b16 %v2678, %v2677
  %v2961 = vpack.c.b16 %v2680, %v2679
  %v2962 = vpack.c.b16 %v2682, %v2681
  %v2963 = vpack.c.b16 %v2684, %v2683
  %v2964 = vpack.c.b16 %v2686, %v2685
  %v2965 = vpack.c.b16 %v2688, %v2687
  %v2966 = vpack.c.b16 %v2690, %v2689
  %v2967 = vpack.c.b16 %v2692, %v2691
  %v2968 = vpack.c.b16 %v2694, %v2693
  %v2969 = vpack.c.b16 %v2696, %v2695
  %v2970 = vpack.c.b16 %v2698, %v2697
  %v2971 = vpack.c.b16 %v2700, %v2699
  %v2972 = vpack.c.b16 %v2702, %v2701
  %v2973 = vpack.c.b16 %v2704, %v2703
  %v2974 = vpack.c.b16 %v2706, %v2705
  %v2975 = vpack.c.b16 %v2708, %v2707
  %v2976 = vpack.c.b16 %v2710, %v2709
  %v2977 = vpack.c.b16 %v2712, %v2711
  %v2978 = vpack.c.b16 %v2714, %v2713
  %v2979 = vpack.c.b16 %v2716, %v2715
  %v2980 = vpack.c.b16 %v2718, %v2717
  %v2981 = vpack.c.b16 %v2720, %v2719
  %v2982 = vpack.c.b16 %v2722, %v2721
  %v2983 = vpack.c.b16 %v2724, %v2723
  %v2984 = vpack.c.b16 %v2726, %v2725
  %v2985 = vpack.c.b16 %v2728, %v2727
  %v2986 = vpack.c.b16 %v2730, %v2729
  %v2987 = vpack.c.b16 %v2732, %v2731
  %v2988 = vpack.c.b16 %v2734, %v2733
  %v2989 = vpack.c.b16 %v2736, %v2735
  %v2990 = vpack.c.b16 %v2738, %v2737
  %v2991 = vpack.c.b16 %v2740, %v2739
  %v2992 = vpack.c.b16 %v2742, %v2741
  %v2993 = vpack.c.b16 %v2744, %v2743
  %v2994 = vpack.c.b16 %v2746, %v2745
  %v2995 = vpack.c.b16 %v2748, %v2747
  %v2996 = vpack.c.b16 %v2750, %v2749
  %v2997 = vpack.c.b16 %v2752, %v2751
  %v2998 = vpack.c.b16 %v2754, %v2753
  %v2999 = vpack.c.b16 %v2756, %v2755
  %v3000 = vpack.c.b16 %v2758, %v2757
  %v3001 = vpack.c.b16 %v2760, %v2759
  %v3002 = vpack.c.b16 %v2762, %v2761
  %v3003 = vpack.c.b16 %v2764, %v2763
  %v3004 = vpack.c.b16 %v2766, %v2765
  %v3005 = vpack.c.b16 %v2768, %v2767
  %v3006 = vpack.c.b16 %v2770, %v2769
  %v3007 = vpack.c.b16 %v2772, %v2771
  %v3008 = vpack.c.b16 %v2774, %v2773
  %v3009 = vpack.c.b16 %v2776, %v2775
  %v3010 = vpack.c.b16 %v2778, %v2777
  %v3011 = vpack.c.b16 %v2780, %v2779
  %v3012 = vpack.c.b16 %v2782, %v2781
  %v3013 = vpack.c.b16 %v2784, %v2783
  %v3014 = vpack.c.b16 %v2786, %v2785
  %v3015 = vpack.c.b16 %v2788, %v2787
  %v3016 = vpack.c.b16 %v2790, %v2789
  %v3017 = vpack.c.b16 %v2792, %v2791
  %v3018 = vpack.c.b16 %v2794, %v2793
  %v3019 = vpack.c.b16 %v2796, %v2795
  %v3020 = vpack.c.b16 %v2798, %v2797
  %v3021 = vpack.c.b16 %v2800, %v2799
  %v3022 = vpack.c.b16 %v2802, %v2801
  %v3023 = vpack.c.b16 %v2804, %v2803
  %v3024 = vpack.c.b16 %v2806, %v2805
  %v3025 = vpack.c.b16 %v2808, %v2807
  %v3026 = vpack.c.b16 %v2810, %v2809
  %v3027 = vpack.c.b16 %v2812, %v2811
  %v3028 = vpack.c.b16 %v2814, %v2813
  %v3029 = vpack.c.b16 %v2816, %v2815
  %v3030 = vpack.c.b16 %v2818, %v2817
  %v3031 = vpack.c.b16 %v2820, %v2819
  %v3032 = vpack.c.b16 %v2822, %v2821
  %v3033 = vpack.c.b16 %v2824, %v2823
  %v3034 = vpack.c.b16 %v2826, %v2825
  %v3035 = vpack.c.b16 %v2828, %v2827
  %v3036 = vpack.c.b16 %v2830, %v2829
  %v3037 = vpack.c.b16 %v2832, %v2831
  %v3038 = vpack.c.b16 %v2834, %v2833
  %v3039 = vpack.c.b16 %v2836, %v2835
  %v3040 = vpack.c.b16 %v2838, %v2837
  %v3041 = vpack.c.b16 %v2840, %v2839
  %v3042 = vpack.c.b16 %v2842, %v2841
  %3243 = vmatprep.subr.bf16.mxu0 0
  %3244 = vmatpush1.bf16.msra.mxu0 %v2843
  %3245 = vmatprep.subr.bf16.mxu0 0
  %3246 = vmatpush1.bf16.msra.mxu0 %v2844
  %3247 = vmatprep.subr.bf16.mxu0 0
  %3248 = vmatpush1.bf16.msra.mxu0 %v2845
  %3249 = vmatprep.subr.bf16.mxu0 0
  %3250 = vmatpush1.bf16.msra.mxu0 %v2846
  %3251 = vmatprep.subr.bf16.mxu0 0
  %3252 = vmatpush1.bf16.msra.mxu0 %v2847
  %3253 = vmatprep.subr.bf16.mxu0 0
  %3254 = vmatpush1.bf16.msra.mxu0 %v2848
  %3255 = vmatprep.subr.bf16.mxu0 0
  %3256 = vmatpush1.bf16.msra.mxu0 %v2849
  %3257 = vmatprep.subr.bf16.mxu0 0
  %3258 = vmatpush1.bf16.msra.mxu0 %v2850
  %3259 = vmatprep.subr.bf16.mxu0 0
  %3260 = vmatpush1.bf16.msra.mxu0 %v2851
  %3261 = vmatprep.subr.bf16.mxu0 0
  %3262 = vmatpush1.bf16.msra.mxu0 %v2852
  %3263 = vmatprep.subr.bf16.mxu0 0
  %3264 = vmatpush1.bf16.msra.mxu0 %v2853
  %3265 = vmatprep.subr.bf16.mxu0 0
  %3266 = vmatpush1.bf16.msra.mxu0 %v2854
  %3267 = vmatprep.subr.bf16.mxu0 0
  %3268 = vmatpush1.bf16.msra.mxu0 %v2855
  %3269 = vmatprep.subr.bf16.mxu0 0
  %3270 = vmatpush1.bf16.msra.mxu0 %v2856
  %3271 = vmatprep.subr.bf16.mxu0 0
  %3272 = vmatpush1.bf16.msra.mxu0 %v2857
  %3273 = vmatprep.subr.bf16.mxu0 0
  %3274 = vmatpush1.bf16.msra.mxu0 %v2858
  %3275 = vmatprep.mubr.bf16.mxu0 %v1494
  %3276 = vmatmul.mubr.bf16.gmra.mrb[0].mxu0 %v1493
  %v3277 = vpop.f32.mrb[0].mxu0
  %v3278 = vadd.f32 %v693, %v3277
  %v3279 = vpop.f32.mrb[0].mxu0
  %v3280 = vpop.f32.mrb[0].mxu0
  %v3281 = vadd.f32 %v693, %v3280
  %v3282 = vpop.f32.mrb[0].mxu0
  %3283 = vmatprep.mubr.bf16.mxu0 %v1519
  %3284 = vmatmul.mubr.bf16.gmra.mrb[0].mxu0 %v1518
  %v3285 = vpop.f32.mrb[0].mxu0
  %v3286 = vadd.f32 %v693, %v3285
  %v3287 = vpop.f32.mrb[0].mxu0
  %v3288 = vpop.f32.mrb[0].mxu0
  %v3289 = vadd.f32 %v693, %v3288
  %v3290 = vpop.f32.mrb[0].mxu0
  %3291 = vmatprep.mubr.bf16.mxu0 %v1544
  %3292 = vmatmul.mubr.bf16.gmra.mrb[0].mxu0 %v1543
  %v3293 = vpop.f32.mrb[0].mxu0
  %v3294 = vadd.f32 %v693, %v3293
  %v3295 = vpop.f32.mrb[0].mxu0
  %v3296 = vpop.f32.mrb[0].mxu0
  %v3297 = vadd.f32 %v693, %v3296
  %v3298 = vpop.f32.mrb[0].mxu0
  %3299 = vmatprep.mubr.bf16.mxu0 %v1569
  %3300 = vmatmul.mubr.bf16.gmra.mrb[0].mxu0 %v1568
  %v3301 = vpop.f32.mrb[0].mxu0
  %v3302 = vadd.f32 %v693, %v3301
  %v3303 = vpop.f32.mrb[0].mxu0
  %v3304 = vpop.f32.mrb[0].mxu0
  %v3305 = vadd.f32 %v693, %v3304
  %v3306 = vpop.f32.mrb[0].mxu0
  %3307 = vmatprep.mubr.bf16.mxu0 %v1594
  %3308 = vmatmul.mubr.bf16.gmra.mrb[0].mxu0 %v1593
  %v3309 = vpop.f32.mrb[0].mxu0
  %v3310 = vadd.f32 %v693, %v3309
  %v3311 = vpop.f32.mrb[0].mxu0
  %v3312 = vpop.f32.mrb[0].mxu0
  %v3313 = vadd.f32 %v693, %v3312
  %v3314 = vpop.f32.mrb[0].mxu0
  %3315 = vmatprep.mubr.bf16.mxu0 %v1619
  %3316 = vmatmul.mubr.bf16.gmra.mrb[0].mxu0 %v1618
  %v3317 = vpop.f32.mrb[0].mxu0
  %v3318 = vadd.f32 %v693, %v3317
  %v3319 = vpop.f32.mrb[0].mxu0
  %v3320 = vpop.f32.mrb[0].mxu0
  %v3321 = vadd.f32 %v693, %v3320
  %v3322 = vpop.f32.mrb[0].mxu0
  %3323 = vmatprep.mubr.bf16.mxu0 %v1644
  %3324 = vmatmul.mubr.bf16.gmra.mrb[0].mxu0 %v1643
  %v3325 = vpop.f32.mrb[0].mxu0
  %v3326 = vadd.f32 %v693, %v3325
  %v3327 = vpop.f32.mrb[0].mxu0
  %v3328 = vpop.f32.mrb[0].mxu0
  %v3329 = vadd.f32 %v693, %v3328
  %v3330 = vpop.f32.mrb[0].mxu0
  %3331 = vmatprep.mubr.bf16.mxu0 %v1669
  %3332 = vmatmul.mubr.bf16.gmra.mrb[0].mxu0 %v1668
  %v3333 = vpop.f32.mrb[0].mxu0
  %v3334 = vadd.f32 %v693, %v3333
  %v3335 = vpop.f32.mrb[0].mxu0
  %v3336 = vpop.f32.mrb[0].mxu0
  %v3337 = vadd.f32 %v693, %v3336
  %v3338 = vpop.f32.mrb[0].mxu0
  %3339 = vmatprep.mubr.bf16.mxu0 %v1694
  %3340 = vmatmul.mubr.bf16.gmra.mrb[0].mxu0 %v1693
  %v3341 = vpop.f32.mrb[0].mxu0
  %v3342 = vadd.f32 %v693, %v3341
  %v3343 = vpop.f32.mrb[0].mxu0
  %v3344 = vpop.f32.mrb[0].mxu0
  %v3345 = vadd.f32 %v693, %v3344
  %v3346 = vpop.f32.mrb[0].mxu0
  %3347 = vmatprep.mubr.bf16.mxu0 %v1719
  %3348 = vmatmul.mubr.bf16.gmra.mrb[0].mxu0 %v1718
  %v3349 = vpop.f32.mrb[0].mxu0
  %v3350 = vadd.f32 %v693, %v3349
  %v3351 = vpop.f32.mrb[0].mxu0
  %v3352 = vpop.f32.mrb[0].mxu0
  %v3353 = vadd.f32 %v693, %v3352
  %v3354 = vpop.f32.mrb[0].mxu0
  %3355 = vmatprep.mubr.bf16.mxu0 %v1744
  %3356 = vmatmul.mubr.bf16.gmra.mrb[0].mxu0 %v1743
  %v3357 = vpop.f32.mrb[0].mxu0
  %v3358 = vadd.f32 %v693, %v3357
  %v3359 = vpop.f32.mrb[0].mxu0
  %v3360 = vpop.f32.mrb[0].mxu0
  %v3361 = vpop.f32.mrb[0].mxu0
  %3362 = vdwg.mxu0
  %3363 = vmatprep.subr.bf16.mxu0 0
  %3364 = vmatpush1.bf16.msra.mxu0 %v2859
  %3365 = vmatprep.subr.bf16.mxu0 0
  %3366 = vmatpush1.bf16.msra.mxu0 %v2860
  %3367 = vmatprep.subr.bf16.mxu0 0
  %3368 = vmatpush1.bf16.msra.mxu0 %v2861
  %3369 = vmatprep.subr.bf16.mxu0 0
  %3370 = vmatpush1.bf16.msra.mxu0 %v2862
  %3371 = vmatprep.subr.bf16.mxu0 0
  %3372 = vmatpush1.bf16.msra.mxu0 %v2863
  %3373 = vmatprep.subr.bf16.mxu0 0
  %3374 = vmatpush1.bf16.msra.mxu0 %v2864
  %3375 = vmatprep.subr.bf16.mxu0 0
  %3376 = vmatpush1.bf16.msra.mxu0 %v2865
  %3377 = vmatprep.subr.bf16.mxu0 0
  %3378 = vmatpush1.bf16.msra.mxu0 %v2866
  %3379 = vmatprep.subr.bf16.mxu0 0
  %3380 = vmatpush1.bf16.msra.mxu0 %v2867
  %3381 = vmatprep.subr.bf16.mxu0 0
  %3382 = vmatpush1.bf16.msra.mxu0 %v2868
  %3383 = vmatprep.subr.bf16.mxu0 0
  %3384 = vmatpush1.bf16.msra.mxu0 %v2869
  %3385 = vmatprep.subr.bf16.mxu0 0
  %3386 = vmatpush1.bf16.msra.mxu0 %v2870
  %3387 = vmatprep.subr.bf16.mxu0 0
  %3388 = vmatpush1.bf16.msra.mxu0 %v2871
  %3389 = vmatprep.subr.bf16.mxu0 0
  %3390 = vmatpush1.bf16.msra.mxu0 %v2872
  %3391 = vmatprep.subr.bf16.mxu0 0
  %3392 = vmatpush1.bf16.msra.mxu0 %v2873
  %3393 = vmatprep.subr.bf16.mxu0 0
  %3394 = vmatpush1.bf16.msra.mxu0 %v2874
  %3395 = vmatprep.mubr.bf16.mxu0 %v1496
  %3396 = vmatmul.mubr.bf16.gmra.mrb[0].mxu0 %v1495
  %v3397 = vpop.f32.mrb[0].mxu0
  %v3398 = vadd.f32 %v3278, %v3397
  %v3399 = vpop.f32.mrb[0].mxu0
  %v3400 = vpop.f32.mrb[0].mxu0
  %v3401 = vadd.f32 %v3281, %v3400
  %v3402 = vpop.f32.mrb[0].mxu0
  %3403 = vmatprep.mubr.bf16.mxu0 %v1521
  %3404 = vmatmul.mubr.bf16.gmra.mrb[0].mxu0 %v1520
  %v3405 = vpop.f32.mrb[0].mxu0
  %v3406 = vadd.f32 %v3286, %v3405
  %v3407 = vpop.f32.mrb[0].mxu0
  %v3408 = vpop.f32.mrb[0].mxu0
  %v3409 = vadd.f32 %v3289, %v3408
  %v3410 = vpop.f32.mrb[0].mxu0
  %3411 = vmatprep.mubr.bf16.mxu0 %v1546
  %3412 = vmatmul.mubr.bf16.gmra.mrb[0].mxu0 %v1545
  %v3413 = vpop.f32.mrb[0].mxu0
  %v3414 = vadd.f32 %v3294, %v3413
  %v3415 = vpop.f32.mrb[0].mxu0
  %v3416 = vpop.f32.mrb[0].mxu0
  %v3417 = vadd.f32 %v3297, %v3416
  %v3418 = vpop.f32.mrb[0].mxu0
  %3419 = vmatprep.mubr.bf16.mxu0 %v1571
  %3420 = vmatmul.mubr.bf16.gmra.mrb[0].mxu0 %v1570
  %v3421 = vpop.f32.mrb[0].mxu0
  %v3422 = vadd.f32 %v3302, %v3421
  %v3423 = vpop.f32.mrb[0].mxu0
  %v3424 = vpop.f32.mrb[0].mxu0
  %v3425 = vadd.f32 %v3305, %v3424
  %v3426 = vpop.f32.mrb[0].mxu0
  %3427 = vmatprep.mubr.bf16.mxu0 %v1596
  %3428 = vmatmul.mubr.bf16.gmra.mrb[0].mxu0 %v1595
  %v3429 = vpop.f32.mrb[0].mxu0
  %v3430 = vadd.f32 %v3310, %v3429
  %v3431 = vpop.f32.mrb[0].mxu0
  %v3432 = vpop.f32.mrb[0].mxu0
  %v3433 = vadd.f32 %v3313, %v3432
  %v3434 = vpop.f32.mrb[0].mxu0
  %3435 = vmatprep.mubr.bf16.mxu0 %v1621
  %3436 = vmatmul.mubr.bf16.gmra.mrb[0].mxu0 %v1620
  %v3437 = vpop.f32.mrb[0].mxu0
  %v3438 = vadd.f32 %v3318, %v3437
  %v3439 = vpop.f32.mrb[0].mxu0
  %v3440 = vpop.f32.mrb[0].mxu0
  %v3441 = vadd.f32 %v3321, %v3440
  %v3442 = vpop.f32.mrb[0].mxu0
  %3443 = vmatprep.mubr.bf16.mxu0 %v1646
  %3444 = vmatmul.mubr.bf16.gmra.mrb[0].mxu0 %v1645
  %v3445 = vpop.f32.mrb[0].mxu0
  %v3446 = vadd.f32 %v3326, %v3445
  %v3447 = vpop.f32.mrb[0].mxu0
  %v3448 = vpop.f32.mrb[0].mxu0
  %v3449 = vadd.f32 %v3329, %v3448
  %v3450 = vpop.f32.mrb[0].mxu0
  %3451 = vmatprep.mubr.bf16.mxu0 %v1671
  %3452 = vmatmul.mubr.bf16.gmra.mrb[0].mxu0 %v1670
  %v3453 = vpop.f32.mrb[0].mxu0
  %v3454 = vadd.f32 %v3334, %v3453
  %v3455 = vpop.f32.mrb[0].mxu0
  %v3456 = vpop.f32.mrb[0].mxu0
  %v3457 = vadd.f32 %v3337, %v3456
  %v3458 = vpop.f32.mrb[0].mxu0
  %3459 = vmatprep.mubr.bf16.mxu0 %v1696
  %3460 = vmatmul.mubr.bf16.gmra.mrb[0].mxu0 %v1695
  %v3461 = vpop.f32.mrb[0].mxu0
  %v3462 = vadd.f32 %v3342, %v3461
  %v3463 = vpop.f32.mrb[0].mxu0
  %v3464 = vpop.f32.mrb[0].mxu0
  %v3465 = vadd.f32 %v3345, %v3464
  %v3466 = vpop.f32.mrb[0].mxu0
  %3467 = vmatprep.mubr.bf16.mxu0 %v1721
  %3468 = vmatmul.mubr.bf16.gmra.mrb[0].mxu0 %v1720
  %v3469 = vpop.f32.mrb[0].mxu0
  %v3470 = vadd.f32 %v3350, %v3469
  %v3471 = vpop.f32.mrb[0].mxu0
  %v3472 = vpop.f32.mrb[0].mxu0
  %v3473 = vadd.f32 %v3353, %v3472
  %v3474 = vpop.f32.mrb[0].mxu0
  %3475 = vmatprep.mubr.bf16.mxu0 %v1746
  %3476 = vmatmul.mubr.bf16.gmra.mrb[0].mxu0 %v1745
  %v3477 = vpop.f32.mrb[0].mxu0
  %v3478 = vadd.f32 %v3358, %v3477
  %v3479 = vpop.f32.mrb[0].mxu0
  %v3480 = vpop.f32.mrb[0].mxu0
  %v3481 = vpop.f32.mrb[0].mxu0
  %3482 = vdwg.mxu0
  %3483 = vmatprep.subr.bf16.mxu0 0
  %3484 = vmatpush1.bf16.msra.mxu0 %v2875
  %3485 = vmatprep.subr.bf16.mxu0 0
  %3486 = vmatpush1.bf16.msra.mxu0 %v2876
  %3487 = vmatprep.subr.bf16.mxu0 0
  %3488 = vmatpush1.bf16.msra.mxu0 %v2877
  %3489 = vmatprep.subr.bf16.mxu0 0
  %3490 = vmatpush1.bf16.msra.mxu0 %v2878
  %3491 = vmatprep.subr.bf16.mxu0 0
  %3492 = vmatpush1.bf16.msra.mxu0 %v2879
  %3493 = vmatprep.subr.bf16.mxu0 0
  %3494 = vmatpush1.bf16.msra.mxu0 %v2880
  %3495 = vmatprep.subr.bf16.mxu0 0
  %3496 = vmatpush1.bf16.msra.mxu0 %v2881
  %3497 = vmatprep.subr.bf16.mxu0 0
  %3498 = vmatpush1.bf16.msra.mxu0 %v2882
  %3499 = vmatprep.subr.bf16.mxu0 0
  %3500 = vmatpush1.bf16.msra.mxu0 %v2883
  %3501 = vmatprep.subr.bf16.mxu0 0
  %3502 = vmatpush1.bf16.msra.mxu0 %v2884
  %3503 = vmatprep.subr.bf16.mxu0 0
  %3504 = vmatpush1.bf16.msra.mxu0 %v2885
  %3505 = vmatprep.subr.bf16.mxu0 0
  %3506 = vmatpush1.bf16.msra.mxu0 %v2886
  %3507 = vmatprep.subr.bf16.mxu0 0
  %3508 = vmatpush1.bf16.msra.mxu0 %v2887
  %3509 = vmatprep.subr.bf16.mxu0 0
  %3510 = vmatpush1.bf16.msra.mxu0 %v2888
  %3511 = vmatprep.subr.bf16.mxu0 0
  %3512 = vmatpush1.bf16.msra.mxu0 %v2889
  %3513 = vmatprep.subr.bf16.mxu0 0
  %3514 = vmatpush1.bf16.msra.mxu0 %v2890
  %3515 = vmatprep.mubr.bf16.mxu0 %v1498
  %3516 = vmatmul.mubr.bf16.gmra.mrb[0].mxu0 %v1497
  %v3517 = vpop.f32.mrb[0].mxu0
  %v3518 = vadd.f32 %v3398, %v3517
  %v3519 = vpop.f32.mrb[0].mxu0
  %v3520 = vpop.f32.mrb[0].mxu0
  %v3521 = vadd.f32 %v3401, %v3520
  %v3522 = vpop.f32.mrb[0].mxu0
  %3523 = vmatprep.mubr.bf16.mxu0 %v1523
  %3524 = vmatmul.mubr.bf16.gmra.mrb[0].mxu0 %v1522
  %v3525 = vpop.f32.mrb[0].mxu0
  %v3526 = vadd.f32 %v3406, %v3525
  %v3527 = vpop.f32.mrb[0].mxu0
  %v3528 = vpop.f32.mrb[0].mxu0
  %v3529 = vadd.f32 %v3409, %v3528
  %v3530 = vpop.f32.mrb[0].mxu0
  %3531 = vmatprep.mubr.bf16.mxu0 %v1548
  %3532 = vmatmul.mubr.bf16.gmra.mrb[0].mxu0 %v1547
  %v3533 = vpop.f32.mrb[0].mxu0
  %v3534 = vadd.f32 %v3414, %v3533
  %v3535 = vpop.f32.mrb[0].mxu0
  %v3536 = vpop.f32.mrb[0].mxu0
  %v3537 = vadd.f32 %v3417, %v3536
  %v3538 = vpop.f32.mrb[0].mxu0
  %3539 = vmatprep.mubr.bf16.mxu0 %v1573
  %3540 = vmatmul.mubr.bf16.gmra.mrb[0].mxu0 %v1572
  %v3541 = vpop.f32.mrb[0].mxu0
  %v3542 = vadd.f32 %v3422, %v3541
  %v3543 = vpop.f32.mrb[0].mxu0
  %v3544 = vpop.f32.mrb[0].mxu0
  %v3545 = vadd.f32 %v3425, %v3544
  %v3546 = vpop.f32.mrb[0].mxu0
  %3547 = vmatprep.mubr.bf16.mxu0 %v1598
  %3548 = vmatmul.mubr.bf16.gmra.mrb[0].mxu0 %v1597
  %v3549 = vpop.f32.mrb[0].mxu0
  %v3550 = vadd.f32 %v3430, %v3549
  %v3551 = vpop.f32.mrb[0].mxu0
  %v3552 = vpop.f32.mrb[0].mxu0
  %v3553 = vadd.f32 %v3433, %v3552
  %v3554 = vpop.f32.mrb[0].mxu0
  %3555 = vmatprep.mubr.bf16.mxu0 %v1623
  %3556 = vmatmul.mubr.bf16.gmra.mrb[0].mxu0 %v1622
  %v3557 = vpop.f32.mrb[0].mxu0
  %v3558 = vadd.f32 %v3438, %v3557
  %v3559 = vpop.f32.mrb[0].mxu0
  %v3560 = vpop.f32.mrb[0].mxu0
  %v3561 = vadd.f32 %v3441, %v3560
  %v3562 = vpop.f32.mrb[0].mxu0
  %3563 = vmatprep.mubr.bf16.mxu0 %v1648
  %3564 = vmatmul.mubr.bf16.gmra.mrb[0].mxu0 %v1647
  %v3565 = vpop.f32.mrb[0].mxu0
  %v3566 = vadd.f32 %v3446, %v3565
  %v3567 = vpop.f32.mrb[0].mxu0
  %v3568 = vpop.f32.mrb[0].mxu0
  %v3569 = vadd.f32 %v3449, %v3568
  %v3570 = vpop.f32.mrb[0].mxu0
  %3571 = vmatprep.mubr.bf16.mxu0 %v1673
  %3572 = vmatmul.mubr.bf16.gmra.mrb[0].mxu0 %v1672
  %v3573 = vpop.f32.mrb[0].mxu0
  %v3574 = vadd.f32 %v3454, %v3573
  %v3575 = vpop.f32.mrb[0].mxu0
  %v3576 = vpop.f32.mrb[0].mxu0
  %v3577 = vadd.f32 %v3457, %v3576
  %v3578 = vpop.f32.mrb[0].mxu0
  %3579 = vmatprep.mubr.bf16.mxu0 %v1698
  %3580 = vmatmul.mubr.bf16.gmra.mrb[0].mxu0 %v1697
  %v3581 = vpop.f32.mrb[0].mxu0
  %v3582 = vadd.f32 %v3462, %v3581
  %v3583 = vpop.f32.mrb[0].mxu0
  %v3584 = vpop.f32.mrb[0].mxu0
  %v3585 = vadd.f32 %v3465, %v3584
  %v3586 = vpop.f32.mrb[0].mxu0
  %3587 = vmatprep.mubr.bf16.mxu0 %v1723
  %3588 = vmatmul.mubr.bf16.gmra.mrb[0].mxu0 %v1722
  %v3589 = vpop.f32.mrb[0].mxu0
  %v3590 = vadd.f32 %v3470, %v3589
  %v3591 = vpop.f32.mrb[0].mxu0
  %v3592 = vpop.f32.mrb[0].mxu0
  %v3593 = vadd.f32 %v3473, %v3592
  %v3594 = vpop.f32.mrb[0].mxu0
  %3595 = vmatprep.mubr.bf16.mxu0 %v1748
  %3596 = vmatmul.mubr.bf16.gmra.mrb[0].mxu0 %v1747
  %v3597 = vpop.f32.mrb[0].mxu0
  %v3598 = vadd.f32 %v3478, %v3597
  %v3599 = vpop.f32.mrb[0].mxu0
  %v3600 = vpop.f32.mrb[0].mxu0
  %v3601 = vpop.f32.mrb[0].mxu0
  %3602 = vdwg.mxu0
  %3603 = vmatprep.subr.bf16.mxu0 0
  %3604 = vmatpush1.bf16.msra.mxu0 %v2891
  %3605 = vmatprep.subr.bf16.mxu0 0
  %3606 = vmatpush1.bf16.msra.mxu0 %v2892
  %3607 = vmatprep.subr.bf16.mxu0 0
  %3608 = vmatpush1.bf16.msra.mxu0 %v2893
  %3609 = vmatprep.subr.bf16.mxu0 0
  %3610 = vmatpush1.bf16.msra.mxu0 %v2894
  %3611 = vmatprep.subr.bf16.mxu0 0
  %3612 = vmatpush1.bf16.msra.mxu0 %v2895
  %3613 = vmatprep.subr.bf16.mxu0 0
  %3614 = vmatpush1.bf16.msra.mxu0 %v2896
  %3615 = vmatprep.subr.bf16.mxu0 0
  %3616 = vmatpush1.bf16.msra.mxu0 %v2897
  %3617 = vmatprep.subr.bf16.mxu0 0
  %3618 = vmatpush1.bf16.msra.mxu0 %v2898
  %3619 = vmatprep.subr.bf16.mxu0 0
  %3620 = vmatpush1.bf16.msra.mxu0 %v2899
  %3621 = vmatprep.subr.bf16.mxu0 0
  %3622 = vmatpush1.bf16.msra.mxu0 %v2900
  %3623 = vmatprep.subr.bf16.mxu0 0
  %3624 = vmatpush1.bf16.msra.mxu0 %v2901
  %3625 = vmatprep.subr.bf16.mxu0 0
  %3626 = vmatpush1.bf16.msra.mxu0 %v2902
  %3627 = vmatprep.subr.bf16.mxu0 0
  %3628 = vmatpush1.bf16.msra.mxu0 %v2903
  %3629 = vmatprep.subr.bf16.mxu0 0
  %3630 = vmatpush1.bf16.msra.mxu0 %v2904
  %3631 = vmatprep.subr.bf16.mxu0 0
  %3632 = vmatpush1.bf16.msra.mxu0 %v2905
  %3633 = vmatprep.subr.bf16.mxu0 0
  %3634 = vmatpush1.bf16.msra.mxu0 %v2906
  %3635 = vmatprep.mubr.bf16.mxu0 %v1500
  %3636 = vmatmul.mubr.bf16.gmra.mrb[0].mxu0 %v1499
  %v3637 = vpop.f32.mrb[0].mxu0
  %v3638 = vadd.f32 %v3518, %v3637
  %v3639 = vpop.f32.mrb[0].mxu0
  %v3640 = vpop.f32.mrb[0].mxu0
  %v3641 = vadd.f32 %v3521, %v3640
  %v3642 = vpop.f32.mrb[0].mxu0
  %3643 = vmatprep.mubr.bf16.mxu0 %v1525
  %3644 = vmatmul.mubr.bf16.gmra.mrb[0].mxu0 %v1524
  %v3645 = vpop.f32.mrb[0].mxu0
  %v3646 = vadd.f32 %v3526, %v3645
  %v3647 = vpop.f32.mrb[0].mxu0
  %v3648 = vpop.f32.mrb[0].mxu0
  %v3649 = vadd.f32 %v3529, %v3648
  %v3650 = vpop.f32.mrb[0].mxu0
  %3651 = vmatprep.mubr.bf16.mxu0 %v1550
  %3652 = vmatmul.mubr.bf16.gmra.mrb[0].mxu0 %v1549
  %v3653 = vpop.f32.mrb[0].mxu0
  %v3654 = vadd.f32 %v3534, %v3653
  %v3655 = vpop.f32.mrb[0].mxu0
  %v3656 = vpop.f32.mrb[0].mxu0
  %v3657 = vadd.f32 %v3537, %v3656
  %v3658 = vpop.f32.mrb[0].mxu0
  %3659 = vmatprep.mubr.bf16.mxu0 %v1575
  %3660 = vmatmul.mubr.bf16.gmra.mrb[0].mxu0 %v1574
  %v3661 = vpop.f32.mrb[0].mxu0
  %v3662 = vadd.f32 %v3542, %v3661
  %v3663 = vpop.f32.mrb[0].mxu0
  %v3664 = vpop.f32.mrb[0].mxu0
  %v3665 = vadd.f32 %v3545, %v3664
  %v3666 = vpop.f32.mrb[0].mxu0
  %3667 = vmatprep.mubr.bf16.mxu0 %v1600
  %3668 = vmatmul.mubr.bf16.gmra.mrb[0].mxu0 %v1599
  %v3669 = vpop.f32.mrb[0].mxu0
  %v3670 = vadd.f32 %v3550, %v3669
  %v3671 = vpop.f32.mrb[0].mxu0
  %v3672 = vpop.f32.mrb[0].mxu0
  %v3673 = vadd.f32 %v3553, %v3672
  %v3674 = vpop.f32.mrb[0].mxu0
  %3675 = vmatprep.mubr.bf16.mxu0 %v1625
  %3676 = vmatmul.mubr.bf16.gmra.mrb[0].mxu0 %v1624
  %v3677 = vpop.f32.mrb[0].mxu0
  %v3678 = vadd.f32 %v3558, %v3677
  %v3679 = vpop.f32.mrb[0].mxu0
  %v3680 = vpop.f32.mrb[0].mxu0
  %v3681 = vadd.f32 %v3561, %v3680
  %v3682 = vpop.f32.mrb[0].mxu0
  %3683 = vmatprep.mubr.bf16.mxu0 %v1650
  %3684 = vmatmul.mubr.bf16.gmra.mrb[0].mxu0 %v1649
  %v3685 = vpop.f32.mrb[0].mxu0
  %v3686 = vadd.f32 %v3566, %v3685
  %v3687 = vpop.f32.mrb[0].mxu0
  %v3688 = vpop.f32.mrb[0].mxu0
  %v3689 = vadd.f32 %v3569, %v3688
  %v3690 = vpop.f32.mrb[0].mxu0
  %3691 = vmatprep.mubr.bf16.mxu0 %v1675
  %3692 = vmatmul.mubr.bf16.gmra.mrb[0].mxu0 %v1674
  %v3693 = vpop.f32.mrb[0].mxu0
  %v3694 = vadd.f32 %v3574, %v3693
  %v3695 = vpop.f32.mrb[0].mxu0
  %v3696 = vpop.f32.mrb[0].mxu0
  %v3697 = vadd.f32 %v3577, %v3696
  %v3698 = vpop.f32.mrb[0].mxu0
  %3699 = vmatprep.mubr.bf16.mxu0 %v1700
  %3700 = vmatmul.mubr.bf16.gmra.mrb[0].mxu0 %v1699
  %v3701 = vpop.f32.mrb[0].mxu0
  %v3702 = vadd.f32 %v3582, %v3701
  %v3703 = vpop.f32.mrb[0].mxu0
  %v3704 = vpop.f32.mrb[0].mxu0
  %v3705 = vadd.f32 %v3585, %v3704
  %v3706 = vpop.f32.mrb[0].mxu0
  %3707 = vmatprep.mubr.bf16.mxu0 %v1725
  %3708 = vmatmul.mubr.bf16.gmra.mrb[0].mxu0 %v1724
  %v3709 = vpop.f32.mrb[0].mxu0
  %v3710 = vadd.f32 %v3590, %v3709
  %v3711 = vpop.f32.mrb[0].mxu0
  %v3712 = vpop.f32.mrb[0].mxu0
  %v3713 = vadd.f32 %v3593, %v3712
  %v3714 = vpop.f32.mrb[0].mxu0
  %3715 = vmatprep.mubr.bf16.mxu0 %v1750
  %3716 = vmatmul.mubr.bf16.gmra.mrb[0].mxu0 %v1749
  %v3717 = vpop.f32.mrb[0].mxu0
  %v3718 = vadd.f32 %v3598, %v3717
  %v3719 = vpop.f32.mrb[0].mxu0
  %v3720 = vpop.f32.mrb[0].mxu0
  %v3721 = vpop.f32.mrb[0].mxu0
  %3722 = vdwg.mxu0
  %3723 = vmatprep.subr.bf16.mxu0 0
  %3724 = vmatpush1.bf16.msra.mxu0 %v2907
  %3725 = vmatprep.subr.bf16.mxu0 0
  %3726 = vmatpush1.bf16.msra.mxu0 %v2908
  %3727 = vmatprep.subr.bf16.mxu0 0
  %3728 = vmatpush1.bf16.msra.mxu0 %v2909
  %3729 = vmatprep.subr.bf16.mxu0 0
  %3730 = vmatpush1.bf16.msra.mxu0 %v2910
  %3731 = vmatprep.subr.bf16.mxu0 0
  %3732 = vmatpush1.bf16.msra.mxu0 %v2911
  %3733 = vmatprep.subr.bf16.mxu0 0
  %3734 = vmatpush1.bf16.msra.mxu0 %v2912
  %3735 = vmatprep.subr.bf16.mxu0 0
  %3736 = vmatpush1.bf16.msra.mxu0 %v2913
  %3737 = vmatprep.subr.bf16.mxu0 0
  %3738 = vmatpush1.bf16.msra.mxu0 %v2914
  %3739 = vmatprep.subr.bf16.mxu0 0
  %3740 = vmatpush1.bf16.msra.mxu0 %v2915
  %3741 = vmatprep.subr.bf16.mxu0 0
  %3742 = vmatpush1.bf16.msra.mxu0 %v2916
  %3743 = vmatprep.subr.bf16.mxu0 0
  %3744 = vmatpush1.bf16.msra.mxu0 %v2917
  %3745 = vmatprep.subr.bf16.mxu0 0
  %3746 = vmatpush1.bf16.msra.mxu0 %v2918
  %3747 = vmatprep.subr.bf16.mxu0 0
  %3748 = vmatpush1.bf16.msra.mxu0 %v2919
  %3749 = vmatprep.subr.bf16.mxu0 0
  %3750 = vmatpush1.bf16.msra.mxu0 %v2920
  %3751 = vmatprep.subr.bf16.mxu0 0
  %3752 = vmatpush1.bf16.msra.mxu0 %v2921
  %3753 = vmatprep.subr.bf16.mxu0 0
  %3754 = vmatpush1.bf16.msra.mxu0 %v2922
  %3755 = vmatprep.mubr.bf16.mxu0 %v1502
  %3756 = vmatmul.mubr.bf16.gmra.mrb[0].mxu0 %v1501
  %v3757 = vpop.f32.mrb[0].mxu0
  %v3758 = vadd.f32 %v3638, %v3757
  %v3759 = vpop.f32.mrb[0].mxu0
  %v3760 = vpop.f32.mrb[0].mxu0
  %v3761 = vadd.f32 %v3641, %v3760
  %v3762 = vpop.f32.mrb[0].mxu0
  %3763 = vmatprep.mubr.bf16.mxu0 %v1527
  %3764 = vmatmul.mubr.bf16.gmra.mrb[0].mxu0 %v1526
  %v3765 = vpop.f32.mrb[0].mxu0
  %v3766 = vadd.f32 %v3646, %v3765
  %v3767 = vpop.f32.mrb[0].mxu0
  %v3768 = vpop.f32.mrb[0].mxu0
  %v3769 = vadd.f32 %v3649, %v3768
  %v3770 = vpop.f32.mrb[0].mxu0
  %3771 = vmatprep.mubr.bf16.mxu0 %v1552
  %3772 = vmatmul.mubr.bf16.gmra.mrb[0].mxu0 %v1551
  %v3773 = vpop.f32.mrb[0].mxu0
  %v3774 = vadd.f32 %v3654, %v3773
  %v3775 = vpop.f32.mrb[0].mxu0
  %v3776 = vpop.f32.mrb[0].mxu0
  %v3777 = vadd.f32 %v3657, %v3776
  %v3778 = vpop.f32.mrb[0].mxu0
  %3779 = vmatprep.mubr.bf16.mxu0 %v1577
  %3780 = vmatmul.mubr.bf16.gmra.mrb[0].mxu0 %v1576
  %v3781 = vpop.f32.mrb[0].mxu0
  %v3782 = vadd.f32 %v3662, %v3781
  %v3783 = vpop.f32.mrb[0].mxu0
  %v3784 = vpop.f32.mrb[0].mxu0
  %v3785 = vadd.f32 %v3665, %v3784
  %v3786 = vpop.f32.mrb[0].mxu0
  %3787 = vmatprep.mubr.bf16.mxu0 %v1602
  %3788 = vmatmul.mubr.bf16.gmra.mrb[0].mxu0 %v1601
  %v3789 = vpop.f32.mrb[0].mxu0
  %v3790 = vadd.f32 %v3670, %v3789
  %v3791 = vpop.f32.mrb[0].mxu0
  %v3792 = vpop.f32.mrb[0].mxu0
  %v3793 = vadd.f32 %v3673, %v3792
  %v3794 = vpop.f32.mrb[0].mxu0
  %3795 = vmatprep.mubr.bf16.mxu0 %v1627
  %3796 = vmatmul.mubr.bf16.gmra.mrb[0].mxu0 %v1626
  %v3797 = vpop.f32.mrb[0].mxu0
  %v3798 = vadd.f32 %v3678, %v3797
  %v3799 = vpop.f32.mrb[0].mxu0
  %v3800 = vpop.f32.mrb[0].mxu0
  %v3801 = vadd.f32 %v3681, %v3800
  %v3802 = vpop.f32.mrb[0].mxu0
  %3803 = vmatprep.mubr.bf16.mxu0 %v1652
  %3804 = vmatmul.mubr.bf16.gmra.mrb[0].mxu0 %v1651
  %v3805 = vpop.f32.mrb[0].mxu0
  %v3806 = vadd.f32 %v3686, %v3805
  %v3807 = vpop.f32.mrb[0].mxu0
  %v3808 = vpop.f32.mrb[0].mxu0
  %v3809 = vadd.f32 %v3689, %v3808
  %v3810 = vpop.f32.mrb[0].mxu0
  %3811 = vmatprep.mubr.bf16.mxu0 %v1677
  %3812 = vmatmul.mubr.bf16.gmra.mrb[0].mxu0 %v1676
  %v3813 = vpop.f32.mrb[0].mxu0
  %v3814 = vadd.f32 %v3694, %v3813
  %v3815 = vpop.f32.mrb[0].mxu0
  %v3816 = vpop.f32.mrb[0].mxu0
  %v3817 = vadd.f32 %v3697, %v3816
  %v3818 = vpop.f32.mrb[0].mxu0
  %3819 = vmatprep.mubr.bf16.mxu0 %v1702
  %3820 = vmatmul.mubr.bf16.gmra.mrb[0].mxu0 %v1701
  %v3821 = vpop.f32.mrb[0].mxu0
  %v3822 = vadd.f32 %v3702, %v3821
  %v3823 = vpop.f32.mrb[0].mxu0
  %v3824 = vpop.f32.mrb[0].mxu0
  %v3825 = vadd.f32 %v3705, %v3824
  %v3826 = vpop.f32.mrb[0].mxu0
  %3827 = vmatprep.mubr.bf16.mxu0 %v1727
  %3828 = vmatmul.mubr.bf16.gmra.mrb[0].mxu0 %v1726
  %v3829 = vpop.f32.mrb[0].mxu0
  %v3830 = vadd.f32 %v3710, %v3829
  %v3831 = vpop.f32.mrb[0].mxu0
  %v3832 = vpop.f32.mrb[0].mxu0
  %v3833 = vadd.f32 %v3713, %v3832
  %v3834 = vpop.f32.mrb[0].mxu0
  %3835 = vmatprep.mubr.bf16.mxu0 %v1752
  %3836 = vmatmul.mubr.bf16.gmra.mrb[0].mxu0 %v1751
  %v3837 = vpop.f32.mrb[0].mxu0
  %v3838 = vadd.f32 %v3718, %v3837
  %v3839 = vpop.f32.mrb[0].mxu0
  %v3840 = vpop.f32.mrb[0].mxu0
  %v3841 = vpop.f32.mrb[0].mxu0
  %3842 = vdwg.mxu0
  %3843 = vmatprep.subr.bf16.mxu0 0
  %3844 = vmatpush1.bf16.msra.mxu0 %v2923
  %3845 = vmatprep.subr.bf16.mxu0 0
  %3846 = vmatpush1.bf16.msra.mxu0 %v2924
  %3847 = vmatprep.subr.bf16.mxu0 0
  %3848 = vmatpush1.bf16.msra.mxu0 %v2925
  %3849 = vmatprep.subr.bf16.mxu0 0
  %3850 = vmatpush1.bf16.msra.mxu0 %v2926
  %3851 = vmatprep.subr.bf16.mxu0 0
  %3852 = vmatpush1.bf16.msra.mxu0 %v2927
  %3853 = vmatprep.subr.bf16.mxu0 0
  %3854 = vmatpush1.bf16.msra.mxu0 %v2928
  %3855 = vmatprep.subr.bf16.mxu0 0
  %3856 = vmatpush1.bf16.msra.mxu0 %v2929
  %3857 = vmatprep.subr.bf16.mxu0 0
  %3858 = vmatpush1.bf16.msra.mxu0 %v2930
  %3859 = vmatprep.subr.bf16.mxu0 0
  %3860 = vmatpush1.bf16.msra.mxu0 %v2931
  %3861 = vmatprep.subr.bf16.mxu0 0
  %3862 = vmatpush1.bf16.msra.mxu0 %v2932
  %3863 = vmatprep.subr.bf16.mxu0 0
  %3864 = vmatpush1.bf16.msra.mxu0 %v2933
  %3865 = vmatprep.subr.bf16.mxu0 0
  %3866 = vmatpush1.bf16.msra.mxu0 %v2934
  %3867 = vmatprep.subr.bf16.mxu0 0
  %3868 = vmatpush1.bf16.msra.mxu0 %v2935
  %3869 = vmatprep.subr.bf16.mxu0 0
  %3870 = vmatpush1.bf16.msra.mxu0 %v2936
  %3871 = vmatprep.subr.bf16.mxu0 0
  %3872 = vmatpush1.bf16.msra.mxu0 %v2937
  %3873 = vmatprep.subr.bf16.mxu0 0
  %3874 = vmatpush1.bf16.msra.mxu0 %v2938
  %3875 = vmatprep.mubr.bf16.mxu0 %v1504
  %3876 = vmatmul.mubr.bf16.gmra.mrb[0].mxu0 %v1503
  %v3877 = vpop.f32.mrb[0].mxu0
  %v3878 = vadd.f32 %v3758, %v3877
  %v3879 = vpop.f32.mrb[0].mxu0
  %v3880 = vpop.f32.mrb[0].mxu0
  %v3881 = vadd.f32 %v3761, %v3880
  %v3882 = vpop.f32.mrb[0].mxu0
  %3883 = vmatprep.mubr.bf16.mxu0 %v1529
  %3884 = vmatmul.mubr.bf16.gmra.mrb[0].mxu0 %v1528
  %v3885 = vpop.f32.mrb[0].mxu0
  %v3886 = vadd.f32 %v3766, %v3885
  %v3887 = vpop.f32.mrb[0].mxu0
  %v3888 = vpop.f32.mrb[0].mxu0
  %v3889 = vadd.f32 %v3769, %v3888
  %v3890 = vpop.f32.mrb[0].mxu0
  %3891 = vmatprep.mubr.bf16.mxu0 %v1554
  %3892 = vmatmul.mubr.bf16.gmra.mrb[0].mxu0 %v1553
  %v3893 = vpop.f32.mrb[0].mxu0
  %v3894 = vadd.f32 %v3774, %v3893
  %v3895 = vpop.f32.mrb[0].mxu0
  %v3896 = vpop.f32.mrb[0].mxu0
  %v3897 = vadd.f32 %v3777, %v3896
  %v3898 = vpop.f32.mrb[0].mxu0
  %3899 = vmatprep.mubr.bf16.mxu0 %v1579
  %3900 = vmatmul.mubr.bf16.gmra.mrb[0].mxu0 %v1578
  %v3901 = vpop.f32.mrb[0].mxu0
  %v3902 = vadd.f32 %v3782, %v3901
  %v3903 = vpop.f32.mrb[0].mxu0
  %v3904 = vpop.f32.mrb[0].mxu0
  %v3905 = vadd.f32 %v3785, %v3904
  %v3906 = vpop.f32.mrb[0].mxu0
  %3907 = vmatprep.mubr.bf16.mxu0 %v1604
  %3908 = vmatmul.mubr.bf16.gmra.mrb[0].mxu0 %v1603
  %v3909 = vpop.f32.mrb[0].mxu0
  %v3910 = vadd.f32 %v3790, %v3909
  %v3911 = vpop.f32.mrb[0].mxu0
  %v3912 = vpop.f32.mrb[0].mxu0
  %v3913 = vadd.f32 %v3793, %v3912
  %v3914 = vpop.f32.mrb[0].mxu0
  %3915 = vmatprep.mubr.bf16.mxu0 %v1629
  %3916 = vmatmul.mubr.bf16.gmra.mrb[0].mxu0 %v1628
  %v3917 = vpop.f32.mrb[0].mxu0
  %v3918 = vadd.f32 %v3798, %v3917
  %v3919 = vpop.f32.mrb[0].mxu0
  %v3920 = vpop.f32.mrb[0].mxu0
  %v3921 = vadd.f32 %v3801, %v3920
  %v3922 = vpop.f32.mrb[0].mxu0
  %3923 = vmatprep.mubr.bf16.mxu0 %v1654
  %3924 = vmatmul.mubr.bf16.gmra.mrb[0].mxu0 %v1653
  %v3925 = vpop.f32.mrb[0].mxu0
  %v3926 = vadd.f32 %v3806, %v3925
  %v3927 = vpop.f32.mrb[0].mxu0
  %v3928 = vpop.f32.mrb[0].mxu0
  %v3929 = vadd.f32 %v3809, %v3928
  %v3930 = vpop.f32.mrb[0].mxu0
  %3931 = vmatprep.mubr.bf16.mxu0 %v1679
  %3932 = vmatmul.mubr.bf16.gmra.mrb[0].mxu0 %v1678
  %v3933 = vpop.f32.mrb[0].mxu0
  %v3934 = vadd.f32 %v3814, %v3933
  %v3935 = vpop.f32.mrb[0].mxu0
  %v3936 = vpop.f32.mrb[0].mxu0
  %v3937 = vadd.f32 %v3817, %v3936
  %v3938 = vpop.f32.mrb[0].mxu0
  %3939 = vmatprep.mubr.bf16.mxu0 %v1704
  %3940 = vmatmul.mubr.bf16.gmra.mrb[0].mxu0 %v1703
  %v3941 = vpop.f32.mrb[0].mxu0
  %v3942 = vadd.f32 %v3822, %v3941
  %v3943 = vpop.f32.mrb[0].mxu0
  %v3944 = vpop.f32.mrb[0].mxu0
  %v3945 = vadd.f32 %v3825, %v3944
  %v3946 = vpop.f32.mrb[0].mxu0
  %3947 = vmatprep.mubr.bf16.mxu0 %v1729
  %3948 = vmatmul.mubr.bf16.gmra.mrb[0].mxu0 %v1728
  %v3949 = vpop.f32.mrb[0].mxu0
  %v3950 = vadd.f32 %v3830, %v3949
  %v3951 = vpop.f32.mrb[0].mxu0
  %v3952 = vpop.f32.mrb[0].mxu0
  %v3953 = vadd.f32 %v3833, %v3952
  %v3954 = vpop.f32.mrb[0].mxu0
  %3955 = vmatprep.mubr.bf16.mxu0 %v1754
  %3956 = vmatmul.mubr.bf16.gmra.mrb[0].mxu0 %v1753
  %v3957 = vpop.f32.mrb[0].mxu0
  %v3958 = vadd.f32 %v3838, %v3957
  %v3959 = vpop.f32.mrb[0].mxu0
  %v3960 = vpop.f32.mrb[0].mxu0
  %v3961 = vpop.f32.mrb[0].mxu0
  %3962 = vdwg.mxu0
  %3963 = vmatprep.subr.bf16.mxu0 0
  %3964 = vmatpush1.bf16.msra.mxu0 %v2939
  %3965 = vmatprep.subr.bf16.mxu0 0
  %3966 = vmatpush1.bf16.msra.mxu0 %v2940
  %3967 = vmatprep.subr.bf16.mxu0 0
  %3968 = vmatpush1.bf16.msra.mxu0 %v2941
  %3969 = vmatprep.subr.bf16.mxu0 0
  %3970 = vmatpush1.bf16.msra.mxu0 %v2942
  %3971 = vmatprep.subr.bf16.mxu0 0
  %3972 = vmatpush1.bf16.msra.mxu0 %v2943
  %3973 = vmatprep.subr.bf16.mxu0 0
  %3974 = vmatpush1.bf16.msra.mxu0 %v2944
  %3975 = vmatprep.subr.bf16.mxu0 0
  %3976 = vmatpush1.bf16.msra.mxu0 %v2945
  %3977 = vmatprep.subr.bf16.mxu0 0
  %3978 = vmatpush1.bf16.msra.mxu0 %v2946
  %3979 = vmatprep.subr.bf16.mxu0 0
  %3980 = vmatpush1.bf16.msra.mxu0 %v2947
  %3981 = vmatprep.subr.bf16.mxu0 0
  %3982 = vmatpush1.bf16.msra.mxu0 %v2948
  %3983 = vmatprep.subr.bf16.mxu0 0
  %3984 = vmatpush1.bf16.msra.mxu0 %v2949
  %3985 = vmatprep.subr.bf16.mxu0 0
  %3986 = vmatpush1.bf16.msra.mxu0 %v2950
  %3987 = vmatprep.subr.bf16.mxu0 0
  %3988 = vmatpush1.bf16.msra.mxu0 %v2951
  %3989 = vmatprep.subr.bf16.mxu0 0
  %3990 = vmatpush1.bf16.msra.mxu0 %v2952
  %3991 = vmatprep.subr.bf16.mxu0 0
  %3992 = vmatpush1.bf16.msra.mxu0 %v2953
  %3993 = vmatprep.subr.bf16.mxu0 0
  %3994 = vmatpush1.bf16.msra.mxu0 %v2954
  %3995 = vmatprep.mubr.bf16.mxu0 %v1506
  %3996 = vmatmul.mubr.bf16.gmra.mrb[0].mxu0 %v1505
  %v3997 = vpop.f32.mrb[0].mxu0
  %v3998 = vadd.f32 %v3878, %v3997
  %v3999 = vpop.f32.mrb[0].mxu0
  %v4000 = vpop.f32.mrb[0].mxu0
  %v4001 = vadd.f32 %v3881, %v4000
  %v4002 = vpop.f32.mrb[0].mxu0
  %4003 = vmatprep.mubr.bf16.mxu0 %v1531
  %4004 = vmatmul.mubr.bf16.gmra.mrb[0].mxu0 %v1530
  %v4005 = vpop.f32.mrb[0].mxu0
  %v4006 = vadd.f32 %v3886, %v4005
  %v4007 = vpop.f32.mrb[0].mxu0
  %v4008 = vpop.f32.mrb[0].mxu0
  %v4009 = vadd.f32 %v3889, %v4008
  %v4010 = vpop.f32.mrb[0].mxu0
  %4011 = vmatprep.mubr.bf16.mxu0 %v1556
  %4012 = vmatmul.mubr.bf16.gmra.mrb[0].mxu0 %v1555
  %v4013 = vpop.f32.mrb[0].mxu0
  %v4014 = vadd.f32 %v3894, %v4013
  %v4015 = vpop.f32.mrb[0].mxu0
  %v4016 = vpop.f32.mrb[0].mxu0
  %v4017 = vadd.f32 %v3897, %v4016
  %v4018 = vpop.f32.mrb[0].mxu0
  %4019 = vmatprep.mubr.bf16.mxu0 %v1581
  %4020 = vmatmul.mubr.bf16.gmra.mrb[0].mxu0 %v1580
  %v4021 = vpop.f32.mrb[0].mxu0
  %v4022 = vadd.f32 %v3902, %v4021
  %v4023 = vpop.f32.mrb[0].mxu0
  %v4024 = vpop.f32.mrb[0].mxu0
  %v4025 = vadd.f32 %v3905, %v4024
  %v4026 = vpop.f32.mrb[0].mxu0
  %4027 = vmatprep.mubr.bf16.mxu0 %v1606
  %4028 = vmatmul.mubr.bf16.gmra.mrb[0].mxu0 %v1605
  %v4029 = vpop.f32.mrb[0].mxu0
  %v4030 = vadd.f32 %v3910, %v4029
  %v4031 = vpop.f32.mrb[0].mxu0
  %v4032 = vpop.f32.mrb[0].mxu0
  %v4033 = vadd.f32 %v3913, %v4032
  %v4034 = vpop.f32.mrb[0].mxu0
  %4035 = vmatprep.mubr.bf16.mxu0 %v1631
  %4036 = vmatmul.mubr.bf16.gmra.mrb[0].mxu0 %v1630
  %v4037 = vpop.f32.mrb[0].mxu0
  %v4038 = vadd.f32 %v3918, %v4037
  %v4039 = vpop.f32.mrb[0].mxu0
  %v4040 = vpop.f32.mrb[0].mxu0
  %v4041 = vadd.f32 %v3921, %v4040
  %v4042 = vpop.f32.mrb[0].mxu0
  %4043 = vmatprep.mubr.bf16.mxu0 %v1656
  %4044 = vmatmul.mubr.bf16.gmra.mrb[0].mxu0 %v1655
  %v4045 = vpop.f32.mrb[0].mxu0
  %v4046 = vadd.f32 %v3926, %v4045
  %v4047 = vpop.f32.mrb[0].mxu0
  %v4048 = vpop.f32.mrb[0].mxu0
  %v4049 = vadd.f32 %v3929, %v4048
  %v4050 = vpop.f32.mrb[0].mxu0
  %4051 = vmatprep.mubr.bf16.mxu0 %v1681
  %4052 = vmatmul.mubr.bf16.gmra.mrb[0].mxu0 %v1680
  %v4053 = vpop.f32.mrb[0].mxu0
  %v4054 = vadd.f32 %v3934, %v4053
  %v4055 = vpop.f32.mrb[0].mxu0
  %v4056 = vpop.f32.mrb[0].mxu0
  %v4057 = vadd.f32 %v3937, %v4056
  %v4058 = vpop.f32.mrb[0].mxu0
  %4059 = vmatprep.mubr.bf16.mxu0 %v1706
  %4060 = vmatmul.mubr.bf16.gmra.mrb[0].mxu0 %v1705
  %v4061 = vpop.f32.mrb[0].mxu0
  %v4062 = vadd.f32 %v3942, %v4061
  %v4063 = vpop.f32.mrb[0].mxu0
  %v4064 = vpop.f32.mrb[0].mxu0
  %v4065 = vadd.f32 %v3945, %v4064
  %v4066 = vpop.f32.mrb[0].mxu0
  %4067 = vmatprep.mubr.bf16.mxu0 %v1731
  %4068 = vmatmul.mubr.bf16.gmra.mrb[0].mxu0 %v1730
  %v4069 = vpop.f32.mrb[0].mxu0
  %v4070 = vadd.f32 %v3950, %v4069
  %v4071 = vpop.f32.mrb[0].mxu0
  %v4072 = vpop.f32.mrb[0].mxu0
  %v4073 = vadd.f32 %v3953, %v4072
  %v4074 = vpop.f32.mrb[0].mxu0
  %4075 = vmatprep.mubr.bf16.mxu0 %v1756
  %4076 = vmatmul.mubr.bf16.gmra.mrb[0].mxu0 %v1755
  %v4077 = vpop.f32.mrb[0].mxu0
  %v4078 = vadd.f32 %v3958, %v4077
  %v4079 = vpop.f32.mrb[0].mxu0
  %v4080 = vpop.f32.mrb[0].mxu0
  %v4081 = vpop.f32.mrb[0].mxu0
  %4082 = vdwg.mxu0
  %4083 = vmatprep.subr.bf16.mxu0 0
  %4084 = vmatpush1.bf16.msra.mxu0 %v2955
  %4085 = vmatprep.subr.bf16.mxu0 0
  %4086 = vmatpush1.bf16.msra.mxu0 %v2956
  %4087 = vmatprep.subr.bf16.mxu0 0
  %4088 = vmatpush1.bf16.msra.mxu0 %v2957
  %4089 = vmatprep.subr.bf16.mxu0 0
  %4090 = vmatpush1.bf16.msra.mxu0 %v2958
  %4091 = vmatprep.subr.bf16.mxu0 0
  %4092 = vmatpush1.bf16.msra.mxu0 %v2959
  %4093 = vmatprep.subr.bf16.mxu0 0
  %4094 = vmatpush1.bf16.msra.mxu0 %v2960
  %4095 = vmatprep.subr.bf16.mxu0 0
  %4096 = vmatpush1.bf16.msra.mxu0 %v2961
  %4097 = vmatprep.subr.bf16.mxu0 0
  %4098 = vmatpush1.bf16.msra.mxu0 %v2962
  %4099 = vmatprep.subr.bf16.mxu0 0
  %4100 = vmatpush1.bf16.msra.mxu0 %v2963
  %4101 = vmatprep.subr.bf16.mxu0 0
  %4102 = vmatpush1.bf16.msra.mxu0 %v2964
  %4103 = vmatprep.subr.bf16.mxu0 0
  %4104 = vmatpush1.bf16.msra.mxu0 %v2965
  %4105 = vmatprep.subr.bf16.mxu0 0
  %4106 = vmatpush1.bf16.msra.mxu0 %v2966
  %4107 = vmatprep.subr.bf16.mxu0 0
  %4108 = vmatpush1.bf16.msra.mxu0 %v2967
  %4109 = vmatprep.subr.bf16.mxu0 0
  %4110 = vmatpush1.bf16.msra.mxu0 %v2968
  %4111 = vmatprep.subr.bf16.mxu0 0
  %4112 = vmatpush1.bf16.msra.mxu0 %v2969
  %4113 = vmatprep.subr.bf16.mxu0 0
  %4114 = vmatpush1.bf16.msra.mxu0 %v2970
  %4115 = vmatprep.mubr.bf16.mxu0 %v1508
  %4116 = vmatmul.mubr.bf16.gmra.mrb[0].mxu0 %v1507
  %v4117 = vpop.f32.mrb[0].mxu0
  %v4118 = vadd.f32 %v3998, %v4117
  %v4119 = vpop.f32.mrb[0].mxu0
  %v4120 = vpop.f32.mrb[0].mxu0
  %v4121 = vadd.f32 %v4001, %v4120
  %v4122 = vpop.f32.mrb[0].mxu0
  %4123 = vmatprep.mubr.bf16.mxu0 %v1533
  %4124 = vmatmul.mubr.bf16.gmra.mrb[0].mxu0 %v1532
  %v4125 = vpop.f32.mrb[0].mxu0
  %v4126 = vadd.f32 %v4006, %v4125
  %v4127 = vpop.f32.mrb[0].mxu0
  %v4128 = vpop.f32.mrb[0].mxu0
  %v4129 = vadd.f32 %v4009, %v4128
  %v4130 = vpop.f32.mrb[0].mxu0
  %4131 = vmatprep.mubr.bf16.mxu0 %v1558
  %4132 = vmatmul.mubr.bf16.gmra.mrb[0].mxu0 %v1557
  %v4133 = vpop.f32.mrb[0].mxu0
  %v4134 = vadd.f32 %v4014, %v4133
  %v4135 = vpop.f32.mrb[0].mxu0
  %v4136 = vpop.f32.mrb[0].mxu0
  %v4137 = vadd.f32 %v4017, %v4136
  %v4138 = vpop.f32.mrb[0].mxu0
  %4139 = vmatprep.mubr.bf16.mxu0 %v1583
  %4140 = vmatmul.mubr.bf16.gmra.mrb[0].mxu0 %v1582
  %v4141 = vpop.f32.mrb[0].mxu0
  %v4142 = vadd.f32 %v4022, %v4141
  %v4143 = vpop.f32.mrb[0].mxu0
  %v4144 = vpop.f32.mrb[0].mxu0
  %v4145 = vadd.f32 %v4025, %v4144
  %v4146 = vpop.f32.mrb[0].mxu0
  %4147 = vmatprep.mubr.bf16.mxu0 %v1608
  %4148 = vmatmul.mubr.bf16.gmra.mrb[0].mxu0 %v1607
  %v4149 = vpop.f32.mrb[0].mxu0
  %v4150 = vadd.f32 %v4030, %v4149
  %v4151 = vpop.f32.mrb[0].mxu0
  %v4152 = vpop.f32.mrb[0].mxu0
  %v4153 = vadd.f32 %v4033, %v4152
  %v4154 = vpop.f32.mrb[0].mxu0
  %4155 = vmatprep.mubr.bf16.mxu0 %v1633
  %4156 = vmatmul.mubr.bf16.gmra.mrb[0].mxu0 %v1632
  %v4157 = vpop.f32.mrb[0].mxu0
  %v4158 = vadd.f32 %v4038, %v4157
  %v4159 = vpop.f32.mrb[0].mxu0
  %v4160 = vpop.f32.mrb[0].mxu0
  %v4161 = vadd.f32 %v4041, %v4160
  %v4162 = vpop.f32.mrb[0].mxu0
  %4163 = vmatprep.mubr.bf16.mxu0 %v1658
  %4164 = vmatmul.mubr.bf16.gmra.mrb[0].mxu0 %v1657
  %v4165 = vpop.f32.mrb[0].mxu0
  %v4166 = vadd.f32 %v4046, %v4165
  %v4167 = vpop.f32.mrb[0].mxu0
  %v4168 = vpop.f32.mrb[0].mxu0
  %v4169 = vadd.f32 %v4049, %v4168
  %v4170 = vpop.f32.mrb[0].mxu0
  %4171 = vmatprep.mubr.bf16.mxu0 %v1683
  %4172 = vmatmul.mubr.bf16.gmra.mrb[0].mxu0 %v1682
  %v4173 = vpop.f32.mrb[0].mxu0
  %v4174 = vadd.f32 %v4054, %v4173
  %v4175 = vpop.f32.mrb[0].mxu0
  %v4176 = vpop.f32.mrb[0].mxu0
  %v4177 = vadd.f32 %v4057, %v4176
  %v4178 = vpop.f32.mrb[0].mxu0
  %4179 = vmatprep.mubr.bf16.mxu0 %v1708
  %4180 = vmatmul.mubr.bf16.gmra.mrb[0].mxu0 %v1707
  %v4181 = vpop.f32.mrb[0].mxu0
  %v4182 = vadd.f32 %v4062, %v4181
  %v4183 = vpop.f32.mrb[0].mxu0
  %v4184 = vpop.f32.mrb[0].mxu0
  %v4185 = vadd.f32 %v4065, %v4184
  %v4186 = vpop.f32.mrb[0].mxu0
  %4187 = vmatprep.mubr.bf16.mxu0 %v1733
  %4188 = vmatmul.mubr.bf16.gmra.mrb[0].mxu0 %v1732
  %v4189 = vpop.f32.mrb[0].mxu0
  %v4190 = vadd.f32 %v4070, %v4189
  %v4191 = vpop.f32.mrb[0].mxu0
  %v4192 = vpop.f32.mrb[0].mxu0
  %v4193 = vadd.f32 %v4073, %v4192
  %v4194 = vpop.f32.mrb[0].mxu0
  %4195 = vmatprep.mubr.bf16.mxu0 %v1758
  %4196 = vmatmul.mubr.bf16.gmra.mrb[0].mxu0 %v1757
  %v4197 = vpop.f32.mrb[0].mxu0
  %v4198 = vadd.f32 %v4078, %v4197
  %v4199 = vpop.f32.mrb[0].mxu0
  %v4200 = vpop.f32.mrb[0].mxu0
  %v4201 = vpop.f32.mrb[0].mxu0
  %4202 = vdwg.mxu0
  %4203 = vmatprep.subr.bf16.mxu0 0
  %4204 = vmatpush1.bf16.msra.mxu0 %v2971
  %4205 = vmatprep.subr.bf16.mxu0 0
  %4206 = vmatpush1.bf16.msra.mxu0 %v2972
  %4207 = vmatprep.subr.bf16.mxu0 0
  %4208 = vmatpush1.bf16.msra.mxu0 %v2973
  %4209 = vmatprep.subr.bf16.mxu0 0
  %4210 = vmatpush1.bf16.msra.mxu0 %v2974
  %4211 = vmatprep.subr.bf16.mxu0 0
  %4212 = vmatpush1.bf16.msra.mxu0 %v2975
  %4213 = vmatprep.subr.bf16.mxu0 0
  %4214 = vmatpush1.bf16.msra.mxu0 %v2976
  %4215 = vmatprep.subr.bf16.mxu0 0
  %4216 = vmatpush1.bf16.msra.mxu0 %v2977
  %4217 = vmatprep.subr.bf16.mxu0 0
  %4218 = vmatpush1.bf16.msra.mxu0 %v2978
  %4219 = vmatprep.subr.bf16.mxu0 0
  %4220 = vmatpush1.bf16.msra.mxu0 %v2979
  %4221 = vmatprep.subr.bf16.mxu0 0
  %4222 = vmatpush1.bf16.msra.mxu0 %v2980
  %4223 = vmatprep.subr.bf16.mxu0 0
  %4224 = vmatpush1.bf16.msra.mxu0 %v2981
  %4225 = vmatprep.subr.bf16.mxu0 0
  %4226 = vmatpush1.bf16.msra.mxu0 %v2982
  %4227 = vmatprep.subr.bf16.mxu0 0
  %4228 = vmatpush1.bf16.msra.mxu0 %v2983
  %4229 = vmatprep.subr.bf16.mxu0 0
  %4230 = vmatpush1.bf16.msra.mxu0 %v2984
  %4231 = vmatprep.subr.bf16.mxu0 0
  %4232 = vmatpush1.bf16.msra.mxu0 %v2985
  %4233 = vmatprep.subr.bf16.mxu0 0
  %4234 = vmatpush1.bf16.msra.mxu0 %v2986
  %4235 = vmatprep.mubr.bf16.mxu0 %v1510
  %4236 = vmatmul.mubr.bf16.gmra.mrb[0].mxu0 %v1509
  %v4237 = vpop.f32.mrb[0].mxu0
  %v4238 = vadd.f32 %v4118, %v4237
  %v4239 = vpop.f32.mrb[0].mxu0
  %v4240 = vpop.f32.mrb[0].mxu0
  %v4241 = vadd.f32 %v4121, %v4240
  %v4242 = vpop.f32.mrb[0].mxu0
  %4243 = vmatprep.mubr.bf16.mxu0 %v1535
  %4244 = vmatmul.mubr.bf16.gmra.mrb[0].mxu0 %v1534
  %v4245 = vpop.f32.mrb[0].mxu0
  %v4246 = vadd.f32 %v4126, %v4245
  %v4247 = vpop.f32.mrb[0].mxu0
  %v4248 = vpop.f32.mrb[0].mxu0
  %v4249 = vadd.f32 %v4129, %v4248
  %v4250 = vpop.f32.mrb[0].mxu0
  %4251 = vmatprep.mubr.bf16.mxu0 %v1560
  %4252 = vmatmul.mubr.bf16.gmra.mrb[0].mxu0 %v1559
  %v4253 = vpop.f32.mrb[0].mxu0
  %v4254 = vadd.f32 %v4134, %v4253
  %v4255 = vpop.f32.mrb[0].mxu0
  %v4256 = vpop.f32.mrb[0].mxu0
  %v4257 = vadd.f32 %v4137, %v4256
  %v4258 = vpop.f32.mrb[0].mxu0
  %4259 = vmatprep.mubr.bf16.mxu0 %v1585
  %4260 = vmatmul.mubr.bf16.gmra.mrb[0].mxu0 %v1584
  %v4261 = vpop.f32.mrb[0].mxu0
  %v4262 = vadd.f32 %v4142, %v4261
  %v4263 = vpop.f32.mrb[0].mxu0
  %v4264 = vpop.f32.mrb[0].mxu0
  %v4265 = vadd.f32 %v4145, %v4264
  %v4266 = vpop.f32.mrb[0].mxu0
  %4267 = vmatprep.mubr.bf16.mxu0 %v1610
  %4268 = vmatmul.mubr.bf16.gmra.mrb[0].mxu0 %v1609
  %v4269 = vpop.f32.mrb[0].mxu0
  %v4270 = vadd.f32 %v4150, %v4269
  %v4271 = vpop.f32.mrb[0].mxu0
  %v4272 = vpop.f32.mrb[0].mxu0
  %v4273 = vadd.f32 %v4153, %v4272
  %v4274 = vpop.f32.mrb[0].mxu0
  %4275 = vmatprep.mubr.bf16.mxu0 %v1635
  %4276 = vmatmul.mubr.bf16.gmra.mrb[0].mxu0 %v1634
  %v4277 = vpop.f32.mrb[0].mxu0
  %v4278 = vadd.f32 %v4158, %v4277
  %v4279 = vpop.f32.mrb[0].mxu0
  %v4280 = vpop.f32.mrb[0].mxu0
  %v4281 = vadd.f32 %v4161, %v4280
  %v4282 = vpop.f32.mrb[0].mxu0
  %4283 = vmatprep.mubr.bf16.mxu0 %v1660
  %4284 = vmatmul.mubr.bf16.gmra.mrb[0].mxu0 %v1659
  %v4285 = vpop.f32.mrb[0].mxu0
  %v4286 = vadd.f32 %v4166, %v4285
  %v4287 = vpop.f32.mrb[0].mxu0
  %v4288 = vpop.f32.mrb[0].mxu0
  %v4289 = vadd.f32 %v4169, %v4288
  %v4290 = vpop.f32.mrb[0].mxu0
  %4291 = vmatprep.mubr.bf16.mxu0 %v1685
  %4292 = vmatmul.mubr.bf16.gmra.mrb[0].mxu0 %v1684
  %v4293 = vpop.f32.mrb[0].mxu0
  %v4294 = vadd.f32 %v4174, %v4293
  %v4295 = vpop.f32.mrb[0].mxu0
  %v4296 = vpop.f32.mrb[0].mxu0
  %v4297 = vadd.f32 %v4177, %v4296
  %v4298 = vpop.f32.mrb[0].mxu0
  %4299 = vmatprep.mubr.bf16.mxu0 %v1710
  %4300 = vmatmul.mubr.bf16.gmra.mrb[0].mxu0 %v1709
  %v4301 = vpop.f32.mrb[0].mxu0
  %v4302 = vadd.f32 %v4182, %v4301
  %v4303 = vpop.f32.mrb[0].mxu0
  %v4304 = vpop.f32.mrb[0].mxu0
  %v4305 = vadd.f32 %v4185, %v4304
  %v4306 = vpop.f32.mrb[0].mxu0
  %4307 = vmatprep.mubr.bf16.mxu0 %v1735
  %4308 = vmatmul.mubr.bf16.gmra.mrb[0].mxu0 %v1734
  %v4309 = vpop.f32.mrb[0].mxu0
  %v4310 = vadd.f32 %v4190, %v4309
  %v4311 = vpop.f32.mrb[0].mxu0
  %v4312 = vpop.f32.mrb[0].mxu0
  %v4313 = vadd.f32 %v4193, %v4312
  %v4314 = vpop.f32.mrb[0].mxu0
  %4315 = vmatprep.mubr.bf16.mxu0 %v1760
  %4316 = vmatmul.mubr.bf16.gmra.mrb[0].mxu0 %v1759
  %v4317 = vpop.f32.mrb[0].mxu0
  %v4318 = vadd.f32 %v4198, %v4317
  %v4319 = vpop.f32.mrb[0].mxu0
  %v4320 = vpop.f32.mrb[0].mxu0
  %v4321 = vpop.f32.mrb[0].mxu0
  %4322 = vdwg.mxu0
  %4323 = vmatprep.subr.bf16.mxu0 0
  %4324 = vmatpush1.bf16.msra.mxu0 %v2987
  %4325 = vmatprep.subr.bf16.mxu0 0
  %4326 = vmatpush1.bf16.msra.mxu0 %v2988
  %4327 = vmatprep.subr.bf16.mxu0 0
  %4328 = vmatpush1.bf16.msra.mxu0 %v2989
  %4329 = vmatprep.subr.bf16.mxu0 0
  %4330 = vmatpush1.bf16.msra.mxu0 %v2990
  %4331 = vmatprep.subr.bf16.mxu0 0
  %4332 = vmatpush1.bf16.msra.mxu0 %v2991
  %4333 = vmatprep.subr.bf16.mxu0 0
  %4334 = vmatpush1.bf16.msra.mxu0 %v2992
  %4335 = vmatprep.subr.bf16.mxu0 0
  %4336 = vmatpush1.bf16.msra.mxu0 %v2993
  %4337 = vmatprep.subr.bf16.mxu0 0
  %4338 = vmatpush1.bf16.msra.mxu0 %v2994
  %4339 = vmatprep.subr.bf16.mxu0 0
  %4340 = vmatpush1.bf16.msra.mxu0 %v2995
  %4341 = vmatprep.subr.bf16.mxu0 0
  %4342 = vmatpush1.bf16.msra.mxu0 %v2996
  %4343 = vmatprep.subr.bf16.mxu0 0
  %4344 = vmatpush1.bf16.msra.mxu0 %v2997
  %4345 = vmatprep.subr.bf16.mxu0 0
  %4346 = vmatpush1.bf16.msra.mxu0 %v2998
  %4347 = vmatprep.subr.bf16.mxu0 0
  %4348 = vmatpush1.bf16.msra.mxu0 %v2999
  %4349 = vmatprep.subr.bf16.mxu0 0
  %4350 = vmatpush1.bf16.msra.mxu0 %v3000
  %4351 = vmatprep.subr.bf16.mxu0 0
  %4352 = vmatpush1.bf16.msra.mxu0 %v3001
  %4353 = vmatprep.subr.bf16.mxu0 0
  %4354 = vmatpush1.bf16.msra.mxu0 %v3002
  %4355 = vmatprep.mubr.bf16.mxu0 %v1512
  %4356 = vmatmul.mubr.bf16.gmra.mrb[0].mxu0 %v1511
  %v4357 = vpop.f32.mrb[0].mxu0
  %v4358 = vadd.f32 %v4238, %v4357
  %v4359 = vpop.f32.mrb[0].mxu0
  %v4360 = vpop.f32.mrb[0].mxu0
  %v4361 = vadd.f32 %v4241, %v4360
  %v4362 = vpop.f32.mrb[0].mxu0
  %4363 = vmatprep.mubr.bf16.mxu0 %v1537
  %4364 = vmatmul.mubr.bf16.gmra.mrb[0].mxu0 %v1536
  %v4365 = vpop.f32.mrb[0].mxu0
  %v4366 = vadd.f32 %v4246, %v4365
  %v4367 = vpop.f32.mrb[0].mxu0
  %v4368 = vpop.f32.mrb[0].mxu0
  %v4369 = vadd.f32 %v4249, %v4368
  %v4370 = vpop.f32.mrb[0].mxu0
  %4371 = vmatprep.mubr.bf16.mxu0 %v1562
  %4372 = vmatmul.mubr.bf16.gmra.mrb[0].mxu0 %v1561
  %v4373 = vpop.f32.mrb[0].mxu0
  %v4374 = vadd.f32 %v4254, %v4373
  %v4375 = vpop.f32.mrb[0].mxu0
  %v4376 = vpop.f32.mrb[0].mxu0
  %v4377 = vadd.f32 %v4257, %v4376
  %v4378 = vpop.f32.mrb[0].mxu0
  %4379 = vmatprep.mubr.bf16.mxu0 %v1587
  %4380 = vmatmul.mubr.bf16.gmra.mrb[0].mxu0 %v1586
  %v4381 = vpop.f32.mrb[0].mxu0
  %v4382 = vadd.f32 %v4262, %v4381
  %v4383 = vpop.f32.mrb[0].mxu0
  %v4384 = vpop.f32.mrb[0].mxu0
  %v4385 = vadd.f32 %v4265, %v4384
  %v4386 = vpop.f32.mrb[0].mxu0
  %4387 = vmatprep.mubr.bf16.mxu0 %v1612
  %4388 = vmatmul.mubr.bf16.gmra.mrb[0].mxu0 %v1611
  %v4389 = vpop.f32.mrb[0].mxu0
  %v4390 = vadd.f32 %v4270, %v4389
  %v4391 = vpop.f32.mrb[0].mxu0
  %v4392 = vpop.f32.mrb[0].mxu0
  %v4393 = vadd.f32 %v4273, %v4392
  %v4394 = vpop.f32.mrb[0].mxu0
  %4395 = vmatprep.mubr.bf16.mxu0 %v1637
  %4396 = vmatmul.mubr.bf16.gmra.mrb[0].mxu0 %v1636
  %v4397 = vpop.f32.mrb[0].mxu0
  %v4398 = vadd.f32 %v4278, %v4397
  %v4399 = vpop.f32.mrb[0].mxu0
  %v4400 = vpop.f32.mrb[0].mxu0
  %v4401 = vadd.f32 %v4281, %v4400
  %v4402 = vpop.f32.mrb[0].mxu0
  %4403 = vmatprep.mubr.bf16.mxu0 %v1662
  %4404 = vmatmul.mubr.bf16.gmra.mrb[0].mxu0 %v1661
  %v4405 = vpop.f32.mrb[0].mxu0
  %v4406 = vadd.f32 %v4286, %v4405
  %v4407 = vpop.f32.mrb[0].mxu0
  %v4408 = vpop.f32.mrb[0].mxu0
  %v4409 = vadd.f32 %v4289, %v4408
  %v4410 = vpop.f32.mrb[0].mxu0
  %4411 = vmatprep.mubr.bf16.mxu0 %v1687
  %4412 = vmatmul.mubr.bf16.gmra.mrb[0].mxu0 %v1686
  %v4413 = vpop.f32.mrb[0].mxu0
  %v4414 = vadd.f32 %v4294, %v4413
  %v4415 = vpop.f32.mrb[0].mxu0
  %v4416 = vpop.f32.mrb[0].mxu0
  %v4417 = vadd.f32 %v4297, %v4416
  %v4418 = vpop.f32.mrb[0].mxu0
  %4419 = vmatprep.mubr.bf16.mxu0 %v1712
  %4420 = vmatmul.mubr.bf16.gmra.mrb[0].mxu0 %v1711
  %v4421 = vpop.f32.mrb[0].mxu0
  %v4422 = vadd.f32 %v4302, %v4421
  %v4423 = vpop.f32.mrb[0].mxu0
  %v4424 = vpop.f32.mrb[0].mxu0
  %v4425 = vadd.f32 %v4305, %v4424
  %v4426 = vpop.f32.mrb[0].mxu0
  %4427 = vmatprep.mubr.bf16.mxu0 %v1737
  %4428 = vmatmul.mubr.bf16.gmra.mrb[0].mxu0 %v1736
  %v4429 = vpop.f32.mrb[0].mxu0
  %v4430 = vadd.f32 %v4310, %v4429
  %v4431 = vpop.f32.mrb[0].mxu0
  %v4432 = vpop.f32.mrb[0].mxu0
  %v4433 = vadd.f32 %v4313, %v4432
  %v4434 = vpop.f32.mrb[0].mxu0
  %4435 = vmatprep.mubr.bf16.mxu0 %v1762
  %4436 = vmatmul.mubr.bf16.gmra.mrb[0].mxu0 %v1761
  %v4437 = vpop.f32.mrb[0].mxu0
  %v4438 = vadd.f32 %v4318, %v4437
  %v4439 = vpop.f32.mrb[0].mxu0
  %v4440 = vpop.f32.mrb[0].mxu0
  %v4441 = vpop.f32.mrb[0].mxu0
  %4442 = vdwg.mxu0
  %4443 = vmatprep.subr.bf16.mxu0 0
  %4444 = vmatpush1.bf16.msra.mxu0 %v3003
  %4445 = vmatprep.subr.bf16.mxu0 0
  %4446 = vmatpush1.bf16.msra.mxu0 %v3004
  %4447 = vmatprep.subr.bf16.mxu0 0
  %4448 = vmatpush1.bf16.msra.mxu0 %v3005
  %4449 = vmatprep.subr.bf16.mxu0 0
  %4450 = vmatpush1.bf16.msra.mxu0 %v3006
  %4451 = vmatprep.subr.bf16.mxu0 0
  %4452 = vmatpush1.bf16.msra.mxu0 %v3007
  %4453 = vmatprep.subr.bf16.mxu0 0
  %4454 = vmatpush1.bf16.msra.mxu0 %v3008
  %4455 = vmatprep.subr.bf16.mxu0 0
  %4456 = vmatpush1.bf16.msra.mxu0 %v3009
  %4457 = vmatprep.subr.bf16.mxu0 0
  %4458 = vmatpush1.bf16.msra.mxu0 %v3010
  %4459 = vmatprep.subr.bf16.mxu0 0
  %4460 = vmatpush1.bf16.msra.mxu0 %v3011
  %4461 = vmatprep.subr.bf16.mxu0 0
  %4462 = vmatpush1.bf16.msra.mxu0 %v3012
  %4463 = vmatprep.subr.bf16.mxu0 0
  %4464 = vmatpush1.bf16.msra.mxu0 %v3013
  %4465 = vmatprep.subr.bf16.mxu0 0
  %4466 = vmatpush1.bf16.msra.mxu0 %v3014
  %4467 = vmatprep.subr.bf16.mxu0 0
  %4468 = vmatpush1.bf16.msra.mxu0 %v3015
  %4469 = vmatprep.subr.bf16.mxu0 0
  %4470 = vmatpush1.bf16.msra.mxu0 %v3016
  %4471 = vmatprep.subr.bf16.mxu0 0
  %4472 = vmatpush1.bf16.msra.mxu0 %v3017
  %4473 = vmatprep.subr.bf16.mxu0 0
  %4474 = vmatpush1.bf16.msra.mxu0 %v3018
  %4475 = vmatprep.mubr.bf16.mxu0 %v1514
  %4476 = vmatmul.mubr.bf16.gmra.mrb[0].mxu0 %v1513
  %v4477 = vpop.f32.mrb[0].mxu0
  %v4478 = vadd.f32 %v4358, %v4477
  %v4479 = vpop.f32.mrb[0].mxu0
  %v4480 = vpop.f32.mrb[0].mxu0
  %v4481 = vadd.f32 %v4361, %v4480
  %v4482 = vpop.f32.mrb[0].mxu0
  %4483 = vmatprep.mubr.bf16.mxu0 %v1539
  %4484 = vmatmul.mubr.bf16.gmra.mrb[0].mxu0 %v1538
  %v4485 = vpop.f32.mrb[0].mxu0
  %v4486 = vadd.f32 %v4366, %v4485
  %v4487 = vpop.f32.mrb[0].mxu0
  %v4488 = vpop.f32.mrb[0].mxu0
  %v4489 = vadd.f32 %v4369, %v4488
  %v4490 = vpop.f32.mrb[0].mxu0
  %4491 = vmatprep.mubr.bf16.mxu0 %v1564
  %4492 = vmatmul.mubr.bf16.gmra.mrb[0].mxu0 %v1563
  %v4493 = vpop.f32.mrb[0].mxu0
  %v4494 = vadd.f32 %v4374, %v4493
  %v4495 = vpop.f32.mrb[0].mxu0
  %v4496 = vpop.f32.mrb[0].mxu0
  %v4497 = vadd.f32 %v4377, %v4496
  %v4498 = vpop.f32.mrb[0].mxu0
  %4499 = vmatprep.mubr.bf16.mxu0 %v1589
  %4500 = vmatmul.mubr.bf16.gmra.mrb[0].mxu0 %v1588
  %v4501 = vpop.f32.mrb[0].mxu0
  %v4502 = vadd.f32 %v4382, %v4501
  %v4503 = vpop.f32.mrb[0].mxu0
  %v4504 = vpop.f32.mrb[0].mxu0
  %v4505 = vadd.f32 %v4385, %v4504
  %v4506 = vpop.f32.mrb[0].mxu0
  %4507 = vmatprep.mubr.bf16.mxu0 %v1614
  %4508 = vmatmul.mubr.bf16.gmra.mrb[0].mxu0 %v1613
  %v4509 = vpop.f32.mrb[0].mxu0
  %v4510 = vadd.f32 %v4390, %v4509
  %v4511 = vpop.f32.mrb[0].mxu0
  %v4512 = vpop.f32.mrb[0].mxu0
  %v4513 = vadd.f32 %v4393, %v4512
  %v4514 = vpop.f32.mrb[0].mxu0
  %4515 = vmatprep.mubr.bf16.mxu0 %v1639
  %4516 = vmatmul.mubr.bf16.gmra.mrb[0].mxu0 %v1638
  %v4517 = vpop.f32.mrb[0].mxu0
  %v4518 = vadd.f32 %v4398, %v4517
  %v4519 = vpop.f32.mrb[0].mxu0
  %v4520 = vpop.f32.mrb[0].mxu0
  %v4521 = vadd.f32 %v4401, %v4520
  %v4522 = vpop.f32.mrb[0].mxu0
  %4523 = vmatprep.mubr.bf16.mxu0 %v1664
  %4524 = vmatmul.mubr.bf16.gmra.mrb[0].mxu0 %v1663
  %v4525 = vpop.f32.mrb[0].mxu0
  %v4526 = vadd.f32 %v4406, %v4525
  %v4527 = vpop.f32.mrb[0].mxu0
  %v4528 = vpop.f32.mrb[0].mxu0
  %v4529 = vadd.f32 %v4409, %v4528
  %v4530 = vpop.f32.mrb[0].mxu0
  %4531 = vmatprep.mubr.bf16.mxu0 %v1689
  %4532 = vmatmul.mubr.bf16.gmra.mrb[0].mxu0 %v1688
  %v4533 = vpop.f32.mrb[0].mxu0
  %v4534 = vadd.f32 %v4414, %v4533
  %v4535 = vpop.f32.mrb[0].mxu0
  %v4536 = vpop.f32.mrb[0].mxu0
  %v4537 = vadd.f32 %v4417, %v4536
  %v4538 = vpop.f32.mrb[0].mxu0
  %4539 = vmatprep.mubr.bf16.mxu0 %v1714
  %4540 = vmatmul.mubr.bf16.gmra.mrb[0].mxu0 %v1713
  %v4541 = vpop.f32.mrb[0].mxu0
  %v4542 = vadd.f32 %v4422, %v4541
  %v4543 = vpop.f32.mrb[0].mxu0
  %v4544 = vpop.f32.mrb[0].mxu0
  %v4545 = vadd.f32 %v4425, %v4544
  %v4546 = vpop.f32.mrb[0].mxu0
  %4547 = vmatprep.mubr.bf16.mxu0 %v1739
  %4548 = vmatmul.mubr.bf16.gmra.mrb[0].mxu0 %v1738
  %v4549 = vpop.f32.mrb[0].mxu0
  %v4550 = vadd.f32 %v4430, %v4549
  %v4551 = vpop.f32.mrb[0].mxu0
  %v4552 = vpop.f32.mrb[0].mxu0
  %v4553 = vadd.f32 %v4433, %v4552
  %v4554 = vpop.f32.mrb[0].mxu0
  %4555 = vmatprep.mubr.bf16.mxu0 %v1764
  %4556 = vmatmul.mubr.bf16.gmra.mrb[0].mxu0 %v1763
  %v4557 = vpop.f32.mrb[0].mxu0
  %v4558 = vadd.f32 %v4438, %v4557
  %v4559 = vpop.f32.mrb[0].mxu0
  %v4560 = vpop.f32.mrb[0].mxu0
  %v4561 = vpop.f32.mrb[0].mxu0
  %4562 = vdwg.mxu0
  %4563 = vmatprep.subr.bf16.mxu0 0
  %4564 = vmatpush1.bf16.msra.mxu0 %v3019
  %4565 = vmatprep.subr.bf16.mxu0 0
  %4566 = vmatpush1.bf16.msra.mxu0 %v3020
  %4567 = vmatprep.subr.bf16.mxu0 0
  %4568 = vmatpush1.bf16.msra.mxu0 %v3021
  %4569 = vmatprep.subr.bf16.mxu0 0
  %4570 = vmatpush1.bf16.msra.mxu0 %v3022
  %4571 = vmatprep.subr.bf16.mxu0 0
  %4572 = vmatpush1.bf16.msra.mxu0 %v3023
  %4573 = vmatprep.subr.bf16.mxu0 0
  %4574 = vmatpush1.bf16.msra.mxu0 %v3024
  %4575 = vmatprep.subr.bf16.mxu0 0
  %4576 = vmatpush1.bf16.msra.mxu0 %v3025
  %4577 = vmatprep.subr.bf16.mxu0 0
  %4578 = vmatpush1.bf16.msra.mxu0 %v3026
  %4579 = vmatprep.subr.bf16.mxu0 0
  %4580 = vmatpush1.bf16.msra.mxu0 %v3027
  %4581 = vmatprep.subr.bf16.mxu0 0
  %4582 = vmatpush1.bf16.msra.mxu0 %v3028
  %4583 = vmatprep.subr.bf16.mxu0 0
  %4584 = vmatpush1.bf16.msra.mxu0 %v3029
  %4585 = vmatprep.subr.bf16.mxu0 0
  %4586 = vmatpush1.bf16.msra.mxu0 %v3030
  %4587 = vmatprep.subr.bf16.mxu0 0
  %4588 = vmatpush1.bf16.msra.mxu0 %v3031
  %4589 = vmatprep.subr.bf16.mxu0 0
  %4590 = vmatpush1.bf16.msra.mxu0 %v3032
  %4591 = vmatprep.subr.bf16.mxu0 0
  %4592 = vmatpush1.bf16.msra.mxu0 %v3033
  %4593 = vmatprep.subr.bf16.mxu0 0
  %4594 = vmatpush1.bf16.msra.mxu0 %v3034
  %4595 = vmatprep.mubr.bf16.mxu0 %v1516
  %4596 = vmatmul.mubr.bf16.gmra.mrb[0].mxu0 %v1515
  %v4597 = vpop.f32.mrb[0].mxu0
  %v4598 = vadd.f32 %v4478, %v4597
  %v4599 = vpop.f32.mrb[0].mxu0
  %v4600 = vpop.f32.mrb[0].mxu0
  %v4601 = vadd.f32 %v4481, %v4600
  %v4602 = vpop.f32.mrb[0].mxu0
  %4603 = vmatprep.mubr.bf16.mxu0 %v1541
  %4604 = vmatmul.mubr.bf16.gmra.mrb[0].mxu0 %v1540
  %v4605 = vpop.f32.mrb[0].mxu0
  %v4606 = vadd.f32 %v4486, %v4605
  %v4607 = vpop.f32.mrb[0].mxu0
  %v4608 = vpop.f32.mrb[0].mxu0
  %v4609 = vadd.f32 %v4489, %v4608
  %v4610 = vpop.f32.mrb[0].mxu0
  %4611 = vmatprep.mubr.bf16.mxu0 %v1566
  %4612 = vmatmul.mubr.bf16.gmra.mrb[0].mxu0 %v1565
  %v4613 = vpop.f32.mrb[0].mxu0
  %v4614 = vadd.f32 %v4494, %v4613
  %v4615 = vpop.f32.mrb[0].mxu0
  %v4616 = vpop.f32.mrb[0].mxu0
  %v4617 = vadd.f32 %v4497, %v4616
  %v4618 = vpop.f32.mrb[0].mxu0
  %4619 = vmatprep.mubr.bf16.mxu0 %v1591
  %4620 = vmatmul.mubr.bf16.gmra.mrb[0].mxu0 %v1590
  %v4621 = vpop.f32.mrb[0].mxu0
  %v4622 = vadd.f32 %v4502, %v4621
  %v4623 = vpop.f32.mrb[0].mxu0
  %v4624 = vpop.f32.mrb[0].mxu0
  %v4625 = vadd.f32 %v4505, %v4624
  %v4626 = vpop.f32.mrb[0].mxu0
  %4627 = vmatprep.mubr.bf16.mxu0 %v1616
  %4628 = vmatmul.mubr.bf16.gmra.mrb[0].mxu0 %v1615
  %v4629 = vpop.f32.mrb[0].mxu0
  %v4630 = vadd.f32 %v4510, %v4629
  %v4631 = vpop.f32.mrb[0].mxu0
  %v4632 = vpop.f32.mrb[0].mxu0
  %v4633 = vadd.f32 %v4513, %v4632
  %v4634 = vpop.f32.mrb[0].mxu0
  %4635 = vmatprep.mubr.bf16.mxu0 %v1641
  %4636 = vmatmul.mubr.bf16.gmra.mrb[0].mxu0 %v1640
  %v4637 = vpop.f32.mrb[0].mxu0
  %v4638 = vadd.f32 %v4518, %v4637
  %v4639 = vpop.f32.mrb[0].mxu0
  %v4640 = vpop.f32.mrb[0].mxu0
  %v4641 = vadd.f32 %v4521, %v4640
  %v4642 = vpop.f32.mrb[0].mxu0
  %4643 = vmatprep.mubr.bf16.mxu0 %v1666
  %4644 = vmatmul.mubr.bf16.gmra.mrb[0].mxu0 %v1665
  %v4645 = vpop.f32.mrb[0].mxu0
  %v4646 = vadd.f32 %v4526, %v4645
  %v4647 = vpop.f32.mrb[0].mxu0
  %v4648 = vpop.f32.mrb[0].mxu0
  %v4649 = vadd.f32 %v4529, %v4648
  %v4650 = vpop.f32.mrb[0].mxu0
  %4651 = vmatprep.mubr.bf16.mxu0 %v1691
  %4652 = vmatmul.mubr.bf16.gmra.mrb[0].mxu0 %v1690
  %v4653 = vpop.f32.mrb[0].mxu0
  %v4654 = vadd.f32 %v4534, %v4653
  %v4655 = vpop.f32.mrb[0].mxu0
  %v4656 = vpop.f32.mrb[0].mxu0
  %v4657 = vadd.f32 %v4537, %v4656
  %v4658 = vpop.f32.mrb[0].mxu0
  %4659 = vmatprep.mubr.bf16.mxu0 %v1716
  %4660 = vmatmul.mubr.bf16.gmra.mrb[0].mxu0 %v1715
  %v4661 = vpop.f32.mrb[0].mxu0
  %v4662 = vadd.f32 %v4542, %v4661
  %v4663 = vpop.f32.mrb[0].mxu0
  %v4664 = vpop.f32.mrb[0].mxu0
  %v4665 = vadd.f32 %v4545, %v4664
  %v4666 = vpop.f32.mrb[0].mxu0
  %4667 = vmatprep.mubr.bf16.mxu0 %v1741
  %4668 = vmatmul.mubr.bf16.gmra.mrb[0].mxu0 %v1740
  %v4669 = vpop.f32.mrb[0].mxu0
  %v4670 = vadd.f32 %v4550, %v4669
  %v4671 = vpop.f32.mrb[0].mxu0
  %v4672 = vpop.f32.mrb[0].mxu0
  %v4673 = vadd.f32 %v4553, %v4672
  %v4674 = vpop.f32.mrb[0].mxu0
  %4675 = vmatprep.mubr.bf16.mxu0 %v1766
  %4676 = vmatmul.mubr.bf16.gmra.mrb[0].mxu0 %v1765
  %v4677 = vpop.f32.mrb[0].mxu0
  %v4678 = vadd.f32 %v4558, %v4677
  %v4679 = vpop.f32.mrb[0].mxu0
  %v4680 = vpop.f32.mrb[0].mxu0
  %v4681 = vpop.f32.mrb[0].mxu0
  %4682 = vdwg.mxu0
  %4683 = vmatprep.subr.bf16.mxu0 0
  %4684 = vmatpush1.bf16.msra.mxu0 %v3035
  %4685 = vmatprep.subr.bf16.mxu0 0
  %4686 = vmatpush1.bf16.msra.mxu0 %v3036
  %4687 = vmatprep.subr.bf16.mxu0 0
  %4688 = vmatpush1.bf16.msra.mxu0 %v3037
  %4689 = vmatprep.subr.bf16.mxu0 0
  %4690 = vmatpush1.bf16.msra.mxu0 %v3038
  %4691 = vmatprep.subr.bf16.mxu0 0
  %4692 = vmatpush1.bf16.msra.mxu0 %v3039
  %4693 = vmatprep.subr.bf16.mxu0 0
  %4694 = vmatpush1.bf16.msra.mxu0 %v3040
  %4695 = vmatprep.subr.bf16.mxu0 0
  %4696 = vmatpush1.bf16.msra.mxu0 %v3041
  %4697 = vmatprep.subr.bf16.mxu0 0
  %4698 = vmatpush1.bf16.msra.mxu0 %v3042
  %4699 = vmatprep.subr.bf16.mxu0 0
  %4700 = vmatpush1.bf16.msra.mxu0 0
  %4701 = vmatprep.subr.bf16.mxu0 0
  %4702 = vmatpush1.bf16.msra.mxu0 0
  %4703 = vmatprep.subr.bf16.mxu0 0
  %4704 = vmatpush1.bf16.msra.mxu0 0
  %4705 = vmatprep.subr.bf16.mxu0 0
  %4706 = vmatpush1.bf16.msra.mxu0 0
  %4707 = vmatprep.subr.bf16.mxu0 0
  %4708 = vmatpush1.bf16.msra.mxu0 0
  %4709 = vmatprep.subr.bf16.mxu0 0
  %4710 = vmatpush1.bf16.msra.mxu0 0
  %4711 = vmatprep.subr.bf16.mxu0 0
  %4712 = vmatpush1.bf16.msra.mxu0 0
  %4713 = vmatprep.subr.bf16.mxu0 0
  %4714 = vmatpush1.bf16.msra.mxu0 0
  %4715 = vmatprep.mubr.bf16.mxu0 0
  %4716 = vmatmul.mubr.bf16.gmra.mrb[0].mxu0 %v1517
  %v4717 = vpop.f32.mrb[0].mxu0
  %v4718 = vadd.f32 %v4598, %v4717
  %v4719 = vpop.f32.mrb[0].mxu0
  %v4720 = vpop.f32.mrb[0].mxu0
  %v4721 = vadd.f32 %v4601, %v4720
  %v4722 = vpop.f32.mrb[0].mxu0
  %4723 = vmatprep.mubr.bf16.mxu0 0
  %4724 = vmatmul.mubr.bf16.gmra.mrb[0].mxu0 %v1542
  %v4725 = vpop.f32.mrb[0].mxu0
  %v4726 = vadd.f32 %v4606, %v4725
  %v4727 = vpop.f32.mrb[0].mxu0
  %v4728 = vpop.f32.mrb[0].mxu0
  %v4729 = vadd.f32 %v4609, %v4728
  %v4730 = vpop.f32.mrb[0].mxu0
  %4731 = vmatprep.mubr.bf16.mxu0 0
  %4732 = vmatmul.mubr.bf16.gmra.mrb[0].mxu0 %v1567
  %v4733 = vpop.f32.mrb[0].mxu0
  %v4734 = vadd.f32 %v4614, %v4733
  %v4735 = vpop.f32.mrb[0].mxu0
  %v4736 = vpop.f32.mrb[0].mxu0
  %v4737 = vadd.f32 %v4617, %v4736
  %v4738 = vpop.f32.mrb[0].mxu0
  %4739 = vmatprep.mubr.bf16.mxu0 0
  %4740 = vmatmul.mubr.bf16.gmra.mrb[0].mxu0 %v1592
  %v4741 = vpop.f32.mrb[0].mxu0
  %v4742 = vadd.f32 %v4622, %v4741
  %v4743 = vpop.f32.mrb[0].mxu0
  %v4744 = vpop.f32.mrb[0].mxu0
  %v4745 = vadd.f32 %v4625, %v4744
  %v4746 = vpop.f32.mrb[0].mxu0
  %4747 = vmatprep.mubr.bf16.mxu0 0
  %4748 = vmatmul.mubr.bf16.gmra.mrb[0].mxu0 %v1617
  %v4749 = vpop.f32.mrb[0].mxu0
  %v4750 = vadd.f32 %v4630, %v4749
  %v4751 = vpop.f32.mrb[0].mxu0
  %v4752 = vpop.f32.mrb[0].mxu0
  %v4753 = vadd.f32 %v4633, %v4752
  %v4754 = vpop.f32.mrb[0].mxu0
  %4755 = vmatprep.mubr.bf16.mxu0 0
  %4756 = vmatmul.mubr.bf16.gmra.mrb[0].mxu0 %v1642
  %v4757 = vpop.f32.mrb[0].mxu0
  %v4758 = vadd.f32 %v4638, %v4757
  %v4759 = vpop.f32.mrb[0].mxu0
  %v4760 = vpop.f32.mrb[0].mxu0
  %v4761 = vadd.f32 %v4641, %v4760
  %v4762 = vpop.f32.mrb[0].mxu0
  %4763 = vmatprep.mubr.bf16.mxu0 0
  %4764 = vmatmul.mubr.bf16.gmra.mrb[0].mxu0 %v1667
  %v4765 = vpop.f32.mrb[0].mxu0
  %v4766 = vadd.f32 %v4646, %v4765
  %v4767 = vpop.f32.mrb[0].mxu0
  %v4768 = vpop.f32.mrb[0].mxu0
  %v4769 = vadd.f32 %v4649, %v4768
  %v4770 = vpop.f32.mrb[0].mxu0
  %4771 = vmatprep.mubr.bf16.mxu0 0
  %4772 = vmatmul.mubr.bf16.gmra.mrb[0].mxu0 %v1692
  %v4773 = vpop.f32.mrb[0].mxu0
  %v4774 = vadd.f32 %v4654, %v4773
  %v4775 = vpop.f32.mrb[0].mxu0
  %v4776 = vpop.f32.mrb[0].mxu0
  %v4777 = vadd.f32 %v4657, %v4776
  %v4778 = vpop.f32.mrb[0].mxu0
  %4779 = vmatprep.mubr.bf16.mxu0 0
  %4780 = vmatmul.mubr.bf16.gmra.mrb[0].mxu0 %v1717
  %v4781 = vpop.f32.mrb[0].mxu0
  %v4782 = vadd.f32 %v4662, %v4781
  %v4783 = vpop.f32.mrb[0].mxu0
  %v4784 = vpop.f32.mrb[0].mxu0
  %v4785 = vadd.f32 %v4665, %v4784
  %v4786 = vpop.f32.mrb[0].mxu0
  %4787 = vmatprep.mubr.bf16.mxu0 0
  %4788 = vmatmul.mubr.bf16.gmra.mrb[0].mxu0 %v1742
  %v4789 = vpop.f32.mrb[0].mxu0
  %v4790 = vadd.f32 %v4670, %v4789
  %v4791 = vpop.f32.mrb[0].mxu0
  %v4792 = vpop.f32.mrb[0].mxu0
  %v4793 = vadd.f32 %v4673, %v4792
  %v4794 = vpop.f32.mrb[0].mxu0
  %4795 = vmatprep.mubr.bf16.mxu0 0
  %4796 = vmatmul.mubr.bf16.gmra.mrb[0].mxu0 %v1767
  %v4797 = vpop.f32.mrb[0].mxu0
  %v4798 = vadd.f32 %v4678, %v4797
  %v4799 = vpop.f32.mrb[0].mxu0
  %v4800 = vpop.f32.mrb[0].mxu0
  %v4801 = vpop.f32.mrb[0].mxu0
  %4802 = vdwg.mxu0
  %v4803 = vmax.f32 %v4718, 0.0
  %v4804 = vmax.f32 %v4721, 0.0
  %v4805 = vmax.f32 %v4726, 0.0
  %v4806 = vmax.f32 %v4729, 0.0
  %v4807 = vmax.f32 %v4734, 0.0
  %v4808 = vmax.f32 %v4737, 0.0
  %v4809 = vmax.f32 %v4742, 0.0
  %v4810 = vmax.f32 %v4745, 0.0
  %v4811 = vmax.f32 %v4750, 0.0
  %v4812 = vmax.f32 %v4753, 0.0
  %v4813 = vmax.f32 %v4758, 0.0
  %v4814 = vmax.f32 %v4761, 0.0
  %v4815 = vmax.f32 %v4766, 0.0
  %v4816 = vmax.f32 %v4769, 0.0
  %v4817 = vmax.f32 %v4774, 0.0
  %v4818 = vmax.f32 %v4777, 0.0
  %v4819 = vmax.f32 %v4782, 0.0
  %v4820 = vmax.f32 %v4785, 0.0
  %v4821 = vmax.f32 %v4790, 0.0
  %v4822 = vmax.f32 %v4793, 0.0
  %v4823 = vmax.f32 %v4798, 0.0
  %v4824 = vpack.c.bf16 %v4804, %v4803
  %v4825 = vpack.c.bf16 %v4806, %v4805
  %v4826 = vpack.c.bf16 %v4808, %v4807
  %v4827 = vpack.c.bf16 %v4810, %v4809
  %v4828 = vpack.c.bf16 %v4812, %v4811
  %v4829 = vpack.c.bf16 %v4814, %v4813
  %v4830 = vpack.c.bf16 %v4816, %v4815
  %v4831 = vpack.c.bf16 %v4818, %v4817
  %v4832 = vpack.c.bf16 %v4820, %v4819
  %v4833 = vpack.c.bf16 %v4822, %v4821
  %v4834 = vpack.c.bf16 %v4823, %v4823
  %v4846 = vunpack.c.l.b16 %v4824
  %v4847 = vunpack.c.h.b16 %v4824
  %v4848 = vunpack.c.l.b16 %v4825
  %v4849 = vunpack.c.h.b16 %v4825
  %v4850 = vunpack.c.l.b16 %v4826
  %v4851 = vunpack.c.h.b16 %v4826
  %v4852 = vunpack.c.l.b16 %v4827
  %v4853 = vunpack.c.h.b16 %v4827
  %v4854 = vunpack.c.l.b16 %v4828
  %v4855 = vunpack.c.h.b16 %v4828
  %v4856 = vunpack.c.l.b16 %v4829
  %v4857 = vunpack.c.h.b16 %v4829
  %v4858 = vunpack.c.l.b16 %v4830
  %v4859 = vunpack.c.h.b16 %v4830
  %v4860 = vunpack.c.l.b16 %v4831
  %v4861 = vunpack.c.h.b16 %v4831
  %v4862 = vunpack.c.l.b16 %v4832
  %v4863 = vunpack.c.h.b16 %v4832
  %v4864 = vunpack.c.l.b16 %v4833
  %v4865 = vunpack.c.h.b16 %v4833
  %v4866 = vunpack.c.l.b16 %v4834
  %v4867 = vpack.c.b16 %v4846, %v4846
  %v4868 = vpack.c.b16 %v4847, %v4847
  %v4869 = vpack.c.b16 %v4848, %v4848
  %v4870 = vpack.c.b16 %v4849, %v4849
  %v4871 = vpack.c.b16 %v4850, %v4850
  %v4872 = vpack.c.b16 %v4851, %v4851
  %v4873 = vpack.c.b16 %v4852, %v4852
  %v4874 = vpack.c.b16 %v4853, %v4853
  %v4875 = vpack.c.b16 %v4854, %v4854
  %v4876 = vpack.c.b16 %v4855, %v4855
  %v4877 = vpack.c.b16 %v4856, %v4856
  %v4878 = vpack.c.b16 %v4857, %v4857
  %v4879 = vpack.c.b16 %v4858, %v4858
  %v4880 = vpack.c.b16 %v4859, %v4859
  %v4881 = vpack.c.b16 %v4860, %v4860
  %v4882 = vpack.c.b16 %v4861, %v4861
  %v4883 = vpack.c.b16 %v4862, %v4862
  %v4884 = vpack.c.b16 %v4863, %v4863
  %v4885 = vpack.c.b16 %v4864, %v4864
  %v4886 = vpack.c.b16 %v4865, %v4865
  %v4887 = vpack.c.b16 %v4866, %v4866
  %4909 = vst [vmem:[%s3] sm:$0xf] %v4867
  %4910 = vst [vmem:[%s3 + $0x4] sm:$0xf] %v4868
  %4911 = vst [vmem:[%s3 + $0x8] sm:$0xf] %v4869
  %4912 = vst [vmem:[%s3 + $0xc] sm:$0xf] %v4870
  %4913 = vst [vmem:[%s3 + $0x10] sm:$0xf] %v4871
  %4914 = vst [vmem:[%s3 + $0x14] sm:$0xf] %v4872
  %4915 = vst [vmem:[%s3 + $0x18] sm:$0xf] %v4873
  %4916 = vst [vmem:[%s3 + $0x1c] sm:$0xf] %v4874
  %4917 = vst [vmem:[%s3 + $0x20] sm:$0xf] %v4875
  %4918 = vst [vmem:[%s3 + $0x24] sm:$0xf] %v4876
  %4919 = vst [vmem:[%s3 + $0x28] sm:$0xf] %v4877
  %4920 = vst [vmem:[%s3 + $0x2c] sm:$0xf] %v4878
  %4921 = vst [vmem:[%s3 + $0x30] sm:$0xf] %v4879
  %4922 = vst [vmem:[%s3 + $0x34] sm:$0xf] %v4880
  %4923 = vst [vmem:[%s3 + $0x38] sm:$0xf] %v4881
  %4924 = vst [vmem:[%s3 + $0x3c] sm:$0xf] %v4882
  %4925 = vst [vmem:[%s3 + $0x40] sm:$0xf] %v4883
  %4926 = vst [vmem:[%s3 + $0x44] sm:$0xf] %v4884
  %4927 = vst [vmem:[%s3 + $0x48] sm:$0xf] %v4885
  %4928 = vst [vmem:[%s3 + $0x4c] sm:$0xf] %v4886
  %4929 = vst [vmem:[%s3 + $0x50] sm:$0x1] %v4887
  // Predicated region
  $region14: #{shared_encoder_forward.4} parent=0 // pred_check
    _
  $region15: #{shared_encoder_forward.4} parent=0 // pred_check_branch
    %4931 = sbr.rel (0) target = $region17
  $region16: #{shared_encoder_forward.4} parent=0 // pred_region
    _
  $region17: #{shared_encoder_forward.4} parent=0 // pred_fallthru
    _
  // Predicated region
  $region18: #{shared_encoder_forward.4} parent=0 // pred_check
    _
  $region19: #{shared_encoder_forward.4} parent=0 // pred_check_branch
    %4933 = sbr.rel (0) target = $region21
  $region20: #{shared_encoder_forward.4} parent=0 // pred_region
    _
  $region21: #{shared_encoder_forward.4} parent=0 // pred_fallthru
    _

</llo_original>
